<compile_context>
chip_gen: v6e
topology: v6e:2x2x1
jax: 0.10.0
libtpu: 0.0.40
codegen_flags: <defaults>
</compile_context>

<pallas_src>
import functools

import jax
import jax.numpy as jnp
import numpy as np
from jax.experimental import pallas as pl
from jax.experimental.pallas import tpu as pltpu

BN_EPS = 1e-5
_VMEM_LIMIT = 32 * 1024 * 1024  # valid on v5e/v6e (128 MiB) and v7x (64 MiB)


def _compiler_params():
    return pltpu.CompilerParams(
        dimension_semantics=("parallel",),   # batch tiles are independent
        vmem_limit_bytes=_VMEM_LIMIT,
    )


# --------------------------------------------------------------------------
# shared conv body: 3x3 same-conv on one (1, H, W, Cin) tile
# --------------------------------------------------------------------------
def _conv3x3_taps(h_f32, w_ref, pad_ref, H, W, Cin, Cout):
    """h_f32: (1, H, W, Cin) f32 value. Returns (1, H, W, Cout) f32 conv result.

    Zero-padding happens in the VMEM scratch `pad_ref` (no wrapper-side
    jnp.pad). MXU operands are bf16, accumulation is f32.
    """
    pad_ref[...] = jnp.zeros_like(pad_ref)
    pad_ref[:, 1:H + 1, 1:W + 1, :] = h_f32
    xb = pad_ref[...].astype(jnp.bfloat16)        # one cast feeds all 9 taps
    acc = jnp.zeros((1, H, W, Cout), jnp.float32)
    for t in range(9):                            # 9 shallow MXU matmuls
        ky, kx = t // 3, t % 3
        acc = acc + jnp.einsum(
            'bhwc,co->bhwo',
            xb[:, ky:ky + H, kx:kx + W, :],
            w_ref[t],
            preferred_element_type=jnp.float32)
    return acc


def _emit_partial_stats(acc, ssum_ref, ssq_ref):
    # Per-tile partial sums; the global BN mean / inv-std are finalized
    # outside the kernel (tiny op on (C,) vectors).
    ssum_ref[...] = jnp.sum(acc, axis=(0, 1, 2), keepdims=True)
    ssq_ref[...] = jnp.sum(acc * acc, axis=(0, 1, 2), keepdims=True)


# --------------------------------------------------------------------------
# kernels
# --------------------------------------------------------------------------
def _conv1_kernel(x_ref, w_ref, y_ref, ssum_ref, ssq_ref, pad_ref,
                  *, H, W, Cin, Cout):
    """conv1 on one batch tile + partial BN1 statistics."""
    acc = _conv3x3_taps(x_ref[...].astype(jnp.float32), w_ref, pad_ref,
                        H, W, Cin, Cout)
    _emit_partial_stats(acc, ssum_ref, ssq_ref)
    y_ref[...] = acc.astype(y_ref.dtype)          # bf16 pre-BN intermediate


def _bn_relu_conv_kernel(y1_ref, scale_ref, shift_ref, w_ref,
                         y2_ref, ssum_ref, ssq_ref, pad_ref,
                         *, H, W, Cin, Cout):
    """BN1 (finalized affine) + ReLU fused with conv2 + partial BN2 stats.

    The post-ReLU activation `h` lives only in VMEM/vregs — no HBM round trip.
    """
    h = jnp.maximum(
        y1_ref[...].astype(jnp.float32) * scale_ref[...] + shift_ref[...], 0.0)
    acc = _conv3x3_taps(h, w_ref, pad_ref, H, W, Cin, Cout)
    _emit_partial_stats(acc, ssum_ref, ssq_ref)
    y2_ref[...] = acc.astype(y2_ref.dtype)        # bf16 pre-BN intermediate


def _bn_add_relu_kernel(y2_ref, res_ref, scale_ref, shift_ref, o_ref):
    """BN2 (finalized affine) + residual add + ReLU on one batch tile."""
    y = y2_ref[...].astype(jnp.float32) * scale_ref[...] + shift_ref[...]
    o_ref[...] = jnp.maximum(y + res_ref[...].astype(jnp.float32),
                             0.0).astype(o_ref.dtype)


# --------------------------------------------------------------------------
# pallas_call wrappers (grid over batch, pipelined, "parallel")
# --------------------------------------------------------------------------
def _conv_outputs(B, H, W, Cout):
    out_specs = [
        pl.BlockSpec((1, H, W, Cout), lambda b: (b, 0, 0, 0)),
        pl.BlockSpec((1, 1, 1, Cout), lambda b: (b, 0, 0, 0)),
        pl.BlockSpec((1, 1, 1, Cout), lambda b: (b, 0, 0, 0)),
    ]
    out_shape = [
        jax.ShapeDtypeStruct((B, H, W, Cout), jnp.bfloat16),
        jax.ShapeDtypeStruct((B, 1, 1, Cout), jnp.float32),
        jax.ShapeDtypeStruct((B, 1, 1, Cout), jnp.float32),
    ]
    return out_specs, out_shape


def _conv_pass(x, w_taps_bf16):
    """Pass 1: conv1 + partial BN1 stats."""
    B, H, W, Cin = x.shape
    Cout = w_taps_bf16.shape[-1]
    out_specs, out_shape = _conv_outputs(B, H, W, Cout)
    kernel = functools.partial(_conv1_kernel, H=H, W=W, Cin=Cin, Cout=Cout)
    return pl.pallas_call(
        kernel,
        grid=(B,),
        in_specs=[
            pl.BlockSpec((1, H, W, Cin), lambda b: (b, 0, 0, 0)),
            pl.BlockSpec((9, Cin, Cout), lambda b: (0, 0, 0)),
        ],
        out_specs=out_specs,
        out_shape=out_shape,
        scratch_shapes=[pltpu.VMEM((1, H + 2, W + 2, Cin), jnp.float32)],
        compiler_params=_compiler_params(),
    )(x, w_taps_bf16)


def _bn_relu_conv_pass(y1, scale, shift, w_taps_bf16):
    """Pass 2: BN1+ReLU fused with conv2 + partial BN2 stats."""
    B, H, W, Cin = y1.shape
    Cout = w_taps_bf16.shape[-1]
    out_specs, out_shape = _conv_outputs(B, H, W, Cout)
    kernel = functools.partial(_bn_relu_conv_kernel, H=H, W=W, Cin=Cin,
                               Cout=Cout)
    return pl.pallas_call(
        kernel,
        grid=(B,),
        in_specs=[
            pl.BlockSpec((1, H, W, Cin), lambda b: (b, 0, 0, 0)),
            pl.BlockSpec((1, Cin), lambda b: (0, 0)),
            pl.BlockSpec((1, Cin), lambda b: (0, 0)),
            pl.BlockSpec((9, Cin, Cout), lambda b: (0, 0, 0)),
        ],
        out_specs=out_specs,
        out_shape=out_shape,
        scratch_shapes=[pltpu.VMEM((1, H + 2, W + 2, Cin), jnp.float32)],
        compiler_params=_compiler_params(),
    )(y1, scale, shift, w_taps_bf16)


def _bn_add_relu_pass(y2, residual, scale, shift):
    """Pass 3: BN2 + residual add + ReLU."""
    B, H, W, C = y2.shape
    return pl.pallas_call(
        _bn_add_relu_kernel,
        grid=(B,),
        in_specs=[
            pl.BlockSpec((1, H, W, C), lambda b: (b, 0, 0, 0)),
            pl.BlockSpec((1, H, W, C), lambda b: (b, 0, 0, 0)),
            pl.BlockSpec((1, C), lambda b: (0, 0)),
            pl.BlockSpec((1, C), lambda b: (0, 0)),
        ],
        out_specs=pl.BlockSpec((1, H, W, C), lambda b: (b, 0, 0, 0)),
        out_shape=jax.ShapeDtypeStruct((B, H, W, C), jnp.float32),
        compiler_params=_compiler_params(),
    )(y2, residual, scale, shift)


# --------------------------------------------------------------------------
# BN statistic finalization (tiny XLA op on (C,) vectors)
# --------------------------------------------------------------------------
def _bn_scale_shift(ssum, ssq, gamma, beta, count):
    s = jnp.sum(ssum, axis=0).reshape(-1)          # (C,)
    q = jnp.sum(ssq, axis=0).reshape(-1)           # (C,)
    mean = s / count
    # guard against tiny negative variance from E[x^2]-mean^2 cancellation
    var = jnp.maximum(q / count - mean * mean, 0.0)
    inv = jax.lax.rsqrt(var + BN_EPS)
    scale = gamma * inv
    shift = beta - mean * scale
    C = gamma.shape[0]
    return (scale.reshape(1, C).astype(jnp.float32),
            shift.reshape(1, C).astype(jnp.float32))


# --------------------------------------------------------------------------
# public forward (NCHW in / NCHW out, matching the PyTorch module)
# --------------------------------------------------------------------------
@jax.jit
def basic_block_forward(x_nchw, params):
    x = jnp.transpose(x_nchw, (0, 2, 3, 1))        # NCHW -> NHWC (boundary)
    B, H, W, _ = x.shape
    count = B * H * W

    w1 = params['w1'].astype(jnp.bfloat16)
    w2 = params['w2'].astype(jnp.bfloat16)

    y1, s1, q1 = _conv_pass(x, w1)                             # conv1
    scale1, shift1 = _bn_scale_shift(s1, q1, params['g1'], params['b1'], count)
    y2, s2, q2 = _bn_relu_conv_pass(y1, scale1, shift1, w2)    # bn1+relu+conv2
    scale2, shift2 = _bn_scale_shift(s2, q2, params['g2'], params['b2'], count)
    out = _bn_add_relu_pass(y2, x, scale2, shift2)             # bn2+res+relu
    return jnp.transpose(out, (0, 3, 1, 2))        # NHWC -> NCHW


def _torch_w_to_taps(w_oihw):
    """(Cout, Cin, 3, 3) -> (9, Cin, Cout), tap-major (ky*3+kx)."""
    cout, cin = w_oihw.shape[0], w_oihw.shape[1]
    return jnp.transpose(w_oihw, (2, 3, 1, 0)).reshape(9, cin, cout)


# --------------------------------------------------------------------------
# pure-JAX f32 reference (PyTorch semantics), returns NCHW
# --------------------------------------------------------------------------
def _reference(x_nchw, params):
    x = jnp.transpose(x_nchw, (0, 2, 3, 1)).astype(jnp.float32)

    def conv_bn(inp, w_taps, g, b):
        cin, cout = w_taps.shape[1], w_taps.shape[2]
        w_hwio = w_taps.reshape(3, 3, cin, cout)
        y = jax.lax.conv_general_dilated(
            inp, w_hwio, window_strides=(1, 1), padding='SAME',
            dimension_numbers=('NHWC', 'HWIO', 'NHWC'))
        mean = jnp.mean(y, axis=(0, 1, 2), keepdims=True)
        var = jnp.mean(jnp.square(y - mean), axis=(0, 1, 2), keepdims=True)
        return (y - mean) * jax.lax.rsqrt(var + BN_EPS) * g + b

    h = jnp.maximum(conv_bn(x, params['w1'], params['g1'], params['b1']), 0.0)
    y = jnp.maximum(conv_bn(h, params['w2'], params['g2'], params['b2']) + x, 0.0)
    return jnp.transpose(y, (0, 3, 1, 2))          # NHWC -> NCHW (bug fixed)


if __name__ == "__main__":
    B, inplanes, planes, H, W = 2, 4, 4, 16, 16    # stride=1, downsample=None

    key = jax.random.PRNGKey(0)
    k1, k2, k3, k4, k5 = jax.random.split(key, 5)

    x = jax.random.normal(k1, (B, inplanes, H, W), dtype=jnp.float32)

    # PyTorch conv weight shapes: (planes, inplanes, 3, 3), (planes, planes, 3, 3)
    w1_oihw = 0.1 * jax.random.normal(k2, (planes, inplanes, 3, 3), jnp.float32)
    w2_oihw = 0.1 * jax.random.normal(k3, (planes, planes, 3, 3), jnp.float32)

    params = {
        'w1': _torch_w_to_taps(w1_oihw),
        'w2': _torch_w_to_taps(w2_oihw),
        'g1': 1.0 + 0.1 * jax.random.normal(k4, (planes,), jnp.float32),
        'b1': 0.05 * jnp.arange(planes, dtype=jnp.float32),
        'g2': 1.0 + 0.1 * jax.random.normal(k5, (planes,), jnp.float32),
        'b2': -0.05 * jnp.arange(planes, dtype=jnp.float32),
    }

    out = jax.block_until_ready(basic_block_forward(x, params))
    ref = jax.block_until_ready(_reference(x, params))

    # Tolerance reflects bf16 MXU operands / bf16 HBM intermediates vs the
    # pure-f32 reference; a layout/tap bug would produce O(1) errors.
    np.testing.assert_allclose(np.asarray(out), np.asarray(ref),
                               rtol=5e-2, atol=5e-2)

    print("KERNEL_OK")
</pallas_src>

<mosaic_0001>
module attributes {stable_mosaic.version = 11 : i64} {
  func.func @_conv1_kernel(%arg0: i32, %arg1: memref<1x16x16x4xf32, #tpu.memory_space<vmem>>, %arg2: memref<9x4x4xbf16, #tpu.memory_space<vmem>>, %arg3: memref<1x16x16x4xbf16, #tpu.memory_space<vmem>>, %arg4: memref<1x1x1x4xf32, #tpu.memory_space<vmem>>, %arg5: memref<1x1x1x4xf32, #tpu.memory_space<vmem>>, %arg6: memref<1x18x18x4xf32, #tpu.memory_space<vmem>>) attributes {dimension_semantics = [#tpu.dimension_semantics<parallel>], iteration_bounds = array<i64: 2>, scalar_prefetch = 0 : i64, scratch_operands = 1 : i64, tpu.core_type = #tpu.core_type<tc>, window_params = [{transform_indices = @transform_0, window_bounds = array<i64: 1, 16, 16, 4>}, {pipeline_mode = #tpu.pipeline_mode<synchronous>, transform_indices = @transform_1, window_bounds = array<i64: 9, 4, 4>}, {transform_indices = @transform_2, window_bounds = array<i64: 1, 16, 16, 4>}, {transform_indices = @transform_3, window_bounds = array<i64: 1, 1, 1, 4>}, {transform_indices = @transform_4, window_bounds = array<i64: 1, 1, 1, 4>}]} {
    %c0 = arith.constant 0 : index
    %c0_0 = arith.constant 0 : index
    %c0_1 = arith.constant 0 : index
    %c0_2 = arith.constant 0 : index
    %0 = vector.load %arg1[%c0, %c0_0, %c0_1, %c0_2] : memref<1x16x16x4xf32, #tpu.memory_space<vmem>>, vector<1x16x16x4xf32>
    %cst = arith.constant 0.000000e+00 : f32
    %1 = vector.broadcast %cst : f32 to vector<1x18x18x4xf32>
    %c0_3 = arith.constant 0 : index
    %c0_4 = arith.constant 0 : index
    %c0_5 = arith.constant 0 : index
    %c0_6 = arith.constant 0 : index
    %2 = vector.load %arg6[%c0_3, %c0_4, %c0_5, %c0_6] : memref<1x18x18x4xf32, #tpu.memory_space<vmem>>, vector<1x18x18x4xf32>
    tpu.vector_store %arg6[%c0_3, %c0_4, %c0_5, %c0_6], %1 {strides = array<i32>} : memref<1x18x18x4xf32, #tpu.memory_space<vmem>>, vector<1x18x18x4xf32>,
    %c0_7 = arith.constant 0 : index
    %c1 = arith.constant 1 : index
    %c1_8 = arith.constant 1 : index
    %c0_9 = arith.constant 0 : index
    %3 = vector.load %arg6[%c0_7, %c1, %c1_8, %c0_9] : memref<1x18x18x4xf32, #tpu.memory_space<vmem>>, vector<1x16x16x4xf32>
    tpu.vector_store %arg6[%c0_7, %c1, %c1_8, %c0_9], %0 {strides = array<i32>} : memref<1x18x18x4xf32, #tpu.memory_space<vmem>>, vector<1x16x16x4xf32>,
    %c0_10 = arith.constant 0 : index
    %c0_11 = arith.constant 0 : index
    %c0_12 = arith.constant 0 : index
    %c0_13 = arith.constant 0 : index
    %4 = vector.load %arg6[%c0_10, %c0_11, %c0_12, %c0_13] : memref<1x18x18x4xf32, #tpu.memory_space<vmem>>, vector<1x18x18x4xf32>
    %5 = arith.truncf %4 : vector<1x18x18x4xf32> to vector<1x18x18x4xbf16>
    %cst_14 = arith.constant 0.000000e+00 : f32
    %6 = vector.broadcast %cst_14 : f32 to vector<1x16x16x4xf32>
    %7 = vector.extract_strided_slice %5 {offsets = [0, 0, 0, 0], sizes = [1, 16, 16, 4], strides = [1, 1, 1, 1]} : vector<1x18x18x4xbf16> to vector<1x16x16x4xbf16>
    %c0_15 = arith.constant 0 : index
    %c0_16 = arith.constant 0 : index
    %c0_17 = arith.constant 0 : index
    %8 = vector.load %arg2[%c0_15, %c0_16, %c0_17] : memref<9x4x4xbf16, #tpu.memory_space<vmem>>, vector<1x4x4xbf16>
    %9 = vector.shape_cast %8 : vector<1x4x4xbf16> to vector<4x4xbf16>
    "tpu.trace_start"() <{level = 10 : i32, message = "bhwc,co->bhwo"}> : () -> ()
    %cst_18 = arith.constant dense<0.000000e+00> : vector<1x16x16x4xf32>
    %10 = tpu.matmul %7, %9, %cst_18 {dimension_numbers = #tpu.dot_dimension_numbers<[3], [0], [0, 1, 2], [1], [0, 0, 0, 1, 0, 2, 1, 1], [], []>} : vector<1x16x16x4xbf16>, vector<4x4xbf16>, vector<1x16x16x4xf32> -> vector<1x16x16x4xf32>
    "tpu.trace_stop"() : () -> ()
    %11 = arith.addf %6, %10 : vector<1x16x16x4xf32>
    %12 = vector.extract_strided_slice %5 {offsets = [0, 0, 1, 0], sizes = [1, 16, 16, 4], strides = [1, 1, 1, 1]} : vector<1x18x18x4xbf16> to vector<1x16x16x4xbf16>
    %c1_19 = arith.constant 1 : index
    %c0_20 = arith.constant 0 : index
    %c0_21 = arith.constant 0 : index
    %13 = vector.load %arg2[%c1_19, %c0_20, %c0_21] : memref<9x4x4xbf16, #tpu.memory_space<vmem>>, vector<1x4x4xbf16>
    %14 = vector.shape_cast %13 : vector<1x4x4xbf16> to vector<4x4xbf16>
    "tpu.trace_start"() <{level = 10 : i32, message = "bhwc,co->bhwo"}> : () -> ()
    %cst_22 = arith.constant dense<0.000000e+00> : vector<1x16x16x4xf32>
    %15 = tpu.matmul %12, %14, %cst_22 {dimension_numbers = #tpu.dot_dimension_numbers<[3], [0], [0, 1, 2], [1], [0, 0, 0, 1, 0, 2, 1, 1], [], []>} : vector<1x16x16x4xbf16>, vector<4x4xbf16>, vector<1x16x16x4xf32> -> vector<1x16x16x4xf32>
    "tpu.trace_stop"() : () -> ()
    %16 = arith.addf %11, %15 : vector<1x16x16x4xf32>
    %17 = vector.extract_strided_slice %5 {offsets = [0, 0, 2, 0], sizes = [1, 16, 16, 4], strides = [1, 1, 1, 1]} : vector<1x18x18x4xbf16> to vector<1x16x16x4xbf16>
    %c2 = arith.constant 2 : index
    %c0_23 = arith.constant 0 : index
    %c0_24 = arith.constant 0 : index
    %18 = vector.load %arg2[%c2, %c0_23, %c0_24] : memref<9x4x4xbf16, #tpu.memory_space<vmem>>, vector<1x4x4xbf16>
    %19 = vector.shape_cast %18 : vector<1x4x4xbf16> to vector<4x4xbf16>
    "tpu.trace_start"() <{level = 10 : i32, message = "bhwc,co->bhwo"}> : () -> ()
    %cst_25 = arith.constant dense<0.000000e+00> : vector<1x16x16x4xf32>
    %20 = tpu.matmul %17, %19, %cst_25 {dimension_numbers = #tpu.dot_dimension_numbers<[3], [0], [0, 1, 2], [1], [0, 0, 0, 1, 0, 2, 1, 1], [], []>} : vector<1x16x16x4xbf16>, vector<4x4xbf16>, vector<1x16x16x4xf32> -> vector<1x16x16x4xf32>
    "tpu.trace_stop"() : () -> ()
    %21 = arith.addf %16, %20 : vector<1x16x16x4xf32>
    %22 = vector.extract_strided_slice %5 {offsets = [0, 1, 0, 0], sizes = [1, 16, 16, 4], strides = [1, 1, 1, 1]} : vector<1x18x18x4xbf16> to vector<1x16x16x4xbf16>
    %c3 = arith.constant 3 : index
    %c0_26 = arith.constant 0 : index
    %c0_27 = arith.constant 0 : index
    %23 = vector.load %arg2[%c3, %c0_26, %c0_27] : memref<9x4x4xbf16, #tpu.memory_space<vmem>>, vector<1x4x4xbf16>
    %24 = vector.shape_cast %23 : vector<1x4x4xbf16> to vector<4x4xbf16>
    "tpu.trace_start"() <{level = 10 : i32, message = "bhwc,co->bhwo"}> : () -> ()
    %cst_28 = arith.constant dense<0.000000e+00> : vector<1x16x16x4xf32>
    %25 = tpu.matmul %22, %24, %cst_28 {dimension_numbers = #tpu.dot_dimension_numbers<[3], [0], [0, 1, 2], [1], [0, 0, 0, 1, 0, 2, 1, 1], [], []>} : vector<1x16x16x4xbf16>, vector<4x4xbf16>, vector<1x16x16x4xf32> -> vector<1x16x16x4xf32>
    "tpu.trace_stop"() : () -> ()
    %26 = arith.addf %21, %25 : vector<1x16x16x4xf32>
    %27 = vector.extract_strided_slice %5 {offsets = [0, 1, 1, 0], sizes = [1, 16, 16, 4], strides = [1, 1, 1, 1]} : vector<1x18x18x4xbf16> to vector<1x16x16x4xbf16>
    %c4 = arith.constant 4 : index
    %c0_29 = arith.constant 0 : index
    %c0_30 = arith.constant 0 : index
    %28 = vector.load %arg2[%c4, %c0_29, %c0_30] : memref<9x4x4xbf16, #tpu.memory_space<vmem>>, vector<1x4x4xbf16>
    %29 = vector.shape_cast %28 : vector<1x4x4xbf16> to vector<4x4xbf16>
    "tpu.trace_start"() <{level = 10 : i32, message = "bhwc,co->bhwo"}> : () -> ()
    %cst_31 = arith.constant dense<0.000000e+00> : vector<1x16x16x4xf32>
    %30 = tpu.matmul %27, %29, %cst_31 {dimension_numbers = #tpu.dot_dimension_numbers<[3], [0], [0, 1, 2], [1], [0, 0, 0, 1, 0, 2, 1, 1], [], []>} : vector<1x16x16x4xbf16>, vector<4x4xbf16>, vector<1x16x16x4xf32> -> vector<1x16x16x4xf32>
    "tpu.trace_stop"() : () -> ()
    %31 = arith.addf %26, %30 : vector<1x16x16x4xf32>
    %32 = vector.extract_strided_slice %5 {offsets = [0, 1, 2, 0], sizes = [1, 16, 16, 4], strides = [1, 1, 1, 1]} : vector<1x18x18x4xbf16> to vector<1x16x16x4xbf16>
    %c5 = arith.constant 5 : index
    %c0_32 = arith.constant 0 : index
    %c0_33 = arith.constant 0 : index
    %33 = vector.load %arg2[%c5, %c0_32, %c0_33] : memref<9x4x4xbf16, #tpu.memory_space<vmem>>, vector<1x4x4xbf16>
    %34 = vector.shape_cast %33 : vector<1x4x4xbf16> to vector<4x4xbf16>
    "tpu.trace_start"() <{level = 10 : i32, message = "bhwc,co->bhwo"}> : () -> ()
    %cst_34 = arith.constant dense<0.000000e+00> : vector<1x16x16x4xf32>
    %35 = tpu.matmul %32, %34, %cst_34 {dimension_numbers = #tpu.dot_dimension_numbers<[3], [0], [0, 1, 2], [1], [0, 0, 0, 1, 0, 2, 1, 1], [], []>} : vector<1x16x16x4xbf16>, vector<4x4xbf16>, vector<1x16x16x4xf32> -> vector<1x16x16x4xf32>
    "tpu.trace_stop"() : () -> ()
    %36 = arith.addf %31, %35 : vector<1x16x16x4xf32>
    %37 = vector.extract_strided_slice %5 {offsets = [0, 2, 0, 0], sizes = [1, 16, 16, 4], strides = [1, 1, 1, 1]} : vector<1x18x18x4xbf16> to vector<1x16x16x4xbf16>
    %c6 = arith.constant 6 : index
    %c0_35 = arith.constant 0 : index
    %c0_36 = arith.constant 0 : index
    %38 = vector.load %arg2[%c6, %c0_35, %c0_36] : memref<9x4x4xbf16, #tpu.memory_space<vmem>>, vector<1x4x4xbf16>
    %39 = vector.shape_cast %38 : vector<1x4x4xbf16> to vector<4x4xbf16>
    "tpu.trace_start"() <{level = 10 : i32, message = "bhwc,co->bhwo"}> : () -> ()
    %cst_37 = arith.constant dense<0.000000e+00> : vector<1x16x16x4xf32>
    %40 = tpu.matmul %37, %39, %cst_37 {dimension_numbers = #tpu.dot_dimension_numbers<[3], [0], [0, 1, 2], [1], [0, 0, 0, 1, 0, 2, 1, 1], [], []>} : vector<1x16x16x4xbf16>, vector<4x4xbf16>, vector<1x16x16x4xf32> -> vector<1x16x16x4xf32>
    "tpu.trace_stop"() : () -> ()
    %41 = arith.addf %36, %40 : vector<1x16x16x4xf32>
    %42 = vector.extract_strided_slice %5 {offsets = [0, 2, 1, 0], sizes = [1, 16, 16, 4], strides = [1, 1, 1, 1]} : vector<1x18x18x4xbf16> to vector<1x16x16x4xbf16>
    %c7 = arith.constant 7 : index
    %c0_38 = arith.constant 0 : index
    %c0_39 = arith.constant 0 : index
    %43 = vector.load %arg2[%c7, %c0_38, %c0_39] : memref<9x4x4xbf16, #tpu.memory_space<vmem>>, vector<1x4x4xbf16>
    %44 = vector.shape_cast %43 : vector<1x4x4xbf16> to vector<4x4xbf16>
    "tpu.trace_start"() <{level = 10 : i32, message = "bhwc,co->bhwo"}> : () -> ()
    %cst_40 = arith.constant dense<0.000000e+00> : vector<1x16x16x4xf32>
    %45 = tpu.matmul %42, %44, %cst_40 {dimension_numbers = #tpu.dot_dimension_numbers<[3], [0], [0, 1, 2], [1], [0, 0, 0, 1, 0, 2, 1, 1], [], []>} : vector<1x16x16x4xbf16>, vector<4x4xbf16>, vector<1x16x16x4xf32> -> vector<1x16x16x4xf32>
    "tpu.trace_stop"() : () -> ()
    %46 = arith.addf %41, %45 : vector<1x16x16x4xf32>
    %47 = vector.extract_strided_slice %5 {offsets = [0, 2, 2, 0], sizes = [1, 16, 16, 4], strides = [1, 1, 1, 1]} : vector<1x18x18x4xbf16> to vector<1x16x16x4xbf16>
    %c8 = arith.constant 8 : index
    %c0_41 = arith.constant 0 : index
    %c0_42 = arith.constant 0 : index
    %48 = vector.load %arg2[%c8, %c0_41, %c0_42] : memref<9x4x4xbf16, #tpu.memory_space<vmem>>, vector<1x4x4xbf16>
    %49 = vector.shape_cast %48 : vector<1x4x4xbf16> to vector<4x4xbf16>
    "tpu.trace_start"() <{level = 10 : i32, message = "bhwc,co->bhwo"}> : () -> ()
    %cst_43 = arith.constant dense<0.000000e+00> : vector<1x16x16x4xf32>
    %50 = tpu.matmul %47, %49, %cst_43 {dimension_numbers = #tpu.dot_dimension_numbers<[3], [0], [0, 1, 2], [1], [0, 0, 0, 1, 0, 2, 1, 1], [], []>} : vector<1x16x16x4xbf16>, vector<4x4xbf16>, vector<1x16x16x4xf32> -> vector<1x16x16x4xf32>
    "tpu.trace_stop"() : () -> ()
    %51 = arith.addf %46, %50 : vector<1x16x16x4xf32>
    %cst_44 = arith.constant dense<0.000000e+00> : vector<4xf32>
    %52 = vector.multi_reduction <add>, %51, %cst_44 [0, 1, 2] : vector<1x16x16x4xf32> to vector<4xf32>
    %53 = vector.shape_cast %52 : vector<4xf32> to vector<1x1x1x4xf32>
    %c0_45 = arith.constant 0 : index
    %c0_46 = arith.constant 0 : index
    %c0_47 = arith.constant 0 : index
    %c0_48 = arith.constant 0 : index
    %54 = vector.load %arg4[%c0_45, %c0_46, %c0_47, %c0_48] : memref<1x1x1x4xf32, #tpu.memory_space<vmem>>, vector<1x1x1x4xf32>
    tpu.vector_store %arg4[%c0_45, %c0_46, %c0_47, %c0_48], %53 {strides = array<i32>} : memref<1x1x1x4xf32, #tpu.memory_space<vmem>>, vector<1x1x1x4xf32>,
    %55 = arith.mulf %51, %51 : vector<1x16x16x4xf32>
    %cst_49 = arith.constant dense<0.000000e+00> : vector<4xf32>
    %56 = vector.multi_reduction <add>, %55, %cst_49 [0, 1, 2] : vector<1x16x16x4xf32> to vector<4xf32>
    %57 = vector.shape_cast %56 : vector<4xf32> to vector<1x1x1x4xf32>
    %c0_50 = arith.constant 0 : index
    %c0_51 = arith.constant 0 : index
    %c0_52 = arith.constant 0 : index
    %c0_53 = arith.constant 0 : index
    %58 = vector.load %arg5[%c0_50, %c0_51, %c0_52, %c0_53] : memref<1x1x1x4xf32, #tpu.memory_space<vmem>>, vector<1x1x1x4xf32>
    tpu.vector_store %arg5[%c0_50, %c0_51, %c0_52, %c0_53], %57 {strides = array<i32>} : memref<1x1x1x4xf32, #tpu.memory_space<vmem>>, vector<1x1x1x4xf32>,
    %59 = arith.truncf %51 : vector<1x16x16x4xf32> to vector<1x16x16x4xbf16>
    %c0_54 = arith.constant 0 : index
    %c0_55 = arith.constant 0 : index
    %c0_56 = arith.constant 0 : index
    %c0_57 = arith.constant 0 : index
    %60 = vector.load %arg3[%c0_54, %c0_55, %c0_56, %c0_57] : memref<1x16x16x4xbf16, #tpu.memory_space<vmem>>, vector<1x16x16x4xbf16>
    tpu.vector_store %arg3[%c0_54, %c0_55, %c0_56, %c0_57], %59 {strides = array<i32>} : memref<1x16x16x4xbf16, #tpu.memory_space<vmem>>, vector<1x16x16x4xbf16>,
    return
  }
  func.func @transform_0(%arg0: i32) -> (i32, i32, i32, i32) {
    %c0_i32 = arith.constant 0 : i32
    %c0_i32_0 = arith.constant 0 : i32
    %c0_i32_1 = arith.constant 0 : i32
    %c0_i32_2 = arith.constant 0 : i32
    return %arg0, %c0_i32, %c0_i32_0, %c0_i32_1 : i32, i32, i32, i32
  }
  func.func @transform_1(%arg0: i32) -> (i32, i32, i32) {
    %c0_i32 = arith.constant 0 : i32
    %c0_i32_0 = arith.constant 0 : i32
    %c0_i32_1 = arith.constant 0 : i32
    %c0_i32_2 = arith.constant 0 : i32
    return %c0_i32, %c0_i32_0, %c0_i32_1 : i32, i32, i32
  }
  func.func @transform_2(%arg0: i32) -> (i32, i32, i32, i32) {
    %c0_i32 = arith.constant 0 : i32
    %c0_i32_0 = arith.constant 0 : i32
    %c0_i32_1 = arith.constant 0 : i32
    %c0_i32_2 = arith.constant 0 : i32
    return %arg0, %c0_i32, %c0_i32_0, %c0_i32_1 : i32, i32, i32, i32
  }
  func.func @transform_3(%arg0: i32) -> (i32, i32, i32, i32) {
    %c0_i32 = arith.constant 0 : i32
    %c0_i32_0 = arith.constant 0 : i32
    %c0_i32_1 = arith.constant 0 : i32
    %c0_i32_2 = arith.constant 0 : i32
    return %arg0, %c0_i32, %c0_i32_0, %c0_i32_1 : i32, i32, i32, i32
  }
  func.func @transform_4(%arg0: i32) -> (i32, i32, i32, i32) {
    %c0_i32 = arith.constant 0 : i32
    %c0_i32_0 = arith.constant 0 : i32
    %c0_i32_1 = arith.constant 0 : i32
    %c0_i32_2 = arith.constant 0 : i32
    return %arg0, %c0_i32, %c0_i32_0, %c0_i32_1 : i32, i32, i32, i32
  }
}

module attributes {stable_mosaic.version = 11 : i64} {
  func.func @_bn_add_relu_kernel(%arg0: i32, %arg1: memref<1x16x16x4xbf16, #tpu.memory_space<vmem>>, %arg2: memref<1x16x16x4xf32, #tpu.memory_space<vmem>>, %arg3: memref<1x4xf32, #tpu.memory_space<vmem>>, %arg4: memref<1x4xf32, #tpu.memory_space<vmem>>, %arg5: memref<1x16x16x4xf32, #tpu.memory_space<vmem>>) attributes {dimension_semantics = [#tpu.dimension_semantics<parallel>], iteration_bounds = array<i64: 2>, scalar_prefetch = 0 : i64, scratch_operands = 0 : i64, tpu.core_type = #tpu.core_type<tc>, window_params = [{transform_indices = @transform_0, window_bounds = array<i64: 1, 16, 16, 4>}, {transform_indices = @transform_1, window_bounds = array<i64: 1, 16, 16, 4>}, {pipeline_mode = #tpu.pipeline_mode<synchronous>, transform_indices = @transform_2, window_bounds = array<i64: 1, 4>}, {pipeline_mode = #tpu.pipeline_mode<synchronous>, transform_indices = @transform_3, window_bounds = array<i64: 1, 4>}, {transform_indices = @transform_4, window_bounds = array<i64: 1, 16, 16, 4>}]} {
    %c0 = arith.constant 0 : index
    %c0_0 = arith.constant 0 : index
    %c0_1 = arith.constant 0 : index
    %c0_2 = arith.constant 0 : index
    %0 = vector.load %arg1[%c0, %c0_0, %c0_1, %c0_2] : memref<1x16x16x4xbf16, #tpu.memory_space<vmem>>, vector<1x16x16x4xbf16>
    %1 = arith.extf %0 : vector<1x16x16x4xbf16> to vector<1x16x16x4xf32>
    %c0_3 = arith.constant 0 : index
    %c0_4 = arith.constant 0 : index
    %2 = vector.load %arg3[%c0_3, %c0_4] : memref<1x4xf32, #tpu.memory_space<vmem>>, vector<1x4xf32>
    %3 = vector.shape_cast %2 : vector<1x4xf32> to vector<1x1x1x4xf32>
    %4 = vector.broadcast %3 : vector<1x1x1x4xf32> to vector<1x16x16x4xf32>
    %5 = arith.mulf %1, %4 : vector<1x16x16x4xf32>
    %c0_5 = arith.constant 0 : index
    %c0_6 = arith.constant 0 : index
    %6 = vector.load %arg4[%c0_5, %c0_6] : memref<1x4xf32, #tpu.memory_space<vmem>>, vector<1x4xf32>
    %7 = vector.shape_cast %6 : vector<1x4xf32> to vector<1x1x1x4xf32>
    %8 = vector.broadcast %7 : vector<1x1x1x4xf32> to vector<1x16x16x4xf32>
    %9 = arith.addf %5, %8 : vector<1x16x16x4xf32>
    %c0_7 = arith.constant 0 : index
    %c0_8 = arith.constant 0 : index
    %c0_9 = arith.constant 0 : index
    %c0_10 = arith.constant 0 : index
    %10 = vector.load %arg2[%c0_7, %c0_8, %c0_9, %c0_10] : memref<1x16x16x4xf32, #tpu.memory_space<vmem>>, vector<1x16x16x4xf32>
    %11 = arith.addf %9, %10 : vector<1x16x16x4xf32>
    %cst = arith.constant 0.000000e+00 : f32
    %12 = vector.broadcast %cst : f32 to vector<1x16x16x4xf32>
    %13 = arith.maximumf %11, %12 : vector<1x16x16x4xf32>
    %c0_11 = arith.constant 0 : index
    %c0_12 = arith.constant 0 : index
    %c0_13 = arith.constant 0 : index
    %c0_14 = arith.constant 0 : index
    %14 = vector.load %arg5[%c0_11, %c0_12, %c0_13, %c0_14] : memref<1x16x16x4xf32, #tpu.memory_space<vmem>>, vector<1x16x16x4xf32>
    tpu.vector_store %arg5[%c0_11, %c0_12, %c0_13, %c0_14], %13 {strides = array<i32>} : memref<1x16x16x4xf32, #tpu.memory_space<vmem>>, vector<1x16x16x4xf32>,
    return
  }
  func.func @transform_0(%arg0: i32) -> (i32, i32, i32, i32) {
    %c0_i32 = arith.constant 0 : i32
    %c0_i32_0 = arith.constant 0 : i32
    %c0_i32_1 = arith.constant 0 : i32
    %c0_i32_2 = arith.constant 0 : i32
    return %arg0, %c0_i32, %c0_i32_0, %c0_i32_1 : i32, i32, i32, i32
  }
  func.func @transform_1(%arg0: i32) -> (i32, i32, i32, i32) {
    %c0_i32 = arith.constant 0 : i32
    %c0_i32_0 = arith.constant 0 : i32
    %c0_i32_1 = arith.constant 0 : i32
    %c0_i32_2 = arith.constant 0 : i32
    return %arg0, %c0_i32, %c0_i32_0, %c0_i32_1 : i32, i32, i32, i32
  }
  func.func @transform_2(%arg0: i32) -> (i32, i32) {
    %c0_i32 = arith.constant 0 : i32
    %c0_i32_0 = arith.constant 0 : i32
    %c0_i32_1 = arith.constant 0 : i32
    return %c0_i32, %c0_i32_0 : i32, i32
  }
  func.func @transform_3(%arg0: i32) -> (i32, i32) {
    %c0_i32 = arith.constant 0 : i32
    %c0_i32_0 = arith.constant 0 : i32
    %c0_i32_1 = arith.constant 0 : i32
    return %c0_i32, %c0_i32_0 : i32, i32
  }
  func.func @transform_4(%arg0: i32) -> (i32, i32, i32, i32) {
    %c0_i32 = arith.constant 0 : i32
    %c0_i32_0 = arith.constant 0 : i32
    %c0_i32_1 = arith.constant 0 : i32
    %c0_i32_2 = arith.constant 0 : i32
    return %arg0, %c0_i32, %c0_i32_0, %c0_i32_1 : i32, i32, i32, i32
  }
}

module attributes {stable_mosaic.version = 11 : i64} {
  func.func @_bn_relu_conv_kernel(%arg0: i32, %arg1: memref<1x16x16x4xbf16, #tpu.memory_space<vmem>>, %arg2: memref<1x4xf32, #tpu.memory_space<vmem>>, %arg3: memref<1x4xf32, #tpu.memory_space<vmem>>, %arg4: memref<9x4x4xbf16, #tpu.memory_space<vmem>>, %arg5: memref<1x16x16x4xbf16, #tpu.memory_space<vmem>>, %arg6: memref<1x1x1x4xf32, #tpu.memory_space<vmem>>, %arg7: memref<1x1x1x4xf32, #tpu.memory_space<vmem>>, %arg8: memref<1x18x18x4xf32, #tpu.memory_space<vmem>>) attributes {dimension_semantics = [#tpu.dimension_semantics<parallel>], iteration_bounds = array<i64: 2>, scalar_prefetch = 0 : i64, scratch_operands = 1 : i64, tpu.core_type = #tpu.core_type<tc>, window_params = [{transform_indices = @transform_0, window_bounds = array<i64: 1, 16, 16, 4>}, {pipeline_mode = #tpu.pipeline_mode<synchronous>, transform_indices = @transform_1, window_bounds = array<i64: 1, 4>}, {pipeline_mode = #tpu.pipeline_mode<synchronous>, transform_indices = @transform_2, window_bounds = array<i64: 1, 4>}, {pipeline_mode = #tpu.pipeline_mode<synchronous>, transform_indices = @transform_3, window_bounds = array<i64: 9, 4, 4>}, {transform_indices = @transform_4, window_bounds = array<i64: 1, 16, 16, 4>}, {transform_indices = @transform_5, window_bounds = array<i64: 1, 1, 1, 4>}, {transform_indices = @transform_6, window_bounds = array<i64: 1, 1, 1, 4>}]} {
    %c0 = arith.constant 0 : index
    %c0_0 = arith.constant 0 : index
    %c0_1 = arith.constant 0 : index
    %c0_2 = arith.constant 0 : index
    %0 = vector.load %arg1[%c0, %c0_0, %c0_1, %c0_2] : memref<1x16x16x4xbf16, #tpu.memory_space<vmem>>, vector<1x16x16x4xbf16>
    %1 = arith.extf %0 : vector<1x16x16x4xbf16> to vector<1x16x16x4xf32>
    %c0_3 = arith.constant 0 : index
    %c0_4 = arith.constant 0 : index
    %2 = vector.load %arg2[%c0_3, %c0_4] : memref<1x4xf32, #tpu.memory_space<vmem>>, vector<1x4xf32>
    %3 = vector.shape_cast %2 : vector<1x4xf32> to vector<1x1x1x4xf32>
    %4 = vector.broadcast %3 : vector<1x1x1x4xf32> to vector<1x16x16x4xf32>
    %5 = arith.mulf %1, %4 : vector<1x16x16x4xf32>
    %c0_5 = arith.constant 0 : index
    %c0_6 = arith.constant 0 : index
    %6 = vector.load %arg3[%c0_5, %c0_6] : memref<1x4xf32, #tpu.memory_space<vmem>>, vector<1x4xf32>
    %7 = vector.shape_cast %6 : vector<1x4xf32> to vector<1x1x1x4xf32>
    %8 = vector.broadcast %7 : vector<1x1x1x4xf32> to vector<1x16x16x4xf32>
    %9 = arith.addf %5, %8 : vector<1x16x16x4xf32>
    %cst = arith.constant 0.000000e+00 : f32
    %10 = vector.broadcast %cst : f32 to vector<1x16x16x4xf32>
    %11 = arith.maximumf %9, %10 : vector<1x16x16x4xf32>
    %cst_7 = arith.constant 0.000000e+00 : f32
    %12 = vector.broadcast %cst_7 : f32 to vector<1x18x18x4xf32>
    %c0_8 = arith.constant 0 : index
    %c0_9 = arith.constant 0 : index
    %c0_10 = arith.constant 0 : index
    %c0_11 = arith.constant 0 : index
    %13 = vector.load %arg8[%c0_8, %c0_9, %c0_10, %c0_11] : memref<1x18x18x4xf32, #tpu.memory_space<vmem>>, vector<1x18x18x4xf32>
    tpu.vector_store %arg8[%c0_8, %c0_9, %c0_10, %c0_11], %12 {strides = array<i32>} : memref<1x18x18x4xf32, #tpu.memory_space<vmem>>, vector<1x18x18x4xf32>,
    %c0_12 = arith.constant 0 : index
    %c1 = arith.constant 1 : index
    %c1_13 = arith.constant 1 : index
    %c0_14 = arith.constant 0 : index
    %14 = vector.load %arg8[%c0_12, %c1, %c1_13, %c0_14] : memref<1x18x18x4xf32, #tpu.memory_space<vmem>>, vector<1x16x16x4xf32>
    tpu.vector_store %arg8[%c0_12, %c1, %c1_13, %c0_14], %11 {strides = array<i32>} : memref<1x18x18x4xf32, #tpu.memory_space<vmem>>, vector<1x16x16x4xf32>,
    %c0_15 = arith.constant 0 : index
    %c0_16 = arith.constant 0 : index
    %c0_17 = arith.constant 0 : index
    %c0_18 = arith.constant 0 : index
    %15 = vector.load %arg8[%c0_15, %c0_16, %c0_17, %c0_18] : memref<1x18x18x4xf32, #tpu.memory_space<vmem>>, vector<1x18x18x4xf32>
    %16 = arith.truncf %15 : vector<1x18x18x4xf32> to vector<1x18x18x4xbf16>
    %cst_19 = arith.constant 0.000000e+00 : f32
    %17 = vector.broadcast %cst_19 : f32 to vector<1x16x16x4xf32>
    %18 = vector.extract_strided_slice %16 {offsets = [0, 0, 0, 0], sizes = [1, 16, 16, 4], strides = [1, 1, 1, 1]} : vector<1x18x18x4xbf16> to vector<1x16x16x4xbf16>
    %c0_20 = arith.constant 0 : index
    %c0_21 = arith.constant 0 : index
    %c0_22 = arith.constant 0 : index
    %19 = vector.load %arg4[%c0_20, %c0_21, %c0_22] : memref<9x4x4xbf16, #tpu.memory_space<vmem>>, vector<1x4x4xbf16>
    %20 = vector.shape_cast %19 : vector<1x4x4xbf16> to vector<4x4xbf16>
    "tpu.trace_start"() <{level = 10 : i32, message = "bhwc,co->bhwo"}> : () -> ()
    %cst_23 = arith.constant dense<0.000000e+00> : vector<1x16x16x4xf32>
    %21 = tpu.matmul %18, %20, %cst_23 {dimension_numbers = #tpu.dot_dimension_numbers<[3], [0], [0, 1, 2], [1], [0, 0, 0, 1, 0, 2, 1, 1], [], []>} : vector<1x16x16x4xbf16>, vector<4x4xbf16>, vector<1x16x16x4xf32> -> vector<1x16x16x4xf32>
    "tpu.trace_stop"() : () -> ()
    %22 = arith.addf %17, %21 : vector<1x16x16x4xf32>
    %23 = vector.extract_strided_slice %16 {offsets = [0, 0, 1, 0], sizes = [1, 16, 16, 4], strides = [1, 1, 1, 1]} : vector<1x18x18x4xbf16> to vector<1x16x16x4xbf16>
    %c1_24 = arith.constant 1 : index
    %c0_25 = arith.constant 0 : index
    %c0_26 = arith.constant 0 : index
    %24 = vector.load %arg4[%c1_24, %c0_25, %c0_26] : memref<9x4x4xbf16, #tpu.memory_space<vmem>>, vector<1x4x4xbf16>
    %25 = vector.shape_cast %24 : vector<1x4x4xbf16> to vector<4x4xbf16>
    "tpu.trace_start"() <{level = 10 : i32, message = "bhwc,co->bhwo"}> : () -> ()
    %cst_27 = arith.constant dense<0.000000e+00> : vector<1x16x16x4xf32>
    %26 = tpu.matmul %23, %25, %cst_27 {dimension_numbers = #tpu.dot_dimension_numbers<[3], [0], [0, 1, 2], [1], [0, 0, 0, 1, 0, 2, 1, 1], [], []>} : vector<1x16x16x4xbf16>, vector<4x4xbf16>, vector<1x16x16x4xf32> -> vector<1x16x16x4xf32>
    "tpu.trace_stop"() : () -> ()
    %27 = arith.addf %22, %26 : vector<1x16x16x4xf32>
    %28 = vector.extract_strided_slice %16 {offsets = [0, 0, 2, 0], sizes = [1, 16, 16, 4], strides = [1, 1, 1, 1]} : vector<1x18x18x4xbf16> to vector<1x16x16x4xbf16>
    %c2 = arith.constant 2 : index
    %c0_28 = arith.constant 0 : index
    %c0_29 = arith.constant 0 : index
    %29 = vector.load %arg4[%c2, %c0_28, %c0_29] : memref<9x4x4xbf16, #tpu.memory_space<vmem>>, vector<1x4x4xbf16>
    %30 = vector.shape_cast %29 : vector<1x4x4xbf16> to vector<4x4xbf16>
    "tpu.trace_start"() <{level = 10 : i32, message = "bhwc,co->bhwo"}> : () -> ()
    %cst_30 = arith.constant dense<0.000000e+00> : vector<1x16x16x4xf32>
    %31 = tpu.matmul %28, %30, %cst_30 {dimension_numbers = #tpu.dot_dimension_numbers<[3], [0], [0, 1, 2], [1], [0, 0, 0, 1, 0, 2, 1, 1], [], []>} : vector<1x16x16x4xbf16>, vector<4x4xbf16>, vector<1x16x16x4xf32> -> vector<1x16x16x4xf32>
    "tpu.trace_stop"() : () -> ()
    %32 = arith.addf %27, %31 : vector<1x16x16x4xf32>
    %33 = vector.extract_strided_slice %16 {offsets = [0, 1, 0, 0], sizes = [1, 16, 16, 4], strides = [1, 1, 1, 1]} : vector<1x18x18x4xbf16> to vector<1x16x16x4xbf16>
    %c3 = arith.constant 3 : index
    %c0_31 = arith.constant 0 : index
    %c0_32 = arith.constant 0 : index
    %34 = vector.load %arg4[%c3, %c0_31, %c0_32] : memref<9x4x4xbf16, #tpu.memory_space<vmem>>, vector<1x4x4xbf16>
    %35 = vector.shape_cast %34 : vector<1x4x4xbf16> to vector<4x4xbf16>
    "tpu.trace_start"() <{level = 10 : i32, message = "bhwc,co->bhwo"}> : () -> ()
    %cst_33 = arith.constant dense<0.000000e+00> : vector<1x16x16x4xf32>
    %36 = tpu.matmul %33, %35, %cst_33 {dimension_numbers = #tpu.dot_dimension_numbers<[3], [0], [0, 1, 2], [1], [0, 0, 0, 1, 0, 2, 1, 1], [], []>} : vector<1x16x16x4xbf16>, vector<4x4xbf16>, vector<1x16x16x4xf32> -> vector<1x16x16x4xf32>
    "tpu.trace_stop"() : () -> ()
    %37 = arith.addf %32, %36 : vector<1x16x16x4xf32>
    %38 = vector.extract_strided_slice %16 {offsets = [0, 1, 1, 0], sizes = [1, 16, 16, 4], strides = [1, 1, 1, 1]} : vector<1x18x18x4xbf16> to vector<1x16x16x4xbf16>
    %c4 = arith.constant 4 : index
    %c0_34 = arith.constant 0 : index
    %c0_35 = arith.constant 0 : index
    %39 = vector.load %arg4[%c4, %c0_34, %c0_35] : memref<9x4x4xbf16, #tpu.memory_space<vmem>>, vector<1x4x4xbf16>
    %40 = vector.shape_cast %39 : vector<1x4x4xbf16> to vector<4x4xbf16>
    "tpu.trace_start"() <{level = 10 : i32, message = "bhwc,co->bhwo"}> : () -> ()
    %cst_36 = arith.constant dense<0.000000e+00> : vector<1x16x16x4xf32>
    %41 = tpu.matmul %38, %40, %cst_36 {dimension_numbers = #tpu.dot_dimension_numbers<[3], [0], [0, 1, 2], [1], [0, 0, 0, 1, 0, 2, 1, 1], [], []>} : vector<1x16x16x4xbf16>, vector<4x4xbf16>, vector<1x16x16x4xf32> -> vector<1x16x16x4xf32>
    "tpu.trace_stop"() : () -> ()
    %42 = arith.addf %37, %41 : vector<1x16x16x4xf32>
    %43 = vector.extract_strided_slice %16 {offsets = [0, 1, 2, 0], sizes = [1, 16, 16, 4], strides = [1, 1, 1, 1]} : vector<1x18x18x4xbf16> to vector<1x16x16x4xbf16>
    %c5 = arith.constant 5 : index
    %c0_37 = arith.constant 0 : index
    %c0_38 = arith.constant 0 : index
    %44 = vector.load %arg4[%c5, %c0_37, %c0_38] : memref<9x4x4xbf16, #tpu.memory_space<vmem>>, vector<1x4x4xbf16>
    %45 = vector.shape_cast %44 : vector<1x4x4xbf16> to vector<4x4xbf16>
    "tpu.trace_start"() <{level = 10 : i32, message = "bhwc,co->bhwo"}> : () -> ()
    %cst_39 = arith.constant dense<0.000000e+00> : vector<1x16x16x4xf32>
    %46 = tpu.matmul %43, %45, %cst_39 {dimension_numbers = #tpu.dot_dimension_numbers<[3], [0], [0, 1, 2], [1], [0, 0, 0, 1, 0, 2, 1, 1], [], []>} : vector<1x16x16x4xbf16>, vector<4x4xbf16>, vector<1x16x16x4xf32> -> vector<1x16x16x4xf32>
    "tpu.trace_stop"() : () -> ()
    %47 = arith.addf %42, %46 : vector<1x16x16x4xf32>
    %48 = vector.extract_strided_slice %16 {offsets = [0, 2, 0, 0], sizes = [1, 16, 16, 4], strides = [1, 1, 1, 1]} : vector<1x18x18x4xbf16> to vector<1x16x16x4xbf16>
    %c6 = arith.constant 6 : index
    %c0_40 = arith.constant 0 : index
    %c0_41 = arith.constant 0 : index
    %49 = vector.load %arg4[%c6, %c0_40, %c0_41] : memref<9x4x4xbf16, #tpu.memory_space<vmem>>, vector<1x4x4xbf16>
    %50 = vector.shape_cast %49 : vector<1x4x4xbf16> to vector<4x4xbf16>
    "tpu.trace_start"() <{level = 10 : i32, message = "bhwc,co->bhwo"}> : () -> ()
    %cst_42 = arith.constant dense<0.000000e+00> : vector<1x16x16x4xf32>
    %51 = tpu.matmul %48, %50, %cst_42 {dimension_numbers = #tpu.dot_dimension_numbers<[3], [0], [0, 1, 2], [1], [0, 0, 0, 1, 0, 2, 1, 1], [], []>} : vector<1x16x16x4xbf16>, vector<4x4xbf16>, vector<1x16x16x4xf32> -> vector<1x16x16x4xf32>
    "tpu.trace_stop"() : () -> ()
    %52 = arith.addf %47, %51 : vector<1x16x16x4xf32>
    %53 = vector.extract_strided_slice %16 {offsets = [0, 2, 1, 0], sizes = [1, 16, 16, 4], strides = [1, 1, 1, 1]} : vector<1x18x18x4xbf16> to vector<1x16x16x4xbf16>
    %c7 = arith.constant 7 : index
    %c0_43 = arith.constant 0 : index
    %c0_44 = arith.constant 0 : index
    %54 = vector.load %arg4[%c7, %c0_43, %c0_44] : memref<9x4x4xbf16, #tpu.memory_space<vmem>>, vector<1x4x4xbf16>
    %55 = vector.shape_cast %54 : vector<1x4x4xbf16> to vector<4x4xbf16>
    "tpu.trace_start"() <{level = 10 : i32, message = "bhwc,co->bhwo"}> : () -> ()
    %cst_45 = arith.constant dense<0.000000e+00> : vector<1x16x16x4xf32>
    %56 = tpu.matmul %53, %55, %cst_45 {dimension_numbers = #tpu.dot_dimension_numbers<[3], [0], [0, 1, 2], [1], [0, 0, 0, 1, 0, 2, 1, 1], [], []>} : vector<1x16x16x4xbf16>, vector<4x4xbf16>, vector<1x16x16x4xf32> -> vector<1x16x16x4xf32>
    "tpu.trace_stop"() : () -> ()
    %57 = arith.addf %52, %56 : vector<1x16x16x4xf32>
    %58 = vector.extract_strided_slice %16 {offsets = [0, 2, 2, 0], sizes = [1, 16, 16, 4], strides = [1, 1, 1, 1]} : vector<1x18x18x4xbf16> to vector<1x16x16x4xbf16>
    %c8 = arith.constant 8 : index
    %c0_46 = arith.constant 0 : index
    %c0_47 = arith.constant 0 : index
    %59 = vector.load %arg4[%c8, %c0_46, %c0_47] : memref<9x4x4xbf16, #tpu.memory_space<vmem>>, vector<1x4x4xbf16>
    %60 = vector.shape_cast %59 : vector<1x4x4xbf16> to vector<4x4xbf16>
    "tpu.trace_start"() <{level = 10 : i32, message = "bhwc,co->bhwo"}> : () -> ()
    %cst_48 = arith.constant dense<0.000000e+00> : vector<1x16x16x4xf32>
    %61 = tpu.matmul %58, %60, %cst_48 {dimension_numbers = #tpu.dot_dimension_numbers<[3], [0], [0, 1, 2], [1], [0, 0, 0, 1, 0, 2, 1, 1], [], []>} : vector<1x16x16x4xbf16>, vector<4x4xbf16>, vector<1x16x16x4xf32> -> vector<1x16x16x4xf32>
    "tpu.trace_stop"() : () -> ()
    %62 = arith.addf %57, %61 : vector<1x16x16x4xf32>
    %cst_49 = arith.constant dense<0.000000e+00> : vector<4xf32>
    %63 = vector.multi_reduction <add>, %62, %cst_49 [0, 1, 2] : vector<1x16x16x4xf32> to vector<4xf32>
    %64 = vector.shape_cast %63 : vector<4xf32> to vector<1x1x1x4xf32>
    %c0_50 = arith.constant 0 : index
    %c0_51 = arith.constant 0 : index
    %c0_52 = arith.constant 0 : index
    %c0_53 = arith.constant 0 : index
    %65 = vector.load %arg6[%c0_50, %c0_51, %c0_52, %c0_53] : memref<1x1x1x4xf32, #tpu.memory_space<vmem>>, vector<1x1x1x4xf32>
    tpu.vector_store %arg6[%c0_50, %c0_51, %c0_52, %c0_53], %64 {strides = array<i32>} : memref<1x1x1x4xf32, #tpu.memory_space<vmem>>, vector<1x1x1x4xf32>,
    %66 = arith.mulf %62, %62 : vector<1x16x16x4xf32>
    %cst_54 = arith.constant dense<0.000000e+00> : vector<4xf32>
    %67 = vector.multi_reduction <add>, %66, %cst_54 [0, 1, 2] : vector<1x16x16x4xf32> to vector<4xf32>
    %68 = vector.shape_cast %67 : vector<4xf32> to vector<1x1x1x4xf32>
    %c0_55 = arith.constant 0 : index
    %c0_56 = arith.constant 0 : index
    %c0_57 = arith.constant 0 : index
    %c0_58 = arith.constant 0 : index
    %69 = vector.load %arg7[%c0_55, %c0_56, %c0_57, %c0_58] : memref<1x1x1x4xf32, #tpu.memory_space<vmem>>, vector<1x1x1x4xf32>
    tpu.vector_store %arg7[%c0_55, %c0_56, %c0_57, %c0_58], %68 {strides = array<i32>} : memref<1x1x1x4xf32, #tpu.memory_space<vmem>>, vector<1x1x1x4xf32>,
    %70 = arith.truncf %62 : vector<1x16x16x4xf32> to vector<1x16x16x4xbf16>
    %c0_59 = arith.constant 0 : index
    %c0_60 = arith.constant 0 : index
    %c0_61 = arith.constant 0 : index
    %c0_62 = arith.constant 0 : index
    %71 = vector.load %arg5[%c0_59, %c0_60, %c0_61, %c0_62] : memref<1x16x16x4xbf16, #tpu.memory_space<vmem>>, vector<1x16x16x4xbf16>
    tpu.vector_store %arg5[%c0_59, %c0_60, %c0_61, %c0_62], %70 {strides = array<i32>} : memref<1x16x16x4xbf16, #tpu.memory_space<vmem>>, vector<1x16x16x4xbf16>,
    return
  }
  func.func @transform_0(%arg0: i32) -> (i32, i32, i32, i32) {
    %c0_i32 = arith.constant 0 : i32
    %c0_i32_0 = arith.constant 0 : i32
    %c0_i32_1 = arith.constant 0 : i32
    %c0_i32_2 = arith.constant 0 : i32
    return %arg0, %c0_i32, %c0_i32_0, %c0_i32_1 : i32, i32, i32, i32
  }
  func.func @transform_1(%arg0: i32) -> (i32, i32) {
    %c0_i32 = arith.constant 0 : i32
    %c0_i32_0 = arith.constant 0 : i32
    %c0_i32_1 = arith.constant 0 : i32
    return %c0_i32, %c0_i32_0 : i32, i32
  }
  func.func @transform_2(%arg0: i32) -> (i32, i32) {
    %c0_i32 = arith.constant 0 : i32
    %c0_i32_0 = arith.constant 0 : i32
    %c0_i32_1 = arith.constant 0 : i32
    return %c0_i32, %c0_i32_0 : i32, i32
  }
  func.func @transform_3(%arg0: i32) -> (i32, i32, i32) {
    %c0_i32 = arith.constant 0 : i32
    %c0_i32_0 = arith.constant 0 : i32
    %c0_i32_1 = arith.constant 0 : i32
    %c0_i32_2 = arith.constant 0 : i32
    return %c0_i32, %c0_i32_0, %c0_i32_1 : i32, i32, i32
  }
  func.func @transform_4(%arg0: i32) -> (i32, i32, i32, i32) {
    %c0_i32 = arith.constant 0 : i32
    %c0_i32_0 = arith.constant 0 : i32
    %c0_i32_1 = arith.constant 0 : i32
    %c0_i32_2 = arith.constant 0 : i32
    return %arg0, %c0_i32, %c0_i32_0, %c0_i32_1 : i32, i32, i32, i32
  }
  func.func @transform_5(%arg0: i32) -> (i32, i32, i32, i32) {
    %c0_i32 = arith.constant 0 : i32
    %c0_i32_0 = arith.constant 0 : i32
    %c0_i32_1 = arith.constant 0 : i32
    %c0_i32_2 = arith.constant 0 : i32
    return %arg0, %c0_i32, %c0_i32_0, %c0_i32_1 : i32, i32, i32, i32
  }
  func.func @transform_6(%arg0: i32) -> (i32, i32, i32, i32) {
    %c0_i32 = arith.constant 0 : i32
    %c0_i32_0 = arith.constant 0 : i32
    %c0_i32_1 = arith.constant 0 : i32
    %c0_i32_2 = arith.constant 0 : i32
    return %arg0, %c0_i32, %c0_i32_0, %c0_i32_1 : i32, i32, i32, i32
  }
}

</mosaic_0001>

<llo_original>
// kernel: basic_block_forward.5
$region0: #{basic_block_forward.5}
  #allocation0 [shape = 'u32[]', space=smem, size = 0x4, offset = 0x4, fixed_abs, tag = 'smem constant byte address 0x4 - core index']
  #allocation1 [shape = 'u32[144,128]{1,0:T(1,128)}', space=vmem, size = 0x12000, scoped, tag = 'internal scratch']
  %s0 = inlined_call_operand.vmem [shape: bf16[2,16,16,4], index: 0, kind: input, shape index: {}]
  %s1 = inlined_call_operand.vmem [shape: f32[2,16,16,4], index: 1, kind: input, shape index: {}]
  %s2 = inlined_call_operand.vmem [shape: f32[1,4], index: 2, kind: input, shape index: {}]
  %s3 = inlined_call_operand.vmem [shape: f32[1,4], index: 3, kind: input, shape index: {}]
  %s4 = inlined_call_operand.vmem [shape: f32[2,16,16,4], index: 4, kind: output, shape index: {}]
  %s5 = sld [smem:[#allocation0]]
  $region49: #{basic_block_forward.5} parent=0
    _
  %s7 = ssub.s32 1, %s5
  %s8 = scalar_select 0, %s7, %s5
  loop: start=0, step=1, limit=4
  $region2: #{basic_block_forward.5} parent=0 // loop_pre_header
    _
  $region3: #{basic_block_forward.5} parent=0 // loop_header
    %s10 = sphi 0, %s14
    %p11 = scmp.ge.s32.totalorder %s10, 4
    %s20 = sphi 0, %s22
    %s23 = sphi 0, %s20
    %s24 = sphi 0, %s23
    %s40 = sphi 0, %s24
    %s46 = sphi 0, %s48
    %s49 = sphi 0, %s46
    %s50 = sphi 0, %s49
    %s66 = sphi 0, %s50
    %s70 = sphi 0, %s70
    %s72 = sphi 0, %s70
    %s73 = sphi 0, %s72
    %s87 = sphi 0, %s73
    %s91 = sphi 0, %s91
    %s93 = sphi 0, %s91
    %s94 = sphi 0, %s93
    %s108 = sphi 0, %s94
    %s114 = sphi 0, %s116
    %s117 = sphi 0, %s114
    %s118 = sphi 0, %s117
    %s134 = sphi 0, %s118
  $region4: #{basic_block_forward.5} parent=0 // loop_header_branch
    %13 = sbr.rel (%p11) target = $region8
  $region5: #{basic_block_forward.5} parent=0 // loop_body
    %s15 = ssub.s32 %s10, 1
    %s16 = ssub.s32 %s10, 2
    %s17 = sadd.s32 %s10, 1
    %s18 = ssub.s32 %s10, %s17
    %p19 = scmp.eq.s32.totalorder %s18, 0
    %s21 = sadd.s32 %s20, 1
    %s22 = scalar_select %p19, %s20, %s21
    %p25 = pneg %p19
    %p26 = scmp.eq.s32.totalorder %s10, 1
    %p27 = por %p25, %p26
    %p28 = scmp.ne.s32.totalorder %s20, %s23
    %p29 = scmp.eq.s32.totalorder %s10, 0
    %p30 = por %p28, %p29
    %p31 = scmp.ne.s32.totalorder %s20, %s23
    %p32 = scmp.eq.s32.totalorder %s15, 1
    %p33 = por %p31, %p32
    %p34 = scmp.ne.s32.totalorder %s23, %s24
    %p35 = scmp.eq.s32.totalorder %s15, 0
    %p36 = por %p34, %p35
    %p37 = scmp.ne.s32.totalorder %s23, %s24
    %p38 = scmp.eq.s32.totalorder %s16, 1
    %p39 = por %p37, %p38
    %p41 = scmp.ne.s32.totalorder %s24, %s40
    %p42 = scmp.eq.s32.totalorder %s16, 0
    %p43 = por %p41, %p42
    %s44 = ssub.s32 %s10, %s17
    %p45 = scmp.eq.s32.totalorder %s44, 0
    %s47 = sadd.s32 %s46, 1
    %s48 = scalar_select %p45, %s46, %s47
    %p51 = pneg %p45
    %p52 = scmp.eq.s32.totalorder %s10, 1
    %p53 = por %p51, %p52
    %p54 = scmp.ne.s32.totalorder %s46, %s49
    %p55 = scmp.eq.s32.totalorder %s10, 0
    %p56 = por %p54, %p55
    %p57 = scmp.ne.s32.totalorder %s46, %s49
    %p58 = scmp.eq.s32.totalorder %s15, 1
    %p59 = por %p57, %p58
    %p60 = scmp.ne.s32.totalorder %s49, %s50
    %p61 = scmp.eq.s32.totalorder %s15, 0
    %p62 = por %p60, %p61
    %p63 = scmp.ne.s32.totalorder %s49, %s50
    %p64 = scmp.eq.s32.totalorder %s16, 1
    %p65 = por %p63, %p64
    %p67 = scmp.ne.s32.totalorder %s50, %s66
    %p68 = scmp.eq.s32.totalorder %s16, 0
    %p69 = por %p67, %p68
    %s71 = sadd.s32 %s70, 1
    %p74 = scmp.eq.s32.totalorder %s10, 1
    %p75 = scmp.ne.s32.totalorder %s70, %s72
    %p76 = scmp.eq.s32.totalorder %s10, 0
    %p77 = por %p75, %p76
    %p78 = scmp.ne.s32.totalorder %s70, %s72
    %p79 = scmp.eq.s32.totalorder %s15, 1
    %p80 = por %p78, %p79
    %p81 = scmp.ne.s32.totalorder %s72, %s73
    %p82 = scmp.eq.s32.totalorder %s15, 0
    %p83 = por %p81, %p82
    %p84 = scmp.ne.s32.totalorder %s72, %s73
    %p85 = scmp.eq.s32.totalorder %s16, 1
    %p86 = por %p84, %p85
    %p88 = scmp.ne.s32.totalorder %s73, %s87
    %p89 = scmp.eq.s32.totalorder %s16, 0
    %p90 = por %p88, %p89
    %s92 = sadd.s32 %s91, 1
    %p95 = scmp.eq.s32.totalorder %s10, 1
    %p96 = scmp.ne.s32.totalorder %s91, %s93
    %p97 = scmp.eq.s32.totalorder %s10, 0
    %p98 = por %p96, %p97
    %p99 = scmp.ne.s32.totalorder %s91, %s93
    %p100 = scmp.eq.s32.totalorder %s15, 1
    %p101 = por %p99, %p100
    %p102 = scmp.ne.s32.totalorder %s93, %s94
    %p103 = scmp.eq.s32.totalorder %s15, 0
    %p104 = por %p102, %p103
    %p105 = scmp.ne.s32.totalorder %s93, %s94
    %p106 = scmp.eq.s32.totalorder %s16, 1
    %p107 = por %p105, %p106
    %p109 = scmp.ne.s32.totalorder %s94, %s108
    %p110 = scmp.eq.s32.totalorder %s16, 0
    %p111 = por %p109, %p110
    %s112 = ssub.s32 %s10, %s17
    %p113 = scmp.eq.s32.totalorder %s112, 0
    %s115 = sadd.s32 %s114, 1
    %s116 = scalar_select %p113, %s114, %s115
    %p119 = pneg %p113
    %p120 = scmp.eq.s32.totalorder %s10, 1
    %p121 = por %p119, %p120
    %p122 = scmp.ne.s32.totalorder %s114, %s117
    %p123 = scmp.eq.s32.totalorder %s10, 0
    %p124 = por %p122, %p123
    %p125 = scmp.ne.s32.totalorder %s114, %s117
    %p126 = scmp.eq.s32.totalorder %s15, 1
    %p127 = por %p125, %p126
    %p128 = scmp.ne.s32.totalorder %s117, %s118
    %p129 = scmp.eq.s32.totalorder %s15, 0
    %p130 = por %p128, %p129
    %p131 = scmp.ne.s32.totalorder %s117, %s118
    %p132 = scmp.eq.s32.totalorder %s16, 1
    %p133 = por %p131, %p132
    %p135 = scmp.ne.s32.totalorder %s118, %s134
    %p136 = scmp.eq.s32.totalorder %s16, 0
    %p137 = por %p135, %p136
    %p138 = scmp.le.s32.totalorder 1, %s10
    %p139 = scmp.lt.s32.totalorder %s10, 3
    %p140 = pnand %p138, %p139
    %p141 = pneg %p140
    // Predicated region
    $region9: #{basic_block_forward.5} parent=5 // pred_check
      _
    $region10: #{basic_block_forward.5} parent=5 // pred_check_branch
      %143 = sbr.rel (%p140) target = $region12
    $region11: #{basic_block_forward.5} parent=5 // pred_region
      %s144 = ssub.s32 %s10, 1
      // Predicated region
      $region13: #{basic_block_forward.5} parent=11 // pred_check
        %p145 = pneg %p83
      $region14: #{basic_block_forward.5} parent=11 // pred_check_branch
        %147 = sbr.rel (%p145) target = $region16
      $region15: #{basic_block_forward.5} parent=11 // pred_region
        _
      $region16: #{basic_block_forward.5} parent=11 // pred_fallthru
        _
      // Predicated region
      $region17: #{basic_block_forward.5} parent=11 // pred_check
        %p148 = pneg %p104
      $region18: #{basic_block_forward.5} parent=11 // pred_check_branch
        %150 = sbr.rel (%p148) target = $region20
      $region19: #{basic_block_forward.5} parent=11 // pred_region
        _
      $region20: #{basic_block_forward.5} parent=11 // pred_fallthru
        _
    $region12: #{basic_block_forward.5} parent=5 // pred_fallthru
      _
    %p151 = scmp.lt.s32.totalorder %s10, 2
    // Predicated region
    $region21: #{basic_block_forward.5} parent=5 // pred_check
      %p152 = pneg %p151
    $region22: #{basic_block_forward.5} parent=5 // pred_check_branch
      %154 = sbr.rel (%p152) target = $region24
    $region23: #{basic_block_forward.5} parent=5 // pred_region
      // Predicated region
      $region25: #{basic_block_forward.5} parent=23 // pred_check
        %p155 = pneg %p30
      $region26: #{basic_block_forward.5} parent=23 // pred_check_branch
        %157 = sbr.rel (%p155) target = $region28
      $region27: #{basic_block_forward.5} parent=23 // pred_region
        %p158 = scmp.lt.s32.totalorder %s10, 1
        %s159 = scalar_select %p158, %s10, 1
        %s160 = smul.addr %s159, 32
        %s161 = smul.addr %s160, 4
        %s162 = scalar_lea.vmem %s0, %s161
      $region28: #{basic_block_forward.5} parent=23 // pred_fallthru
        _
      // Predicated region
      $region29: #{basic_block_forward.5} parent=23 // pred_check
        %p163 = pneg %p56
      $region30: #{basic_block_forward.5} parent=23 // pred_check_branch
        %165 = sbr.rel (%p163) target = $region32
      $region31: #{basic_block_forward.5} parent=23 // pred_region
        %p166 = scmp.lt.s32.totalorder %s10, 1
        %s167 = scalar_select %p166, %s10, 1
        %s168 = smul.addr %s167, 32
        %s169 = smul.addr %s168, 8
        %s170 = scalar_lea.vmem %s1, %s169
      $region32: #{basic_block_forward.5} parent=23 // pred_fallthru
        _
    $region24: #{basic_block_forward.5} parent=5 // pred_fallthru
      _
    %p171 = scmp.le.s32.totalorder 1, %s10
    %p172 = scmp.lt.s32.totalorder %s10, 3
    %p173 = pnand %p171, %p172
    %p174 = pneg %p173
    // Predicated region
    $region33: #{basic_block_forward.5} parent=5 // pred_check
      _
    $region34: #{basic_block_forward.5} parent=5 // pred_check_branch
      %176 = sbr.rel (%p173) target = $region36
    $region35: #{basic_block_forward.5} parent=5 // pred_region
      %s177 = ssub.s32 %s10, 1
      %p178 = scmp.lt.s32.totalorder %s15, 1
      %s179 = scalar_select %p178, %s15, 1
      %s180 = smul.addr %s179, 32
      %s181 = smul.addr %s180, 4
      %s182 = scalar_lea.vmem %s0, %s181
      %p183 = pneg %p36
      %p184 = pneg %p33
      %p185 = scmp.lt.s32.totalorder %s15, 1
      %s186 = scalar_select %p185, %s15, 1
      %s187 = smul.addr %s186, 32
      %s188 = smul.addr %s187, 8
      %s189 = scalar_lea.vmem %s1, %s188
      %p190 = pneg %p62
      %p191 = pneg %p59
      %p192 = pneg %p83
      %p193 = pneg %p80
      %p194 = pneg %p104
      %p195 = pneg %p101
      %p196 = pneg %p130
      %p197 = pneg %p127
      %p198 = scmp.lt.s32.totalorder %s15, 1
      %s199 = scalar_select %p198, %s15, 1
      %s200 = smul.addr %s199, 32
      %s201 = smul.addr %s200, 8
      %s202 = scalar_lea.vmem %s4, %s201
      %p203 = scmp.lt.s32.totalorder %s15, 1
      %s204 = scalar_select %p203, %s15, 1
      %s205 = smul.addr %s204, 32
      %s206 = smul.addr %s205, 4
      %s207 = scalar_lea.vmem %s0, %s206
      %p208 = scmp.lt.s32.totalorder %s15, 1
      %s209 = scalar_select %p208, %s15, 1
      %s210 = smul.addr %s209, 32
      %s211 = smul.addr %s210, 8
      %s212 = scalar_lea.vmem %s1, %s211
      %p213 = scmp.lt.s32.totalorder %s15, 1
      %s214 = scalar_select %p213, %s15, 1
      %s215 = smul.addr %s214, 32
      %s216 = smul.addr %s215, 8
      %s217 = scalar_lea.vmem %s4, %s216
      %v218 = vld [vmem:[%s207] sm:$0xf]
      %v219 = vld [vmem:[%s207 + $0x4] sm:$0xf]
      %v220 = vld [vmem:[%s207 + $0x8] sm:$0xf]
      %v221 = vld [vmem:[%s207 + $0xc] sm:$0xf]
      %v222 = vld [vmem:[%s207 + $0x10] sm:$0xf]
      %v223 = vld [vmem:[%s207 + $0x14] sm:$0xf]
      %v224 = vld [vmem:[%s207 + $0x18] sm:$0xf]
      %v225 = vld [vmem:[%s207 + $0x1c] sm:$0xf]
      %v226 = vld [vmem:[%s207 + $0x20] sm:$0xf]
      %v227 = vld [vmem:[%s207 + $0x24] sm:$0xf]
      %v228 = vld [vmem:[%s207 + $0x28] sm:$0xf]
      %v229 = vld [vmem:[%s207 + $0x2c] sm:$0xf]
      %v230 = vld [vmem:[%s207 + $0x30] sm:$0xf]
      %v231 = vld [vmem:[%s207 + $0x34] sm:$0xf]
      %v232 = vld [vmem:[%s207 + $0x38] sm:$0xf]
      %v233 = vld [vmem:[%s207 + $0x3c] sm:$0xf]
      %v234 = vld [vmem:[%s207 + $0x40] sm:$0xf]
      %v235 = vld [vmem:[%s207 + $0x44] sm:$0xf]
      %v236 = vld [vmem:[%s207 + $0x48] sm:$0xf]
      %v237 = vld [vmem:[%s207 + $0x4c] sm:$0xf]
      %v238 = vld [vmem:[%s207 + $0x50] sm:$0xf]
      %v239 = vld [vmem:[%s207 + $0x54] sm:$0xf]
      %v240 = vld [vmem:[%s207 + $0x58] sm:$0xf]
      %v241 = vld [vmem:[%s207 + $0x5c] sm:$0xf]
      %v242 = vld [vmem:[%s207 + $0x60] sm:$0xf]
      %v243 = vld [vmem:[%s207 + $0x64] sm:$0xf]
      %v244 = vld [vmem:[%s207 + $0x68] sm:$0xf]
      %v245 = vld [vmem:[%s207 + $0x6c] sm:$0xf]
      %v246 = vld [vmem:[%s207 + $0x70] sm:$0xf]
      %v247 = vld [vmem:[%s207 + $0x74] sm:$0xf]
      %v248 = vld [vmem:[%s207 + $0x78] sm:$0xf]
      %v249 = vld [vmem:[%s207 + $0x7c] sm:$0xf]
      %v250 = vunpack.c.l.bf16 %v218
      %v251 = vunpack.c.l.bf16 %v219
      %v252 = vunpack.c.l.bf16 %v220
      %v253 = vunpack.c.l.bf16 %v221
      %v254 = vunpack.c.l.bf16 %v222
      %v255 = vunpack.c.l.bf16 %v223
      %v256 = vunpack.c.l.bf16 %v224
      %v257 = vunpack.c.l.bf16 %v225
      %v258 = vunpack.c.l.bf16 %v226
      %v259 = vunpack.c.l.bf16 %v227
      %v260 = vunpack.c.l.bf16 %v228
      %v261 = vunpack.c.l.bf16 %v229
      %v262 = vunpack.c.l.bf16 %v230
      %v263 = vunpack.c.l.bf16 %v231
      %v264 = vunpack.c.l.bf16 %v232
      %v265 = vunpack.c.l.bf16 %v233
      %v266 = vunpack.c.l.bf16 %v234
      %v267 = vunpack.c.l.bf16 %v235
      %v268 = vunpack.c.l.bf16 %v236
      %v269 = vunpack.c.l.bf16 %v237
      %v270 = vunpack.c.l.bf16 %v238
      %v271 = vunpack.c.l.bf16 %v239
      %v272 = vunpack.c.l.bf16 %v240
      %v273 = vunpack.c.l.bf16 %v241
      %v274 = vunpack.c.l.bf16 %v242
      %v275 = vunpack.c.l.bf16 %v243
      %v276 = vunpack.c.l.bf16 %v244
      %v277 = vunpack.c.l.bf16 %v245
      %v278 = vunpack.c.l.bf16 %v246
      %v279 = vunpack.c.l.bf16 %v247
      %v280 = vunpack.c.l.bf16 %v248
      %v281 = vunpack.c.l.bf16 %v249
      %v282 = vld [vmem:[%s2] sm:$0x1]
      %v284 = vlaneseq
      %v285 = vshrl.u32 %v284, 7
      %v286 = vsub.s32 0, %v285
      %v287 = vrot.slane %v282, %v286
      %v289 = vmul.f32 %v250, %v287
      %v290 = vmul.f32 %v251, %v287
      %v291 = vmul.f32 %v252, %v287
      %v292 = vmul.f32 %v253, %v287
      %v293 = vmul.f32 %v254, %v287
      %v294 = vmul.f32 %v255, %v287
      %v295 = vmul.f32 %v256, %v287
      %v296 = vmul.f32 %v257, %v287
      %v297 = vmul.f32 %v258, %v287
      %v298 = vmul.f32 %v259, %v287
      %v299 = vmul.f32 %v260, %v287
      %v300 = vmul.f32 %v261, %v287
      %v301 = vmul.f32 %v262, %v287
      %v302 = vmul.f32 %v263, %v287
      %v303 = vmul.f32 %v264, %v287
      %v304 = vmul.f32 %v265, %v287
      %v305 = vmul.f32 %v266, %v287
      %v306 = vmul.f32 %v267, %v287
      %v307 = vmul.f32 %v268, %v287
      %v308 = vmul.f32 %v269, %v287
      %v309 = vmul.f32 %v270, %v287
      %v310 = vmul.f32 %v271, %v287
      %v311 = vmul.f32 %v272, %v287
      %v312 = vmul.f32 %v273, %v287
      %v313 = vmul.f32 %v274, %v287
      %v314 = vmul.f32 %v275, %v287
      %v315 = vmul.f32 %v276, %v287
      %v316 = vmul.f32 %v277, %v287
      %v317 = vmul.f32 %v278, %v287
      %v318 = vmul.f32 %v279, %v287
      %v319 = vmul.f32 %v280, %v287
      %v320 = vmul.f32 %v281, %v287
      %v321 = vld [vmem:[%s3] sm:$0x1]
      %v323 = vlaneseq
      %v324 = vshrl.u32 %v323, 7
      %v325 = vsub.s32 0, %v324
      %v326 = vrot.slane %v321, %v325
      %v328 = vadd.f32 %v289, %v326
      %v329 = vadd.f32 %v290, %v326
      %v330 = vadd.f32 %v291, %v326
      %v331 = vadd.f32 %v292, %v326
      %v332 = vadd.f32 %v293, %v326
      %v333 = vadd.f32 %v294, %v326
      %v334 = vadd.f32 %v295, %v326
      %v335 = vadd.f32 %v296, %v326
      %v336 = vadd.f32 %v297, %v326
      %v337 = vadd.f32 %v298, %v326
      %v338 = vadd.f32 %v299, %v326
      %v339 = vadd.f32 %v300, %v326
      %v340 = vadd.f32 %v301, %v326
      %v341 = vadd.f32 %v302, %v326
      %v342 = vadd.f32 %v303, %v326
      %v343 = vadd.f32 %v304, %v326
      %v344 = vadd.f32 %v305, %v326
      %v345 = vadd.f32 %v306, %v326
      %v346 = vadd.f32 %v307, %v326
      %v347 = vadd.f32 %v308, %v326
      %v348 = vadd.f32 %v309, %v326
      %v349 = vadd.f32 %v310, %v326
      %v350 = vadd.f32 %v311, %v326
      %v351 = vadd.f32 %v312, %v326
      %v352 = vadd.f32 %v313, %v326
      %v353 = vadd.f32 %v314, %v326
      %v354 = vadd.f32 %v315, %v326
      %v355 = vadd.f32 %v316, %v326
      %v356 = vadd.f32 %v317, %v326
      %v357 = vadd.f32 %v318, %v326
      %v358 = vadd.f32 %v319, %v326
      %v359 = vadd.f32 %v320, %v326
      %v360 = vld [vmem:[%s212] sm:$0xff]
      %v361 = vld [vmem:[%s212 + $0x8] sm:$0xff]
      %v362 = vld [vmem:[%s212 + $0x10] sm:$0xff]
      %v363 = vld [vmem:[%s212 + $0x18] sm:$0xff]
      %v364 = vld [vmem:[%s212 + $0x20] sm:$0xff]
      %v365 = vld [vmem:[%s212 + $0x28] sm:$0xff]
      %v366 = vld [vmem:[%s212 + $0x30] sm:$0xff]
      %v367 = vld [vmem:[%s212 + $0x38] sm:$0xff]
      %v368 = vld [vmem:[%s212 + $0x40] sm:$0xff]
      %v369 = vld [vmem:[%s212 + $0x48] sm:$0xff]
      %v370 = vld [vmem:[%s212 + $0x50] sm:$0xff]
      %v371 = vld [vmem:[%s212 + $0x58] sm:$0xff]
      %v372 = vld [vmem:[%s212 + $0x60] sm:$0xff]
      %v373 = vld [vmem:[%s212 + $0x68] sm:$0xff]
      %v374 = vld [vmem:[%s212 + $0x70] sm:$0xff]
      %v375 = vld [vmem:[%s212 + $0x78] sm:$0xff]
      %v376 = vld [vmem:[%s212 + $0x80] sm:$0xff]
      %v377 = vld [vmem:[%s212 + $0x88] sm:$0xff]
      %v378 = vld [vmem:[%s212 + $0x90] sm:$0xff]
      %v379 = vld [vmem:[%s212 + $0x98] sm:$0xff]
      %v380 = vld [vmem:[%s212 + $0xa0] sm:$0xff]
      %v381 = vld [vmem:[%s212 + $0xa8] sm:$0xff]
      %v382 = vld [vmem:[%s212 + $0xb0] sm:$0xff]
      %v383 = vld [vmem:[%s212 + $0xb8] sm:$0xff]
      %v384 = vld [vmem:[%s212 + $0xc0] sm:$0xff]
      %v385 = vld [vmem:[%s212 + $0xc8] sm:$0xff]
      %v386 = vld [vmem:[%s212 + $0xd0] sm:$0xff]
      %v387 = vld [vmem:[%s212 + $0xd8] sm:$0xff]
      %v388 = vld [vmem:[%s212 + $0xe0] sm:$0xff]
      %v389 = vld [vmem:[%s212 + $0xe8] sm:$0xff]
      %v390 = vld [vmem:[%s212 + $0xf0] sm:$0xff]
      %v391 = vld [vmem:[%s212 + $0xf8] sm:$0xff]
      %v392 = vadd.f32 %v328, %v360
      %v393 = vadd.f32 %v329, %v361
      %v394 = vadd.f32 %v330, %v362
      %v395 = vadd.f32 %v331, %v363
      %v396 = vadd.f32 %v332, %v364
      %v397 = vadd.f32 %v333, %v365
      %v398 = vadd.f32 %v334, %v366
      %v399 = vadd.f32 %v335, %v367
      %v400 = vadd.f32 %v336, %v368
      %v401 = vadd.f32 %v337, %v369
      %v402 = vadd.f32 %v338, %v370
      %v403 = vadd.f32 %v339, %v371
      %v404 = vadd.f32 %v340, %v372
      %v405 = vadd.f32 %v341, %v373
      %v406 = vadd.f32 %v342, %v374
      %v407 = vadd.f32 %v343, %v375
      %v408 = vadd.f32 %v344, %v376
      %v409 = vadd.f32 %v345, %v377
      %v410 = vadd.f32 %v346, %v378
      %v411 = vadd.f32 %v347, %v379
      %v412 = vadd.f32 %v348, %v380
      %v413 = vadd.f32 %v349, %v381
      %v414 = vadd.f32 %v350, %v382
      %v415 = vadd.f32 %v351, %v383
      %v416 = vadd.f32 %v352, %v384
      %v417 = vadd.f32 %v353, %v385
      %v418 = vadd.f32 %v354, %v386
      %v419 = vadd.f32 %v355, %v387
      %v420 = vadd.f32 %v356, %v388
      %v421 = vadd.f32 %v357, %v389
      %v422 = vadd.f32 %v358, %v390
      %v423 = vadd.f32 %v359, %v391
      %v424 = vmax.f32 %v392, 0.0
      %v425 = vmax.f32 %v393, 0.0
      %v426 = vmax.f32 %v394, 0.0
      %v427 = vmax.f32 %v395, 0.0
      %v428 = vmax.f32 %v396, 0.0
      %v429 = vmax.f32 %v397, 0.0
      %v430 = vmax.f32 %v398, 0.0
      %v431 = vmax.f32 %v399, 0.0
      %v432 = vmax.f32 %v400, 0.0
      %v433 = vmax.f32 %v401, 0.0
      %v434 = vmax.f32 %v402, 0.0
      %v435 = vmax.f32 %v403, 0.0
      %v436 = vmax.f32 %v404, 0.0
      %v437 = vmax.f32 %v405, 0.0
      %v438 = vmax.f32 %v406, 0.0
      %v439 = vmax.f32 %v407, 0.0
      %v440 = vmax.f32 %v408, 0.0
      %v441 = vmax.f32 %v409, 0.0
      %v442 = vmax.f32 %v410, 0.0
      %v443 = vmax.f32 %v411, 0.0
      %v444 = vmax.f32 %v412, 0.0
      %v445 = vmax.f32 %v413, 0.0
      %v446 = vmax.f32 %v414, 0.0
      %v447 = vmax.f32 %v415, 0.0
      %v448 = vmax.f32 %v416, 0.0
      %v449 = vmax.f32 %v417, 0.0
      %v450 = vmax.f32 %v418, 0.0
      %v451 = vmax.f32 %v419, 0.0
      %v452 = vmax.f32 %v420, 0.0
      %v453 = vmax.f32 %v421, 0.0
      %v454 = vmax.f32 %v422, 0.0
      %v455 = vmax.f32 %v423, 0.0
      %vm456 = vcmask 31744
      %457 = vst.msk [vmem:[%s217] sm:$0xff] %vm456, %v424
      %458 = vst.msk [vmem:[%s217 + $0x8] sm:$0xff] %vm456, %v425
      %459 = vst.msk [vmem:[%s217 + $0x10] sm:$0xff] %vm456, %v426
      %460 = vst.msk [vmem:[%s217 + $0x18] sm:$0xff] %vm456, %v427
      %461 = vst.msk [vmem:[%s217 + $0x20] sm:$0xff] %vm456, %v428
      %462 = vst.msk [vmem:[%s217 + $0x28] sm:$0xff] %vm456, %v429
      %463 = vst.msk [vmem:[%s217 + $0x30] sm:$0xff] %vm456, %v430
      %464 = vst.msk [vmem:[%s217 + $0x38] sm:$0xff] %vm456, %v431
      %465 = vst.msk [vmem:[%s217 + $0x40] sm:$0xff] %vm456, %v432
      %466 = vst.msk [vmem:[%s217 + $0x48] sm:$0xff] %vm456, %v433
      %467 = vst.msk [vmem:[%s217 + $0x50] sm:$0xff] %vm456, %v434
      %468 = vst.msk [vmem:[%s217 + $0x58] sm:$0xff] %vm456, %v435
      %469 = vst.msk [vmem:[%s217 + $0x60] sm:$0xff] %vm456, %v436
      %470 = vst.msk [vmem:[%s217 + $0x68] sm:$0xff] %vm456, %v437
      %471 = vst.msk [vmem:[%s217 + $0x70] sm:$0xff] %vm456, %v438
      %472 = vst.msk [vmem:[%s217 + $0x78] sm:$0xff] %vm456, %v439
      %473 = vst.msk [vmem:[%s217 + $0x80] sm:$0xff] %vm456, %v440
      %474 = vst.msk [vmem:[%s217 + $0x88] sm:$0xff] %vm456, %v441
      %475 = vst.msk [vmem:[%s217 + $0x90] sm:$0xff] %vm456, %v442
      %476 = vst.msk [vmem:[%s217 + $0x98] sm:$0xff] %vm456, %v443
      %477 = vst.msk [vmem:[%s217 + $0xa0] sm:$0xff] %vm456, %v444
      %478 = vst.msk [vmem:[%s217 + $0xa8] sm:$0xff] %vm456, %v445
      %479 = vst.msk [vmem:[%s217 + $0xb0] sm:$0xff] %vm456, %v446
      %480 = vst.msk [vmem:[%s217 + $0xb8] sm:$0xff] %vm456, %v447
      %481 = vst.msk [vmem:[%s217 + $0xc0] sm:$0xff] %vm456, %v448
      %482 = vst.msk [vmem:[%s217 + $0xc8] sm:$0xff] %vm456, %v449
      %483 = vst.msk [vmem:[%s217 + $0xd0] sm:$0xff] %vm456, %v450
      %484 = vst.msk [vmem:[%s217 + $0xd8] sm:$0xff] %vm456, %v451
      %485 = vst.msk [vmem:[%s217 + $0xe0] sm:$0xff] %vm456, %v452
      %486 = vst.msk [vmem:[%s217 + $0xe8] sm:$0xff] %vm456, %v453
      %487 = vst.msk [vmem:[%s217 + $0xf0] sm:$0xff] %vm456, %v454
      %488 = vst.msk [vmem:[%s217 + $0xf8] sm:$0xff] %vm456, %v455
      %p489 = scmp.lt.s32.totalorder %s15, 1
      %s490 = scalar_select %p489, %s15, 1
      %s491 = smul.addr %s490, 32
      %s492 = smul.addr %s491, 8
      %s493 = scalar_lea.vmem %s4, %s492
      // Predicated region
      $region37: #{basic_block_forward.5} parent=35 // pred_check
        %p494 = pneg %p127
      $region38: #{basic_block_forward.5} parent=35 // pred_check_branch
        %496 = sbr.rel (%p494) target = $region40
      $region39: #{basic_block_forward.5} parent=35 // pred_region
        _
      $region40: #{basic_block_forward.5} parent=35 // pred_fallthru
        _
    $region36: #{basic_block_forward.5} parent=5 // pred_fallthru
      _
    %p497 = scmp.le.s32.totalorder 2, %s10
    // Predicated region
    $region41: #{basic_block_forward.5} parent=5 // pred_check
      %p498 = pneg %p497
    $region42: #{basic_block_forward.5} parent=5 // pred_check_branch
      %500 = sbr.rel (%p498) target = $region44
    $region43: #{basic_block_forward.5} parent=5 // pred_region
      %s501 = ssub.s32 %s10, 2
      // Predicated region
      $region45: #{basic_block_forward.5} parent=43 // pred_check
        %p502 = pneg %p133
      $region46: #{basic_block_forward.5} parent=43 // pred_check_branch
        %504 = sbr.rel (%p502) target = $region48
      $region47: #{basic_block_forward.5} parent=43 // pred_region
        %p505 = scmp.lt.s32.totalorder %s16, 1
        %s506 = scalar_select %p505, %s16, 1
        %s507 = smul.addr %s506, 32
        %s508 = smul.addr %s507, 8
        %s509 = scalar_lea.vmem %s4, %s508
      $region48: #{basic_block_forward.5} parent=43 // pred_fallthru
        _
    $region44: #{basic_block_forward.5} parent=5 // pred_fallthru
      _
  $region6: #{basic_block_forward.5} parent=0 // loop_footer
    %s14 = sadd.s32 1, %s10
  $region7: #{basic_block_forward.5} parent=0 // loop_footer_branch
    %9 = sbr.rel target = $region3
  $region8: #{basic_block_forward.5} parent=0 // loop_exit
    _

// kernel: basic_block_forward.3
$region0: #{basic_block_forward.3}
  #allocation0 [shape = 'u32[]', space=smem, size = 0x4, offset = 0x4, fixed_abs, tag = 'smem constant byte address 0x4 - core index']
  #allocation1 [shape = 'u32[144,128]{1,0:T(1,128)}', space=vmem, size = 0x12000, scoped, tag = 'internal scratch']
  #allocation2 [shape = 'f32[1,18,18,4]{3,2,1,0:T(8,128)}', space=vmem, size = 0x36000, scoped, tag = 'scratch operand']
  %s0 = inlined_call_operand.vmem [shape: f32[2,16,16,4], index: 0, kind: input, shape index: {}]
  %s1 = inlined_call_operand.vmem [shape: bf16[9,4,4], index: 1, kind: input, shape index: {}]
  %s2 = inlined_call_operand.vmem [shape: bf16[2,16,16,4], index: 2, kind: output, shape index: {0}]
  %s3 = inlined_call_operand.vmem [shape: f32[2,1,1,4], index: 3, kind: output, shape index: {1}]
  %s4 = inlined_call_operand.vmem [shape: f32[2,1,1,4], index: 4, kind: output, shape index: {2}]
  %5 = xla_tuple %s2, %s3, %s4
  %s6 = sld [smem:[#allocation0]]
  $region57: #{basic_block_forward.3} parent=0
    _
  %s8 = ssub.s32 1, %s6
  %s9 = scalar_select 0, %s8, %s6
  loop: start=0, step=1, limit=4
  $region2: #{basic_block_forward.3} parent=0 // loop_pre_header
    _
  $region3: #{basic_block_forward.3} parent=0 // loop_header
    %s11 = sphi 0, %s15
    %p12 = scmp.ge.s32.totalorder %s11, 4
    %s21 = sphi 0, %s23
    %s24 = sphi 0, %s21
    %s25 = sphi 0, %s24
    %s41 = sphi 0, %s25
    %s45 = sphi 0, %s45
    %s47 = sphi 0, %s45
    %s48 = sphi 0, %s47
    %s62 = sphi 0, %s48
    %s68 = sphi 0, %s70
    %s71 = sphi 0, %s68
    %s72 = sphi 0, %s71
    %s88 = sphi 0, %s72
    %s94 = sphi 0, %s96
    %s97 = sphi 0, %s94
    %s98 = sphi 0, %s97
    %s114 = sphi 0, %s98
    %s120 = sphi 0, %s122
    %s123 = sphi 0, %s120
    %s124 = sphi 0, %s123
    %s140 = sphi 0, %s124
  $region4: #{basic_block_forward.3} parent=0 // loop_header_branch
    %14 = sbr.rel (%p12) target = $region8
  $region5: #{basic_block_forward.3} parent=0 // loop_body
    %s16 = ssub.s32 %s11, 1
    %s17 = ssub.s32 %s11, 2
    %s18 = sadd.s32 %s11, 1
    %s19 = ssub.s32 %s11, %s18
    %p20 = scmp.eq.s32.totalorder %s19, 0
    %s22 = sadd.s32 %s21, 1
    %s23 = scalar_select %p20, %s21, %s22
    %p26 = pneg %p20
    %p27 = scmp.eq.s32.totalorder %s11, 1
    %p28 = por %p26, %p27
    %p29 = scmp.ne.s32.totalorder %s21, %s24
    %p30 = scmp.eq.s32.totalorder %s11, 0
    %p31 = por %p29, %p30
    %p32 = scmp.ne.s32.totalorder %s21, %s24
    %p33 = scmp.eq.s32.totalorder %s16, 1
    %p34 = por %p32, %p33
    %p35 = scmp.ne.s32.totalorder %s24, %s25
    %p36 = scmp.eq.s32.totalorder %s16, 0
    %p37 = por %p35, %p36
    %p38 = scmp.ne.s32.totalorder %s24, %s25
    %p39 = scmp.eq.s32.totalorder %s17, 1
    %p40 = por %p38, %p39
    %p42 = scmp.ne.s32.totalorder %s25, %s41
    %p43 = scmp.eq.s32.totalorder %s17, 0
    %p44 = por %p42, %p43
    %s46 = sadd.s32 %s45, 1
    %p49 = scmp.eq.s32.totalorder %s11, 1
    %p50 = scmp.ne.s32.totalorder %s45, %s47
    %p51 = scmp.eq.s32.totalorder %s11, 0
    %p52 = por %p50, %p51
    %p53 = scmp.ne.s32.totalorder %s45, %s47
    %p54 = scmp.eq.s32.totalorder %s16, 1
    %p55 = por %p53, %p54
    %p56 = scmp.ne.s32.totalorder %s47, %s48
    %p57 = scmp.eq.s32.totalorder %s16, 0
    %p58 = por %p56, %p57
    %p59 = scmp.ne.s32.totalorder %s47, %s48
    %p60 = scmp.eq.s32.totalorder %s17, 1
    %p61 = por %p59, %p60
    %p63 = scmp.ne.s32.totalorder %s48, %s62
    %p64 = scmp.eq.s32.totalorder %s17, 0
    %p65 = por %p63, %p64
    %s66 = ssub.s32 %s11, %s18
    %p67 = scmp.eq.s32.totalorder %s66, 0
    %s69 = sadd.s32 %s68, 1
    %s70 = scalar_select %p67, %s68, %s69
    %p73 = pneg %p67
    %p74 = scmp.eq.s32.totalorder %s11, 1
    %p75 = por %p73, %p74
    %p76 = scmp.ne.s32.totalorder %s68, %s71
    %p77 = scmp.eq.s32.totalorder %s11, 0
    %p78 = por %p76, %p77
    %p79 = scmp.ne.s32.totalorder %s68, %s71
    %p80 = scmp.eq.s32.totalorder %s16, 1
    %p81 = por %p79, %p80
    %p82 = scmp.ne.s32.totalorder %s71, %s72
    %p83 = scmp.eq.s32.totalorder %s16, 0
    %p84 = por %p82, %p83
    %p85 = scmp.ne.s32.totalorder %s71, %s72
    %p86 = scmp.eq.s32.totalorder %s17, 1
    %p87 = por %p85, %p86
    %p89 = scmp.ne.s32.totalorder %s72, %s88
    %p90 = scmp.eq.s32.totalorder %s17, 0
    %p91 = por %p89, %p90
    %s92 = ssub.s32 %s11, %s18
    %p93 = scmp.eq.s32.totalorder %s92, 0
    %s95 = sadd.s32 %s94, 1
    %s96 = scalar_select %p93, %s94, %s95
    %p99 = pneg %p93
    %p100 = scmp.eq.s32.totalorder %s11, 1
    %p101 = por %p99, %p100
    %p102 = scmp.ne.s32.totalorder %s94, %s97
    %p103 = scmp.eq.s32.totalorder %s11, 0
    %p104 = por %p102, %p103
    %p105 = scmp.ne.s32.totalorder %s94, %s97
    %p106 = scmp.eq.s32.totalorder %s16, 1
    %p107 = por %p105, %p106
    %p108 = scmp.ne.s32.totalorder %s97, %s98
    %p109 = scmp.eq.s32.totalorder %s16, 0
    %p110 = por %p108, %p109
    %p111 = scmp.ne.s32.totalorder %s97, %s98
    %p112 = scmp.eq.s32.totalorder %s17, 1
    %p113 = por %p111, %p112
    %p115 = scmp.ne.s32.totalorder %s98, %s114
    %p116 = scmp.eq.s32.totalorder %s17, 0
    %p117 = por %p115, %p116
    %s118 = ssub.s32 %s11, %s18
    %p119 = scmp.eq.s32.totalorder %s118, 0
    %s121 = sadd.s32 %s120, 1
    %s122 = scalar_select %p119, %s120, %s121
    %p125 = pneg %p119
    %p126 = scmp.eq.s32.totalorder %s11, 1
    %p127 = por %p125, %p126
    %p128 = scmp.ne.s32.totalorder %s120, %s123
    %p129 = scmp.eq.s32.totalorder %s11, 0
    %p130 = por %p128, %p129
    %p131 = scmp.ne.s32.totalorder %s120, %s123
    %p132 = scmp.eq.s32.totalorder %s16, 1
    %p133 = por %p131, %p132
    %p134 = scmp.ne.s32.totalorder %s123, %s124
    %p135 = scmp.eq.s32.totalorder %s16, 0
    %p136 = por %p134, %p135
    %p137 = scmp.ne.s32.totalorder %s123, %s124
    %p138 = scmp.eq.s32.totalorder %s17, 1
    %p139 = por %p137, %p138
    %p141 = scmp.ne.s32.totalorder %s124, %s140
    %p142 = scmp.eq.s32.totalorder %s17, 0
    %p143 = por %p141, %p142
    %p144 = scmp.le.s32.totalorder 1, %s11
    %p145 = scmp.lt.s32.totalorder %s11, 3
    %p146 = pnand %p144, %p145
    %p147 = pneg %p146
    // Predicated region
    $region9: #{basic_block_forward.3} parent=5 // pred_check
      _
    $region10: #{basic_block_forward.3} parent=5 // pred_check_branch
      %149 = sbr.rel (%p146) target = $region12
    $region11: #{basic_block_forward.3} parent=5 // pred_region
      %s150 = ssub.s32 %s11, 1
      // Predicated region
      $region13: #{basic_block_forward.3} parent=11 // pred_check
        %p151 = pneg %p58
      $region14: #{basic_block_forward.3} parent=11 // pred_check_branch
        %153 = sbr.rel (%p151) target = $region16
      $region15: #{basic_block_forward.3} parent=11 // pred_region
        _
      $region16: #{basic_block_forward.3} parent=11 // pred_fallthru
        _
    $region12: #{basic_block_forward.3} parent=5 // pred_fallthru
      _
    %p154 = scmp.lt.s32.totalorder %s11, 2
    // Predicated region
    $region17: #{basic_block_forward.3} parent=5 // pred_check
      %p155 = pneg %p154
    $region18: #{basic_block_forward.3} parent=5 // pred_check_branch
      %157 = sbr.rel (%p155) target = $region20
    $region19: #{basic_block_forward.3} parent=5 // pred_region
      // Predicated region
      $region21: #{basic_block_forward.3} parent=19 // pred_check
        %p158 = pneg %p31
      $region22: #{basic_block_forward.3} parent=19 // pred_check_branch
        %160 = sbr.rel (%p158) target = $region24
      $region23: #{basic_block_forward.3} parent=19 // pred_region
        %p161 = scmp.lt.s32.totalorder %s11, 1
        %s162 = scalar_select %p161, %s11, 1
        %s163 = smul.addr %s162, 32
        %s164 = smul.addr %s163, 8
        %s165 = scalar_lea.vmem %s0, %s164
      $region24: #{basic_block_forward.3} parent=19 // pred_fallthru
        _
    $region20: #{basic_block_forward.3} parent=5 // pred_fallthru
      _
    %p166 = scmp.le.s32.totalorder 1, %s11
    %p167 = scmp.lt.s32.totalorder %s11, 3
    %p168 = pnand %p166, %p167
    %p169 = pneg %p168
    // Predicated region
    $region25: #{basic_block_forward.3} parent=5 // pred_check
      _
    $region26: #{basic_block_forward.3} parent=5 // pred_check_branch
      %171 = sbr.rel (%p168) target = $region28
    $region27: #{basic_block_forward.3} parent=5 // pred_region
      %s172 = ssub.s32 %s11, 1
      %p173 = scmp.lt.s32.totalorder %s16, 1
      %s174 = scalar_select %p173, %s16, 1
      %s175 = smul.addr %s174, 32
      %s176 = smul.addr %s175, 8
      %s177 = scalar_lea.vmem %s0, %s176
      %p178 = pneg %p37
      %p179 = pneg %p34
      %p180 = pneg %p58
      %p181 = pneg %p55
      %p182 = pneg %p84
      %p183 = pneg %p81
      %p184 = scmp.lt.s32.totalorder %s16, 1
      %s185 = scalar_select %p184, %s16, 1
      %s186 = smul.addr %s185, 32
      %s187 = smul.addr %s186, 4
      %s188 = scalar_lea.vmem %s2, %s187
      %p189 = pneg %p110
      %p190 = pneg %p107
      %p191 = scmp.lt.s32.totalorder %s16, 1
      %s192 = scalar_select %p191, %s16, 1
      %s193 = scalar_lea.vmem %s3, %s192
      %p194 = pneg %p136
      %p195 = pneg %p133
      %p196 = scmp.lt.s32.totalorder %s16, 1
      %s197 = scalar_select %p196, %s16, 1
      %s198 = scalar_lea.vmem %s4, %s197
      %p199 = scmp.lt.s32.totalorder %s16, 1
      %s200 = scalar_select %p199, %s16, 1
      %s201 = smul.addr %s200, 32
      %s202 = smul.addr %s201, 8
      %s203 = scalar_lea.vmem %s0, %s202
      %p204 = scmp.lt.s32.totalorder %s16, 1
      %s205 = scalar_select %p204, %s16, 1
      %s206 = smul.addr %s205, 32
      %s207 = smul.addr %s206, 4
      %s208 = scalar_lea.vmem %s2, %s207
      %p209 = scmp.lt.s32.totalorder %s16, 1
      %s210 = scalar_select %p209, %s16, 1
      %s211 = scalar_lea.vmem %s3, %s210
      %p212 = scmp.lt.s32.totalorder %s16, 1
      %s213 = scalar_select %p212, %s16, 1
      %s214 = scalar_lea.vmem %s4, %s213
      %v216 = vld [vmem:[%s203] sm:$0xff]
      %v217 = vld [vmem:[%s203 + $0x8] sm:$0xff]
      %v218 = vld [vmem:[%s203 + $0x10] sm:$0xff]
      %v219 = vld [vmem:[%s203 + $0x18] sm:$0xff]
      %v220 = vld [vmem:[%s203 + $0x20] sm:$0xff]
      %v221 = vld [vmem:[%s203 + $0x28] sm:$0xff]
      %v222 = vld [vmem:[%s203 + $0x30] sm:$0xff]
      %v223 = vld [vmem:[%s203 + $0x38] sm:$0xff]
      %v224 = vld [vmem:[%s203 + $0x40] sm:$0xff]
      %v225 = vld [vmem:[%s203 + $0x48] sm:$0xff]
      %v226 = vld [vmem:[%s203 + $0x50] sm:$0xff]
      %v227 = vld [vmem:[%s203 + $0x58] sm:$0xff]
      %v228 = vld [vmem:[%s203 + $0x60] sm:$0xff]
      %v229 = vld [vmem:[%s203 + $0x68] sm:$0xff]
      %v230 = vld [vmem:[%s203 + $0x70] sm:$0xff]
      %v231 = vld [vmem:[%s203 + $0x78] sm:$0xff]
      %v232 = vld [vmem:[%s203 + $0x80] sm:$0xff]
      %v233 = vld [vmem:[%s203 + $0x88] sm:$0xff]
      %v234 = vld [vmem:[%s203 + $0x90] sm:$0xff]
      %v235 = vld [vmem:[%s203 + $0x98] sm:$0xff]
      %v236 = vld [vmem:[%s203 + $0xa0] sm:$0xff]
      %v237 = vld [vmem:[%s203 + $0xa8] sm:$0xff]
      %v238 = vld [vmem:[%s203 + $0xb0] sm:$0xff]
      %v239 = vld [vmem:[%s203 + $0xb8] sm:$0xff]
      %v240 = vld [vmem:[%s203 + $0xc0] sm:$0xff]
      %v241 = vld [vmem:[%s203 + $0xc8] sm:$0xff]
      %v242 = vld [vmem:[%s203 + $0xd0] sm:$0xff]
      %v243 = vld [vmem:[%s203 + $0xd8] sm:$0xff]
      %v244 = vld [vmem:[%s203 + $0xe0] sm:$0xff]
      %v245 = vld [vmem:[%s203 + $0xe8] sm:$0xff]
      %v246 = vld [vmem:[%s203 + $0xf0] sm:$0xff]
      %v247 = vld [vmem:[%s203 + $0xf8] sm:$0xff]
      %vm248 = vcmask 31744
      %249 = vst.msk [vmem:[#allocation2] sm:$0xff] %vm248, 0.0
      %250 = vst.msk [vmem:[#allocation2 + $0x8] sm:$0xff] %vm248, 0.0
      %vm251 = vcmask 25600
      %252 = vst.msk [vmem:[#allocation2 + $0x10] sm:$0x3] %vm251, 0.0
      %253 = vst.msk [vmem:[#allocation2 + $0x18] sm:$0xff] %vm248, 0.0
      %254 = vst.msk [vmem:[#allocation2 + $0x20] sm:$0xff] %vm248, 0.0
      %255 = vst.msk [vmem:[#allocation2 + $0x28] sm:$0x3] %vm251, 0.0
      %256 = vst.msk [vmem:[#allocation2 + $0x30] sm:$0xff] %vm248, 0.0
      %257 = vst.msk [vmem:[#allocation2 + $0x38] sm:$0xff] %vm248, 0.0
      %258 = vst.msk [vmem:[#allocation2 + $0x40] sm:$0x3] %vm251, 0.0
      %259 = vst.msk [vmem:[#allocation2 + $0x48] sm:$0xff] %vm248, 0.0
      %260 = vst.msk [vmem:[#allocation2 + $0x50] sm:$0xff] %vm248, 0.0
      %261 = vst.msk [vmem:[#allocation2 + $0x58] sm:$0x3] %vm251, 0.0
      %262 = vst.msk [vmem:[#allocation2 + $0x60] sm:$0xff] %vm248, 0.0
      %263 = vst.msk [vmem:[#allocation2 + $0x68] sm:$0xff] %vm248, 0.0
      %264 = vst.msk [vmem:[#allocation2 + $0x70] sm:$0x3] %vm251, 0.0
      %265 = vst.msk [vmem:[#allocation2 + $0x78] sm:$0xff] %vm248, 0.0
      %266 = vst.msk [vmem:[#allocation2 + $0x80] sm:$0xff] %vm248, 0.0
      %267 = vst.msk [vmem:[#allocation2 + $0x88] sm:$0x3] %vm251, 0.0
      %268 = vst.msk [vmem:[#allocation2 + $0x90] sm:$0xff] %vm248, 0.0
      %269 = vst.msk [vmem:[#allocation2 + $0x98] sm:$0xff] %vm248, 0.0
      %270 = vst.msk [vmem:[#allocation2 + $0xa0] sm:$0x3] %vm251, 0.0
      %271 = vst.msk [vmem:[#allocation2 + $0xa8] sm:$0xff] %vm248, 0.0
      %272 = vst.msk [vmem:[#allocation2 + $0xb0] sm:$0xff] %vm248, 0.0
      %273 = vst.msk [vmem:[#allocation2 + $0xb8] sm:$0x3] %vm251, 0.0
      %274 = vst.msk [vmem:[#allocation2 + $0xc0] sm:$0xff] %vm248, 0.0
      %275 = vst.msk [vmem:[#allocation2 + $0xc8] sm:$0xff] %vm248, 0.0
      %276 = vst.msk [vmem:[#allocation2 + $0xd0] sm:$0x3] %vm251, 0.0
      %277 = vst.msk [vmem:[#allocation2 + $0xd8] sm:$0xff] %vm248, 0.0
      %278 = vst.msk [vmem:[#allocation2 + $0xe0] sm:$0xff] %vm248, 0.0
      %279 = vst.msk [vmem:[#allocation2 + $0xe8] sm:$0x3] %vm251, 0.0
      %280 = vst.msk [vmem:[#allocation2 + $0xf0] sm:$0xff] %vm248, 0.0
      %281 = vst.msk [vmem:[#allocation2 + $0xf8] sm:$0xff] %vm248, 0.0
      %282 = vst.msk [vmem:[#allocation2 + $0x100] sm:$0x3] %vm251, 0.0
      %283 = vst.msk [vmem:[#allocation2 + $0x108] sm:$0xff] %vm248, 0.0
      %284 = vst.msk [vmem:[#allocation2 + $0x110] sm:$0xff] %vm248, 0.0
      %285 = vst.msk [vmem:[#allocation2 + $0x118] sm:$0x3] %vm251, 0.0
      %286 = vst.msk [vmem:[#allocation2 + $0x120] sm:$0xff] %vm248, 0.0
      %287 = vst.msk [vmem:[#allocation2 + $0x128] sm:$0xff] %vm248, 0.0
      %288 = vst.msk [vmem:[#allocation2 + $0x130] sm:$0x3] %vm251, 0.0
      %289 = vst.msk [vmem:[#allocation2 + $0x138] sm:$0xff] %vm248, 0.0
      %290 = vst.msk [vmem:[#allocation2 + $0x140] sm:$0xff] %vm248, 0.0
      %291 = vst.msk [vmem:[#allocation2 + $0x148] sm:$0x3] %vm251, 0.0
      %292 = vst.msk [vmem:[#allocation2 + $0x150] sm:$0xff] %vm248, 0.0
      %293 = vst.msk [vmem:[#allocation2 + $0x158] sm:$0xff] %vm248, 0.0
      %294 = vst.msk [vmem:[#allocation2 + $0x160] sm:$0x3] %vm251, 0.0
      %295 = vst.msk [vmem:[#allocation2 + $0x168] sm:$0xff] %vm248, 0.0
      %296 = vst.msk [vmem:[#allocation2 + $0x170] sm:$0xff] %vm248, 0.0
      %297 = vst.msk [vmem:[#allocation2 + $0x178] sm:$0x3] %vm251, 0.0
      %298 = vst.msk [vmem:[#allocation2 + $0x180] sm:$0xff] %vm248, 0.0
      %299 = vst.msk [vmem:[#allocation2 + $0x188] sm:$0xff] %vm248, 0.0
      %300 = vst.msk [vmem:[#allocation2 + $0x190] sm:$0x3] %vm251, 0.0
      %301 = vst.msk [vmem:[#allocation2 + $0x198] sm:$0xff] %vm248, 0.0
      %302 = vst.msk [vmem:[#allocation2 + $0x1a0] sm:$0xff] %vm248, 0.0
      %303 = vst.msk [vmem:[#allocation2 + $0x1a8] sm:$0x3] %vm251, 0.0
      %s304 = scalar_lea.vmem [#allocation2], 24
      %305 = vst.msk [vmem:[%s304 + $0x1] sm:$0xff] %vm248, %v216
      %306 = vst.msk [vmem:[%s304 + $0x9] sm:$0xff] %vm248, %v217
      %307 = vst.msk [vmem:[%s304 + $0x19] sm:$0xff] %vm248, %v218
      %308 = vst.msk [vmem:[%s304 + $0x21] sm:$0xff] %vm248, %v219
      %309 = vst.msk [vmem:[%s304 + $0x31] sm:$0xff] %vm248, %v220
      %310 = vst.msk [vmem:[%s304 + $0x39] sm:$0xff] %vm248, %v221
      %311 = vst.msk [vmem:[%s304 + $0x49] sm:$0xff] %vm248, %v222
      %312 = vst.msk [vmem:[%s304 + $0x51] sm:$0xff] %vm248, %v223
      %313 = vst.msk [vmem:[%s304 + $0x61] sm:$0xff] %vm248, %v224
      %314 = vst.msk [vmem:[%s304 + $0x69] sm:$0xff] %vm248, %v225
      %315 = vst.msk [vmem:[%s304 + $0x79] sm:$0xff] %vm248, %v226
      %316 = vst.msk [vmem:[%s304 + $0x81] sm:$0xff] %vm248, %v227
      %317 = vst.msk [vmem:[%s304 + $0x91] sm:$0xff] %vm248, %v228
      %318 = vst.msk [vmem:[%s304 + $0x99] sm:$0xff] %vm248, %v229
      %319 = vst.msk [vmem:[%s304 + $0xa9] sm:$0xff] %vm248, %v230
      %320 = vst.msk [vmem:[%s304 + $0xb1] sm:$0xff] %vm248, %v231
      %321 = vst.msk [vmem:[%s304 + $0xc1] sm:$0xff] %vm248, %v232
      %322 = vst.msk [vmem:[%s304 + $0xc9] sm:$0xff] %vm248, %v233
      %323 = vst.msk [vmem:[%s304 + $0xd9] sm:$0xff] %vm248, %v234
      %324 = vst.msk [vmem:[%s304 + $0xe1] sm:$0xff] %vm248, %v235
      %325 = vst.msk [vmem:[%s304 + $0xf1] sm:$0xff] %vm248, %v236
      %326 = vst.msk [vmem:[%s304 + $0xf9] sm:$0xff] %vm248, %v237
      %327 = vst.msk [vmem:[%s304 + $0x109] sm:$0xff] %vm248, %v238
      %328 = vst.msk [vmem:[%s304 + $0x111] sm:$0xff] %vm248, %v239
      %329 = vst.msk [vmem:[%s304 + $0x121] sm:$0xff] %vm248, %v240
      %330 = vst.msk [vmem:[%s304 + $0x129] sm:$0xff] %vm248, %v241
      %331 = vst.msk [vmem:[%s304 + $0x139] sm:$0xff] %vm248, %v242
      %332 = vst.msk [vmem:[%s304 + $0x141] sm:$0xff] %vm248, %v243
      %333 = vst.msk [vmem:[%s304 + $0x151] sm:$0xff] %vm248, %v244
      %334 = vst.msk [vmem:[%s304 + $0x159] sm:$0xff] %vm248, %v245
      %335 = vst.msk [vmem:[%s304 + $0x169] sm:$0xff] %vm248, %v246
      %336 = vst.msk [vmem:[%s304 + $0x171] sm:$0xff] %vm248, %v247
      %v337 = vld [vmem:[#allocation2] sm:$0xff]
      %v338 = vld [vmem:[#allocation2 + $0x8] sm:$0xff]
      %v339 = vld [vmem:[#allocation2 + $0x10] sm:$0x3]
      %v340 = vld [vmem:[#allocation2 + $0x18] sm:$0xff]
      %v341 = vld [vmem:[#allocation2 + $0x20] sm:$0xff]
      %v342 = vld [vmem:[#allocation2 + $0x28] sm:$0x3]
      %v343 = vld [vmem:[#allocation2 + $0x30] sm:$0xff]
      %v344 = vld [vmem:[#allocation2 + $0x38] sm:$0xff]
      %v345 = vld [vmem:[#allocation2 + $0x40] sm:$0x3]
      %v346 = vld [vmem:[#allocation2 + $0x48] sm:$0xff]
      %v347 = vld [vmem:[#allocation2 + $0x50] sm:$0xff]
      %v348 = vld [vmem:[#allocation2 + $0x58] sm:$0x3]
      %v349 = vld [vmem:[#allocation2 + $0x60] sm:$0xff]
      %v350 = vld [vmem:[#allocation2 + $0x68] sm:$0xff]
      %v351 = vld [vmem:[#allocation2 + $0x70] sm:$0x3]
      %v352 = vld [vmem:[#allocation2 + $0x78] sm:$0xff]
      %v353 = vld [vmem:[#allocation2 + $0x80] sm:$0xff]
      %v354 = vld [vmem:[#allocation2 + $0x88] sm:$0x3]
      %v355 = vld [vmem:[#allocation2 + $0x90] sm:$0xff]
      %v356 = vld [vmem:[#allocation2 + $0x98] sm:$0xff]
      %v357 = vld [vmem:[#allocation2 + $0xa0] sm:$0x3]
      %v358 = vld [vmem:[#allocation2 + $0xa8] sm:$0xff]
      %v359 = vld [vmem:[#allocation2 + $0xb0] sm:$0xff]
      %v360 = vld [vmem:[#allocation2 + $0xb8] sm:$0x3]
      %v361 = vld [vmem:[#allocation2 + $0xc0] sm:$0xff]
      %v362 = vld [vmem:[#allocation2 + $0xc8] sm:$0xff]
      %v363 = vld [vmem:[#allocation2 + $0xd0] sm:$0x3]
      %v364 = vld [vmem:[#allocation2 + $0xd8] sm:$0xff]
      %v365 = vld [vmem:[#allocation2 + $0xe0] sm:$0xff]
      %v366 = vld [vmem:[#allocation2 + $0xe8] sm:$0x3]
      %v367 = vld [vmem:[#allocation2 + $0xf0] sm:$0xff]
      %v368 = vld [vmem:[#allocation2 + $0xf8] sm:$0xff]
      %v369 = vld [vmem:[#allocation2 + $0x100] sm:$0x3]
      %v370 = vld [vmem:[#allocation2 + $0x108] sm:$0xff]
      %v371 = vld [vmem:[#allocation2 + $0x110] sm:$0xff]
      %v372 = vld [vmem:[#allocation2 + $0x118] sm:$0x3]
      %v373 = vld [vmem:[#allocation2 + $0x120] sm:$0xff]
      %v374 = vld [vmem:[#allocation2 + $0x128] sm:$0xff]
      %v375 = vld [vmem:[#allocation2 + $0x130] sm:$0x3]
      %v376 = vld [vmem:[#allocation2 + $0x138] sm:$0xff]
      %v377 = vld [vmem:[#allocation2 + $0x140] sm:$0xff]
      %v378 = vld [vmem:[#allocation2 + $0x148] sm:$0x3]
      %v379 = vld [vmem:[#allocation2 + $0x150] sm:$0xff]
      %v380 = vld [vmem:[#allocation2 + $0x158] sm:$0xff]
      %v381 = vld [vmem:[#allocation2 + $0x160] sm:$0x3]
      %v382 = vld [vmem:[#allocation2 + $0x168] sm:$0xff]
      %v383 = vld [vmem:[#allocation2 + $0x170] sm:$0xff]
      %v384 = vld [vmem:[#allocation2 + $0x178] sm:$0x3]
      %v385 = vld [vmem:[#allocation2 + $0x180] sm:$0xff]
      %v386 = vld [vmem:[#allocation2 + $0x188] sm:$0xff]
      %v387 = vld [vmem:[#allocation2 + $0x190] sm:$0x3]
      %v388 = vld [vmem:[#allocation2 + $0x198] sm:$0xff]
      %v389 = vld [vmem:[#allocation2 + $0x1a0] sm:$0xff]
      %v390 = vld [vmem:[#allocation2 + $0x1a8] sm:$0x3]
      %v391 = vpack.c.bf16 %v338, %v337
      %v392 = vpack.c.bf16 %v339, %v339
      %v393 = vpack.c.bf16 %v341, %v340
      %v394 = vpack.c.bf16 %v342, %v342
      %v395 = vpack.c.bf16 %v344, %v343
      %v396 = vpack.c.bf16 %v345, %v345
      %v397 = vpack.c.bf16 %v347, %v346
      %v398 = vpack.c.bf16 %v348, %v348
      %v399 = vpack.c.bf16 %v350, %v349
      %v400 = vpack.c.bf16 %v351, %v351
      %v401 = vpack.c.bf16 %v353, %v352
      %v402 = vpack.c.bf16 %v354, %v354
      %v403 = vpack.c.bf16 %v356, %v355
      %v404 = vpack.c.bf16 %v357, %v357
      %v405 = vpack.c.bf16 %v359, %v358
      %v406 = vpack.c.bf16 %v360, %v360
      %v407 = vpack.c.bf16 %v362, %v361
      %v408 = vpack.c.bf16 %v363, %v363
      %v409 = vpack.c.bf16 %v365, %v364
      %v410 = vpack.c.bf16 %v366, %v366
      %v411 = vpack.c.bf16 %v368, %v367
      %v412 = vpack.c.bf16 %v369, %v369
      %v413 = vpack.c.bf16 %v371, %v370
      %v414 = vpack.c.bf16 %v372, %v372
      %v415 = vpack.c.bf16 %v374, %v373
      %v416 = vpack.c.bf16 %v375, %v375
      %v417 = vpack.c.bf16 %v377, %v376
      %v418 = vpack.c.bf16 %v378, %v378
      %v419 = vpack.c.bf16 %v380, %v379
      %v420 = vpack.c.bf16 %v381, %v381
      %v421 = vpack.c.bf16 %v383, %v382
      %v422 = vpack.c.bf16 %v384, %v384
      %v423 = vpack.c.bf16 %v386, %v385
      %v424 = vpack.c.bf16 %v387, %v387
      %v425 = vpack.c.bf16 %v389, %v388
      %v426 = vpack.c.bf16 %v390, %v390
      %v427 = vld [vmem:[%s1] sm:$0x3]
      %s428 = scalar_lea.vmem %s1, 2
      %v429 = vld [vmem:[%s428] sm:$0x3]
      %vm430 = vsmask.f32 7424
      %v432 = vshrl.u32 %v391, 16
      %v434 = vshll.u32 %v391, 16
      %v436 = vrot.slane %v434, 1
      %v437 = vor.u32 %v432, %v436
      %v439 = vshll.u32 %v392, 16
      %v441 = vrot.slane %v439, 1
      %v442 = vsel %vm430, %v437, %v441
      %v444 = vshrl.u32 %v393, 16
      %v446 = vshll.u32 %v393, 16
      %v448 = vrot.slane %v446, 1
      %v449 = vor.u32 %v444, %v448
      %v451 = vshll.u32 %v394, 16
      %v453 = vrot.slane %v451, 1
      %v454 = vsel %vm430, %v449, %v453
      %v456 = vshrl.u32 %v395, 16
      %v458 = vshll.u32 %v395, 16
      %v460 = vrot.slane %v458, 1
      %v461 = vor.u32 %v456, %v460
      %v463 = vshll.u32 %v396, 16
      %v465 = vrot.slane %v463, 1
      %v466 = vsel %vm430, %v461, %v465
      %v468 = vshrl.u32 %v397, 16
      %v470 = vshll.u32 %v397, 16
      %v472 = vrot.slane %v470, 1
      %v473 = vor.u32 %v468, %v472
      %v475 = vshll.u32 %v398, 16
      %v477 = vrot.slane %v475, 1
      %v478 = vsel %vm430, %v473, %v477
      %v480 = vshrl.u32 %v399, 16
      %v482 = vshll.u32 %v399, 16
      %v484 = vrot.slane %v482, 1
      %v485 = vor.u32 %v480, %v484
      %v487 = vshll.u32 %v400, 16
      %v489 = vrot.slane %v487, 1
      %v490 = vsel %vm430, %v485, %v489
      %v492 = vshrl.u32 %v401, 16
      %v494 = vshll.u32 %v401, 16
      %v496 = vrot.slane %v494, 1
      %v497 = vor.u32 %v492, %v496
      %v499 = vshll.u32 %v402, 16
      %v501 = vrot.slane %v499, 1
      %v502 = vsel %vm430, %v497, %v501
      %v504 = vshrl.u32 %v403, 16
      %v506 = vshll.u32 %v403, 16
      %v508 = vrot.slane %v506, 1
      %v509 = vor.u32 %v504, %v508
      %v511 = vshll.u32 %v404, 16
      %v513 = vrot.slane %v511, 1
      %v514 = vsel %vm430, %v509, %v513
      %v516 = vshrl.u32 %v405, 16
      %v518 = vshll.u32 %v405, 16
      %v520 = vrot.slane %v518, 1
      %v521 = vor.u32 %v516, %v520
      %v523 = vshll.u32 %v406, 16
      %v525 = vrot.slane %v523, 1
      %v526 = vsel %vm430, %v521, %v525
      %v528 = vshrl.u32 %v407, 16
      %v530 = vshll.u32 %v407, 16
      %v532 = vrot.slane %v530, 1
      %v533 = vor.u32 %v528, %v532
      %v535 = vshll.u32 %v408, 16
      %v537 = vrot.slane %v535, 1
      %v538 = vsel %vm430, %v533, %v537
      %v540 = vshrl.u32 %v409, 16
      %v542 = vshll.u32 %v409, 16
      %v544 = vrot.slane %v542, 1
      %v545 = vor.u32 %v540, %v544
      %v547 = vshll.u32 %v410, 16
      %v549 = vrot.slane %v547, 1
      %v550 = vsel %vm430, %v545, %v549
      %v552 = vshrl.u32 %v411, 16
      %v554 = vshll.u32 %v411, 16
      %v556 = vrot.slane %v554, 1
      %v557 = vor.u32 %v552, %v556
      %v559 = vshll.u32 %v412, 16
      %v561 = vrot.slane %v559, 1
      %v562 = vsel %vm430, %v557, %v561
      %v564 = vshrl.u32 %v413, 16
      %v566 = vshll.u32 %v413, 16
      %v568 = vrot.slane %v566, 1
      %v569 = vor.u32 %v564, %v568
      %v571 = vshll.u32 %v414, 16
      %v573 = vrot.slane %v571, 1
      %v574 = vsel %vm430, %v569, %v573
      %v576 = vshrl.u32 %v415, 16
      %v578 = vshll.u32 %v415, 16
      %v580 = vrot.slane %v578, 1
      %v581 = vor.u32 %v576, %v580
      %v583 = vshll.u32 %v416, 16
      %v585 = vrot.slane %v583, 1
      %v586 = vsel %vm430, %v581, %v585
      %v588 = vshrl.u32 %v417, 16
      %v590 = vshll.u32 %v417, 16
      %v592 = vrot.slane %v590, 1
      %v593 = vor.u32 %v588, %v592
      %v595 = vshll.u32 %v418, 16
      %v597 = vrot.slane %v595, 1
      %v598 = vsel %vm430, %v593, %v597
      %v600 = vshrl.u32 %v419, 16
      %v602 = vshll.u32 %v419, 16
      %v604 = vrot.slane %v602, 1
      %v605 = vor.u32 %v600, %v604
      %v607 = vshll.u32 %v420, 16
      %v609 = vrot.slane %v607, 1
      %v610 = vsel %vm430, %v605, %v609
      %v612 = vshrl.u32 %v421, 16
      %v614 = vshll.u32 %v421, 16
      %v616 = vrot.slane %v614, 1
      %v617 = vor.u32 %v612, %v616
      %v619 = vshll.u32 %v422, 16
      %v621 = vrot.slane %v619, 1
      %v622 = vsel %vm430, %v617, %v621
      %v624 = vsel %vm248, %v442, 0
      %v627 = vsel %vm248, %v454, 0
      %v630 = vsel %vm248, %v466, 0
      %v633 = vsel %vm248, %v478, 0
      %v636 = vsel %vm248, %v490, 0
      %v639 = vsel %vm248, %v502, 0
      %v642 = vsel %vm248, %v514, 0
      %v645 = vsel %vm248, %v526, 0
      %v648 = vsel %vm248, %v538, 0
      %v651 = vsel %vm248, %v550, 0
      %v654 = vsel %vm248, %v562, 0
      %v657 = vsel %vm248, %v574, 0
      %v660 = vsel %vm248, %v586, 0
      %v663 = vsel %vm248, %v598, 0
      %v666 = vsel %vm248, %v610, 0
      %v669 = vsel %vm248, %v622, 0
      %vm671 = vcmask 1041408
      %v673 = vsel %vm671, %v429, 0
      %675 = vmatprep.subr.bf16.mxu0 0
      %676 = vmatpush1.bf16.msra.mxu0 0
      %677 = vmatprep.subr.bf16.mxu0 0
      %678 = vmatpush1.bf16.msra.mxu0 0
      %679 = vmatprep.subr.bf16.mxu0 0
      %680 = vmatpush1.bf16.msra.mxu0 0
      %681 = vmatprep.subr.bf16.mxu0 0
      %682 = vmatpush1.bf16.msra.mxu0 0
      %683 = vmatprep.subr.bf16.mxu0 0
      %684 = vmatpush1.bf16.msra.mxu0 0
      %685 = vmatprep.subr.bf16.mxu0 0
      %686 = vmatpush1.bf16.msra.mxu0 0
      %687 = vmatprep.subr.bf16.mxu0 0
      %688 = vmatpush1.bf16.msra.mxu0 0
      %689 = vmatprep.subr.bf16.mxu0 0
      %690 = vmatpush1.bf16.msra.mxu0 %v673
      %691 = vmatprep.subr.bf16.mxu0 0
      %692 = vmatpush2.bf16.msra.mxu0 0
      %693 = vmatprep.subr.bf16.mxu0 0
      %694 = vmatpush2.bf16.msra.mxu0 0
      %695 = vmatprep.subr.bf16.mxu0 0
      %696 = vmatpush2.bf16.msra.mxu0 0
      %697 = vmatprep.subr.bf16.mxu0 0
      %698 = vmatpush2.bf16.msra.mxu0 0
      %699 = vmatprep.subr.bf16.mxu0 0
      %700 = vmatpush2.bf16.msra.mxu0 0
      %701 = vmatprep.subr.bf16.mxu0 0
      %702 = vmatpush2.bf16.msra.mxu0 0
      %703 = vmatprep.subr.bf16.mxu0 0
      %704 = vmatpush2.bf16.msra.mxu0 0
      %705 = vmatprep.subr.bf16.mxu0 0
      %706 = vmatpush2.bf16.msra.mxu0 0
      %707 = vmatprep.mubr.bf16.mxu0 0
      %708 = vmatmul.mubr.bf16.gmra.mxu0 %v624
      %v709 = vpop.f32.mrf.mxu0
      %v710 = vadd.f32 0.0, %v709
      %v711 = vpop.f32.mrf.mxu0
      %v712 = vpop.f32.mrf.mxu0
      %v713 = vadd.f32 0.0, %v712
      %v714 = vpop.f32.mrf.mxu0
      %715 = vmatprep.mubr.bf16.mxu0 0
      %716 = vmatmul.mubr.bf16.gmra.mxu0 %v627
      %v717 = vpop.f32.mrf.mxu0
      %v718 = vadd.f32 0.0, %v717
      %v719 = vpop.f32.mrf.mxu0
      %v720 = vpop.f32.mrf.mxu0
      %v721 = vadd.f32 0.0, %v720
      %v722 = vpop.f32.mrf.mxu0
      %723 = vmatprep.mubr.bf16.mxu0 0
      %724 = vmatmul.mubr.bf16.gmra.mxu0 %v630
      %v725 = vpop.f32.mrf.mxu0
      %v726 = vadd.f32 0.0, %v725
      %v727 = vpop.f32.mrf.mxu0
      %v728 = vpop.f32.mrf.mxu0
      %v729 = vadd.f32 0.0, %v728
      %v730 = vpop.f32.mrf.mxu0
      %731 = vmatprep.mubr.bf16.mxu0 0
      %732 = vmatmul.mubr.bf16.gmra.mxu0 %v633
      %v733 = vpop.f32.mrf.mxu0
      %v734 = vadd.f32 0.0, %v733
      %v735 = vpop.f32.mrf.mxu0
      %v736 = vpop.f32.mrf.mxu0
      %v737 = vadd.f32 0.0, %v736
      %v738 = vpop.f32.mrf.mxu0
      %739 = vmatprep.mubr.bf16.mxu0 0
      %740 = vmatmul.mubr.bf16.gmra.mxu0 %v636
      %v741 = vpop.f32.mrf.mxu0
      %v742 = vadd.f32 0.0, %v741
      %v743 = vpop.f32.mrf.mxu0
      %v744 = vpop.f32.mrf.mxu0
      %v745 = vadd.f32 0.0, %v744
      %v746 = vpop.f32.mrf.mxu0
      %747 = vmatprep.mubr.bf16.mxu0 0
      %748 = vmatmul.mubr.bf16.gmra.mxu0 %v639
      %v749 = vpop.f32.mrf.mxu0
      %v750 = vadd.f32 0.0, %v749
      %v751 = vpop.f32.mrf.mxu0
      %v752 = vpop.f32.mrf.mxu0
      %v753 = vadd.f32 0.0, %v752
      %v754 = vpop.f32.mrf.mxu0
      %755 = vmatprep.mubr.bf16.mxu0 0
      %756 = vmatmul.mubr.bf16.gmra.mxu0 %v642
      %v757 = vpop.f32.mrf.mxu0
      %v758 = vadd.f32 0.0, %v757
      %v759 = vpop.f32.mrf.mxu0
      %v760 = vpop.f32.mrf.mxu0
      %v761 = vadd.f32 0.0, %v760
      %v762 = vpop.f32.mrf.mxu0
      %763 = vmatprep.mubr.bf16.mxu0 0
      %764 = vmatmul.mubr.bf16.gmra.mxu0 %v645
      %v765 = vpop.f32.mrf.mxu0
      %v766 = vadd.f32 0.0, %v765
      %v767 = vpop.f32.mrf.mxu0
      %v768 = vpop.f32.mrf.mxu0
      %v769 = vadd.f32 0.0, %v768
      %v770 = vpop.f32.mrf.mxu0
      %771 = vmatprep.mubr.bf16.mxu0 0
      %772 = vmatmul.mubr.bf16.gmra.mxu0 %v648
      %v773 = vpop.f32.mrf.mxu0
      %v774 = vadd.f32 0.0, %v773
      %v775 = vpop.f32.mrf.mxu0
      %v776 = vpop.f32.mrf.mxu0
      %v777 = vadd.f32 0.0, %v776
      %v778 = vpop.f32.mrf.mxu0
      %779 = vmatprep.mubr.bf16.mxu0 0
      %780 = vmatmul.mubr.bf16.gmra.mxu0 %v651
      %v781 = vpop.f32.mrf.mxu0
      %v782 = vadd.f32 0.0, %v781
      %v783 = vpop.f32.mrf.mxu0
      %v784 = vpop.f32.mrf.mxu0
      %v785 = vadd.f32 0.0, %v784
      %v786 = vpop.f32.mrf.mxu0
      %787 = vmatprep.mubr.bf16.mxu0 0
      %788 = vmatmul.mubr.bf16.gmra.mxu0 %v654
      %v789 = vpop.f32.mrf.mxu0
      %v790 = vadd.f32 0.0, %v789
      %v791 = vpop.f32.mrf.mxu0
      %v792 = vpop.f32.mrf.mxu0
      %v793 = vadd.f32 0.0, %v792
      %v794 = vpop.f32.mrf.mxu0
      %795 = vmatprep.mubr.bf16.mxu0 0
      %796 = vmatmul.mubr.bf16.gmra.mxu0 %v657
      %v797 = vpop.f32.mrf.mxu0
      %v798 = vadd.f32 0.0, %v797
      %v799 = vpop.f32.mrf.mxu0
      %v800 = vpop.f32.mrf.mxu0
      %v801 = vadd.f32 0.0, %v800
      %v802 = vpop.f32.mrf.mxu0
      %803 = vmatprep.mubr.bf16.mxu0 0
      %804 = vmatmul.mubr.bf16.gmra.mxu0 %v660
      %v805 = vpop.f32.mrf.mxu0
      %v806 = vadd.f32 0.0, %v805
      %v807 = vpop.f32.mrf.mxu0
      %v808 = vpop.f32.mrf.mxu0
      %v809 = vadd.f32 0.0, %v808
      %v810 = vpop.f32.mrf.mxu0
      %811 = vmatprep.mubr.bf16.mxu0 0
      %812 = vmatmul.mubr.bf16.gmra.mxu0 %v663
      %v813 = vpop.f32.mrf.mxu0
      %v814 = vadd.f32 0.0, %v813
      %v815 = vpop.f32.mrf.mxu0
      %v816 = vpop.f32.mrf.mxu0
      %v817 = vadd.f32 0.0, %v816
      %v818 = vpop.f32.mrf.mxu0
      %819 = vmatprep.mubr.bf16.mxu0 0
      %820 = vmatmul.mubr.bf16.gmra.mxu0 %v666
      %v821 = vpop.f32.mrf.mxu0
      %v822 = vadd.f32 0.0, %v821
      %v823 = vpop.f32.mrf.mxu0
      %v824 = vpop.f32.mrf.mxu0
      %v825 = vadd.f32 0.0, %v824
      %v826 = vpop.f32.mrf.mxu0
      %827 = vmatprep.mubr.bf16.mxu0 0
      %828 = vmatmul.mubr.bf16.gmra.mxu0 %v669
      %v829 = vpop.f32.mrf.mxu0
      %v830 = vadd.f32 0.0, %v829
      %v831 = vpop.f32.mrf.mxu0
      %v832 = vpop.f32.mrf.mxu0
      %v833 = vadd.f32 0.0, %v832
      %v834 = vpop.f32.mrf.mxu0
      %835 = vdwg.mxu0
      %v836 = vsel %vm248, %v391, 0
      %v838 = vsel %vm248, %v393, 0
      %v840 = vsel %vm248, %v395, 0
      %v842 = vsel %vm248, %v397, 0
      %v844 = vsel %vm248, %v399, 0
      %v846 = vsel %vm248, %v401, 0
      %v848 = vsel %vm248, %v403, 0
      %v850 = vsel %vm248, %v405, 0
      %v852 = vsel %vm248, %v407, 0
      %v854 = vsel %vm248, %v409, 0
      %v856 = vsel %vm248, %v411, 0
      %v858 = vsel %vm248, %v413, 0
      %v860 = vsel %vm248, %v415, 0
      %v862 = vsel %vm248, %v417, 0
      %v864 = vsel %vm248, %v419, 0
      %v866 = vsel %vm248, %v421, 0
      %v869 = vsel %vm671, %v427, 0
      %871 = vmatprep.subr.bf16.mxu0 0
      %872 = vmatpush1.bf16.msra.mxu0 0
      %873 = vmatprep.subr.bf16.mxu0 0
      %874 = vmatpush1.bf16.msra.mxu0 0
      %875 = vmatprep.subr.bf16.mxu0 0
      %876 = vmatpush1.bf16.msra.mxu0 0
      %877 = vmatprep.subr.bf16.mxu0 0
      %878 = vmatpush1.bf16.msra.mxu0 0
      %879 = vmatprep.subr.bf16.mxu0 0
      %880 = vmatpush1.bf16.msra.mxu0 0
      %881 = vmatprep.subr.bf16.mxu0 0
      %882 = vmatpush1.bf16.msra.mxu0 0
      %883 = vmatprep.subr.bf16.mxu0 0
      %884 = vmatpush1.bf16.msra.mxu0 0
      %885 = vmatprep.subr.bf16.mxu0 0
      %886 = vmatpush1.bf16.msra.mxu0 %v869
      %887 = vmatprep.subr.bf16.mxu0 0
      %888 = vmatpush2.bf16.msra.mxu0 0
      %889 = vmatprep.subr.bf16.mxu0 0
      %890 = vmatpush2.bf16.msra.mxu0 0
      %891 = vmatprep.subr.bf16.mxu0 0
      %892 = vmatpush2.bf16.msra.mxu0 0
      %893 = vmatprep.subr.bf16.mxu0 0
      %894 = vmatpush2.bf16.msra.mxu0 0
      %895 = vmatprep.subr.bf16.mxu0 0
      %896 = vmatpush2.bf16.msra.mxu0 0
      %897 = vmatprep.subr.bf16.mxu0 0
      %898 = vmatpush2.bf16.msra.mxu0 0
      %899 = vmatprep.subr.bf16.mxu0 0
      %900 = vmatpush2.bf16.msra.mxu0 0
      %901 = vmatprep.subr.bf16.mxu0 0
      %902 = vmatpush2.bf16.msra.mxu0 0
      %903 = vmatprep.mubr.bf16.mxu0 0
      %904 = vmatmul.mubr.bf16.gmra.mxu0 %v836
      %v905 = vpop.f32.mrf.mxu0
      %v906 = vadd.f32 %v710, %v905
      %v907 = vpop.f32.mrf.mxu0
      %v908 = vpop.f32.mrf.mxu0
      %v909 = vadd.f32 %v713, %v908
      %v910 = vpop.f32.mrf.mxu0
      %911 = vmatprep.mubr.bf16.mxu0 0
      %912 = vmatmul.mubr.bf16.gmra.mxu0 %v838
      %v913 = vpop.f32.mrf.mxu0
      %v914 = vadd.f32 %v718, %v913
      %v915 = vpop.f32.mrf.mxu0
      %v916 = vpop.f32.mrf.mxu0
      %v917 = vadd.f32 %v721, %v916
      %v918 = vpop.f32.mrf.mxu0
      %919 = vmatprep.mubr.bf16.mxu0 0
      %920 = vmatmul.mubr.bf16.gmra.mxu0 %v840
      %v921 = vpop.f32.mrf.mxu0
      %v922 = vadd.f32 %v726, %v921
      %v923 = vpop.f32.mrf.mxu0
      %v924 = vpop.f32.mrf.mxu0
      %v925 = vadd.f32 %v729, %v924
      %v926 = vpop.f32.mrf.mxu0
      %927 = vmatprep.mubr.bf16.mxu0 0
      %928 = vmatmul.mubr.bf16.gmra.mxu0 %v842
      %v929 = vpop.f32.mrf.mxu0
      %v930 = vadd.f32 %v734, %v929
      %v931 = vpop.f32.mrf.mxu0
      %v932 = vpop.f32.mrf.mxu0
      %v933 = vadd.f32 %v737, %v932
      %v934 = vpop.f32.mrf.mxu0
      %935 = vmatprep.mubr.bf16.mxu0 0
      %936 = vmatmul.mubr.bf16.gmra.mxu0 %v844
      %v937 = vpop.f32.mrf.mxu0
      %v938 = vadd.f32 %v742, %v937
      %v939 = vpop.f32.mrf.mxu0
      %v940 = vpop.f32.mrf.mxu0
      %v941 = vadd.f32 %v745, %v940
      %v942 = vpop.f32.mrf.mxu0
      %943 = vmatprep.mubr.bf16.mxu0 0
      %944 = vmatmul.mubr.bf16.gmra.mxu0 %v846
      %v945 = vpop.f32.mrf.mxu0
      %v946 = vadd.f32 %v750, %v945
      %v947 = vpop.f32.mrf.mxu0
      %v948 = vpop.f32.mrf.mxu0
      %v949 = vadd.f32 %v753, %v948
      %v950 = vpop.f32.mrf.mxu0
      %951 = vmatprep.mubr.bf16.mxu0 0
      %952 = vmatmul.mubr.bf16.gmra.mxu0 %v848
      %v953 = vpop.f32.mrf.mxu0
      %v954 = vadd.f32 %v758, %v953
      %v955 = vpop.f32.mrf.mxu0
      %v956 = vpop.f32.mrf.mxu0
      %v957 = vadd.f32 %v761, %v956
      %v958 = vpop.f32.mrf.mxu0
      %959 = vmatprep.mubr.bf16.mxu0 0
      %960 = vmatmul.mubr.bf16.gmra.mxu0 %v850
      %v961 = vpop.f32.mrf.mxu0
      %v962 = vadd.f32 %v766, %v961
      %v963 = vpop.f32.mrf.mxu0
      %v964 = vpop.f32.mrf.mxu0
      %v965 = vadd.f32 %v769, %v964
      %v966 = vpop.f32.mrf.mxu0
      %967 = vmatprep.mubr.bf16.mxu0 0
      %968 = vmatmul.mubr.bf16.gmra.mxu0 %v852
      %v969 = vpop.f32.mrf.mxu0
      %v970 = vadd.f32 %v774, %v969
      %v971 = vpop.f32.mrf.mxu0
      %v972 = vpop.f32.mrf.mxu0
      %v973 = vadd.f32 %v777, %v972
      %v974 = vpop.f32.mrf.mxu0
      %975 = vmatprep.mubr.bf16.mxu0 0
      %976 = vmatmul.mubr.bf16.gmra.mxu0 %v854
      %v977 = vpop.f32.mrf.mxu0
      %v978 = vadd.f32 %v782, %v977
      %v979 = vpop.f32.mrf.mxu0
      %v980 = vpop.f32.mrf.mxu0
      %v981 = vadd.f32 %v785, %v980
      %v982 = vpop.f32.mrf.mxu0
      %983 = vmatprep.mubr.bf16.mxu0 0
      %984 = vmatmul.mubr.bf16.gmra.mxu0 %v856
      %v985 = vpop.f32.mrf.mxu0
      %v986 = vadd.f32 %v790, %v985
      %v987 = vpop.f32.mrf.mxu0
      %v988 = vpop.f32.mrf.mxu0
      %v989 = vadd.f32 %v793, %v988
      %v990 = vpop.f32.mrf.mxu0
      %991 = vmatprep.mubr.bf16.mxu0 0
      %992 = vmatmul.mubr.bf16.gmra.mxu0 %v858
      %v993 = vpop.f32.mrf.mxu0
      %v994 = vadd.f32 %v798, %v993
      %v995 = vpop.f32.mrf.mxu0
      %v996 = vpop.f32.mrf.mxu0
      %v997 = vadd.f32 %v801, %v996
      %v998 = vpop.f32.mrf.mxu0
      %999 = vmatprep.mubr.bf16.mxu0 0
      %1000 = vmatmul.mubr.bf16.gmra.mxu0 %v860
      %v1001 = vpop.f32.mrf.mxu0
      %v1002 = vadd.f32 %v806, %v1001
      %v1003 = vpop.f32.mrf.mxu0
      %v1004 = vpop.f32.mrf.mxu0
      %v1005 = vadd.f32 %v809, %v1004
      %v1006 = vpop.f32.mrf.mxu0
      %1007 = vmatprep.mubr.bf16.mxu0 0
      %1008 = vmatmul.mubr.bf16.gmra.mxu0 %v862
      %v1009 = vpop.f32.mrf.mxu0
      %v1010 = vadd.f32 %v814, %v1009
      %v1011 = vpop.f32.mrf.mxu0
      %v1012 = vpop.f32.mrf.mxu0
      %v1013 = vadd.f32 %v817, %v1012
      %v1014 = vpop.f32.mrf.mxu0
      %1015 = vmatprep.mubr.bf16.mxu0 0
      %1016 = vmatmul.mubr.bf16.gmra.mxu0 %v864
      %v1017 = vpop.f32.mrf.mxu0
      %v1018 = vadd.f32 %v822, %v1017
      %v1019 = vpop.f32.mrf.mxu0
      %v1020 = vpop.f32.mrf.mxu0
      %v1021 = vadd.f32 %v825, %v1020
      %v1022 = vpop.f32.mrf.mxu0
      %1023 = vmatprep.mubr.bf16.mxu0 0
      %1024 = vmatmul.mubr.bf16.gmra.mxu0 %v866
      %v1025 = vpop.f32.mrf.mxu0
      %v1026 = vadd.f32 %v830, %v1025
      %v1027 = vpop.f32.mrf.mxu0
      %v1028 = vpop.f32.mrf.mxu0
      %v1029 = vadd.f32 %v833, %v1028
      %v1030 = vpop.f32.mrf.mxu0
      %1031 = vdwg.mxu0
      %s1032 = scalar_lea.vmem %s1, 4
      %v1033 = vld [vmem:[%s1032] sm:$0x3]
      %vm1066 = vcmask 1046528
      %v1067 = vrot.slane %v391, 1
      %v1068 = vrot.slane %v392, 1
      %v1069 = vsel %vm1066, %v1067, %v1068
      %v1070 = vrot.slane %v393, 1
      %v1071 = vrot.slane %v394, 1
      %v1072 = vsel %vm1066, %v1070, %v1071
      %v1073 = vrot.slane %v395, 1
      %v1074 = vrot.slane %v396, 1
      %v1075 = vsel %vm1066, %v1073, %v1074
      %v1076 = vrot.slane %v397, 1
      %v1077 = vrot.slane %v398, 1
      %v1078 = vsel %vm1066, %v1076, %v1077
      %v1079 = vrot.slane %v399, 1
      %v1080 = vrot.slane %v400, 1
      %v1081 = vsel %vm1066, %v1079, %v1080
      %v1082 = vrot.slane %v401, 1
      %v1083 = vrot.slane %v402, 1
      %v1084 = vsel %vm1066, %v1082, %v1083
      %v1085 = vrot.slane %v403, 1
      %v1086 = vrot.slane %v404, 1
      %v1087 = vsel %vm1066, %v1085, %v1086
      %v1088 = vrot.slane %v405, 1
      %v1089 = vrot.slane %v406, 1
      %v1090 = vsel %vm1066, %v1088, %v1089
      %v1091 = vrot.slane %v407, 1
      %v1092 = vrot.slane %v408, 1
      %v1093 = vsel %vm1066, %v1091, %v1092
      %v1094 = vrot.slane %v409, 1
      %v1095 = vrot.slane %v410, 1
      %v1096 = vsel %vm1066, %v1094, %v1095
      %v1097 = vrot.slane %v411, 1
      %v1098 = vrot.slane %v412, 1
      %v1099 = vsel %vm1066, %v1097, %v1098
      %v1100 = vrot.slane %v413, 1
      %v1101 = vrot.slane %v414, 1
      %v1102 = vsel %vm1066, %v1100, %v1101
      %v1103 = vrot.slane %v415, 1
      %v1104 = vrot.slane %v416, 1
      %v1105 = vsel %vm1066, %v1103, %v1104
      %v1106 = vrot.slane %v417, 1
      %v1107 = vrot.slane %v418, 1
      %v1108 = vsel %vm1066, %v1106, %v1107
      %v1109 = vrot.slane %v419, 1
      %v1110 = vrot.slane %v420, 1
      %v1111 = vsel %vm1066, %v1109, %v1110
      %v1112 = vrot.slane %v421, 1
      %v1113 = vrot.slane %v422, 1
      %v1114 = vsel %vm1066, %v1112, %v1113
      %v1116 = vsel %vm248, %v1069, 0
      %v1119 = vsel %vm248, %v1072, 0
      %v1122 = vsel %vm248, %v1075, 0
      %v1125 = vsel %vm248, %v1078, 0
      %v1128 = vsel %vm248, %v1081, 0
      %v1131 = vsel %vm248, %v1084, 0
      %v1134 = vsel %vm248, %v1087, 0
      %v1137 = vsel %vm248, %v1090, 0
      %v1140 = vsel %vm248, %v1093, 0
      %v1143 = vsel %vm248, %v1096, 0
      %v1146 = vsel %vm248, %v1099, 0
      %v1149 = vsel %vm248, %v1102, 0
      %v1152 = vsel %vm248, %v1105, 0
      %v1155 = vsel %vm248, %v1108, 0
      %v1158 = vsel %vm248, %v1111, 0
      %v1161 = vsel %vm248, %v1114, 0
      %v1164 = vsel %vm671, %v1033, 0
      %1166 = vmatprep.subr.bf16.mxu0 0
      %1167 = vmatpush1.bf16.msra.mxu0 0
      %1168 = vmatprep.subr.bf16.mxu0 0
      %1169 = vmatpush1.bf16.msra.mxu0 0
      %1170 = vmatprep.subr.bf16.mxu0 0
      %1171 = vmatpush1.bf16.msra.mxu0 0
      %1172 = vmatprep.subr.bf16.mxu0 0
      %1173 = vmatpush1.bf16.msra.mxu0 0
      %1174 = vmatprep.subr.bf16.mxu0 0
      %1175 = vmatpush1.bf16.msra.mxu0 0
      %1176 = vmatprep.subr.bf16.mxu0 0
      %1177 = vmatpush1.bf16.msra.mxu0 0
      %1178 = vmatprep.subr.bf16.mxu0 0
      %1179 = vmatpush1.bf16.msra.mxu0 0
      %1180 = vmatprep.subr.bf16.mxu0 0
      %1181 = vmatpush1.bf16.msra.mxu0 %v1164
      %1182 = vmatprep.subr.bf16.mxu0 0
      %1183 = vmatpush2.bf16.msra.mxu0 0
      %1184 = vmatprep.subr.bf16.mxu0 0
      %1185 = vmatpush2.bf16.msra.mxu0 0
      %1186 = vmatprep.subr.bf16.mxu0 0
      %1187 = vmatpush2.bf16.msra.mxu0 0
      %1188 = vmatprep.subr.bf16.mxu0 0
      %1189 = vmatpush2.bf16.msra.mxu0 0
      %1190 = vmatprep.subr.bf16.mxu0 0
      %1191 = vmatpush2.bf16.msra.mxu0 0
      %1192 = vmatprep.subr.bf16.mxu0 0
      %1193 = vmatpush2.bf16.msra.mxu0 0
      %1194 = vmatprep.subr.bf16.mxu0 0
      %1195 = vmatpush2.bf16.msra.mxu0 0
      %1196 = vmatprep.subr.bf16.mxu0 0
      %1197 = vmatpush2.bf16.msra.mxu0 0
      %1198 = vmatprep.mubr.bf16.mxu0 0
      %1199 = vmatmul.mubr.bf16.gmra.mxu0 %v1116
      %v1200 = vpop.f32.mrf.mxu0
      %v1201 = vadd.f32 0.0, %v1200
      %v1202 = vpop.f32.mrf.mxu0
      %v1203 = vpop.f32.mrf.mxu0
      %v1204 = vadd.f32 0.0, %v1203
      %v1205 = vpop.f32.mrf.mxu0
      %1206 = vmatprep.mubr.bf16.mxu0 0
      %1207 = vmatmul.mubr.bf16.gmra.mxu0 %v1119
      %v1208 = vpop.f32.mrf.mxu0
      %v1209 = vadd.f32 0.0, %v1208
      %v1210 = vpop.f32.mrf.mxu0
      %v1211 = vpop.f32.mrf.mxu0
      %v1212 = vadd.f32 0.0, %v1211
      %v1213 = vpop.f32.mrf.mxu0
      %1214 = vmatprep.mubr.bf16.mxu0 0
      %1215 = vmatmul.mubr.bf16.gmra.mxu0 %v1122
      %v1216 = vpop.f32.mrf.mxu0
      %v1217 = vadd.f32 0.0, %v1216
      %v1218 = vpop.f32.mrf.mxu0
      %v1219 = vpop.f32.mrf.mxu0
      %v1220 = vadd.f32 0.0, %v1219
      %v1221 = vpop.f32.mrf.mxu0
      %1222 = vmatprep.mubr.bf16.mxu0 0
      %1223 = vmatmul.mubr.bf16.gmra.mxu0 %v1125
      %v1224 = vpop.f32.mrf.mxu0
      %v1225 = vadd.f32 0.0, %v1224
      %v1226 = vpop.f32.mrf.mxu0
      %v1227 = vpop.f32.mrf.mxu0
      %v1228 = vadd.f32 0.0, %v1227
      %v1229 = vpop.f32.mrf.mxu0
      %1230 = vmatprep.mubr.bf16.mxu0 0
      %1231 = vmatmul.mubr.bf16.gmra.mxu0 %v1128
      %v1232 = vpop.f32.mrf.mxu0
      %v1233 = vadd.f32 0.0, %v1232
      %v1234 = vpop.f32.mrf.mxu0
      %v1235 = vpop.f32.mrf.mxu0
      %v1236 = vadd.f32 0.0, %v1235
      %v1237 = vpop.f32.mrf.mxu0
      %1238 = vmatprep.mubr.bf16.mxu0 0
      %1239 = vmatmul.mubr.bf16.gmra.mxu0 %v1131
      %v1240 = vpop.f32.mrf.mxu0
      %v1241 = vadd.f32 0.0, %v1240
      %v1242 = vpop.f32.mrf.mxu0
      %v1243 = vpop.f32.mrf.mxu0
      %v1244 = vadd.f32 0.0, %v1243
      %v1245 = vpop.f32.mrf.mxu0
      %1246 = vmatprep.mubr.bf16.mxu0 0
      %1247 = vmatmul.mubr.bf16.gmra.mxu0 %v1134
      %v1248 = vpop.f32.mrf.mxu0
      %v1249 = vadd.f32 0.0, %v1248
      %v1250 = vpop.f32.mrf.mxu0
      %v1251 = vpop.f32.mrf.mxu0
      %v1252 = vadd.f32 0.0, %v1251
      %v1253 = vpop.f32.mrf.mxu0
      %1254 = vmatprep.mubr.bf16.mxu0 0
      %1255 = vmatmul.mubr.bf16.gmra.mxu0 %v1137
      %v1256 = vpop.f32.mrf.mxu0
      %v1257 = vadd.f32 0.0, %v1256
      %v1258 = vpop.f32.mrf.mxu0
      %v1259 = vpop.f32.mrf.mxu0
      %v1260 = vadd.f32 0.0, %v1259
      %v1261 = vpop.f32.mrf.mxu0
      %1262 = vmatprep.mubr.bf16.mxu0 0
      %1263 = vmatmul.mubr.bf16.gmra.mxu0 %v1140
      %v1264 = vpop.f32.mrf.mxu0
      %v1265 = vadd.f32 0.0, %v1264
      %v1266 = vpop.f32.mrf.mxu0
      %v1267 = vpop.f32.mrf.mxu0
      %v1268 = vadd.f32 0.0, %v1267
      %v1269 = vpop.f32.mrf.mxu0
      %1270 = vmatprep.mubr.bf16.mxu0 0
      %1271 = vmatmul.mubr.bf16.gmra.mxu0 %v1143
      %v1272 = vpop.f32.mrf.mxu0
      %v1273 = vadd.f32 0.0, %v1272
      %v1274 = vpop.f32.mrf.mxu0
      %v1275 = vpop.f32.mrf.mxu0
      %v1276 = vadd.f32 0.0, %v1275
      %v1277 = vpop.f32.mrf.mxu0
      %1278 = vmatprep.mubr.bf16.mxu0 0
      %1279 = vmatmul.mubr.bf16.gmra.mxu0 %v1146
      %v1280 = vpop.f32.mrf.mxu0
      %v1281 = vadd.f32 0.0, %v1280
      %v1282 = vpop.f32.mrf.mxu0
      %v1283 = vpop.f32.mrf.mxu0
      %v1284 = vadd.f32 0.0, %v1283
      %v1285 = vpop.f32.mrf.mxu0
      %1286 = vmatprep.mubr.bf16.mxu0 0
      %1287 = vmatmul.mubr.bf16.gmra.mxu0 %v1149
      %v1288 = vpop.f32.mrf.mxu0
      %v1289 = vadd.f32 0.0, %v1288
      %v1290 = vpop.f32.mrf.mxu0
      %v1291 = vpop.f32.mrf.mxu0
      %v1292 = vadd.f32 0.0, %v1291
      %v1293 = vpop.f32.mrf.mxu0
      %1294 = vmatprep.mubr.bf16.mxu0 0
      %1295 = vmatmul.mubr.bf16.gmra.mxu0 %v1152
      %v1296 = vpop.f32.mrf.mxu0
      %v1297 = vadd.f32 0.0, %v1296
      %v1298 = vpop.f32.mrf.mxu0
      %v1299 = vpop.f32.mrf.mxu0
      %v1300 = vadd.f32 0.0, %v1299
      %v1301 = vpop.f32.mrf.mxu0
      %1302 = vmatprep.mubr.bf16.mxu0 0
      %1303 = vmatmul.mubr.bf16.gmra.mxu0 %v1155
      %v1304 = vpop.f32.mrf.mxu0
      %v1305 = vadd.f32 0.0, %v1304
      %v1306 = vpop.f32.mrf.mxu0
      %v1307 = vpop.f32.mrf.mxu0
      %v1308 = vadd.f32 0.0, %v1307
      %v1309 = vpop.f32.mrf.mxu0
      %1310 = vmatprep.mubr.bf16.mxu0 0
      %1311 = vmatmul.mubr.bf16.gmra.mxu0 %v1158
      %v1312 = vpop.f32.mrf.mxu0
      %v1313 = vadd.f32 0.0, %v1312
      %v1314 = vpop.f32.mrf.mxu0
      %v1315 = vpop.f32.mrf.mxu0
      %v1316 = vadd.f32 0.0, %v1315
      %v1317 = vpop.f32.mrf.mxu0
      %1318 = vmatprep.mubr.bf16.mxu0 0
      %1319 = vmatmul.mubr.bf16.gmra.mxu0 %v1161
      %v1320 = vpop.f32.mrf.mxu0
      %v1321 = vadd.f32 0.0, %v1320
      %v1322 = vpop.f32.mrf.mxu0
      %v1323 = vpop.f32.mrf.mxu0
      %v1324 = vadd.f32 0.0, %v1323
      %v1325 = vpop.f32.mrf.mxu0
      %1326 = vdwg.mxu0
      %v1327 = vadd.f32 %v906, %v1201
      %v1328 = vadd.f32 %v909, %v1204
      %v1329 = vadd.f32 %v914, %v1209
      %v1330 = vadd.f32 %v917, %v1212
      %v1331 = vadd.f32 %v922, %v1217
      %v1332 = vadd.f32 %v925, %v1220
      %v1333 = vadd.f32 %v930, %v1225
      %v1334 = vadd.f32 %v933, %v1228
      %v1335 = vadd.f32 %v938, %v1233
      %v1336 = vadd.f32 %v941, %v1236
      %v1337 = vadd.f32 %v946, %v1241
      %v1338 = vadd.f32 %v949, %v1244
      %v1339 = vadd.f32 %v954, %v1249
      %v1340 = vadd.f32 %v957, %v1252
      %v1341 = vadd.f32 %v962, %v1257
      %v1342 = vadd.f32 %v965, %v1260
      %v1343 = vadd.f32 %v970, %v1265
      %v1344 = vadd.f32 %v973, %v1268
      %v1345 = vadd.f32 %v978, %v1273
      %v1346 = vadd.f32 %v981, %v1276
      %v1347 = vadd.f32 %v986, %v1281
      %v1348 = vadd.f32 %v989, %v1284
      %v1349 = vadd.f32 %v994, %v1289
      %v1350 = vadd.f32 %v997, %v1292
      %v1351 = vadd.f32 %v1002, %v1297
      %v1352 = vadd.f32 %v1005, %v1300
      %v1353 = vadd.f32 %v1010, %v1305
      %v1354 = vadd.f32 %v1013, %v1308
      %v1355 = vadd.f32 %v1018, %v1313
      %v1356 = vadd.f32 %v1021, %v1316
      %v1357 = vadd.f32 %v1026, %v1321
      %v1358 = vadd.f32 %v1029, %v1324
      %s1359 = scalar_lea.vmem %s1, 6
      %v1360 = vld [vmem:[%s1359] sm:$0x3]
      %v1362 = vsel %vm248, %v423, 0
      %v1365 = vsel %vm671, %v1360, 0
      %1367 = vmatprep.subr.bf16.mxu0 0
      %1368 = vmatpush1.bf16.msra.mxu0 0
      %1369 = vmatprep.subr.bf16.mxu0 0
      %1370 = vmatpush1.bf16.msra.mxu0 0
      %1371 = vmatprep.subr.bf16.mxu0 0
      %1372 = vmatpush1.bf16.msra.mxu0 0
      %1373 = vmatprep.subr.bf16.mxu0 0
      %1374 = vmatpush1.bf16.msra.mxu0 0
      %1375 = vmatprep.subr.bf16.mxu0 0
      %1376 = vmatpush1.bf16.msra.mxu0 0
      %1377 = vmatprep.subr.bf16.mxu0 0
      %1378 = vmatpush1.bf16.msra.mxu0 0
      %1379 = vmatprep.subr.bf16.mxu0 0
      %1380 = vmatpush1.bf16.msra.mxu0 0
      %1381 = vmatprep.subr.bf16.mxu0 0
      %1382 = vmatpush1.bf16.msra.mxu0 %v1365
      %1383 = vmatprep.subr.bf16.mxu0 0
      %1384 = vmatpush2.bf16.msra.mxu0 0
      %1385 = vmatprep.subr.bf16.mxu0 0
      %1386 = vmatpush2.bf16.msra.mxu0 0
      %1387 = vmatprep.subr.bf16.mxu0 0
      %1388 = vmatpush2.bf16.msra.mxu0 0
      %1389 = vmatprep.subr.bf16.mxu0 0
      %1390 = vmatpush2.bf16.msra.mxu0 0
      %1391 = vmatprep.subr.bf16.mxu0 0
      %1392 = vmatpush2.bf16.msra.mxu0 0
      %1393 = vmatprep.subr.bf16.mxu0 0
      %1394 = vmatpush2.bf16.msra.mxu0 0
      %1395 = vmatprep.subr.bf16.mxu0 0
      %1396 = vmatpush2.bf16.msra.mxu0 0
      %1397 = vmatprep.subr.bf16.mxu0 0
      %1398 = vmatpush2.bf16.msra.mxu0 0
      %1399 = vmatprep.mubr.bf16.mxu0 0
      %1400 = vmatmul.mubr.bf16.gmra.mxu0 %v838
      %v1401 = vpop.f32.mrf.mxu0
      %v1402 = vadd.f32 0.0, %v1401
      %v1403 = vpop.f32.mrf.mxu0
      %v1404 = vpop.f32.mrf.mxu0
      %v1405 = vadd.f32 0.0, %v1404
      %v1406 = vpop.f32.mrf.mxu0
      %1407 = vmatprep.mubr.bf16.mxu0 0
      %1408 = vmatmul.mubr.bf16.gmra.mxu0 %v840
      %v1409 = vpop.f32.mrf.mxu0
      %v1410 = vadd.f32 0.0, %v1409
      %v1411 = vpop.f32.mrf.mxu0
      %v1412 = vpop.f32.mrf.mxu0
      %v1413 = vadd.f32 0.0, %v1412
      %v1414 = vpop.f32.mrf.mxu0
      %1415 = vmatprep.mubr.bf16.mxu0 0
      %1416 = vmatmul.mubr.bf16.gmra.mxu0 %v842
      %v1417 = vpop.f32.mrf.mxu0
      %v1418 = vadd.f32 0.0, %v1417
      %v1419 = vpop.f32.mrf.mxu0
      %v1420 = vpop.f32.mrf.mxu0
      %v1421 = vadd.f32 0.0, %v1420
      %v1422 = vpop.f32.mrf.mxu0
      %1423 = vmatprep.mubr.bf16.mxu0 0
      %1424 = vmatmul.mubr.bf16.gmra.mxu0 %v844
      %v1425 = vpop.f32.mrf.mxu0
      %v1426 = vadd.f32 0.0, %v1425
      %v1427 = vpop.f32.mrf.mxu0
      %v1428 = vpop.f32.mrf.mxu0
      %v1429 = vadd.f32 0.0, %v1428
      %v1430 = vpop.f32.mrf.mxu0
      %1431 = vmatprep.mubr.bf16.mxu0 0
      %1432 = vmatmul.mubr.bf16.gmra.mxu0 %v846
      %v1433 = vpop.f32.mrf.mxu0
      %v1434 = vadd.f32 0.0, %v1433
      %v1435 = vpop.f32.mrf.mxu0
      %v1436 = vpop.f32.mrf.mxu0
      %v1437 = vadd.f32 0.0, %v1436
      %v1438 = vpop.f32.mrf.mxu0
      %1439 = vmatprep.mubr.bf16.mxu0 0
      %1440 = vmatmul.mubr.bf16.gmra.mxu0 %v848
      %v1441 = vpop.f32.mrf.mxu0
      %v1442 = vadd.f32 0.0, %v1441
      %v1443 = vpop.f32.mrf.mxu0
      %v1444 = vpop.f32.mrf.mxu0
      %v1445 = vadd.f32 0.0, %v1444
      %v1446 = vpop.f32.mrf.mxu0
      %1447 = vmatprep.mubr.bf16.mxu0 0
      %1448 = vmatmul.mubr.bf16.gmra.mxu0 %v850
      %v1449 = vpop.f32.mrf.mxu0
      %v1450 = vadd.f32 0.0, %v1449
      %v1451 = vpop.f32.mrf.mxu0
      %v1452 = vpop.f32.mrf.mxu0
      %v1453 = vadd.f32 0.0, %v1452
      %v1454 = vpop.f32.mrf.mxu0
      %1455 = vmatprep.mubr.bf16.mxu0 0
      %1456 = vmatmul.mubr.bf16.gmra.mxu0 %v852
      %v1457 = vpop.f32.mrf.mxu0
      %v1458 = vadd.f32 0.0, %v1457
      %v1459 = vpop.f32.mrf.mxu0
      %v1460 = vpop.f32.mrf.mxu0
      %v1461 = vadd.f32 0.0, %v1460
      %v1462 = vpop.f32.mrf.mxu0
      %1463 = vmatprep.mubr.bf16.mxu0 0
      %1464 = vmatmul.mubr.bf16.gmra.mxu0 %v854
      %v1465 = vpop.f32.mrf.mxu0
      %v1466 = vadd.f32 0.0, %v1465
      %v1467 = vpop.f32.mrf.mxu0
      %v1468 = vpop.f32.mrf.mxu0
      %v1469 = vadd.f32 0.0, %v1468
      %v1470 = vpop.f32.mrf.mxu0
      %1471 = vmatprep.mubr.bf16.mxu0 0
      %1472 = vmatmul.mubr.bf16.gmra.mxu0 %v856
      %v1473 = vpop.f32.mrf.mxu0
      %v1474 = vadd.f32 0.0, %v1473
      %v1475 = vpop.f32.mrf.mxu0
      %v1476 = vpop.f32.mrf.mxu0
      %v1477 = vadd.f32 0.0, %v1476
      %v1478 = vpop.f32.mrf.mxu0
      %1479 = vmatprep.mubr.bf16.mxu0 0
      %1480 = vmatmul.mubr.bf16.gmra.mxu0 %v858
      %v1481 = vpop.f32.mrf.mxu0
      %v1482 = vadd.f32 0.0, %v1481
      %v1483 = vpop.f32.mrf.mxu0
      %v1484 = vpop.f32.mrf.mxu0
      %v1485 = vadd.f32 0.0, %v1484
      %v1486 = vpop.f32.mrf.mxu0
      %1487 = vmatprep.mubr.bf16.mxu0 0
      %1488 = vmatmul.mubr.bf16.gmra.mxu0 %v860
      %v1489 = vpop.f32.mrf.mxu0
      %v1490 = vadd.f32 0.0, %v1489
      %v1491 = vpop.f32.mrf.mxu0
      %v1492 = vpop.f32.mrf.mxu0
      %v1493 = vadd.f32 0.0, %v1492
      %v1494 = vpop.f32.mrf.mxu0
      %1495 = vmatprep.mubr.bf16.mxu0 0
      %1496 = vmatmul.mubr.bf16.gmra.mxu0 %v862
      %v1497 = vpop.f32.mrf.mxu0
      %v1498 = vadd.f32 0.0, %v1497
      %v1499 = vpop.f32.mrf.mxu0
      %v1500 = vpop.f32.mrf.mxu0
      %v1501 = vadd.f32 0.0, %v1500
      %v1502 = vpop.f32.mrf.mxu0
      %1503 = vmatprep.mubr.bf16.mxu0 0
      %1504 = vmatmul.mubr.bf16.gmra.mxu0 %v864
      %v1505 = vpop.f32.mrf.mxu0
      %v1506 = vadd.f32 0.0, %v1505
      %v1507 = vpop.f32.mrf.mxu0
      %v1508 = vpop.f32.mrf.mxu0
      %v1509 = vadd.f32 0.0, %v1508
      %v1510 = vpop.f32.mrf.mxu0
      %1511 = vmatprep.mubr.bf16.mxu0 0
      %1512 = vmatmul.mubr.bf16.gmra.mxu0 %v866
      %v1513 = vpop.f32.mrf.mxu0
      %v1514 = vadd.f32 0.0, %v1513
      %v1515 = vpop.f32.mrf.mxu0
      %v1516 = vpop.f32.mrf.mxu0
      %v1517 = vadd.f32 0.0, %v1516
      %v1518 = vpop.f32.mrf.mxu0
      %1519 = vmatprep.mubr.bf16.mxu0 0
      %1520 = vmatmul.mubr.bf16.gmra.mxu0 %v1362
      %v1521 = vpop.f32.mrf.mxu0
      %v1522 = vadd.f32 0.0, %v1521
      %v1523 = vpop.f32.mrf.mxu0
      %v1524 = vpop.f32.mrf.mxu0
      %v1525 = vadd.f32 0.0, %v1524
      %v1526 = vpop.f32.mrf.mxu0
      %1527 = vdwg.mxu0
      %v1528 = vadd.f32 %v1327, %v1402
      %v1529 = vadd.f32 %v1328, %v1405
      %v1530 = vadd.f32 %v1329, %v1410
      %v1531 = vadd.f32 %v1330, %v1413
      %v1532 = vadd.f32 %v1331, %v1418
      %v1533 = vadd.f32 %v1332, %v1421
      %v1534 = vadd.f32 %v1333, %v1426
      %v1535 = vadd.f32 %v1334, %v1429
      %v1536 = vadd.f32 %v1335, %v1434
      %v1537 = vadd.f32 %v1336, %v1437
      %v1538 = vadd.f32 %v1337, %v1442
      %v1539 = vadd.f32 %v1338, %v1445
      %v1540 = vadd.f32 %v1339, %v1450
      %v1541 = vadd.f32 %v1340, %v1453
      %v1542 = vadd.f32 %v1341, %v1458
      %v1543 = vadd.f32 %v1342, %v1461
      %v1544 = vadd.f32 %v1343, %v1466
      %v1545 = vadd.f32 %v1344, %v1469
      %v1546 = vadd.f32 %v1345, %v1474
      %v1547 = vadd.f32 %v1346, %v1477
      %v1548 = vadd.f32 %v1347, %v1482
      %v1549 = vadd.f32 %v1348, %v1485
      %v1550 = vadd.f32 %v1349, %v1490
      %v1551 = vadd.f32 %v1350, %v1493
      %v1552 = vadd.f32 %v1351, %v1498
      %v1553 = vadd.f32 %v1352, %v1501
      %v1554 = vadd.f32 %v1353, %v1506
      %v1555 = vadd.f32 %v1354, %v1509
      %v1556 = vadd.f32 %v1355, %v1514
      %v1557 = vadd.f32 %v1356, %v1517
      %v1558 = vadd.f32 %v1357, %v1522
      %v1559 = vadd.f32 %v1358, %v1525
      %s1560 = scalar_lea.vmem %s1, 8
      %v1561 = vld [vmem:[%s1560] sm:$0x3]
      %v1562 = vshrl.u32 %v423, 16
      %v1564 = vshll.u32 %v423, 16
      %v1566 = vrot.slane %v1564, 1
      %v1567 = vor.u32 %v1562, %v1566
      %v1569 = vshll.u32 %v424, 16
      %v1571 = vrot.slane %v1569, 1
      %v1572 = vsel %vm430, %v1567, %v1571
      %v1574 = vsel %vm248, %v1572, 0
      %v1577 = vsel %vm671, %v1561, 0
      %1579 = vmatprep.subr.bf16.mxu0 0
      %1580 = vmatpush1.bf16.msra.mxu0 0
      %1581 = vmatprep.subr.bf16.mxu0 0
      %1582 = vmatpush1.bf16.msra.mxu0 0
      %1583 = vmatprep.subr.bf16.mxu0 0
      %1584 = vmatpush1.bf16.msra.mxu0 0
      %1585 = vmatprep.subr.bf16.mxu0 0
      %1586 = vmatpush1.bf16.msra.mxu0 0
      %1587 = vmatprep.subr.bf16.mxu0 0
      %1588 = vmatpush1.bf16.msra.mxu0 0
      %1589 = vmatprep.subr.bf16.mxu0 0
      %1590 = vmatpush1.bf16.msra.mxu0 0
      %1591 = vmatprep.subr.bf16.mxu0 0
      %1592 = vmatpush1.bf16.msra.mxu0 0
      %1593 = vmatprep.subr.bf16.mxu0 0
      %1594 = vmatpush1.bf16.msra.mxu0 %v1577
      %1595 = vmatprep.subr.bf16.mxu0 0
      %1596 = vmatpush2.bf16.msra.mxu0 0
      %1597 = vmatprep.subr.bf16.mxu0 0
      %1598 = vmatpush2.bf16.msra.mxu0 0
      %1599 = vmatprep.subr.bf16.mxu0 0
      %1600 = vmatpush2.bf16.msra.mxu0 0
      %1601 = vmatprep.subr.bf16.mxu0 0
      %1602 = vmatpush2.bf16.msra.mxu0 0
      %1603 = vmatprep.subr.bf16.mxu0 0
      %1604 = vmatpush2.bf16.msra.mxu0 0
      %1605 = vmatprep.subr.bf16.mxu0 0
      %1606 = vmatpush2.bf16.msra.mxu0 0
      %1607 = vmatprep.subr.bf16.mxu0 0
      %1608 = vmatpush2.bf16.msra.mxu0 0
      %1609 = vmatprep.subr.bf16.mxu0 0
      %1610 = vmatpush2.bf16.msra.mxu0 0
      %1611 = vmatprep.mubr.bf16.mxu0 0
      %1612 = vmatmul.mubr.bf16.gmra.mxu0 %v627
      %v1613 = vpop.f32.mrf.mxu0
      %v1614 = vadd.f32 0.0, %v1613
      %v1615 = vpop.f32.mrf.mxu0
      %v1616 = vpop.f32.mrf.mxu0
      %v1617 = vadd.f32 0.0, %v1616
      %v1618 = vpop.f32.mrf.mxu0
      %1619 = vmatprep.mubr.bf16.mxu0 0
      %1620 = vmatmul.mubr.bf16.gmra.mxu0 %v630
      %v1621 = vpop.f32.mrf.mxu0
      %v1622 = vadd.f32 0.0, %v1621
      %v1623 = vpop.f32.mrf.mxu0
      %v1624 = vpop.f32.mrf.mxu0
      %v1625 = vadd.f32 0.0, %v1624
      %v1626 = vpop.f32.mrf.mxu0
      %1627 = vmatprep.mubr.bf16.mxu0 0
      %1628 = vmatmul.mubr.bf16.gmra.mxu0 %v633
      %v1629 = vpop.f32.mrf.mxu0
      %v1630 = vadd.f32 0.0, %v1629
      %v1631 = vpop.f32.mrf.mxu0
      %v1632 = vpop.f32.mrf.mxu0
      %v1633 = vadd.f32 0.0, %v1632
      %v1634 = vpop.f32.mrf.mxu0
      %1635 = vmatprep.mubr.bf16.mxu0 0
      %1636 = vmatmul.mubr.bf16.gmra.mxu0 %v636
      %v1637 = vpop.f32.mrf.mxu0
      %v1638 = vadd.f32 0.0, %v1637
      %v1639 = vpop.f32.mrf.mxu0
      %v1640 = vpop.f32.mrf.mxu0
      %v1641 = vadd.f32 0.0, %v1640
      %v1642 = vpop.f32.mrf.mxu0
      %1643 = vmatprep.mubr.bf16.mxu0 0
      %1644 = vmatmul.mubr.bf16.gmra.mxu0 %v639
      %v1645 = vpop.f32.mrf.mxu0
      %v1646 = vadd.f32 0.0, %v1645
      %v1647 = vpop.f32.mrf.mxu0
      %v1648 = vpop.f32.mrf.mxu0
      %v1649 = vadd.f32 0.0, %v1648
      %v1650 = vpop.f32.mrf.mxu0
      %1651 = vmatprep.mubr.bf16.mxu0 0
      %1652 = vmatmul.mubr.bf16.gmra.mxu0 %v642
      %v1653 = vpop.f32.mrf.mxu0
      %v1654 = vadd.f32 0.0, %v1653
      %v1655 = vpop.f32.mrf.mxu0
      %v1656 = vpop.f32.mrf.mxu0
      %v1657 = vadd.f32 0.0, %v1656
      %v1658 = vpop.f32.mrf.mxu0
      %1659 = vmatprep.mubr.bf16.mxu0 0
      %1660 = vmatmul.mubr.bf16.gmra.mxu0 %v645
      %v1661 = vpop.f32.mrf.mxu0
      %v1662 = vadd.f32 0.0, %v1661
      %v1663 = vpop.f32.mrf.mxu0
      %v1664 = vpop.f32.mrf.mxu0
      %v1665 = vadd.f32 0.0, %v1664
      %v1666 = vpop.f32.mrf.mxu0
      %1667 = vmatprep.mubr.bf16.mxu0 0
      %1668 = vmatmul.mubr.bf16.gmra.mxu0 %v648
      %v1669 = vpop.f32.mrf.mxu0
      %v1670 = vadd.f32 0.0, %v1669
      %v1671 = vpop.f32.mrf.mxu0
      %v1672 = vpop.f32.mrf.mxu0
      %v1673 = vadd.f32 0.0, %v1672
      %v1674 = vpop.f32.mrf.mxu0
      %1675 = vmatprep.mubr.bf16.mxu0 0
      %1676 = vmatmul.mubr.bf16.gmra.mxu0 %v651
      %v1677 = vpop.f32.mrf.mxu0
      %v1678 = vadd.f32 0.0, %v1677
      %v1679 = vpop.f32.mrf.mxu0
      %v1680 = vpop.f32.mrf.mxu0
      %v1681 = vadd.f32 0.0, %v1680
      %v1682 = vpop.f32.mrf.mxu0
      %1683 = vmatprep.mubr.bf16.mxu0 0
      %1684 = vmatmul.mubr.bf16.gmra.mxu0 %v654
      %v1685 = vpop.f32.mrf.mxu0
      %v1686 = vadd.f32 0.0, %v1685
      %v1687 = vpop.f32.mrf.mxu0
      %v1688 = vpop.f32.mrf.mxu0
      %v1689 = vadd.f32 0.0, %v1688
      %v1690 = vpop.f32.mrf.mxu0
      %1691 = vmatprep.mubr.bf16.mxu0 0
      %1692 = vmatmul.mubr.bf16.gmra.mxu0 %v657
      %v1693 = vpop.f32.mrf.mxu0
      %v1694 = vadd.f32 0.0, %v1693
      %v1695 = vpop.f32.mrf.mxu0
      %v1696 = vpop.f32.mrf.mxu0
      %v1697 = vadd.f32 0.0, %v1696
      %v1698 = vpop.f32.mrf.mxu0
      %1699 = vmatprep.mubr.bf16.mxu0 0
      %1700 = vmatmul.mubr.bf16.gmra.mxu0 %v660
      %v1701 = vpop.f32.mrf.mxu0
      %v1702 = vadd.f32 0.0, %v1701
      %v1703 = vpop.f32.mrf.mxu0
      %v1704 = vpop.f32.mrf.mxu0
      %v1705 = vadd.f32 0.0, %v1704
      %v1706 = vpop.f32.mrf.mxu0
      %1707 = vmatprep.mubr.bf16.mxu0 0
      %1708 = vmatmul.mubr.bf16.gmra.mxu0 %v663
      %v1709 = vpop.f32.mrf.mxu0
      %v1710 = vadd.f32 0.0, %v1709
      %v1711 = vpop.f32.mrf.mxu0
      %v1712 = vpop.f32.mrf.mxu0
      %v1713 = vadd.f32 0.0, %v1712
      %v1714 = vpop.f32.mrf.mxu0
      %1715 = vmatprep.mubr.bf16.mxu0 0
      %1716 = vmatmul.mubr.bf16.gmra.mxu0 %v666
      %v1717 = vpop.f32.mrf.mxu0
      %v1718 = vadd.f32 0.0, %v1717
      %v1719 = vpop.f32.mrf.mxu0
      %v1720 = vpop.f32.mrf.mxu0
      %v1721 = vadd.f32 0.0, %v1720
      %v1722 = vpop.f32.mrf.mxu0
      %1723 = vmatprep.mubr.bf16.mxu0 0
      %1724 = vmatmul.mubr.bf16.gmra.mxu0 %v669
      %v1725 = vpop.f32.mrf.mxu0
      %v1726 = vadd.f32 0.0, %v1725
      %v1727 = vpop.f32.mrf.mxu0
      %v1728 = vpop.f32.mrf.mxu0
      %v1729 = vadd.f32 0.0, %v1728
      %v1730 = vpop.f32.mrf.mxu0
      %1731 = vmatprep.mubr.bf16.mxu0 0
      %1732 = vmatmul.mubr.bf16.gmra.mxu0 %v1574
      %v1733 = vpop.f32.mrf.mxu0
      %v1734 = vadd.f32 0.0, %v1733
      %v1735 = vpop.f32.mrf.mxu0
      %v1736 = vpop.f32.mrf.mxu0
      %v1737 = vadd.f32 0.0, %v1736
      %v1738 = vpop.f32.mrf.mxu0
      %1739 = vdwg.mxu0
      %v1740 = vadd.f32 %v1528, %v1614
      %v1741 = vadd.f32 %v1529, %v1617
      %v1742 = vadd.f32 %v1530, %v1622
      %v1743 = vadd.f32 %v1531, %v1625
      %v1744 = vadd.f32 %v1532, %v1630
      %v1745 = vadd.f32 %v1533, %v1633
      %v1746 = vadd.f32 %v1534, %v1638
      %v1747 = vadd.f32 %v1535, %v1641
      %v1748 = vadd.f32 %v1536, %v1646
      %v1749 = vadd.f32 %v1537, %v1649
      %v1750 = vadd.f32 %v1538, %v1654
      %v1751 = vadd.f32 %v1539, %v1657
      %v1752 = vadd.f32 %v1540, %v1662
      %v1753 = vadd.f32 %v1541, %v1665
      %v1754 = vadd.f32 %v1542, %v1670
      %v1755 = vadd.f32 %v1543, %v1673
      %v1756 = vadd.f32 %v1544, %v1678
      %v1757 = vadd.f32 %v1545, %v1681
      %v1758 = vadd.f32 %v1546, %v1686
      %v1759 = vadd.f32 %v1547, %v1689
      %v1760 = vadd.f32 %v1548, %v1694
      %v1761 = vadd.f32 %v1549, %v1697
      %v1762 = vadd.f32 %v1550, %v1702
      %v1763 = vadd.f32 %v1551, %v1705
      %v1764 = vadd.f32 %v1552, %v1710
      %v1765 = vadd.f32 %v1553, %v1713
      %v1766 = vadd.f32 %v1554, %v1718
      %v1767 = vadd.f32 %v1555, %v1721
      %v1768 = vadd.f32 %v1556, %v1726
      %v1769 = vadd.f32 %v1557, %v1729
      %v1770 = vadd.f32 %v1558, %v1734
      %v1771 = vadd.f32 %v1559, %v1737
      %s1772 = scalar_lea.vmem %s1, 10
      %v1773 = vld [vmem:[%s1772] sm:$0x3]
      %v1776 = vrot.slane %v423, 1
      %v1777 = vrot.slane %v424, 1
      %v1778 = vsel %vm1066, %v1776, %v1777
      %v1780 = vsel %vm248, %v1778, 0
      %v1783 = vsel %vm671, %v1773, 0
      %1785 = vmatprep.subr.bf16.mxu0 0
      %1786 = vmatpush1.bf16.msra.mxu0 0
      %1787 = vmatprep.subr.bf16.mxu0 0
      %1788 = vmatpush1.bf16.msra.mxu0 0
      %1789 = vmatprep.subr.bf16.mxu0 0
      %1790 = vmatpush1.bf16.msra.mxu0 0
      %1791 = vmatprep.subr.bf16.mxu0 0
      %1792 = vmatpush1.bf16.msra.mxu0 0
      %1793 = vmatprep.subr.bf16.mxu0 0
      %1794 = vmatpush1.bf16.msra.mxu0 0
      %1795 = vmatprep.subr.bf16.mxu0 0
      %1796 = vmatpush1.bf16.msra.mxu0 0
      %1797 = vmatprep.subr.bf16.mxu0 0
      %1798 = vmatpush1.bf16.msra.mxu0 0
      %1799 = vmatprep.subr.bf16.mxu0 0
      %1800 = vmatpush1.bf16.msra.mxu0 %v1783
      %1801 = vmatprep.subr.bf16.mxu0 0
      %1802 = vmatpush2.bf16.msra.mxu0 0
      %1803 = vmatprep.subr.bf16.mxu0 0
      %1804 = vmatpush2.bf16.msra.mxu0 0
      %1805 = vmatprep.subr.bf16.mxu0 0
      %1806 = vmatpush2.bf16.msra.mxu0 0
      %1807 = vmatprep.subr.bf16.mxu0 0
      %1808 = vmatpush2.bf16.msra.mxu0 0
      %1809 = vmatprep.subr.bf16.mxu0 0
      %1810 = vmatpush2.bf16.msra.mxu0 0
      %1811 = vmatprep.subr.bf16.mxu0 0
      %1812 = vmatpush2.bf16.msra.mxu0 0
      %1813 = vmatprep.subr.bf16.mxu0 0
      %1814 = vmatpush2.bf16.msra.mxu0 0
      %1815 = vmatprep.subr.bf16.mxu0 0
      %1816 = vmatpush2.bf16.msra.mxu0 0
      %1817 = vmatprep.mubr.bf16.mxu0 0
      %1818 = vmatmul.mubr.bf16.gmra.mxu0 %v1119
      %v1819 = vpop.f32.mrf.mxu0
      %v1820 = vadd.f32 0.0, %v1819
      %v1821 = vpop.f32.mrf.mxu0
      %v1822 = vpop.f32.mrf.mxu0
      %v1823 = vadd.f32 0.0, %v1822
      %v1824 = vpop.f32.mrf.mxu0
      %1825 = vmatprep.mubr.bf16.mxu0 0
      %1826 = vmatmul.mubr.bf16.gmra.mxu0 %v1122
      %v1827 = vpop.f32.mrf.mxu0
      %v1828 = vadd.f32 0.0, %v1827
      %v1829 = vpop.f32.mrf.mxu0
      %v1830 = vpop.f32.mrf.mxu0
      %v1831 = vadd.f32 0.0, %v1830
      %v1832 = vpop.f32.mrf.mxu0
      %1833 = vmatprep.mubr.bf16.mxu0 0
      %1834 = vmatmul.mubr.bf16.gmra.mxu0 %v1125
      %v1835 = vpop.f32.mrf.mxu0
      %v1836 = vadd.f32 0.0, %v1835
      %v1837 = vpop.f32.mrf.mxu0
      %v1838 = vpop.f32.mrf.mxu0
      %v1839 = vadd.f32 0.0, %v1838
      %v1840 = vpop.f32.mrf.mxu0
      %1841 = vmatprep.mubr.bf16.mxu0 0
      %1842 = vmatmul.mubr.bf16.gmra.mxu0 %v1128
      %v1843 = vpop.f32.mrf.mxu0
      %v1844 = vadd.f32 0.0, %v1843
      %v1845 = vpop.f32.mrf.mxu0
      %v1846 = vpop.f32.mrf.mxu0
      %v1847 = vadd.f32 0.0, %v1846
      %v1848 = vpop.f32.mrf.mxu0
      %1849 = vmatprep.mubr.bf16.mxu0 0
      %1850 = vmatmul.mubr.bf16.gmra.mxu0 %v1131
      %v1851 = vpop.f32.mrf.mxu0
      %v1852 = vadd.f32 0.0, %v1851
      %v1853 = vpop.f32.mrf.mxu0
      %v1854 = vpop.f32.mrf.mxu0
      %v1855 = vadd.f32 0.0, %v1854
      %v1856 = vpop.f32.mrf.mxu0
      %1857 = vmatprep.mubr.bf16.mxu0 0
      %1858 = vmatmul.mubr.bf16.gmra.mxu0 %v1134
      %v1859 = vpop.f32.mrf.mxu0
      %v1860 = vadd.f32 0.0, %v1859
      %v1861 = vpop.f32.mrf.mxu0
      %v1862 = vpop.f32.mrf.mxu0
      %v1863 = vadd.f32 0.0, %v1862
      %v1864 = vpop.f32.mrf.mxu0
      %1865 = vmatprep.mubr.bf16.mxu0 0
      %1866 = vmatmul.mubr.bf16.gmra.mxu0 %v1137
      %v1867 = vpop.f32.mrf.mxu0
      %v1868 = vadd.f32 0.0, %v1867
      %v1869 = vpop.f32.mrf.mxu0
      %v1870 = vpop.f32.mrf.mxu0
      %v1871 = vadd.f32 0.0, %v1870
      %v1872 = vpop.f32.mrf.mxu0
      %1873 = vmatprep.mubr.bf16.mxu0 0
      %1874 = vmatmul.mubr.bf16.gmra.mxu0 %v1140
      %v1875 = vpop.f32.mrf.mxu0
      %v1876 = vadd.f32 0.0, %v1875
      %v1877 = vpop.f32.mrf.mxu0
      %v1878 = vpop.f32.mrf.mxu0
      %v1879 = vadd.f32 0.0, %v1878
      %v1880 = vpop.f32.mrf.mxu0
      %1881 = vmatprep.mubr.bf16.mxu0 0
      %1882 = vmatmul.mubr.bf16.gmra.mxu0 %v1143
      %v1883 = vpop.f32.mrf.mxu0
      %v1884 = vadd.f32 0.0, %v1883
      %v1885 = vpop.f32.mrf.mxu0
      %v1886 = vpop.f32.mrf.mxu0
      %v1887 = vadd.f32 0.0, %v1886
      %v1888 = vpop.f32.mrf.mxu0
      %1889 = vmatprep.mubr.bf16.mxu0 0
      %1890 = vmatmul.mubr.bf16.gmra.mxu0 %v1146
      %v1891 = vpop.f32.mrf.mxu0
      %v1892 = vadd.f32 0.0, %v1891
      %v1893 = vpop.f32.mrf.mxu0
      %v1894 = vpop.f32.mrf.mxu0
      %v1895 = vadd.f32 0.0, %v1894
      %v1896 = vpop.f32.mrf.mxu0
      %1897 = vmatprep.mubr.bf16.mxu0 0
      %1898 = vmatmul.mubr.bf16.gmra.mxu0 %v1149
      %v1899 = vpop.f32.mrf.mxu0
      %v1900 = vadd.f32 0.0, %v1899
      %v1901 = vpop.f32.mrf.mxu0
      %v1902 = vpop.f32.mrf.mxu0
      %v1903 = vadd.f32 0.0, %v1902
      %v1904 = vpop.f32.mrf.mxu0
      %1905 = vmatprep.mubr.bf16.mxu0 0
      %1906 = vmatmul.mubr.bf16.gmra.mxu0 %v1152
      %v1907 = vpop.f32.mrf.mxu0
      %v1908 = vadd.f32 0.0, %v1907
      %v1909 = vpop.f32.mrf.mxu0
      %v1910 = vpop.f32.mrf.mxu0
      %v1911 = vadd.f32 0.0, %v1910
      %v1912 = vpop.f32.mrf.mxu0
      %1913 = vmatprep.mubr.bf16.mxu0 0
      %1914 = vmatmul.mubr.bf16.gmra.mxu0 %v1155
      %v1915 = vpop.f32.mrf.mxu0
      %v1916 = vadd.f32 0.0, %v1915
      %v1917 = vpop.f32.mrf.mxu0
      %v1918 = vpop.f32.mrf.mxu0
      %v1919 = vadd.f32 0.0, %v1918
      %v1920 = vpop.f32.mrf.mxu0
      %1921 = vmatprep.mubr.bf16.mxu0 0
      %1922 = vmatmul.mubr.bf16.gmra.mxu0 %v1158
      %v1923 = vpop.f32.mrf.mxu0
      %v1924 = vadd.f32 0.0, %v1923
      %v1925 = vpop.f32.mrf.mxu0
      %v1926 = vpop.f32.mrf.mxu0
      %v1927 = vadd.f32 0.0, %v1926
      %v1928 = vpop.f32.mrf.mxu0
      %1929 = vmatprep.mubr.bf16.mxu0 0
      %1930 = vmatmul.mubr.bf16.gmra.mxu0 %v1161
      %v1931 = vpop.f32.mrf.mxu0
      %v1932 = vadd.f32 0.0, %v1931
      %v1933 = vpop.f32.mrf.mxu0
      %v1934 = vpop.f32.mrf.mxu0
      %v1935 = vadd.f32 0.0, %v1934
      %v1936 = vpop.f32.mrf.mxu0
      %1937 = vmatprep.mubr.bf16.mxu0 0
      %1938 = vmatmul.mubr.bf16.gmra.mxu0 %v1780
      %v1939 = vpop.f32.mrf.mxu0
      %v1940 = vadd.f32 0.0, %v1939
      %v1941 = vpop.f32.mrf.mxu0
      %v1942 = vpop.f32.mrf.mxu0
      %v1943 = vadd.f32 0.0, %v1942
      %v1944 = vpop.f32.mrf.mxu0
      %1945 = vdwg.mxu0
      %v1946 = vadd.f32 %v1740, %v1820
      %v1947 = vadd.f32 %v1741, %v1823
      %v1948 = vadd.f32 %v1742, %v1828
      %v1949 = vadd.f32 %v1743, %v1831
      %v1950 = vadd.f32 %v1744, %v1836
      %v1951 = vadd.f32 %v1745, %v1839
      %v1952 = vadd.f32 %v1746, %v1844
      %v1953 = vadd.f32 %v1747, %v1847
      %v1954 = vadd.f32 %v1748, %v1852
      %v1955 = vadd.f32 %v1749, %v1855
      %v1956 = vadd.f32 %v1750, %v1860
      %v1957 = vadd.f32 %v1751, %v1863
      %v1958 = vadd.f32 %v1752, %v1868
      %v1959 = vadd.f32 %v1753, %v1871
      %v1960 = vadd.f32 %v1754, %v1876
      %v1961 = vadd.f32 %v1755, %v1879
      %v1962 = vadd.f32 %v1756, %v1884
      %v1963 = vadd.f32 %v1757, %v1887
      %v1964 = vadd.f32 %v1758, %v1892
      %v1965 = vadd.f32 %v1759, %v1895
      %v1966 = vadd.f32 %v1760, %v1900
      %v1967 = vadd.f32 %v1761, %v1903
      %v1968 = vadd.f32 %v1762, %v1908
      %v1969 = vadd.f32 %v1763, %v1911
      %v1970 = vadd.f32 %v1764, %v1916
      %v1971 = vadd.f32 %v1765, %v1919
      %v1972 = vadd.f32 %v1766, %v1924
      %v1973 = vadd.f32 %v1767, %v1927
      %v1974 = vadd.f32 %v1768, %v1932
      %v1975 = vadd.f32 %v1769, %v1935
      %v1976 = vadd.f32 %v1770, %v1940
      %v1977 = vadd.f32 %v1771, %v1943
      %s1978 = scalar_lea.vmem %s1, 12
      %v1979 = vld [vmem:[%s1978] sm:$0x3]
      %v1981 = vsel %vm248, %v425, 0
      %v1984 = vsel %vm671, %v1979, 0
      %1986 = vmatprep.subr.bf16.mxu0 0
      %1987 = vmatpush1.bf16.msra.mxu0 0
      %1988 = vmatprep.subr.bf16.mxu0 0
      %1989 = vmatpush1.bf16.msra.mxu0 0
      %1990 = vmatprep.subr.bf16.mxu0 0
      %1991 = vmatpush1.bf16.msra.mxu0 0
      %1992 = vmatprep.subr.bf16.mxu0 0
      %1993 = vmatpush1.bf16.msra.mxu0 0
      %1994 = vmatprep.subr.bf16.mxu0 0
      %1995 = vmatpush1.bf16.msra.mxu0 0
      %1996 = vmatprep.subr.bf16.mxu0 0
      %1997 = vmatpush1.bf16.msra.mxu0 0
      %1998 = vmatprep.subr.bf16.mxu0 0
      %1999 = vmatpush1.bf16.msra.mxu0 0
      %2000 = vmatprep.subr.bf16.mxu0 0
      %2001 = vmatpush1.bf16.msra.mxu0 %v1984
      %2002 = vmatprep.subr.bf16.mxu0 0
      %2003 = vmatpush2.bf16.msra.mxu0 0
      %2004 = vmatprep.subr.bf16.mxu0 0
      %2005 = vmatpush2.bf16.msra.mxu0 0
      %2006 = vmatprep.subr.bf16.mxu0 0
      %2007 = vmatpush2.bf16.msra.mxu0 0
      %2008 = vmatprep.subr.bf16.mxu0 0
      %2009 = vmatpush2.bf16.msra.mxu0 0
      %2010 = vmatprep.subr.bf16.mxu0 0
      %2011 = vmatpush2.bf16.msra.mxu0 0
      %2012 = vmatprep.subr.bf16.mxu0 0
      %2013 = vmatpush2.bf16.msra.mxu0 0
      %2014 = vmatprep.subr.bf16.mxu0 0
      %2015 = vmatpush2.bf16.msra.mxu0 0
      %2016 = vmatprep.subr.bf16.mxu0 0
      %2017 = vmatpush2.bf16.msra.mxu0 0
      %2018 = vmatprep.mubr.bf16.mxu0 0
      %2019 = vmatmul.mubr.bf16.gmra.mxu0 %v840
      %v2020 = vpop.f32.mrf.mxu0
      %v2021 = vadd.f32 0.0, %v2020
      %v2022 = vpop.f32.mrf.mxu0
      %v2023 = vpop.f32.mrf.mxu0
      %v2024 = vadd.f32 0.0, %v2023
      %v2025 = vpop.f32.mrf.mxu0
      %2026 = vmatprep.mubr.bf16.mxu0 0
      %2027 = vmatmul.mubr.bf16.gmra.mxu0 %v842
      %v2028 = vpop.f32.mrf.mxu0
      %v2029 = vadd.f32 0.0, %v2028
      %v2030 = vpop.f32.mrf.mxu0
      %v2031 = vpop.f32.mrf.mxu0
      %v2032 = vadd.f32 0.0, %v2031
      %v2033 = vpop.f32.mrf.mxu0
      %2034 = vmatprep.mubr.bf16.mxu0 0
      %2035 = vmatmul.mubr.bf16.gmra.mxu0 %v844
      %v2036 = vpop.f32.mrf.mxu0
      %v2037 = vadd.f32 0.0, %v2036
      %v2038 = vpop.f32.mrf.mxu0
      %v2039 = vpop.f32.mrf.mxu0
      %v2040 = vadd.f32 0.0, %v2039
      %v2041 = vpop.f32.mrf.mxu0
      %2042 = vmatprep.mubr.bf16.mxu0 0
      %2043 = vmatmul.mubr.bf16.gmra.mxu0 %v846
      %v2044 = vpop.f32.mrf.mxu0
      %v2045 = vadd.f32 0.0, %v2044
      %v2046 = vpop.f32.mrf.mxu0
      %v2047 = vpop.f32.mrf.mxu0
      %v2048 = vadd.f32 0.0, %v2047
      %v2049 = vpop.f32.mrf.mxu0
      %2050 = vmatprep.mubr.bf16.mxu0 0
      %2051 = vmatmul.mubr.bf16.gmra.mxu0 %v848
      %v2052 = vpop.f32.mrf.mxu0
      %v2053 = vadd.f32 0.0, %v2052
      %v2054 = vpop.f32.mrf.mxu0
      %v2055 = vpop.f32.mrf.mxu0
      %v2056 = vadd.f32 0.0, %v2055
      %v2057 = vpop.f32.mrf.mxu0
      %2058 = vmatprep.mubr.bf16.mxu0 0
      %2059 = vmatmul.mubr.bf16.gmra.mxu0 %v850
      %v2060 = vpop.f32.mrf.mxu0
      %v2061 = vadd.f32 0.0, %v2060
      %v2062 = vpop.f32.mrf.mxu0
      %v2063 = vpop.f32.mrf.mxu0
      %v2064 = vadd.f32 0.0, %v2063
      %v2065 = vpop.f32.mrf.mxu0
      %2066 = vmatprep.mubr.bf16.mxu0 0
      %2067 = vmatmul.mubr.bf16.gmra.mxu0 %v852
      %v2068 = vpop.f32.mrf.mxu0
      %v2069 = vadd.f32 0.0, %v2068
      %v2070 = vpop.f32.mrf.mxu0
      %v2071 = vpop.f32.mrf.mxu0
      %v2072 = vadd.f32 0.0, %v2071
      %v2073 = vpop.f32.mrf.mxu0
      %2074 = vmatprep.mubr.bf16.mxu0 0
      %2075 = vmatmul.mubr.bf16.gmra.mxu0 %v854
      %v2076 = vpop.f32.mrf.mxu0
      %v2077 = vadd.f32 0.0, %v2076
      %v2078 = vpop.f32.mrf.mxu0
      %v2079 = vpop.f32.mrf.mxu0
      %v2080 = vadd.f32 0.0, %v2079
      %v2081 = vpop.f32.mrf.mxu0
      %2082 = vmatprep.mubr.bf16.mxu0 0
      %2083 = vmatmul.mubr.bf16.gmra.mxu0 %v856
      %v2084 = vpop.f32.mrf.mxu0
      %v2085 = vadd.f32 0.0, %v2084
      %v2086 = vpop.f32.mrf.mxu0
      %v2087 = vpop.f32.mrf.mxu0
      %v2088 = vadd.f32 0.0, %v2087
      %v2089 = vpop.f32.mrf.mxu0
      %2090 = vmatprep.mubr.bf16.mxu0 0
      %2091 = vmatmul.mubr.bf16.gmra.mxu0 %v858
      %v2092 = vpop.f32.mrf.mxu0
      %v2093 = vadd.f32 0.0, %v2092
      %v2094 = vpop.f32.mrf.mxu0
      %v2095 = vpop.f32.mrf.mxu0
      %v2096 = vadd.f32 0.0, %v2095
      %v2097 = vpop.f32.mrf.mxu0
      %2098 = vmatprep.mubr.bf16.mxu0 0
      %2099 = vmatmul.mubr.bf16.gmra.mxu0 %v860
      %v2100 = vpop.f32.mrf.mxu0
      %v2101 = vadd.f32 0.0, %v2100
      %v2102 = vpop.f32.mrf.mxu0
      %v2103 = vpop.f32.mrf.mxu0
      %v2104 = vadd.f32 0.0, %v2103
      %v2105 = vpop.f32.mrf.mxu0
      %2106 = vmatprep.mubr.bf16.mxu0 0
      %2107 = vmatmul.mubr.bf16.gmra.mxu0 %v862
      %v2108 = vpop.f32.mrf.mxu0
      %v2109 = vadd.f32 0.0, %v2108
      %v2110 = vpop.f32.mrf.mxu0
      %v2111 = vpop.f32.mrf.mxu0
      %v2112 = vadd.f32 0.0, %v2111
      %v2113 = vpop.f32.mrf.mxu0
      %2114 = vmatprep.mubr.bf16.mxu0 0
      %2115 = vmatmul.mubr.bf16.gmra.mxu0 %v864
      %v2116 = vpop.f32.mrf.mxu0
      %v2117 = vadd.f32 0.0, %v2116
      %v2118 = vpop.f32.mrf.mxu0
      %v2119 = vpop.f32.mrf.mxu0
      %v2120 = vadd.f32 0.0, %v2119
      %v2121 = vpop.f32.mrf.mxu0
      %2122 = vmatprep.mubr.bf16.mxu0 0
      %2123 = vmatmul.mubr.bf16.gmra.mxu0 %v866
      %v2124 = vpop.f32.mrf.mxu0
      %v2125 = vadd.f32 0.0, %v2124
      %v2126 = vpop.f32.mrf.mxu0
      %v2127 = vpop.f32.mrf.mxu0
      %v2128 = vadd.f32 0.0, %v2127
      %v2129 = vpop.f32.mrf.mxu0
      %2130 = vmatprep.mubr.bf16.mxu0 0
      %2131 = vmatmul.mubr.bf16.gmra.mxu0 %v1362
      %v2132 = vpop.f32.mrf.mxu0
      %v2133 = vadd.f32 0.0, %v2132
      %v2134 = vpop.f32.mrf.mxu0
      %v2135 = vpop.f32.mrf.mxu0
      %v2136 = vadd.f32 0.0, %v2135
      %v2137 = vpop.f32.mrf.mxu0
      %2138 = vmatprep.mubr.bf16.mxu0 0
      %2139 = vmatmul.mubr.bf16.gmra.mxu0 %v1981
      %v2140 = vpop.f32.mrf.mxu0
      %v2141 = vadd.f32 0.0, %v2140
      %v2142 = vpop.f32.mrf.mxu0
      %v2143 = vpop.f32.mrf.mxu0
      %v2144 = vadd.f32 0.0, %v2143
      %v2145 = vpop.f32.mrf.mxu0
      %2146 = vdwg.mxu0
      %v2147 = vadd.f32 %v1946, %v2021
      %v2148 = vadd.f32 %v1947, %v2024
      %v2149 = vadd.f32 %v1948, %v2029
      %v2150 = vadd.f32 %v1949, %v2032
      %v2151 = vadd.f32 %v1950, %v2037
      %v2152 = vadd.f32 %v1951, %v2040
      %v2153 = vadd.f32 %v1952, %v2045
      %v2154 = vadd.f32 %v1953, %v2048
      %v2155 = vadd.f32 %v1954, %v2053
      %v2156 = vadd.f32 %v1955, %v2056
      %v2157 = vadd.f32 %v1956, %v2061
      %v2158 = vadd.f32 %v1957, %v2064
      %v2159 = vadd.f32 %v1958, %v2069
      %v2160 = vadd.f32 %v1959, %v2072
      %v2161 = vadd.f32 %v1960, %v2077
      %v2162 = vadd.f32 %v1961, %v2080
      %v2163 = vadd.f32 %v1962, %v2085
      %v2164 = vadd.f32 %v1963, %v2088
      %v2165 = vadd.f32 %v1964, %v2093
      %v2166 = vadd.f32 %v1965, %v2096
      %v2167 = vadd.f32 %v1966, %v2101
      %v2168 = vadd.f32 %v1967, %v2104
      %v2169 = vadd.f32 %v1968, %v2109
      %v2170 = vadd.f32 %v1969, %v2112
      %v2171 = vadd.f32 %v1970, %v2117
      %v2172 = vadd.f32 %v1971, %v2120
      %v2173 = vadd.f32 %v1972, %v2125
      %v2174 = vadd.f32 %v1973, %v2128
      %v2175 = vadd.f32 %v1974, %v2133
      %v2176 = vadd.f32 %v1975, %v2136
      %v2177 = vadd.f32 %v1976, %v2141
      %v2178 = vadd.f32 %v1977, %v2144
      %s2179 = scalar_lea.vmem %s1, 14
      %v2180 = vld [vmem:[%s2179] sm:$0x3]
      %v2181 = vshrl.u32 %v425, 16
      %v2183 = vshll.u32 %v425, 16
      %v2185 = vrot.slane %v2183, 1
      %v2186 = vor.u32 %v2181, %v2185
      %v2188 = vshll.u32 %v426, 16
      %v2190 = vrot.slane %v2188, 1
      %v2191 = vsel %vm430, %v2186, %v2190
      %v2193 = vsel %vm248, %v2191, 0
      %v2196 = vsel %vm671, %v2180, 0
      %2198 = vmatprep.subr.bf16.mxu0 0
      %2199 = vmatpush1.bf16.msra.mxu0 0
      %2200 = vmatprep.subr.bf16.mxu0 0
      %2201 = vmatpush1.bf16.msra.mxu0 0
      %2202 = vmatprep.subr.bf16.mxu0 0
      %2203 = vmatpush1.bf16.msra.mxu0 0
      %2204 = vmatprep.subr.bf16.mxu0 0
      %2205 = vmatpush1.bf16.msra.mxu0 0
      %2206 = vmatprep.subr.bf16.mxu0 0
      %2207 = vmatpush1.bf16.msra.mxu0 0
      %2208 = vmatprep.subr.bf16.mxu0 0
      %2209 = vmatpush1.bf16.msra.mxu0 0
      %2210 = vmatprep.subr.bf16.mxu0 0
      %2211 = vmatpush1.bf16.msra.mxu0 0
      %2212 = vmatprep.subr.bf16.mxu0 0
      %2213 = vmatpush1.bf16.msra.mxu0 %v2196
      %2214 = vmatprep.subr.bf16.mxu0 0
      %2215 = vmatpush2.bf16.msra.mxu0 0
      %2216 = vmatprep.subr.bf16.mxu0 0
      %2217 = vmatpush2.bf16.msra.mxu0 0
      %2218 = vmatprep.subr.bf16.mxu0 0
      %2219 = vmatpush2.bf16.msra.mxu0 0
      %2220 = vmatprep.subr.bf16.mxu0 0
      %2221 = vmatpush2.bf16.msra.mxu0 0
      %2222 = vmatprep.subr.bf16.mxu0 0
      %2223 = vmatpush2.bf16.msra.mxu0 0
      %2224 = vmatprep.subr.bf16.mxu0 0
      %2225 = vmatpush2.bf16.msra.mxu0 0
      %2226 = vmatprep.subr.bf16.mxu0 0
      %2227 = vmatpush2.bf16.msra.mxu0 0
      %2228 = vmatprep.subr.bf16.mxu0 0
      %2229 = vmatpush2.bf16.msra.mxu0 0
      %2230 = vmatprep.mubr.bf16.mxu0 0
      %2231 = vmatmul.mubr.bf16.gmra.mxu0 %v630
      %v2232 = vpop.f32.mrf.mxu0
      %v2233 = vadd.f32 0.0, %v2232
      %v2234 = vpop.f32.mrf.mxu0
      %v2235 = vpop.f32.mrf.mxu0
      %v2236 = vadd.f32 0.0, %v2235
      %v2237 = vpop.f32.mrf.mxu0
      %2238 = vmatprep.mubr.bf16.mxu0 0
      %2239 = vmatmul.mubr.bf16.gmra.mxu0 %v633
      %v2240 = vpop.f32.mrf.mxu0
      %v2241 = vadd.f32 0.0, %v2240
      %v2242 = vpop.f32.mrf.mxu0
      %v2243 = vpop.f32.mrf.mxu0
      %v2244 = vadd.f32 0.0, %v2243
      %v2245 = vpop.f32.mrf.mxu0
      %2246 = vmatprep.mubr.bf16.mxu0 0
      %2247 = vmatmul.mubr.bf16.gmra.mxu0 %v636
      %v2248 = vpop.f32.mrf.mxu0
      %v2249 = vadd.f32 0.0, %v2248
      %v2250 = vpop.f32.mrf.mxu0
      %v2251 = vpop.f32.mrf.mxu0
      %v2252 = vadd.f32 0.0, %v2251
      %v2253 = vpop.f32.mrf.mxu0
      %2254 = vmatprep.mubr.bf16.mxu0 0
      %2255 = vmatmul.mubr.bf16.gmra.mxu0 %v639
      %v2256 = vpop.f32.mrf.mxu0
      %v2257 = vadd.f32 0.0, %v2256
      %v2258 = vpop.f32.mrf.mxu0
      %v2259 = vpop.f32.mrf.mxu0
      %v2260 = vadd.f32 0.0, %v2259
      %v2261 = vpop.f32.mrf.mxu0
      %2262 = vmatprep.mubr.bf16.mxu0 0
      %2263 = vmatmul.mubr.bf16.gmra.mxu0 %v642
      %v2264 = vpop.f32.mrf.mxu0
      %v2265 = vadd.f32 0.0, %v2264
      %v2266 = vpop.f32.mrf.mxu0
      %v2267 = vpop.f32.mrf.mxu0
      %v2268 = vadd.f32 0.0, %v2267
      %v2269 = vpop.f32.mrf.mxu0
      %2270 = vmatprep.mubr.bf16.mxu0 0
      %2271 = vmatmul.mubr.bf16.gmra.mxu0 %v645
      %v2272 = vpop.f32.mrf.mxu0
      %v2273 = vadd.f32 0.0, %v2272
      %v2274 = vpop.f32.mrf.mxu0
      %v2275 = vpop.f32.mrf.mxu0
      %v2276 = vadd.f32 0.0, %v2275
      %v2277 = vpop.f32.mrf.mxu0
      %2278 = vmatprep.mubr.bf16.mxu0 0
      %2279 = vmatmul.mubr.bf16.gmra.mxu0 %v648
      %v2280 = vpop.f32.mrf.mxu0
      %v2281 = vadd.f32 0.0, %v2280
      %v2282 = vpop.f32.mrf.mxu0
      %v2283 = vpop.f32.mrf.mxu0
      %v2284 = vadd.f32 0.0, %v2283
      %v2285 = vpop.f32.mrf.mxu0
      %2286 = vmatprep.mubr.bf16.mxu0 0
      %2287 = vmatmul.mubr.bf16.gmra.mxu0 %v651
      %v2288 = vpop.f32.mrf.mxu0
      %v2289 = vadd.f32 0.0, %v2288
      %v2290 = vpop.f32.mrf.mxu0
      %v2291 = vpop.f32.mrf.mxu0
      %v2292 = vadd.f32 0.0, %v2291
      %v2293 = vpop.f32.mrf.mxu0
      %2294 = vmatprep.mubr.bf16.mxu0 0
      %2295 = vmatmul.mubr.bf16.gmra.mxu0 %v654
      %v2296 = vpop.f32.mrf.mxu0
      %v2297 = vadd.f32 0.0, %v2296
      %v2298 = vpop.f32.mrf.mxu0
      %v2299 = vpop.f32.mrf.mxu0
      %v2300 = vadd.f32 0.0, %v2299
      %v2301 = vpop.f32.mrf.mxu0
      %2302 = vmatprep.mubr.bf16.mxu0 0
      %2303 = vmatmul.mubr.bf16.gmra.mxu0 %v657
      %v2304 = vpop.f32.mrf.mxu0
      %v2305 = vadd.f32 0.0, %v2304
      %v2306 = vpop.f32.mrf.mxu0
      %v2307 = vpop.f32.mrf.mxu0
      %v2308 = vadd.f32 0.0, %v2307
      %v2309 = vpop.f32.mrf.mxu0
      %2310 = vmatprep.mubr.bf16.mxu0 0
      %2311 = vmatmul.mubr.bf16.gmra.mxu0 %v660
      %v2312 = vpop.f32.mrf.mxu0
      %v2313 = vadd.f32 0.0, %v2312
      %v2314 = vpop.f32.mrf.mxu0
      %v2315 = vpop.f32.mrf.mxu0
      %v2316 = vadd.f32 0.0, %v2315
      %v2317 = vpop.f32.mrf.mxu0
      %2318 = vmatprep.mubr.bf16.mxu0 0
      %2319 = vmatmul.mubr.bf16.gmra.mxu0 %v663
      %v2320 = vpop.f32.mrf.mxu0
      %v2321 = vadd.f32 0.0, %v2320
      %v2322 = vpop.f32.mrf.mxu0
      %v2323 = vpop.f32.mrf.mxu0
      %v2324 = vadd.f32 0.0, %v2323
      %v2325 = vpop.f32.mrf.mxu0
      %2326 = vmatprep.mubr.bf16.mxu0 0
      %2327 = vmatmul.mubr.bf16.gmra.mxu0 %v666
      %v2328 = vpop.f32.mrf.mxu0
      %v2329 = vadd.f32 0.0, %v2328
      %v2330 = vpop.f32.mrf.mxu0
      %v2331 = vpop.f32.mrf.mxu0
      %v2332 = vadd.f32 0.0, %v2331
      %v2333 = vpop.f32.mrf.mxu0
      %2334 = vmatprep.mubr.bf16.mxu0 0
      %2335 = vmatmul.mubr.bf16.gmra.mxu0 %v669
      %v2336 = vpop.f32.mrf.mxu0
      %v2337 = vadd.f32 0.0, %v2336
      %v2338 = vpop.f32.mrf.mxu0
      %v2339 = vpop.f32.mrf.mxu0
      %v2340 = vadd.f32 0.0, %v2339
      %v2341 = vpop.f32.mrf.mxu0
      %2342 = vmatprep.mubr.bf16.mxu0 0
      %2343 = vmatmul.mubr.bf16.gmra.mxu0 %v1574
      %v2344 = vpop.f32.mrf.mxu0
      %v2345 = vadd.f32 0.0, %v2344
      %v2346 = vpop.f32.mrf.mxu0
      %v2347 = vpop.f32.mrf.mxu0
      %v2348 = vadd.f32 0.0, %v2347
      %v2349 = vpop.f32.mrf.mxu0
      %2350 = vmatprep.mubr.bf16.mxu0 0
      %2351 = vmatmul.mubr.bf16.gmra.mxu0 %v2193
      %v2352 = vpop.f32.mrf.mxu0
      %v2353 = vadd.f32 0.0, %v2352
      %v2354 = vpop.f32.mrf.mxu0
      %v2355 = vpop.f32.mrf.mxu0
      %v2356 = vadd.f32 0.0, %v2355
      %v2357 = vpop.f32.mrf.mxu0
      %2358 = vdwg.mxu0
      %v2359 = vadd.f32 %v2147, %v2233
      %v2360 = vadd.f32 %v2148, %v2236
      %v2361 = vadd.f32 %v2149, %v2241
      %v2362 = vadd.f32 %v2150, %v2244
      %v2363 = vadd.f32 %v2151, %v2249
      %v2364 = vadd.f32 %v2152, %v2252
      %v2365 = vadd.f32 %v2153, %v2257
      %v2366 = vadd.f32 %v2154, %v2260
      %v2367 = vadd.f32 %v2155, %v2265
      %v2368 = vadd.f32 %v2156, %v2268
      %v2369 = vadd.f32 %v2157, %v2273
      %v2370 = vadd.f32 %v2158, %v2276
      %v2371 = vadd.f32 %v2159, %v2281
      %v2372 = vadd.f32 %v2160, %v2284
      %v2373 = vadd.f32 %v2161, %v2289
      %v2374 = vadd.f32 %v2162, %v2292
      %v2375 = vadd.f32 %v2163, %v2297
      %v2376 = vadd.f32 %v2164, %v2300
      %v2377 = vadd.f32 %v2165, %v2305
      %v2378 = vadd.f32 %v2166, %v2308
      %v2379 = vadd.f32 %v2167, %v2313
      %v2380 = vadd.f32 %v2168, %v2316
      %v2381 = vadd.f32 %v2169, %v2321
      %v2382 = vadd.f32 %v2170, %v2324
      %v2383 = vadd.f32 %v2171, %v2329
      %v2384 = vadd.f32 %v2172, %v2332
      %v2385 = vadd.f32 %v2173, %v2337
      %v2386 = vadd.f32 %v2174, %v2340
      %v2387 = vadd.f32 %v2175, %v2345
      %v2388 = vadd.f32 %v2176, %v2348
      %v2389 = vadd.f32 %v2177, %v2353
      %v2390 = vadd.f32 %v2178, %v2356
      %s2391 = scalar_lea.vmem %s1, 16
      %v2392 = vld [vmem:[%s2391] sm:$0x3]
      %v2395 = vrot.slane %v425, 1
      %v2396 = vrot.slane %v426, 1
      %v2397 = vsel %vm1066, %v2395, %v2396
      %v2399 = vsel %vm248, %v2397, 0
      %v2402 = vsel %vm671, %v2392, 0
      %2404 = vmatprep.subr.bf16.mxu0 0
      %2405 = vmatpush1.bf16.msra.mxu0 0
      %2406 = vmatprep.subr.bf16.mxu0 0
      %2407 = vmatpush1.bf16.msra.mxu0 0
      %2408 = vmatprep.subr.bf16.mxu0 0
      %2409 = vmatpush1.bf16.msra.mxu0 0
      %2410 = vmatprep.subr.bf16.mxu0 0
      %2411 = vmatpush1.bf16.msra.mxu0 0
      %2412 = vmatprep.subr.bf16.mxu0 0
      %2413 = vmatpush1.bf16.msra.mxu0 0
      %2414 = vmatprep.subr.bf16.mxu0 0
      %2415 = vmatpush1.bf16.msra.mxu0 0
      %2416 = vmatprep.subr.bf16.mxu0 0
      %2417 = vmatpush1.bf16.msra.mxu0 0
      %2418 = vmatprep.subr.bf16.mxu0 0
      %2419 = vmatpush1.bf16.msra.mxu0 %v2402
      %2420 = vmatprep.subr.bf16.mxu0 0
      %2421 = vmatpush2.bf16.msra.mxu0 0
      %2422 = vmatprep.subr.bf16.mxu0 0
      %2423 = vmatpush2.bf16.msra.mxu0 0
      %2424 = vmatprep.subr.bf16.mxu0 0
      %2425 = vmatpush2.bf16.msra.mxu0 0
      %2426 = vmatprep.subr.bf16.mxu0 0
      %2427 = vmatpush2.bf16.msra.mxu0 0
      %2428 = vmatprep.subr.bf16.mxu0 0
      %2429 = vmatpush2.bf16.msra.mxu0 0
      %2430 = vmatprep.subr.bf16.mxu0 0
      %2431 = vmatpush2.bf16.msra.mxu0 0
      %2432 = vmatprep.subr.bf16.mxu0 0
      %2433 = vmatpush2.bf16.msra.mxu0 0
      %2434 = vmatprep.subr.bf16.mxu0 0
      %2435 = vmatpush2.bf16.msra.mxu0 0
      %2436 = vmatprep.mubr.bf16.mxu0 0
      %2437 = vmatmul.mubr.bf16.gmra.mxu0 %v1122
      %v2438 = vpop.f32.mrf.mxu0
      %v2439 = vadd.f32 0.0, %v2438
      %v2440 = vpop.f32.mrf.mxu0
      %v2441 = vpop.f32.mrf.mxu0
      %v2442 = vadd.f32 0.0, %v2441
      %v2443 = vpop.f32.mrf.mxu0
      %2444 = vmatprep.mubr.bf16.mxu0 0
      %2445 = vmatmul.mubr.bf16.gmra.mxu0 %v1125
      %v2446 = vpop.f32.mrf.mxu0
      %v2447 = vadd.f32 0.0, %v2446
      %v2448 = vpop.f32.mrf.mxu0
      %v2449 = vpop.f32.mrf.mxu0
      %v2450 = vadd.f32 0.0, %v2449
      %v2451 = vpop.f32.mrf.mxu0
      %2452 = vmatprep.mubr.bf16.mxu0 0
      %2453 = vmatmul.mubr.bf16.gmra.mxu0 %v1128
      %v2454 = vpop.f32.mrf.mxu0
      %v2455 = vadd.f32 0.0, %v2454
      %v2456 = vpop.f32.mrf.mxu0
      %v2457 = vpop.f32.mrf.mxu0
      %v2458 = vadd.f32 0.0, %v2457
      %v2459 = vpop.f32.mrf.mxu0
      %2460 = vmatprep.mubr.bf16.mxu0 0
      %2461 = vmatmul.mubr.bf16.gmra.mxu0 %v1131
      %v2462 = vpop.f32.mrf.mxu0
      %v2463 = vadd.f32 0.0, %v2462
      %v2464 = vpop.f32.mrf.mxu0
      %v2465 = vpop.f32.mrf.mxu0
      %v2466 = vadd.f32 0.0, %v2465
      %v2467 = vpop.f32.mrf.mxu0
      %2468 = vmatprep.mubr.bf16.mxu0 0
      %2469 = vmatmul.mubr.bf16.gmra.mxu0 %v1134
      %v2470 = vpop.f32.mrf.mxu0
      %v2471 = vadd.f32 0.0, %v2470
      %v2472 = vpop.f32.mrf.mxu0
      %v2473 = vpop.f32.mrf.mxu0
      %v2474 = vadd.f32 0.0, %v2473
      %v2475 = vpop.f32.mrf.mxu0
      %2476 = vmatprep.mubr.bf16.mxu0 0
      %2477 = vmatmul.mubr.bf16.gmra.mxu0 %v1137
      %v2478 = vpop.f32.mrf.mxu0
      %v2479 = vadd.f32 0.0, %v2478
      %v2480 = vpop.f32.mrf.mxu0
      %v2481 = vpop.f32.mrf.mxu0
      %v2482 = vadd.f32 0.0, %v2481
      %v2483 = vpop.f32.mrf.mxu0
      %2484 = vmatprep.mubr.bf16.mxu0 0
      %2485 = vmatmul.mubr.bf16.gmra.mxu0 %v1140
      %v2486 = vpop.f32.mrf.mxu0
      %v2487 = vadd.f32 0.0, %v2486
      %v2488 = vpop.f32.mrf.mxu0
      %v2489 = vpop.f32.mrf.mxu0
      %v2490 = vadd.f32 0.0, %v2489
      %v2491 = vpop.f32.mrf.mxu0
      %2492 = vmatprep.mubr.bf16.mxu0 0
      %2493 = vmatmul.mubr.bf16.gmra.mxu0 %v1143
      %v2494 = vpop.f32.mrf.mxu0
      %v2495 = vadd.f32 0.0, %v2494
      %v2496 = vpop.f32.mrf.mxu0
      %v2497 = vpop.f32.mrf.mxu0
      %v2498 = vadd.f32 0.0, %v2497
      %v2499 = vpop.f32.mrf.mxu0
      %2500 = vmatprep.mubr.bf16.mxu0 0
      %2501 = vmatmul.mubr.bf16.gmra.mxu0 %v1146
      %v2502 = vpop.f32.mrf.mxu0
      %v2503 = vadd.f32 0.0, %v2502
      %v2504 = vpop.f32.mrf.mxu0
      %v2505 = vpop.f32.mrf.mxu0
      %v2506 = vadd.f32 0.0, %v2505
      %v2507 = vpop.f32.mrf.mxu0
      %2508 = vmatprep.mubr.bf16.mxu0 0
      %2509 = vmatmul.mubr.bf16.gmra.mxu0 %v1149
      %v2510 = vpop.f32.mrf.mxu0
      %v2511 = vadd.f32 0.0, %v2510
      %v2512 = vpop.f32.mrf.mxu0
      %v2513 = vpop.f32.mrf.mxu0
      %v2514 = vadd.f32 0.0, %v2513
      %v2515 = vpop.f32.mrf.mxu0
      %2516 = vmatprep.mubr.bf16.mxu0 0
      %2517 = vmatmul.mubr.bf16.gmra.mxu0 %v1152
      %v2518 = vpop.f32.mrf.mxu0
      %v2519 = vadd.f32 0.0, %v2518
      %v2520 = vpop.f32.mrf.mxu0
      %v2521 = vpop.f32.mrf.mxu0
      %v2522 = vadd.f32 0.0, %v2521
      %v2523 = vpop.f32.mrf.mxu0
      %2524 = vmatprep.mubr.bf16.mxu0 0
      %2525 = vmatmul.mubr.bf16.gmra.mxu0 %v1155
      %v2526 = vpop.f32.mrf.mxu0
      %v2527 = vadd.f32 0.0, %v2526
      %v2528 = vpop.f32.mrf.mxu0
      %v2529 = vpop.f32.mrf.mxu0
      %v2530 = vadd.f32 0.0, %v2529
      %v2531 = vpop.f32.mrf.mxu0
      %2532 = vmatprep.mubr.bf16.mxu0 0
      %2533 = vmatmul.mubr.bf16.gmra.mxu0 %v1158
      %v2534 = vpop.f32.mrf.mxu0
      %v2535 = vadd.f32 0.0, %v2534
      %v2536 = vpop.f32.mrf.mxu0
      %v2537 = vpop.f32.mrf.mxu0
      %v2538 = vadd.f32 0.0, %v2537
      %v2539 = vpop.f32.mrf.mxu0
      %2540 = vmatprep.mubr.bf16.mxu0 0
      %2541 = vmatmul.mubr.bf16.gmra.mxu0 %v1161
      %v2542 = vpop.f32.mrf.mxu0
      %v2543 = vadd.f32 0.0, %v2542
      %v2544 = vpop.f32.mrf.mxu0
      %v2545 = vpop.f32.mrf.mxu0
      %v2546 = vadd.f32 0.0, %v2545
      %v2547 = vpop.f32.mrf.mxu0
      %2548 = vmatprep.mubr.bf16.mxu0 0
      %2549 = vmatmul.mubr.bf16.gmra.mxu0 %v1780
      %v2550 = vpop.f32.mrf.mxu0
      %v2551 = vadd.f32 0.0, %v2550
      %v2552 = vpop.f32.mrf.mxu0
      %v2553 = vpop.f32.mrf.mxu0
      %v2554 = vadd.f32 0.0, %v2553
      %v2555 = vpop.f32.mrf.mxu0
      %2556 = vmatprep.mubr.bf16.mxu0 0
      %2557 = vmatmul.mubr.bf16.gmra.mxu0 %v2399
      %v2558 = vpop.f32.mrf.mxu0
      %v2559 = vadd.f32 0.0, %v2558
      %v2560 = vpop.f32.mrf.mxu0
      %v2561 = vpop.f32.mrf.mxu0
      %v2562 = vadd.f32 0.0, %v2561
      %v2563 = vpop.f32.mrf.mxu0
      %2564 = vdwg.mxu0
      %v2565 = vadd.f32 %v2359, %v2439
      %v2566 = vadd.f32 %v2360, %v2442
      %v2567 = vadd.f32 %v2361, %v2447
      %v2568 = vadd.f32 %v2362, %v2450
      %v2569 = vadd.f32 %v2363, %v2455
      %v2570 = vadd.f32 %v2364, %v2458
      %v2571 = vadd.f32 %v2365, %v2463
      %v2572 = vadd.f32 %v2366, %v2466
      %v2573 = vadd.f32 %v2367, %v2471
      %v2574 = vadd.f32 %v2368, %v2474
      %v2575 = vadd.f32 %v2369, %v2479
      %v2576 = vadd.f32 %v2370, %v2482
      %v2577 = vadd.f32 %v2371, %v2487
      %v2578 = vadd.f32 %v2372, %v2490
      %v2579 = vadd.f32 %v2373, %v2495
      %v2580 = vadd.f32 %v2374, %v2498
      %v2581 = vadd.f32 %v2375, %v2503
      %v2582 = vadd.f32 %v2376, %v2506
      %v2583 = vadd.f32 %v2377, %v2511
      %v2584 = vadd.f32 %v2378, %v2514
      %v2585 = vadd.f32 %v2379, %v2519
      %v2586 = vadd.f32 %v2380, %v2522
      %v2587 = vadd.f32 %v2381, %v2527
      %v2588 = vadd.f32 %v2382, %v2530
      %v2589 = vadd.f32 %v2383, %v2535
      %v2590 = vadd.f32 %v2384, %v2538
      %v2591 = vadd.f32 %v2385, %v2543
      %v2592 = vadd.f32 %v2386, %v2546
      %v2593 = vadd.f32 %v2387, %v2551
      %v2594 = vadd.f32 %v2388, %v2554
      %v2595 = vadd.f32 %v2389, %v2559
      %v2596 = vadd.f32 %v2390, %v2562
      %v2597 = vsel %vm248, %v2565, 0.0
      %v2598 = vsel %vm248, %v2566, 0.0
      %v2599 = vadd.f32 %v2597, %v2598
      %v2600 = vsel %vm248, %v2567, 0.0
      %v2601 = vadd.f32 %v2599, %v2600
      %v2602 = vsel %vm248, %v2568, 0.0
      %v2603 = vadd.f32 %v2601, %v2602
      %v2604 = vsel %vm248, %v2569, 0.0
      %v2605 = vadd.f32 %v2603, %v2604
      %v2606 = vsel %vm248, %v2570, 0.0
      %v2607 = vadd.f32 %v2605, %v2606
      %v2608 = vsel %vm248, %v2571, 0.0
      %v2609 = vadd.f32 %v2607, %v2608
      %v2610 = vsel %vm248, %v2572, 0.0
      %v2611 = vadd.f32 %v2609, %v2610
      %v2612 = vsel %vm248, %v2573, 0.0
      %v2613 = vadd.f32 %v2611, %v2612
      %v2614 = vsel %vm248, %v2574, 0.0
      %v2615 = vadd.f32 %v2613, %v2614
      %v2616 = vsel %vm248, %v2575, 0.0
      %v2617 = vadd.f32 %v2615, %v2616
      %v2618 = vsel %vm248, %v2576, 0.0
      %v2619 = vadd.f32 %v2617, %v2618
      %v2620 = vsel %vm248, %v2577, 0.0
      %v2621 = vadd.f32 %v2619, %v2620
      %v2622 = vsel %vm248, %v2578, 0.0
      %v2623 = vadd.f32 %v2621, %v2622
      %v2624 = vsel %vm248, %v2579, 0.0
      %v2625 = vadd.f32 %v2623, %v2624
      %v2626 = vsel %vm248, %v2580, 0.0
      %v2627 = vadd.f32 %v2625, %v2626
      %v2628 = vsel %vm248, %v2581, 0.0
      %v2629 = vadd.f32 %v2627, %v2628
      %v2630 = vsel %vm248, %v2582, 0.0
      %v2631 = vadd.f32 %v2629, %v2630
      %v2632 = vsel %vm248, %v2583, 0.0
      %v2633 = vadd.f32 %v2631, %v2632
      %v2634 = vsel %vm248, %v2584, 0.0
      %v2635 = vadd.f32 %v2633, %v2634
      %v2636 = vsel %vm248, %v2585, 0.0
      %v2637 = vadd.f32 %v2635, %v2636
      %v2638 = vsel %vm248, %v2586, 0.0
      %v2639 = vadd.f32 %v2637, %v2638
      %v2640 = vsel %vm248, %v2587, 0.0
      %v2641 = vadd.f32 %v2639, %v2640
      %v2642 = vsel %vm248, %v2588, 0.0
      %v2643 = vadd.f32 %v2641, %v2642
      %v2644 = vsel %vm248, %v2589, 0.0
      %v2645 = vadd.f32 %v2643, %v2644
      %v2646 = vsel %vm248, %v2590, 0.0
      %v2647 = vadd.f32 %v2645, %v2646
      %v2648 = vsel %vm248, %v2591, 0.0
      %v2649 = vadd.f32 %v2647, %v2648
      %v2650 = vsel %vm248, %v2592, 0.0
      %v2651 = vadd.f32 %v2649, %v2650
      %v2652 = vsel %vm248, %v2593, 0.0
      %v2653 = vadd.f32 %v2651, %v2652
      %v2654 = vsel %vm248, %v2594, 0.0
      %v2655 = vadd.f32 %v2653, %v2654
      %v2656 = vsel %vm248, %v2595, 0.0
      %v2657 = vadd.f32 %v2655, %v2656
      %v2658 = vsel %vm248, %v2596, 0.0
      %v2659 = vadd.f32 %v2657, %v2658
      %v2660 = vrot.slane %v2659, 4
      %v2661 = vadd.f32 %v2659, %v2660
      %v2662 = vrot.slane %v2661, 2
      %v2663 = vadd.f32 %v2661, %v2662
      %v2664 = vrot.slane %v2663, 1
      %v2665 = vadd.f32 %v2663, %v2664
      %vm2666 = vcmask 24576
      %2667 = vst.msk [vmem:[%s211] sm:$0x1] %vm2666, %v2665
      %v2668 = vmul.f32 %v2565, %v2565
      %v2669 = vmul.f32 %v2566, %v2566
      %v2670 = vmul.f32 %v2567, %v2567
      %v2671 = vmul.f32 %v2568, %v2568
      %v2672 = vmul.f32 %v2569, %v2569
      %v2673 = vmul.f32 %v2570, %v2570
      %v2674 = vmul.f32 %v2571, %v2571
      %v2675 = vmul.f32 %v2572, %v2572
      %v2676 = vmul.f32 %v2573, %v2573
      %v2677 = vmul.f32 %v2574, %v2574
      %v2678 = vmul.f32 %v2575, %v2575
      %v2679 = vmul.f32 %v2576, %v2576
      %v2680 = vmul.f32 %v2577, %v2577
      %v2681 = vmul.f32 %v2578, %v2578
      %v2682 = vmul.f32 %v2579, %v2579
      %v2683 = vmul.f32 %v2580, %v2580
      %v2684 = vmul.f32 %v2581, %v2581
      %v2685 = vmul.f32 %v2582, %v2582
      %v2686 = vmul.f32 %v2583, %v2583
      %v2687 = vmul.f32 %v2584, %v2584
      %v2688 = vmul.f32 %v2585, %v2585
      %v2689 = vmul.f32 %v2586, %v2586
      %v2690 = vmul.f32 %v2587, %v2587
      %v2691 = vmul.f32 %v2588, %v2588
      %v2692 = vmul.f32 %v2589, %v2589
      %v2693 = vmul.f32 %v2590, %v2590
      %v2694 = vmul.f32 %v2591, %v2591
      %v2695 = vmul.f32 %v2592, %v2592
      %v2696 = vmul.f32 %v2593, %v2593
      %v2697 = vmul.f32 %v2594, %v2594
      %v2698 = vmul.f32 %v2595, %v2595
      %v2699 = vmul.f32 %v2596, %v2596
      %v2700 = vsel %vm248, %v2668, 0.0
      %v2701 = vsel %vm248, %v2669, 0.0
      %v2702 = vadd.f32 %v2700, %v2701
      %v2703 = vsel %vm248, %v2670, 0.0
      %v2704 = vadd.f32 %v2702, %v2703
      %v2705 = vsel %vm248, %v2671, 0.0
      %v2706 = vadd.f32 %v2704, %v2705
      %v2707 = vsel %vm248, %v2672, 0.0
      %v2708 = vadd.f32 %v2706, %v2707
      %v2709 = vsel %vm248, %v2673, 0.0
      %v2710 = vadd.f32 %v2708, %v2709
      %v2711 = vsel %vm248, %v2674, 0.0
      %v2712 = vadd.f32 %v2710, %v2711
      %v2713 = vsel %vm248, %v2675, 0.0
      %v2714 = vadd.f32 %v2712, %v2713
      %v2715 = vsel %vm248, %v2676, 0.0
      %v2716 = vadd.f32 %v2714, %v2715
      %v2717 = vsel %vm248, %v2677, 0.0
      %v2718 = vadd.f32 %v2716, %v2717
      %v2719 = vsel %vm248, %v2678, 0.0
      %v2720 = vadd.f32 %v2718, %v2719
      %v2721 = vsel %vm248, %v2679, 0.0
      %v2722 = vadd.f32 %v2720, %v2721
      %v2723 = vsel %vm248, %v2680, 0.0
      %v2724 = vadd.f32 %v2722, %v2723
      %v2725 = vsel %vm248, %v2681, 0.0
      %v2726 = vadd.f32 %v2724, %v2725
      %v2727 = vsel %vm248, %v2682, 0.0
      %v2728 = vadd.f32 %v2726, %v2727
      %v2729 = vsel %vm248, %v2683, 0.0
      %v2730 = vadd.f32 %v2728, %v2729
      %v2731 = vsel %vm248, %v2684, 0.0
      %v2732 = vadd.f32 %v2730, %v2731
      %v2733 = vsel %vm248, %v2685, 0.0
      %v2734 = vadd.f32 %v2732, %v2733
      %v2735 = vsel %vm248, %v2686, 0.0
      %v2736 = vadd.f32 %v2734, %v2735
      %v2737 = vsel %vm248, %v2687, 0.0
      %v2738 = vadd.f32 %v2736, %v2737
      %v2739 = vsel %vm248, %v2688, 0.0
      %v2740 = vadd.f32 %v2738, %v2739
      %v2741 = vsel %vm248, %v2689, 0.0
      %v2742 = vadd.f32 %v2740, %v2741
      %v2743 = vsel %vm248, %v2690, 0.0
      %v2744 = vadd.f32 %v2742, %v2743
      %v2745 = vsel %vm248, %v2691, 0.0
      %v2746 = vadd.f32 %v2744, %v2745
      %v2747 = vsel %vm248, %v2692, 0.0
      %v2748 = vadd.f32 %v2746, %v2747
      %v2749 = vsel %vm248, %v2693, 0.0
      %v2750 = vadd.f32 %v2748, %v2749
      %v2751 = vsel %vm248, %v2694, 0.0
      %v2752 = vadd.f32 %v2750, %v2751
      %v2753 = vsel %vm248, %v2695, 0.0
      %v2754 = vadd.f32 %v2752, %v2753
      %v2755 = vsel %vm248, %v2696, 0.0
      %v2756 = vadd.f32 %v2754, %v2755
      %v2757 = vsel %vm248, %v2697, 0.0
      %v2758 = vadd.f32 %v2756, %v2757
      %v2759 = vsel %vm248, %v2698, 0.0
      %v2760 = vadd.f32 %v2758, %v2759
      %v2761 = vsel %vm248, %v2699, 0.0
      %v2762 = vadd.f32 %v2760, %v2761
      %v2763 = vrot.slane %v2762, 4
      %v2764 = vadd.f32 %v2762, %v2763
      %v2765 = vrot.slane %v2764, 2
      %v2766 = vadd.f32 %v2764, %v2765
      %v2767 = vrot.slane %v2766, 1
      %v2768 = vadd.f32 %v2766, %v2767
      %2769 = vst.msk [vmem:[%s214] sm:$0x1] %vm2666, %v2768
      %v2770 = vpack.c.bf16 %v2566, %v2565
      %v2771 = vpack.c.bf16 %v2568, %v2567
      %v2772 = vpack.c.bf16 %v2570, %v2569
      %v2773 = vpack.c.bf16 %v2572, %v2571
      %v2774 = vpack.c.bf16 %v2574, %v2573
      %v2775 = vpack.c.bf16 %v2576, %v2575
      %v2776 = vpack.c.bf16 %v2578, %v2577
      %v2777 = vpack.c.bf16 %v2580, %v2579
      %v2778 = vpack.c.bf16 %v2582, %v2581
      %v2779 = vpack.c.bf16 %v2584, %v2583
      %v2780 = vpack.c.bf16 %v2586, %v2585
      %v2781 = vpack.c.bf16 %v2588, %v2587
      %v2782 = vpack.c.bf16 %v2590, %v2589
      %v2783 = vpack.c.bf16 %v2592, %v2591
      %v2784 = vpack.c.bf16 %v2594, %v2593
      %v2785 = vpack.c.bf16 %v2596, %v2595
      %v2802 = vunpack.c.l.b16 %v2770
      %v2803 = vunpack.c.h.b16 %v2770
      %v2804 = vunpack.c.l.b16 %v2771
      %v2805 = vunpack.c.h.b16 %v2771
      %v2806 = vunpack.c.l.b16 %v2772
      %v2807 = vunpack.c.h.b16 %v2772
      %v2808 = vunpack.c.l.b16 %v2773
      %v2809 = vunpack.c.h.b16 %v2773
      %v2810 = vunpack.c.l.b16 %v2774
      %v2811 = vunpack.c.h.b16 %v2774
      %v2812 = vunpack.c.l.b16 %v2775
      %v2813 = vunpack.c.h.b16 %v2775
      %v2814 = vunpack.c.l.b16 %v2776
      %v2815 = vunpack.c.h.b16 %v2776
      %v2816 = vunpack.c.l.b16 %v2777
      %v2817 = vunpack.c.h.b16 %v2777
      %v2818 = vunpack.c.l.b16 %v2778
      %v2819 = vunpack.c.h.b16 %v2778
      %v2820 = vunpack.c.l.b16 %v2779
      %v2821 = vunpack.c.h.b16 %v2779
      %v2822 = vunpack.c.l.b16 %v2780
      %v2823 = vunpack.c.h.b16 %v2780
      %v2824 = vunpack.c.l.b16 %v2781
      %v2825 = vunpack.c.h.b16 %v2781
      %v2826 = vunpack.c.l.b16 %v2782
      %v2827 = vunpack.c.h.b16 %v2782
      %v2828 = vunpack.c.l.b16 %v2783
      %v2829 = vunpack.c.h.b16 %v2783
      %v2830 = vunpack.c.l.b16 %v2784
      %v2831 = vunpack.c.h.b16 %v2784
      %v2832 = vunpack.c.l.b16 %v2785
      %v2833 = vunpack.c.h.b16 %v2785
      %v2834 = vpack.c.b16 %v2802, %v2802
      %v2835 = vpack.c.b16 %v2803, %v2803
      %v2836 = vpack.c.b16 %v2804, %v2804
      %v2837 = vpack.c.b16 %v2805, %v2805
      %v2838 = vpack.c.b16 %v2806, %v2806
      %v2839 = vpack.c.b16 %v2807, %v2807
      %v2840 = vpack.c.b16 %v2808, %v2808
      %v2841 = vpack.c.b16 %v2809, %v2809
      %v2842 = vpack.c.b16 %v2810, %v2810
      %v2843 = vpack.c.b16 %v2811, %v2811
      %v2844 = vpack.c.b16 %v2812, %v2812
      %v2845 = vpack.c.b16 %v2813, %v2813
      %v2846 = vpack.c.b16 %v2814, %v2814
      %v2847 = vpack.c.b16 %v2815, %v2815
      %v2848 = vpack.c.b16 %v2816, %v2816
      %v2849 = vpack.c.b16 %v2817, %v2817
      %v2850 = vpack.c.b16 %v2818, %v2818
      %v2851 = vpack.c.b16 %v2819, %v2819
      %v2852 = vpack.c.b16 %v2820, %v2820
      %v2853 = vpack.c.b16 %v2821, %v2821
      %v2854 = vpack.c.b16 %v2822, %v2822
      %v2855 = vpack.c.b16 %v2823, %v2823
      %v2856 = vpack.c.b16 %v2824, %v2824
      %v2857 = vpack.c.b16 %v2825, %v2825
      %v2858 = vpack.c.b16 %v2826, %v2826
      %v2859 = vpack.c.b16 %v2827, %v2827
      %v2860 = vpack.c.b16 %v2828, %v2828
      %v2861 = vpack.c.b16 %v2829, %v2829
      %v2862 = vpack.c.b16 %v2830, %v2830
      %v2863 = vpack.c.b16 %v2831, %v2831
      %v2864 = vpack.c.b16 %v2832, %v2832
      %v2865 = vpack.c.b16 %v2833, %v2833
      %vm2898 = vcmask 27648
      %2899 = vst.msk [vmem:[%s208] sm:$0xf] %vm2898, %v2834
      %2900 = vst.msk [vmem:[%s208 + $0x4] sm:$0xf] %vm2898, %v2835
      %2901 = vst.msk [vmem:[%s208 + $0x8] sm:$0xf] %vm2898, %v2836
      %2902 = vst.msk [vmem:[%s208 + $0xc] sm:$0xf] %vm2898, %v2837
      %2903 = vst.msk [vmem:[%s208 + $0x10] sm:$0xf] %vm2898, %v2838
      %2904 = vst.msk [vmem:[%s208 + $0x14] sm:$0xf] %vm2898, %v2839
      %2905 = vst.msk [vmem:[%s208 + $0x18] sm:$0xf] %vm2898, %v2840
      %2906 = vst.msk [vmem:[%s208 + $0x1c] sm:$0xf] %vm2898, %v2841
      %2907 = vst.msk [vmem:[%s208 + $0x20] sm:$0xf] %vm2898, %v2842
      %2908 = vst.msk [vmem:[%s208 + $0x24] sm:$0xf] %vm2898, %v2843
      %2909 = vst.msk [vmem:[%s208 + $0x28] sm:$0xf] %vm2898, %v2844
      %2910 = vst.msk [vmem:[%s208 + $0x2c] sm:$0xf] %vm2898, %v2845
      %2911 = vst.msk [vmem:[%s208 + $0x30] sm:$0xf] %vm2898, %v2846
      %2912 = vst.msk [vmem:[%s208 + $0x34] sm:$0xf] %vm2898, %v2847
      %2913 = vst.msk [vmem:[%s208 + $0x38] sm:$0xf] %vm2898, %v2848
      %2914 = vst.msk [vmem:[%s208 + $0x3c] sm:$0xf] %vm2898, %v2849
      %2915 = vst.msk [vmem:[%s208 + $0x40] sm:$0xf] %vm2898, %v2850
      %2916 = vst.msk [vmem:[%s208 + $0x44] sm:$0xf] %vm2898, %v2851
      %2917 = vst.msk [vmem:[%s208 + $0x48] sm:$0xf] %vm2898, %v2852
      %2918 = vst.msk [vmem:[%s208 + $0x4c] sm:$0xf] %vm2898, %v2853
      %2919 = vst.msk [vmem:[%s208 + $0x50] sm:$0xf] %vm2898, %v2854
      %2920 = vst.msk [vmem:[%s208 + $0x54] sm:$0xf] %vm2898, %v2855
      %2921 = vst.msk [vmem:[%s208 + $0x58] sm:$0xf] %vm2898, %v2856
      %2922 = vst.msk [vmem:[%s208 + $0x5c] sm:$0xf] %vm2898, %v2857
      %2923 = vst.msk [vmem:[%s208 + $0x60] sm:$0xf] %vm2898, %v2858
      %2924 = vst.msk [vmem:[%s208 + $0x64] sm:$0xf] %vm2898, %v2859
      %2925 = vst.msk [vmem:[%s208 + $0x68] sm:$0xf] %vm2898, %v2860
      %2926 = vst.msk [vmem:[%s208 + $0x6c] sm:$0xf] %vm2898, %v2861
      %2927 = vst.msk [vmem:[%s208 + $0x70] sm:$0xf] %vm2898, %v2862
      %2928 = vst.msk [vmem:[%s208 + $0x74] sm:$0xf] %vm2898, %v2863
      %2929 = vst.msk [vmem:[%s208 + $0x78] sm:$0xf] %vm2898, %v2864
      %2930 = vst.msk [vmem:[%s208 + $0x7c] sm:$0xf] %vm2898, %v2865
      %p2931 = scmp.lt.s32.totalorder %s16, 1
      %s2932 = scalar_select %p2931, %s16, 1
      %s2933 = smul.addr %s2932, 32
      %s2934 = smul.addr %s2933, 4
      %s2935 = scalar_lea.vmem %s2, %s2934
      %p2936 = scmp.lt.s32.totalorder %s16, 1
      %s2937 = scalar_select %p2936, %s16, 1
      %s2938 = scalar_lea.vmem %s3, %s2937
      %p2939 = scmp.lt.s32.totalorder %s16, 1
      %s2940 = scalar_select %p2939, %s16, 1
      %s2941 = scalar_lea.vmem %s4, %s2940
      // Predicated region
      $region29: #{basic_block_forward.3} parent=27 // pred_check
        %p2942 = pneg %p81
      $region30: #{basic_block_forward.3} parent=27 // pred_check_branch
        %2944 = sbr.rel (%p2942) target = $region32
      $region31: #{basic_block_forward.3} parent=27 // pred_region
        _
      $region32: #{basic_block_forward.3} parent=27 // pred_fallthru
        _
      // Predicated region
      $region33: #{basic_block_forward.3} parent=27 // pred_check
        %p2945 = pneg %p107
      $region34: #{basic_block_forward.3} parent=27 // pred_check_branch
        %2947 = sbr.rel (%p2945) target = $region36
      $region35: #{basic_block_forward.3} parent=27 // pred_region
        _
      $region36: #{basic_block_forward.3} parent=27 // pred_fallthru
        _
      // Predicated region
      $region37: #{basic_block_forward.3} parent=27 // pred_check
        %p2948 = pneg %p133
      $region38: #{basic_block_forward.3} parent=27 // pred_check_branch
        %2950 = sbr.rel (%p2948) target = $region40
      $region39: #{basic_block_forward.3} parent=27 // pred_region
        _
      $region40: #{basic_block_forward.3} parent=27 // pred_fallthru
        _
    $region28: #{basic_block_forward.3} parent=5 // pred_fallthru
      _
    %p2951 = scmp.le.s32.totalorder 2, %s11
    // Predicated region
    $region41: #{basic_block_forward.3} parent=5 // pred_check
      %p2952 = pneg %p2951
    $region42: #{basic_block_forward.3} parent=5 // pred_check_branch
      %2954 = sbr.rel (%p2952) target = $region44
    $region43: #{basic_block_forward.3} parent=5 // pred_region
      %s2955 = ssub.s32 %s11, 2
      // Predicated region
      $region45: #{basic_block_forward.3} parent=43 // pred_check
        %p2956 = pneg %p87
      $region46: #{basic_block_forward.3} parent=43 // pred_check_branch
        %2958 = sbr.rel (%p2956) target = $region48
      $region47: #{basic_block_forward.3} parent=43 // pred_region
        %p2959 = scmp.lt.s32.totalorder %s17, 1
        %s2960 = scalar_select %p2959, %s17, 1
        %s2961 = smul.addr %s2960, 32
        %s2962 = smul.addr %s2961, 4
        %s2963 = scalar_lea.vmem %s2, %s2962
      $region48: #{basic_block_forward.3} parent=43 // pred_fallthru
        _
      // Predicated region
      $region49: #{basic_block_forward.3} parent=43 // pred_check
        %p2964 = pneg %p113
      $region50: #{basic_block_forward.3} parent=43 // pred_check_branch
        %2966 = sbr.rel (%p2964) target = $region52
      $region51: #{basic_block_forward.3} parent=43 // pred_region
        %p2967 = scmp.lt.s32.totalorder %s17, 1
        %s2968 = scalar_select %p2967, %s17, 1
        %s2969 = scalar_lea.vmem %s3, %s2968
      $region52: #{basic_block_forward.3} parent=43 // pred_fallthru
        _
      // Predicated region
      $region53: #{basic_block_forward.3} parent=43 // pred_check
        %p2970 = pneg %p139
      $region54: #{basic_block_forward.3} parent=43 // pred_check_branch
        %2972 = sbr.rel (%p2970) target = $region56
      $region55: #{basic_block_forward.3} parent=43 // pred_region
        %p2973 = scmp.lt.s32.totalorder %s17, 1
        %s2974 = scalar_select %p2973, %s17, 1
        %s2975 = scalar_lea.vmem %s4, %s2974
      $region56: #{basic_block_forward.3} parent=43 // pred_fallthru
        _
    $region44: #{basic_block_forward.3} parent=5 // pred_fallthru
      _
  $region6: #{basic_block_forward.3} parent=0 // loop_footer
    %s15 = sadd.s32 1, %s11
  $region7: #{basic_block_forward.3} parent=0 // loop_footer_branch
    %10 = sbr.rel target = $region3
  $region8: #{basic_block_forward.3} parent=0 // loop_exit
    _

// kernel: basic_block_forward.4
$region0: #{basic_block_forward.4}
  #allocation0 [shape = 'u32[]', space=smem, size = 0x4, offset = 0x4, fixed_abs, tag = 'smem constant byte address 0x4 - core index']
  #allocation1 [shape = 'u32[144,128]{1,0:T(1,128)}', space=vmem, size = 0x12000, scoped, tag = 'internal scratch']
  #allocation2 [shape = 'f32[1,18,18,4]{3,2,1,0:T(8,128)}', space=vmem, size = 0x36000, scoped, tag = 'scratch operand']
  %s0 = inlined_call_operand.vmem [shape: bf16[2,16,16,4], index: 0, kind: input, shape index: {}]
  %s1 = inlined_call_operand.vmem [shape: f32[1,4], index: 1, kind: input, shape index: {}]
  %s2 = inlined_call_operand.vmem [shape: f32[1,4], index: 2, kind: input, shape index: {}]
  %s3 = inlined_call_operand.vmem [shape: bf16[9,4,4], index: 3, kind: input, shape index: {}]
  %s4 = inlined_call_operand.vmem [shape: bf16[2,16,16,4], index: 4, kind: output, shape index: {0}]
  %s5 = inlined_call_operand.vmem [shape: f32[2,1,1,4], index: 5, kind: output, shape index: {1}]
  %s6 = inlined_call_operand.vmem [shape: f32[2,1,1,4], index: 6, kind: output, shape index: {2}]
  %7 = xla_tuple %s4, %s5, %s6
  %s8 = sld [smem:[#allocation0]]
  $region65: #{basic_block_forward.4} parent=0
    _
  %s10 = ssub.s32 1, %s8
  %s11 = scalar_select 0, %s10, %s8
  loop: start=0, step=1, limit=4
  $region2: #{basic_block_forward.4} parent=0 // loop_pre_header
    _
  $region3: #{basic_block_forward.4} parent=0 // loop_header
    %s13 = sphi 0, %s17
    %p14 = scmp.ge.s32.totalorder %s13, 4
    %s23 = sphi 0, %s25
    %s26 = sphi 0, %s23
    %s27 = sphi 0, %s26
    %s43 = sphi 0, %s27
    %s47 = sphi 0, %s47
    %s49 = sphi 0, %s47
    %s50 = sphi 0, %s49
    %s64 = sphi 0, %s50
    %s68 = sphi 0, %s68
    %s70 = sphi 0, %s68
    %s71 = sphi 0, %s70
    %s85 = sphi 0, %s71
    %s89 = sphi 0, %s89
    %s91 = sphi 0, %s89
    %s92 = sphi 0, %s91
    %s106 = sphi 0, %s92
    %s112 = sphi 0, %s114
    %s115 = sphi 0, %s112
    %s116 = sphi 0, %s115
    %s132 = sphi 0, %s116
    %s138 = sphi 0, %s140
    %s141 = sphi 0, %s138
    %s142 = sphi 0, %s141
    %s158 = sphi 0, %s142
    %s164 = sphi 0, %s166
    %s167 = sphi 0, %s164
    %s168 = sphi 0, %s167
    %s184 = sphi 0, %s168
  $region4: #{basic_block_forward.4} parent=0 // loop_header_branch
    %16 = sbr.rel (%p14) target = $region8
  $region5: #{basic_block_forward.4} parent=0 // loop_body
    %s18 = ssub.s32 %s13, 1
    %s19 = ssub.s32 %s13, 2
    %s20 = sadd.s32 %s13, 1
    %s21 = ssub.s32 %s13, %s20
    %p22 = scmp.eq.s32.totalorder %s21, 0
    %s24 = sadd.s32 %s23, 1
    %s25 = scalar_select %p22, %s23, %s24
    %p28 = pneg %p22
    %p29 = scmp.eq.s32.totalorder %s13, 1
    %p30 = por %p28, %p29
    %p31 = scmp.ne.s32.totalorder %s23, %s26
    %p32 = scmp.eq.s32.totalorder %s13, 0
    %p33 = por %p31, %p32
    %p34 = scmp.ne.s32.totalorder %s23, %s26
    %p35 = scmp.eq.s32.totalorder %s18, 1
    %p36 = por %p34, %p35
    %p37 = scmp.ne.s32.totalorder %s26, %s27
    %p38 = scmp.eq.s32.totalorder %s18, 0
    %p39 = por %p37, %p38
    %p40 = scmp.ne.s32.totalorder %s26, %s27
    %p41 = scmp.eq.s32.totalorder %s19, 1
    %p42 = por %p40, %p41
    %p44 = scmp.ne.s32.totalorder %s27, %s43
    %p45 = scmp.eq.s32.totalorder %s19, 0
    %p46 = por %p44, %p45
    %s48 = sadd.s32 %s47, 1
    %p51 = scmp.eq.s32.totalorder %s13, 1
    %p52 = scmp.ne.s32.totalorder %s47, %s49
    %p53 = scmp.eq.s32.totalorder %s13, 0
    %p54 = por %p52, %p53
    %p55 = scmp.ne.s32.totalorder %s47, %s49
    %p56 = scmp.eq.s32.totalorder %s18, 1
    %p57 = por %p55, %p56
    %p58 = scmp.ne.s32.totalorder %s49, %s50
    %p59 = scmp.eq.s32.totalorder %s18, 0
    %p60 = por %p58, %p59
    %p61 = scmp.ne.s32.totalorder %s49, %s50
    %p62 = scmp.eq.s32.totalorder %s19, 1
    %p63 = por %p61, %p62
    %p65 = scmp.ne.s32.totalorder %s50, %s64
    %p66 = scmp.eq.s32.totalorder %s19, 0
    %p67 = por %p65, %p66
    %s69 = sadd.s32 %s68, 1
    %p72 = scmp.eq.s32.totalorder %s13, 1
    %p73 = scmp.ne.s32.totalorder %s68, %s70
    %p74 = scmp.eq.s32.totalorder %s13, 0
    %p75 = por %p73, %p74
    %p76 = scmp.ne.s32.totalorder %s68, %s70
    %p77 = scmp.eq.s32.totalorder %s18, 1
    %p78 = por %p76, %p77
    %p79 = scmp.ne.s32.totalorder %s70, %s71
    %p80 = scmp.eq.s32.totalorder %s18, 0
    %p81 = por %p79, %p80
    %p82 = scmp.ne.s32.totalorder %s70, %s71
    %p83 = scmp.eq.s32.totalorder %s19, 1
    %p84 = por %p82, %p83
    %p86 = scmp.ne.s32.totalorder %s71, %s85
    %p87 = scmp.eq.s32.totalorder %s19, 0
    %p88 = por %p86, %p87
    %s90 = sadd.s32 %s89, 1
    %p93 = scmp.eq.s32.totalorder %s13, 1
    %p94 = scmp.ne.s32.totalorder %s89, %s91
    %p95 = scmp.eq.s32.totalorder %s13, 0
    %p96 = por %p94, %p95
    %p97 = scmp.ne.s32.totalorder %s89, %s91
    %p98 = scmp.eq.s32.totalorder %s18, 1
    %p99 = por %p97, %p98
    %p100 = scmp.ne.s32.totalorder %s91, %s92
    %p101 = scmp.eq.s32.totalorder %s18, 0
    %p102 = por %p100, %p101
    %p103 = scmp.ne.s32.totalorder %s91, %s92
    %p104 = scmp.eq.s32.totalorder %s19, 1
    %p105 = por %p103, %p104
    %p107 = scmp.ne.s32.totalorder %s92, %s106
    %p108 = scmp.eq.s32.totalorder %s19, 0
    %p109 = por %p107, %p108
    %s110 = ssub.s32 %s13, %s20
    %p111 = scmp.eq.s32.totalorder %s110, 0
    %s113 = sadd.s32 %s112, 1
    %s114 = scalar_select %p111, %s112, %s113
    %p117 = pneg %p111
    %p118 = scmp.eq.s32.totalorder %s13, 1
    %p119 = por %p117, %p118
    %p120 = scmp.ne.s32.totalorder %s112, %s115
    %p121 = scmp.eq.s32.totalorder %s13, 0
    %p122 = por %p120, %p121
    %p123 = scmp.ne.s32.totalorder %s112, %s115
    %p124 = scmp.eq.s32.totalorder %s18, 1
    %p125 = por %p123, %p124
    %p126 = scmp.ne.s32.totalorder %s115, %s116
    %p127 = scmp.eq.s32.totalorder %s18, 0
    %p128 = por %p126, %p127
    %p129 = scmp.ne.s32.totalorder %s115, %s116
    %p130 = scmp.eq.s32.totalorder %s19, 1
    %p131 = por %p129, %p130
    %p133 = scmp.ne.s32.totalorder %s116, %s132
    %p134 = scmp.eq.s32.totalorder %s19, 0
    %p135 = por %p133, %p134
    %s136 = ssub.s32 %s13, %s20
    %p137 = scmp.eq.s32.totalorder %s136, 0
    %s139 = sadd.s32 %s138, 1
    %s140 = scalar_select %p137, %s138, %s139
    %p143 = pneg %p137
    %p144 = scmp.eq.s32.totalorder %s13, 1
    %p145 = por %p143, %p144
    %p146 = scmp.ne.s32.totalorder %s138, %s141
    %p147 = scmp.eq.s32.totalorder %s13, 0
    %p148 = por %p146, %p147
    %p149 = scmp.ne.s32.totalorder %s138, %s141
    %p150 = scmp.eq.s32.totalorder %s18, 1
    %p151 = por %p149, %p150
    %p152 = scmp.ne.s32.totalorder %s141, %s142
    %p153 = scmp.eq.s32.totalorder %s18, 0
    %p154 = por %p152, %p153
    %p155 = scmp.ne.s32.totalorder %s141, %s142
    %p156 = scmp.eq.s32.totalorder %s19, 1
    %p157 = por %p155, %p156
    %p159 = scmp.ne.s32.totalorder %s142, %s158
    %p160 = scmp.eq.s32.totalorder %s19, 0
    %p161 = por %p159, %p160
    %s162 = ssub.s32 %s13, %s20
    %p163 = scmp.eq.s32.totalorder %s162, 0
    %s165 = sadd.s32 %s164, 1
    %s166 = scalar_select %p163, %s164, %s165
    %p169 = pneg %p163
    %p170 = scmp.eq.s32.totalorder %s13, 1
    %p171 = por %p169, %p170
    %p172 = scmp.ne.s32.totalorder %s164, %s167
    %p173 = scmp.eq.s32.totalorder %s13, 0
    %p174 = por %p172, %p173
    %p175 = scmp.ne.s32.totalorder %s164, %s167
    %p176 = scmp.eq.s32.totalorder %s18, 1
    %p177 = por %p175, %p176
    %p178 = scmp.ne.s32.totalorder %s167, %s168
    %p179 = scmp.eq.s32.totalorder %s18, 0
    %p180 = por %p178, %p179
    %p181 = scmp.ne.s32.totalorder %s167, %s168
    %p182 = scmp.eq.s32.totalorder %s19, 1
    %p183 = por %p181, %p182
    %p185 = scmp.ne.s32.totalorder %s168, %s184
    %p186 = scmp.eq.s32.totalorder %s19, 0
    %p187 = por %p185, %p186
    %p188 = scmp.le.s32.totalorder 1, %s13
    %p189 = scmp.lt.s32.totalorder %s13, 3
    %p190 = pnand %p188, %p189
    %p191 = pneg %p190
    // Predicated region
    $region9: #{basic_block_forward.4} parent=5 // pred_check
      _
    $region10: #{basic_block_forward.4} parent=5 // pred_check_branch
      %193 = sbr.rel (%p190) target = $region12
    $region11: #{basic_block_forward.4} parent=5 // pred_region
      %s194 = ssub.s32 %s13, 1
      // Predicated region
      $region13: #{basic_block_forward.4} parent=11 // pred_check
        %p195 = pneg %p60
      $region14: #{basic_block_forward.4} parent=11 // pred_check_branch
        %197 = sbr.rel (%p195) target = $region16
      $region15: #{basic_block_forward.4} parent=11 // pred_region
        _
      $region16: #{basic_block_forward.4} parent=11 // pred_fallthru
        _
      // Predicated region
      $region17: #{basic_block_forward.4} parent=11 // pred_check
        %p198 = pneg %p81
      $region18: #{basic_block_forward.4} parent=11 // pred_check_branch
        %200 = sbr.rel (%p198) target = $region20
      $region19: #{basic_block_forward.4} parent=11 // pred_region
        _
      $region20: #{basic_block_forward.4} parent=11 // pred_fallthru
        _
      // Predicated region
      $region21: #{basic_block_forward.4} parent=11 // pred_check
        %p201 = pneg %p102
      $region22: #{basic_block_forward.4} parent=11 // pred_check_branch
        %203 = sbr.rel (%p201) target = $region24
      $region23: #{basic_block_forward.4} parent=11 // pred_region
        _
      $region24: #{basic_block_forward.4} parent=11 // pred_fallthru
        _
    $region12: #{basic_block_forward.4} parent=5 // pred_fallthru
      _
    %p204 = scmp.lt.s32.totalorder %s13, 2
    // Predicated region
    $region25: #{basic_block_forward.4} parent=5 // pred_check
      %p205 = pneg %p204
    $region26: #{basic_block_forward.4} parent=5 // pred_check_branch
      %207 = sbr.rel (%p205) target = $region28
    $region27: #{basic_block_forward.4} parent=5 // pred_region
      // Predicated region
      $region29: #{basic_block_forward.4} parent=27 // pred_check
        %p208 = pneg %p33
      $region30: #{basic_block_forward.4} parent=27 // pred_check_branch
        %210 = sbr.rel (%p208) target = $region32
      $region31: #{basic_block_forward.4} parent=27 // pred_region
        %p211 = scmp.lt.s32.totalorder %s13, 1
        %s212 = scalar_select %p211, %s13, 1
        %s213 = smul.addr %s212, 32
        %s214 = smul.addr %s213, 4
        %s215 = scalar_lea.vmem %s0, %s214
      $region32: #{basic_block_forward.4} parent=27 // pred_fallthru
        _
    $region28: #{basic_block_forward.4} parent=5 // pred_fallthru
      _
    %p216 = scmp.le.s32.totalorder 1, %s13
    %p217 = scmp.lt.s32.totalorder %s13, 3
    %p218 = pnand %p216, %p217
    %p219 = pneg %p218
    // Predicated region
    $region33: #{basic_block_forward.4} parent=5 // pred_check
      _
    $region34: #{basic_block_forward.4} parent=5 // pred_check_branch
      %221 = sbr.rel (%p218) target = $region36
    $region35: #{basic_block_forward.4} parent=5 // pred_region
      %s222 = ssub.s32 %s13, 1
      %p223 = scmp.lt.s32.totalorder %s18, 1
      %s224 = scalar_select %p223, %s18, 1
      %s225 = smul.addr %s224, 32
      %s226 = smul.addr %s225, 4
      %s227 = scalar_lea.vmem %s0, %s226
      %p228 = pneg %p39
      %p229 = pneg %p36
      %p230 = pneg %p60
      %p231 = pneg %p57
      %p232 = pneg %p81
      %p233 = pneg %p78
      %p234 = pneg %p102
      %p235 = pneg %p99
      %p236 = pneg %p128
      %p237 = pneg %p125
      %p238 = scmp.lt.s32.totalorder %s18, 1
      %s239 = scalar_select %p238, %s18, 1
      %s240 = smul.addr %s239, 32
      %s241 = smul.addr %s240, 4
      %s242 = scalar_lea.vmem %s4, %s241
      %p243 = pneg %p154
      %p244 = pneg %p151
      %p245 = scmp.lt.s32.totalorder %s18, 1
      %s246 = scalar_select %p245, %s18, 1
      %s247 = scalar_lea.vmem %s5, %s246
      %p248 = pneg %p180
      %p249 = pneg %p177
      %p250 = scmp.lt.s32.totalorder %s18, 1
      %s251 = scalar_select %p250, %s18, 1
      %s252 = scalar_lea.vmem %s6, %s251
      %p253 = scmp.lt.s32.totalorder %s18, 1
      %s254 = scalar_select %p253, %s18, 1
      %s255 = smul.addr %s254, 32
      %s256 = smul.addr %s255, 4
      %s257 = scalar_lea.vmem %s0, %s256
      %p258 = scmp.lt.s32.totalorder %s18, 1
      %s259 = scalar_select %p258, %s18, 1
      %s260 = smul.addr %s259, 32
      %s261 = smul.addr %s260, 4
      %s262 = scalar_lea.vmem %s4, %s261
      %p263 = scmp.lt.s32.totalorder %s18, 1
      %s264 = scalar_select %p263, %s18, 1
      %s265 = scalar_lea.vmem %s5, %s264
      %p266 = scmp.lt.s32.totalorder %s18, 1
      %s267 = scalar_select %p266, %s18, 1
      %s268 = scalar_lea.vmem %s6, %s267
      %v270 = vld [vmem:[%s257] sm:$0xf]
      %v271 = vld [vmem:[%s257 + $0x4] sm:$0xf]
      %v272 = vld [vmem:[%s257 + $0x8] sm:$0xf]
      %v273 = vld [vmem:[%s257 + $0xc] sm:$0xf]
      %v274 = vld [vmem:[%s257 + $0x10] sm:$0xf]
      %v275 = vld [vmem:[%s257 + $0x14] sm:$0xf]
      %v276 = vld [vmem:[%s257 + $0x18] sm:$0xf]
      %v277 = vld [vmem:[%s257 + $0x1c] sm:$0xf]
      %v278 = vld [vmem:[%s257 + $0x20] sm:$0xf]
      %v279 = vld [vmem:[%s257 + $0x24] sm:$0xf]
      %v280 = vld [vmem:[%s257 + $0x28] sm:$0xf]
      %v281 = vld [vmem:[%s257 + $0x2c] sm:$0xf]
      %v282 = vld [vmem:[%s257 + $0x30] sm:$0xf]
      %v283 = vld [vmem:[%s257 + $0x34] sm:$0xf]
      %v284 = vld [vmem:[%s257 + $0x38] sm:$0xf]
      %v285 = vld [vmem:[%s257 + $0x3c] sm:$0xf]
      %v286 = vld [vmem:[%s257 + $0x40] sm:$0xf]
      %v287 = vld [vmem:[%s257 + $0x44] sm:$0xf]
      %v288 = vld [vmem:[%s257 + $0x48] sm:$0xf]
      %v289 = vld [vmem:[%s257 + $0x4c] sm:$0xf]
      %v290 = vld [vmem:[%s257 + $0x50] sm:$0xf]
      %v291 = vld [vmem:[%s257 + $0x54] sm:$0xf]
      %v292 = vld [vmem:[%s257 + $0x58] sm:$0xf]
      %v293 = vld [vmem:[%s257 + $0x5c] sm:$0xf]
      %v294 = vld [vmem:[%s257 + $0x60] sm:$0xf]
      %v295 = vld [vmem:[%s257 + $0x64] sm:$0xf]
      %v296 = vld [vmem:[%s257 + $0x68] sm:$0xf]
      %v297 = vld [vmem:[%s257 + $0x6c] sm:$0xf]
      %v298 = vld [vmem:[%s257 + $0x70] sm:$0xf]
      %v299 = vld [vmem:[%s257 + $0x74] sm:$0xf]
      %v300 = vld [vmem:[%s257 + $0x78] sm:$0xf]
      %v301 = vld [vmem:[%s257 + $0x7c] sm:$0xf]
      %v302 = vunpack.c.l.bf16 %v270
      %v303 = vunpack.c.l.bf16 %v271
      %v304 = vunpack.c.l.bf16 %v272
      %v305 = vunpack.c.l.bf16 %v273
      %v306 = vunpack.c.l.bf16 %v274
      %v307 = vunpack.c.l.bf16 %v275
      %v308 = vunpack.c.l.bf16 %v276
      %v309 = vunpack.c.l.bf16 %v277
      %v310 = vunpack.c.l.bf16 %v278
      %v311 = vunpack.c.l.bf16 %v279
      %v312 = vunpack.c.l.bf16 %v280
      %v313 = vunpack.c.l.bf16 %v281
      %v314 = vunpack.c.l.bf16 %v282
      %v315 = vunpack.c.l.bf16 %v283
      %v316 = vunpack.c.l.bf16 %v284
      %v317 = vunpack.c.l.bf16 %v285
      %v318 = vunpack.c.l.bf16 %v286
      %v319 = vunpack.c.l.bf16 %v287
      %v320 = vunpack.c.l.bf16 %v288
      %v321 = vunpack.c.l.bf16 %v289
      %v322 = vunpack.c.l.bf16 %v290
      %v323 = vunpack.c.l.bf16 %v291
      %v324 = vunpack.c.l.bf16 %v292
      %v325 = vunpack.c.l.bf16 %v293
      %v326 = vunpack.c.l.bf16 %v294
      %v327 = vunpack.c.l.bf16 %v295
      %v328 = vunpack.c.l.bf16 %v296
      %v329 = vunpack.c.l.bf16 %v297
      %v330 = vunpack.c.l.bf16 %v298
      %v331 = vunpack.c.l.bf16 %v299
      %v332 = vunpack.c.l.bf16 %v300
      %v333 = vunpack.c.l.bf16 %v301
      %v334 = vld [vmem:[%s1] sm:$0x1]
      %v336 = vlaneseq
      %v337 = vshrl.u32 %v336, 7
      %v338 = vsub.s32 0, %v337
      %v339 = vrot.slane %v334, %v338
      %v341 = vmul.f32 %v302, %v339
      %v342 = vmul.f32 %v303, %v339
      %v343 = vmul.f32 %v304, %v339
      %v344 = vmul.f32 %v305, %v339
      %v345 = vmul.f32 %v306, %v339
      %v346 = vmul.f32 %v307, %v339
      %v347 = vmul.f32 %v308, %v339
      %v348 = vmul.f32 %v309, %v339
      %v349 = vmul.f32 %v310, %v339
      %v350 = vmul.f32 %v311, %v339
      %v351 = vmul.f32 %v312, %v339
      %v352 = vmul.f32 %v313, %v339
      %v353 = vmul.f32 %v314, %v339
      %v354 = vmul.f32 %v315, %v339
      %v355 = vmul.f32 %v316, %v339
      %v356 = vmul.f32 %v317, %v339
      %v357 = vmul.f32 %v318, %v339
      %v358 = vmul.f32 %v319, %v339
      %v359 = vmul.f32 %v320, %v339
      %v360 = vmul.f32 %v321, %v339
      %v361 = vmul.f32 %v322, %v339
      %v362 = vmul.f32 %v323, %v339
      %v363 = vmul.f32 %v324, %v339
      %v364 = vmul.f32 %v325, %v339
      %v365 = vmul.f32 %v326, %v339
      %v366 = vmul.f32 %v327, %v339
      %v367 = vmul.f32 %v328, %v339
      %v368 = vmul.f32 %v329, %v339
      %v369 = vmul.f32 %v330, %v339
      %v370 = vmul.f32 %v331, %v339
      %v371 = vmul.f32 %v332, %v339
      %v372 = vmul.f32 %v333, %v339
      %v373 = vld [vmem:[%s2] sm:$0x1]
      %v375 = vlaneseq
      %v376 = vshrl.u32 %v375, 7
      %v377 = vsub.s32 0, %v376
      %v378 = vrot.slane %v373, %v377
      %v380 = vadd.f32 %v341, %v378
      %v381 = vadd.f32 %v342, %v378
      %v382 = vadd.f32 %v343, %v378
      %v383 = vadd.f32 %v344, %v378
      %v384 = vadd.f32 %v345, %v378
      %v385 = vadd.f32 %v346, %v378
      %v386 = vadd.f32 %v347, %v378
      %v387 = vadd.f32 %v348, %v378
      %v388 = vadd.f32 %v349, %v378
      %v389 = vadd.f32 %v350, %v378
      %v390 = vadd.f32 %v351, %v378
      %v391 = vadd.f32 %v352, %v378
      %v392 = vadd.f32 %v353, %v378
      %v393 = vadd.f32 %v354, %v378
      %v394 = vadd.f32 %v355, %v378
      %v395 = vadd.f32 %v356, %v378
      %v396 = vadd.f32 %v357, %v378
      %v397 = vadd.f32 %v358, %v378
      %v398 = vadd.f32 %v359, %v378
      %v399 = vadd.f32 %v360, %v378
      %v400 = vadd.f32 %v361, %v378
      %v401 = vadd.f32 %v362, %v378
      %v402 = vadd.f32 %v363, %v378
      %v403 = vadd.f32 %v364, %v378
      %v404 = vadd.f32 %v365, %v378
      %v405 = vadd.f32 %v366, %v378
      %v406 = vadd.f32 %v367, %v378
      %v407 = vadd.f32 %v368, %v378
      %v408 = vadd.f32 %v369, %v378
      %v409 = vadd.f32 %v370, %v378
      %v410 = vadd.f32 %v371, %v378
      %v411 = vadd.f32 %v372, %v378
      %v412 = vmax.f32 %v380, 0.0
      %v413 = vmax.f32 %v381, 0.0
      %v414 = vmax.f32 %v382, 0.0
      %v415 = vmax.f32 %v383, 0.0
      %v416 = vmax.f32 %v384, 0.0
      %v417 = vmax.f32 %v385, 0.0
      %v418 = vmax.f32 %v386, 0.0
      %v419 = vmax.f32 %v387, 0.0
      %v420 = vmax.f32 %v388, 0.0
      %v421 = vmax.f32 %v389, 0.0
      %v422 = vmax.f32 %v390, 0.0
      %v423 = vmax.f32 %v391, 0.0
      %v424 = vmax.f32 %v392, 0.0
      %v425 = vmax.f32 %v393, 0.0
      %v426 = vmax.f32 %v394, 0.0
      %v427 = vmax.f32 %v395, 0.0
      %v428 = vmax.f32 %v396, 0.0
      %v429 = vmax.f32 %v397, 0.0
      %v430 = vmax.f32 %v398, 0.0
      %v431 = vmax.f32 %v399, 0.0
      %v432 = vmax.f32 %v400, 0.0
      %v433 = vmax.f32 %v401, 0.0
      %v434 = vmax.f32 %v402, 0.0
      %v435 = vmax.f32 %v403, 0.0
      %v436 = vmax.f32 %v404, 0.0
      %v437 = vmax.f32 %v405, 0.0
      %v438 = vmax.f32 %v406, 0.0
      %v439 = vmax.f32 %v407, 0.0
      %v440 = vmax.f32 %v408, 0.0
      %v441 = vmax.f32 %v409, 0.0
      %v442 = vmax.f32 %v410, 0.0
      %v443 = vmax.f32 %v411, 0.0
      %vm444 = vcmask 31744
      %445 = vst.msk [vmem:[#allocation2] sm:$0xff] %vm444, 0.0
      %446 = vst.msk [vmem:[#allocation2 + $0x8] sm:$0xff] %vm444, 0.0
      %vm447 = vcmask 25600
      %448 = vst.msk [vmem:[#allocation2 + $0x10] sm:$0x3] %vm447, 0.0
      %449 = vst.msk [vmem:[#allocation2 + $0x18] sm:$0xff] %vm444, 0.0
      %450 = vst.msk [vmem:[#allocation2 + $0x20] sm:$0xff] %vm444, 0.0
      %451 = vst.msk [vmem:[#allocation2 + $0x28] sm:$0x3] %vm447, 0.0
      %452 = vst.msk [vmem:[#allocation2 + $0x30] sm:$0xff] %vm444, 0.0
      %453 = vst.msk [vmem:[#allocation2 + $0x38] sm:$0xff] %vm444, 0.0
      %454 = vst.msk [vmem:[#allocation2 + $0x40] sm:$0x3] %vm447, 0.0
      %455 = vst.msk [vmem:[#allocation2 + $0x48] sm:$0xff] %vm444, 0.0
      %456 = vst.msk [vmem:[#allocation2 + $0x50] sm:$0xff] %vm444, 0.0
      %457 = vst.msk [vmem:[#allocation2 + $0x58] sm:$0x3] %vm447, 0.0
      %458 = vst.msk [vmem:[#allocation2 + $0x60] sm:$0xff] %vm444, 0.0
      %459 = vst.msk [vmem:[#allocation2 + $0x68] sm:$0xff] %vm444, 0.0
      %460 = vst.msk [vmem:[#allocation2 + $0x70] sm:$0x3] %vm447, 0.0
      %461 = vst.msk [vmem:[#allocation2 + $0x78] sm:$0xff] %vm444, 0.0
      %462 = vst.msk [vmem:[#allocation2 + $0x80] sm:$0xff] %vm444, 0.0
      %463 = vst.msk [vmem:[#allocation2 + $0x88] sm:$0x3] %vm447, 0.0
      %464 = vst.msk [vmem:[#allocation2 + $0x90] sm:$0xff] %vm444, 0.0
      %465 = vst.msk [vmem:[#allocation2 + $0x98] sm:$0xff] %vm444, 0.0
      %466 = vst.msk [vmem:[#allocation2 + $0xa0] sm:$0x3] %vm447, 0.0
      %467 = vst.msk [vmem:[#allocation2 + $0xa8] sm:$0xff] %vm444, 0.0
      %468 = vst.msk [vmem:[#allocation2 + $0xb0] sm:$0xff] %vm444, 0.0
      %469 = vst.msk [vmem:[#allocation2 + $0xb8] sm:$0x3] %vm447, 0.0
      %470 = vst.msk [vmem:[#allocation2 + $0xc0] sm:$0xff] %vm444, 0.0
      %471 = vst.msk [vmem:[#allocation2 + $0xc8] sm:$0xff] %vm444, 0.0
      %472 = vst.msk [vmem:[#allocation2 + $0xd0] sm:$0x3] %vm447, 0.0
      %473 = vst.msk [vmem:[#allocation2 + $0xd8] sm:$0xff] %vm444, 0.0
      %474 = vst.msk [vmem:[#allocation2 + $0xe0] sm:$0xff] %vm444, 0.0
      %475 = vst.msk [vmem:[#allocation2 + $0xe8] sm:$0x3] %vm447, 0.0
      %476 = vst.msk [vmem:[#allocation2 + $0xf0] sm:$0xff] %vm444, 0.0
      %477 = vst.msk [vmem:[#allocation2 + $0xf8] sm:$0xff] %vm444, 0.0
      %478 = vst.msk [vmem:[#allocation2 + $0x100] sm:$0x3] %vm447, 0.0
      %479 = vst.msk [vmem:[#allocation2 + $0x108] sm:$0xff] %vm444, 0.0
      %480 = vst.msk [vmem:[#allocation2 + $0x110] sm:$0xff] %vm444, 0.0
      %481 = vst.msk [vmem:[#allocation2 + $0x118] sm:$0x3] %vm447, 0.0
      %482 = vst.msk [vmem:[#allocation2 + $0x120] sm:$0xff] %vm444, 0.0
      %483 = vst.msk [vmem:[#allocation2 + $0x128] sm:$0xff] %vm444, 0.0
      %484 = vst.msk [vmem:[#allocation2 + $0x130] sm:$0x3] %vm447, 0.0
      %485 = vst.msk [vmem:[#allocation2 + $0x138] sm:$0xff] %vm444, 0.0
      %486 = vst.msk [vmem:[#allocation2 + $0x140] sm:$0xff] %vm444, 0.0
      %487 = vst.msk [vmem:[#allocation2 + $0x148] sm:$0x3] %vm447, 0.0
      %488 = vst.msk [vmem:[#allocation2 + $0x150] sm:$0xff] %vm444, 0.0
      %489 = vst.msk [vmem:[#allocation2 + $0x158] sm:$0xff] %vm444, 0.0
      %490 = vst.msk [vmem:[#allocation2 + $0x160] sm:$0x3] %vm447, 0.0
      %491 = vst.msk [vmem:[#allocation2 + $0x168] sm:$0xff] %vm444, 0.0
      %492 = vst.msk [vmem:[#allocation2 + $0x170] sm:$0xff] %vm444, 0.0
      %493 = vst.msk [vmem:[#allocation2 + $0x178] sm:$0x3] %vm447, 0.0
      %494 = vst.msk [vmem:[#allocation2 + $0x180] sm:$0xff] %vm444, 0.0
      %495 = vst.msk [vmem:[#allocation2 + $0x188] sm:$0xff] %vm444, 0.0
      %496 = vst.msk [vmem:[#allocation2 + $0x190] sm:$0x3] %vm447, 0.0
      %497 = vst.msk [vmem:[#allocation2 + $0x198] sm:$0xff] %vm444, 0.0
      %498 = vst.msk [vmem:[#allocation2 + $0x1a0] sm:$0xff] %vm444, 0.0
      %499 = vst.msk [vmem:[#allocation2 + $0x1a8] sm:$0x3] %vm447, 0.0
      %s500 = scalar_lea.vmem [#allocation2], 24
      %501 = vst.msk [vmem:[%s500 + $0x1] sm:$0xff] %vm444, %v412
      %502 = vst.msk [vmem:[%s500 + $0x9] sm:$0xff] %vm444, %v413
      %503 = vst.msk [vmem:[%s500 + $0x19] sm:$0xff] %vm444, %v414
      %504 = vst.msk [vmem:[%s500 + $0x21] sm:$0xff] %vm444, %v415
      %505 = vst.msk [vmem:[%s500 + $0x31] sm:$0xff] %vm444, %v416
      %506 = vst.msk [vmem:[%s500 + $0x39] sm:$0xff] %vm444, %v417
      %507 = vst.msk [vmem:[%s500 + $0x49] sm:$0xff] %vm444, %v418
      %508 = vst.msk [vmem:[%s500 + $0x51] sm:$0xff] %vm444, %v419
      %509 = vst.msk [vmem:[%s500 + $0x61] sm:$0xff] %vm444, %v420
      %510 = vst.msk [vmem:[%s500 + $0x69] sm:$0xff] %vm444, %v421
      %511 = vst.msk [vmem:[%s500 + $0x79] sm:$0xff] %vm444, %v422
      %512 = vst.msk [vmem:[%s500 + $0x81] sm:$0xff] %vm444, %v423
      %513 = vst.msk [vmem:[%s500 + $0x91] sm:$0xff] %vm444, %v424
      %514 = vst.msk [vmem:[%s500 + $0x99] sm:$0xff] %vm444, %v425
      %515 = vst.msk [vmem:[%s500 + $0xa9] sm:$0xff] %vm444, %v426
      %516 = vst.msk [vmem:[%s500 + $0xb1] sm:$0xff] %vm444, %v427
      %517 = vst.msk [vmem:[%s500 + $0xc1] sm:$0xff] %vm444, %v428
      %518 = vst.msk [vmem:[%s500 + $0xc9] sm:$0xff] %vm444, %v429
      %519 = vst.msk [vmem:[%s500 + $0xd9] sm:$0xff] %vm444, %v430
      %520 = vst.msk [vmem:[%s500 + $0xe1] sm:$0xff] %vm444, %v431
      %521 = vst.msk [vmem:[%s500 + $0xf1] sm:$0xff] %vm444, %v432
      %522 = vst.msk [vmem:[%s500 + $0xf9] sm:$0xff] %vm444, %v433
      %523 = vst.msk [vmem:[%s500 + $0x109] sm:$0xff] %vm444, %v434
      %524 = vst.msk [vmem:[%s500 + $0x111] sm:$0xff] %vm444, %v435
      %525 = vst.msk [vmem:[%s500 + $0x121] sm:$0xff] %vm444, %v436
      %526 = vst.msk [vmem:[%s500 + $0x129] sm:$0xff] %vm444, %v437
      %527 = vst.msk [vmem:[%s500 + $0x139] sm:$0xff] %vm444, %v438
      %528 = vst.msk [vmem:[%s500 + $0x141] sm:$0xff] %vm444, %v439
      %529 = vst.msk [vmem:[%s500 + $0x151] sm:$0xff] %vm444, %v440
      %530 = vst.msk [vmem:[%s500 + $0x159] sm:$0xff] %vm444, %v441
      %531 = vst.msk [vmem:[%s500 + $0x169] sm:$0xff] %vm444, %v442
      %532 = vst.msk [vmem:[%s500 + $0x171] sm:$0xff] %vm444, %v443
      %v533 = vld [vmem:[#allocation2] sm:$0xff]
      %v534 = vld [vmem:[#allocation2 + $0x8] sm:$0xff]
      %v535 = vld [vmem:[#allocation2 + $0x10] sm:$0x3]
      %v536 = vld [vmem:[#allocation2 + $0x18] sm:$0xff]
      %v537 = vld [vmem:[#allocation2 + $0x20] sm:$0xff]
      %v538 = vld [vmem:[#allocation2 + $0x28] sm:$0x3]
      %v539 = vld [vmem:[#allocation2 + $0x30] sm:$0xff]
      %v540 = vld [vmem:[#allocation2 + $0x38] sm:$0xff]
      %v541 = vld [vmem:[#allocation2 + $0x40] sm:$0x3]
      %v542 = vld [vmem:[#allocation2 + $0x48] sm:$0xff]
      %v543 = vld [vmem:[#allocation2 + $0x50] sm:$0xff]
      %v544 = vld [vmem:[#allocation2 + $0x58] sm:$0x3]
      %v545 = vld [vmem:[#allocation2 + $0x60] sm:$0xff]
      %v546 = vld [vmem:[#allocation2 + $0x68] sm:$0xff]
      %v547 = vld [vmem:[#allocation2 + $0x70] sm:$0x3]
      %v548 = vld [vmem:[#allocation2 + $0x78] sm:$0xff]
      %v549 = vld [vmem:[#allocation2 + $0x80] sm:$0xff]
      %v550 = vld [vmem:[#allocation2 + $0x88] sm:$0x3]
      %v551 = vld [vmem:[#allocation2 + $0x90] sm:$0xff]
      %v552 = vld [vmem:[#allocation2 + $0x98] sm:$0xff]
      %v553 = vld [vmem:[#allocation2 + $0xa0] sm:$0x3]
      %v554 = vld [vmem:[#allocation2 + $0xa8] sm:$0xff]
      %v555 = vld [vmem:[#allocation2 + $0xb0] sm:$0xff]
      %v556 = vld [vmem:[#allocation2 + $0xb8] sm:$0x3]
      %v557 = vld [vmem:[#allocation2 + $0xc0] sm:$0xff]
      %v558 = vld [vmem:[#allocation2 + $0xc8] sm:$0xff]
      %v559 = vld [vmem:[#allocation2 + $0xd0] sm:$0x3]
      %v560 = vld [vmem:[#allocation2 + $0xd8] sm:$0xff]
      %v561 = vld [vmem:[#allocation2 + $0xe0] sm:$0xff]
      %v562 = vld [vmem:[#allocation2 + $0xe8] sm:$0x3]
      %v563 = vld [vmem:[#allocation2 + $0xf0] sm:$0xff]
      %v564 = vld [vmem:[#allocation2 + $0xf8] sm:$0xff]
      %v565 = vld [vmem:[#allocation2 + $0x100] sm:$0x3]
      %v566 = vld [vmem:[#allocation2 + $0x108] sm:$0xff]
      %v567 = vld [vmem:[#allocation2 + $0x110] sm:$0xff]
      %v568 = vld [vmem:[#allocation2 + $0x118] sm:$0x3]
      %v569 = vld [vmem:[#allocation2 + $0x120] sm:$0xff]
      %v570 = vld [vmem:[#allocation2 + $0x128] sm:$0xff]
      %v571 = vld [vmem:[#allocation2 + $0x130] sm:$0x3]
      %v572 = vld [vmem:[#allocation2 + $0x138] sm:$0xff]
      %v573 = vld [vmem:[#allocation2 + $0x140] sm:$0xff]
      %v574 = vld [vmem:[#allocation2 + $0x148] sm:$0x3]
      %v575 = vld [vmem:[#allocation2 + $0x150] sm:$0xff]
      %v576 = vld [vmem:[#allocation2 + $0x158] sm:$0xff]
      %v577 = vld [vmem:[#allocation2 + $0x160] sm:$0x3]
      %v578 = vld [vmem:[#allocation2 + $0x168] sm:$0xff]
      %v579 = vld [vmem:[#allocation2 + $0x170] sm:$0xff]
      %v580 = vld [vmem:[#allocation2 + $0x178] sm:$0x3]
      %v581 = vld [vmem:[#allocation2 + $0x180] sm:$0xff]
      %v582 = vld [vmem:[#allocation2 + $0x188] sm:$0xff]
      %v583 = vld [vmem:[#allocation2 + $0x190] sm:$0x3]
      %v584 = vld [vmem:[#allocation2 + $0x198] sm:$0xff]
      %v585 = vld [vmem:[#allocation2 + $0x1a0] sm:$0xff]
      %v586 = vld [vmem:[#allocation2 + $0x1a8] sm:$0x3]
      %v587 = vpack.c.bf16 %v534, %v533
      %v588 = vpack.c.bf16 %v535, %v535
      %v589 = vpack.c.bf16 %v537, %v536
      %v590 = vpack.c.bf16 %v538, %v538
      %v591 = vpack.c.bf16 %v540, %v539
      %v592 = vpack.c.bf16 %v541, %v541
      %v593 = vpack.c.bf16 %v543, %v542
      %v594 = vpack.c.bf16 %v544, %v544
      %v595 = vpack.c.bf16 %v546, %v545
      %v596 = vpack.c.bf16 %v547, %v547
      %v597 = vpack.c.bf16 %v549, %v548
      %v598 = vpack.c.bf16 %v550, %v550
      %v599 = vpack.c.bf16 %v552, %v551
      %v600 = vpack.c.bf16 %v553, %v553
      %v601 = vpack.c.bf16 %v555, %v554
      %v602 = vpack.c.bf16 %v556, %v556
      %v603 = vpack.c.bf16 %v558, %v557
      %v604 = vpack.c.bf16 %v559, %v559
      %v605 = vpack.c.bf16 %v561, %v560
      %v606 = vpack.c.bf16 %v562, %v562
      %v607 = vpack.c.bf16 %v564, %v563
      %v608 = vpack.c.bf16 %v565, %v565
      %v609 = vpack.c.bf16 %v567, %v566
      %v610 = vpack.c.bf16 %v568, %v568
      %v611 = vpack.c.bf16 %v570, %v569
      %v612 = vpack.c.bf16 %v571, %v571
      %v613 = vpack.c.bf16 %v573, %v572
      %v614 = vpack.c.bf16 %v574, %v574
      %v615 = vpack.c.bf16 %v576, %v575
      %v616 = vpack.c.bf16 %v577, %v577
      %v617 = vpack.c.bf16 %v579, %v578
      %v618 = vpack.c.bf16 %v580, %v580
      %v619 = vpack.c.bf16 %v582, %v581
      %v620 = vpack.c.bf16 %v583, %v583
      %v621 = vpack.c.bf16 %v585, %v584
      %v622 = vpack.c.bf16 %v586, %v586
      %v623 = vld [vmem:[%s3] sm:$0x3]
      %s624 = scalar_lea.vmem %s3, 2
      %v625 = vld [vmem:[%s624] sm:$0x3]
      %vm626 = vsmask.f32 7424
      %v628 = vshrl.u32 %v587, 16
      %v630 = vshll.u32 %v587, 16
      %v632 = vrot.slane %v630, 1
      %v633 = vor.u32 %v628, %v632
      %v635 = vshll.u32 %v588, 16
      %v637 = vrot.slane %v635, 1
      %v638 = vsel %vm626, %v633, %v637
      %v640 = vshrl.u32 %v589, 16
      %v642 = vshll.u32 %v589, 16
      %v644 = vrot.slane %v642, 1
      %v645 = vor.u32 %v640, %v644
      %v647 = vshll.u32 %v590, 16
      %v649 = vrot.slane %v647, 1
      %v650 = vsel %vm626, %v645, %v649
      %v652 = vshrl.u32 %v591, 16
      %v654 = vshll.u32 %v591, 16
      %v656 = vrot.slane %v654, 1
      %v657 = vor.u32 %v652, %v656
      %v659 = vshll.u32 %v592, 16
      %v661 = vrot.slane %v659, 1
      %v662 = vsel %vm626, %v657, %v661
      %v664 = vshrl.u32 %v593, 16
      %v666 = vshll.u32 %v593, 16
      %v668 = vrot.slane %v666, 1
      %v669 = vor.u32 %v664, %v668
      %v671 = vshll.u32 %v594, 16
      %v673 = vrot.slane %v671, 1
      %v674 = vsel %vm626, %v669, %v673
      %v676 = vshrl.u32 %v595, 16
      %v678 = vshll.u32 %v595, 16
      %v680 = vrot.slane %v678, 1
      %v681 = vor.u32 %v676, %v680
      %v683 = vshll.u32 %v596, 16
      %v685 = vrot.slane %v683, 1
      %v686 = vsel %vm626, %v681, %v685
      %v688 = vshrl.u32 %v597, 16
      %v690 = vshll.u32 %v597, 16
      %v692 = vrot.slane %v690, 1
      %v693 = vor.u32 %v688, %v692
      %v695 = vshll.u32 %v598, 16
      %v697 = vrot.slane %v695, 1
      %v698 = vsel %vm626, %v693, %v697
      %v700 = vshrl.u32 %v599, 16
      %v702 = vshll.u32 %v599, 16
      %v704 = vrot.slane %v702, 1
      %v705 = vor.u32 %v700, %v704
      %v707 = vshll.u32 %v600, 16
      %v709 = vrot.slane %v707, 1
      %v710 = vsel %vm626, %v705, %v709
      %v712 = vshrl.u32 %v601, 16
      %v714 = vshll.u32 %v601, 16
      %v716 = vrot.slane %v714, 1
      %v717 = vor.u32 %v712, %v716
      %v719 = vshll.u32 %v602, 16
      %v721 = vrot.slane %v719, 1
      %v722 = vsel %vm626, %v717, %v721
      %v724 = vshrl.u32 %v603, 16
      %v726 = vshll.u32 %v603, 16
      %v728 = vrot.slane %v726, 1
      %v729 = vor.u32 %v724, %v728
      %v731 = vshll.u32 %v604, 16
      %v733 = vrot.slane %v731, 1
      %v734 = vsel %vm626, %v729, %v733
      %v736 = vshrl.u32 %v605, 16
      %v738 = vshll.u32 %v605, 16
      %v740 = vrot.slane %v738, 1
      %v741 = vor.u32 %v736, %v740
      %v743 = vshll.u32 %v606, 16
      %v745 = vrot.slane %v743, 1
      %v746 = vsel %vm626, %v741, %v745
      %v748 = vshrl.u32 %v607, 16
      %v750 = vshll.u32 %v607, 16
      %v752 = vrot.slane %v750, 1
      %v753 = vor.u32 %v748, %v752
      %v755 = vshll.u32 %v608, 16
      %v757 = vrot.slane %v755, 1
      %v758 = vsel %vm626, %v753, %v757
      %v760 = vshrl.u32 %v609, 16
      %v762 = vshll.u32 %v609, 16
      %v764 = vrot.slane %v762, 1
      %v765 = vor.u32 %v760, %v764
      %v767 = vshll.u32 %v610, 16
      %v769 = vrot.slane %v767, 1
      %v770 = vsel %vm626, %v765, %v769
      %v772 = vshrl.u32 %v611, 16
      %v774 = vshll.u32 %v611, 16
      %v776 = vrot.slane %v774, 1
      %v777 = vor.u32 %v772, %v776
      %v779 = vshll.u32 %v612, 16
      %v781 = vrot.slane %v779, 1
      %v782 = vsel %vm626, %v777, %v781
      %v784 = vshrl.u32 %v613, 16
      %v786 = vshll.u32 %v613, 16
      %v788 = vrot.slane %v786, 1
      %v789 = vor.u32 %v784, %v788
      %v791 = vshll.u32 %v614, 16
      %v793 = vrot.slane %v791, 1
      %v794 = vsel %vm626, %v789, %v793
      %v796 = vshrl.u32 %v615, 16
      %v798 = vshll.u32 %v615, 16
      %v800 = vrot.slane %v798, 1
      %v801 = vor.u32 %v796, %v800
      %v803 = vshll.u32 %v616, 16
      %v805 = vrot.slane %v803, 1
      %v806 = vsel %vm626, %v801, %v805
      %v808 = vshrl.u32 %v617, 16
      %v810 = vshll.u32 %v617, 16
      %v812 = vrot.slane %v810, 1
      %v813 = vor.u32 %v808, %v812
      %v815 = vshll.u32 %v618, 16
      %v817 = vrot.slane %v815, 1
      %v818 = vsel %vm626, %v813, %v817
      %v820 = vsel %vm444, %v638, 0
      %v823 = vsel %vm444, %v650, 0
      %v826 = vsel %vm444, %v662, 0
      %v829 = vsel %vm444, %v674, 0
      %v832 = vsel %vm444, %v686, 0
      %v835 = vsel %vm444, %v698, 0
      %v838 = vsel %vm444, %v710, 0
      %v841 = vsel %vm444, %v722, 0
      %v844 = vsel %vm444, %v734, 0
      %v847 = vsel %vm444, %v746, 0
      %v850 = vsel %vm444, %v758, 0
      %v853 = vsel %vm444, %v770, 0
      %v856 = vsel %vm444, %v782, 0
      %v859 = vsel %vm444, %v794, 0
      %v862 = vsel %vm444, %v806, 0
      %v865 = vsel %vm444, %v818, 0
      %vm867 = vcmask 1041408
      %v869 = vsel %vm867, %v625, 0
      %871 = vmatprep.subr.bf16.mxu0 0
      %872 = vmatpush1.bf16.msra.mxu0 0
      %873 = vmatprep.subr.bf16.mxu0 0
      %874 = vmatpush1.bf16.msra.mxu0 0
      %875 = vmatprep.subr.bf16.mxu0 0
      %876 = vmatpush1.bf16.msra.mxu0 0
      %877 = vmatprep.subr.bf16.mxu0 0
      %878 = vmatpush1.bf16.msra.mxu0 0
      %879 = vmatprep.subr.bf16.mxu0 0
      %880 = vmatpush1.bf16.msra.mxu0 0
      %881 = vmatprep.subr.bf16.mxu0 0
      %882 = vmatpush1.bf16.msra.mxu0 0
      %883 = vmatprep.subr.bf16.mxu0 0
      %884 = vmatpush1.bf16.msra.mxu0 0
      %885 = vmatprep.subr.bf16.mxu0 0
      %886 = vmatpush1.bf16.msra.mxu0 %v869
      %887 = vmatprep.subr.bf16.mxu0 0
      %888 = vmatpush2.bf16.msra.mxu0 0
      %889 = vmatprep.subr.bf16.mxu0 0
      %890 = vmatpush2.bf16.msra.mxu0 0
      %891 = vmatprep.subr.bf16.mxu0 0
      %892 = vmatpush2.bf16.msra.mxu0 0
      %893 = vmatprep.subr.bf16.mxu0 0
      %894 = vmatpush2.bf16.msra.mxu0 0
      %895 = vmatprep.subr.bf16.mxu0 0
      %896 = vmatpush2.bf16.msra.mxu0 0
      %897 = vmatprep.subr.bf16.mxu0 0
      %898 = vmatpush2.bf16.msra.mxu0 0
      %899 = vmatprep.subr.bf16.mxu0 0
      %900 = vmatpush2.bf16.msra.mxu0 0
      %901 = vmatprep.subr.bf16.mxu0 0
      %902 = vmatpush2.bf16.msra.mxu0 0
      %903 = vmatprep.mubr.bf16.mxu0 0
      %904 = vmatmul.mubr.bf16.gmra.mxu0 %v820
      %v905 = vpop.f32.mrf.mxu0
      %v906 = vadd.f32 0.0, %v905
      %v907 = vpop.f32.mrf.mxu0
      %v908 = vpop.f32.mrf.mxu0
      %v909 = vadd.f32 0.0, %v908
      %v910 = vpop.f32.mrf.mxu0
      %911 = vmatprep.mubr.bf16.mxu0 0
      %912 = vmatmul.mubr.bf16.gmra.mxu0 %v823
      %v913 = vpop.f32.mrf.mxu0
      %v914 = vadd.f32 0.0, %v913
      %v915 = vpop.f32.mrf.mxu0
      %v916 = vpop.f32.mrf.mxu0
      %v917 = vadd.f32 0.0, %v916
      %v918 = vpop.f32.mrf.mxu0
      %919 = vmatprep.mubr.bf16.mxu0 0
      %920 = vmatmul.mubr.bf16.gmra.mxu0 %v826
      %v921 = vpop.f32.mrf.mxu0
      %v922 = vadd.f32 0.0, %v921
      %v923 = vpop.f32.mrf.mxu0
      %v924 = vpop.f32.mrf.mxu0
      %v925 = vadd.f32 0.0, %v924
      %v926 = vpop.f32.mrf.mxu0
      %927 = vmatprep.mubr.bf16.mxu0 0
      %928 = vmatmul.mubr.bf16.gmra.mxu0 %v829
      %v929 = vpop.f32.mrf.mxu0
      %v930 = vadd.f32 0.0, %v929
      %v931 = vpop.f32.mrf.mxu0
      %v932 = vpop.f32.mrf.mxu0
      %v933 = vadd.f32 0.0, %v932
      %v934 = vpop.f32.mrf.mxu0
      %935 = vmatprep.mubr.bf16.mxu0 0
      %936 = vmatmul.mubr.bf16.gmra.mxu0 %v832
      %v937 = vpop.f32.mrf.mxu0
      %v938 = vadd.f32 0.0, %v937
      %v939 = vpop.f32.mrf.mxu0
      %v940 = vpop.f32.mrf.mxu0
      %v941 = vadd.f32 0.0, %v940
      %v942 = vpop.f32.mrf.mxu0
      %943 = vmatprep.mubr.bf16.mxu0 0
      %944 = vmatmul.mubr.bf16.gmra.mxu0 %v835
      %v945 = vpop.f32.mrf.mxu0
      %v946 = vadd.f32 0.0, %v945
      %v947 = vpop.f32.mrf.mxu0
      %v948 = vpop.f32.mrf.mxu0
      %v949 = vadd.f32 0.0, %v948
      %v950 = vpop.f32.mrf.mxu0
      %951 = vmatprep.mubr.bf16.mxu0 0
      %952 = vmatmul.mubr.bf16.gmra.mxu0 %v838
      %v953 = vpop.f32.mrf.mxu0
      %v954 = vadd.f32 0.0, %v953
      %v955 = vpop.f32.mrf.mxu0
      %v956 = vpop.f32.mrf.mxu0
      %v957 = vadd.f32 0.0, %v956
      %v958 = vpop.f32.mrf.mxu0
      %959 = vmatprep.mubr.bf16.mxu0 0
      %960 = vmatmul.mubr.bf16.gmra.mxu0 %v841
      %v961 = vpop.f32.mrf.mxu0
      %v962 = vadd.f32 0.0, %v961
      %v963 = vpop.f32.mrf.mxu0
      %v964 = vpop.f32.mrf.mxu0
      %v965 = vadd.f32 0.0, %v964
      %v966 = vpop.f32.mrf.mxu0
      %967 = vmatprep.mubr.bf16.mxu0 0
      %968 = vmatmul.mubr.bf16.gmra.mxu0 %v844
      %v969 = vpop.f32.mrf.mxu0
      %v970 = vadd.f32 0.0, %v969
      %v971 = vpop.f32.mrf.mxu0
      %v972 = vpop.f32.mrf.mxu0
      %v973 = vadd.f32 0.0, %v972
      %v974 = vpop.f32.mrf.mxu0
      %975 = vmatprep.mubr.bf16.mxu0 0
      %976 = vmatmul.mubr.bf16.gmra.mxu0 %v847
      %v977 = vpop.f32.mrf.mxu0
      %v978 = vadd.f32 0.0, %v977
      %v979 = vpop.f32.mrf.mxu0
      %v980 = vpop.f32.mrf.mxu0
      %v981 = vadd.f32 0.0, %v980
      %v982 = vpop.f32.mrf.mxu0
      %983 = vmatprep.mubr.bf16.mxu0 0
      %984 = vmatmul.mubr.bf16.gmra.mxu0 %v850
      %v985 = vpop.f32.mrf.mxu0
      %v986 = vadd.f32 0.0, %v985
      %v987 = vpop.f32.mrf.mxu0
      %v988 = vpop.f32.mrf.mxu0
      %v989 = vadd.f32 0.0, %v988
      %v990 = vpop.f32.mrf.mxu0
      %991 = vmatprep.mubr.bf16.mxu0 0
      %992 = vmatmul.mubr.bf16.gmra.mxu0 %v853
      %v993 = vpop.f32.mrf.mxu0
      %v994 = vadd.f32 0.0, %v993
      %v995 = vpop.f32.mrf.mxu0
      %v996 = vpop.f32.mrf.mxu0
      %v997 = vadd.f32 0.0, %v996
      %v998 = vpop.f32.mrf.mxu0
      %999 = vmatprep.mubr.bf16.mxu0 0
      %1000 = vmatmul.mubr.bf16.gmra.mxu0 %v856
      %v1001 = vpop.f32.mrf.mxu0
      %v1002 = vadd.f32 0.0, %v1001
      %v1003 = vpop.f32.mrf.mxu0
      %v1004 = vpop.f32.mrf.mxu0
      %v1005 = vadd.f32 0.0, %v1004
      %v1006 = vpop.f32.mrf.mxu0
      %1007 = vmatprep.mubr.bf16.mxu0 0
      %1008 = vmatmul.mubr.bf16.gmra.mxu0 %v859
      %v1009 = vpop.f32.mrf.mxu0
      %v1010 = vadd.f32 0.0, %v1009
      %v1011 = vpop.f32.mrf.mxu0
      %v1012 = vpop.f32.mrf.mxu0
      %v1013 = vadd.f32 0.0, %v1012
      %v1014 = vpop.f32.mrf.mxu0
      %1015 = vmatprep.mubr.bf16.mxu0 0
      %1016 = vmatmul.mubr.bf16.gmra.mxu0 %v862
      %v1017 = vpop.f32.mrf.mxu0
      %v1018 = vadd.f32 0.0, %v1017
      %v1019 = vpop.f32.mrf.mxu0
      %v1020 = vpop.f32.mrf.mxu0
      %v1021 = vadd.f32 0.0, %v1020
      %v1022 = vpop.f32.mrf.mxu0
      %1023 = vmatprep.mubr.bf16.mxu0 0
      %1024 = vmatmul.mubr.bf16.gmra.mxu0 %v865
      %v1025 = vpop.f32.mrf.mxu0
      %v1026 = vadd.f32 0.0, %v1025
      %v1027 = vpop.f32.mrf.mxu0
      %v1028 = vpop.f32.mrf.mxu0
      %v1029 = vadd.f32 0.0, %v1028
      %v1030 = vpop.f32.mrf.mxu0
      %1031 = vdwg.mxu0
      %v1032 = vsel %vm444, %v587, 0
      %v1034 = vsel %vm444, %v589, 0
      %v1036 = vsel %vm444, %v591, 0
      %v1038 = vsel %vm444, %v593, 0
      %v1040 = vsel %vm444, %v595, 0
      %v1042 = vsel %vm444, %v597, 0
      %v1044 = vsel %vm444, %v599, 0
      %v1046 = vsel %vm444, %v601, 0
      %v1048 = vsel %vm444, %v603, 0
      %v1050 = vsel %vm444, %v605, 0
      %v1052 = vsel %vm444, %v607, 0
      %v1054 = vsel %vm444, %v609, 0
      %v1056 = vsel %vm444, %v611, 0
      %v1058 = vsel %vm444, %v613, 0
      %v1060 = vsel %vm444, %v615, 0
      %v1062 = vsel %vm444, %v617, 0
      %v1065 = vsel %vm867, %v623, 0
      %1067 = vmatprep.subr.bf16.mxu0 0
      %1068 = vmatpush1.bf16.msra.mxu0 0
      %1069 = vmatprep.subr.bf16.mxu0 0
      %1070 = vmatpush1.bf16.msra.mxu0 0
      %1071 = vmatprep.subr.bf16.mxu0 0
      %1072 = vmatpush1.bf16.msra.mxu0 0
      %1073 = vmatprep.subr.bf16.mxu0 0
      %1074 = vmatpush1.bf16.msra.mxu0 0
      %1075 = vmatprep.subr.bf16.mxu0 0
      %1076 = vmatpush1.bf16.msra.mxu0 0
      %1077 = vmatprep.subr.bf16.mxu0 0
      %1078 = vmatpush1.bf16.msra.mxu0 0
      %1079 = vmatprep.subr.bf16.mxu0 0
      %1080 = vmatpush1.bf16.msra.mxu0 0
      %1081 = vmatprep.subr.bf16.mxu0 0
      %1082 = vmatpush1.bf16.msra.mxu0 %v1065
      %1083 = vmatprep.subr.bf16.mxu0 0
      %1084 = vmatpush2.bf16.msra.mxu0 0
      %1085 = vmatprep.subr.bf16.mxu0 0
      %1086 = vmatpush2.bf16.msra.mxu0 0
      %1087 = vmatprep.subr.bf16.mxu0 0
      %1088 = vmatpush2.bf16.msra.mxu0 0
      %1089 = vmatprep.subr.bf16.mxu0 0
      %1090 = vmatpush2.bf16.msra.mxu0 0
      %1091 = vmatprep.subr.bf16.mxu0 0
      %1092 = vmatpush2.bf16.msra.mxu0 0
      %1093 = vmatprep.subr.bf16.mxu0 0
      %1094 = vmatpush2.bf16.msra.mxu0 0
      %1095 = vmatprep.subr.bf16.mxu0 0
      %1096 = vmatpush2.bf16.msra.mxu0 0
      %1097 = vmatprep.subr.bf16.mxu0 0
      %1098 = vmatpush2.bf16.msra.mxu0 0
      %1099 = vmatprep.mubr.bf16.mxu0 0
      %1100 = vmatmul.mubr.bf16.gmra.mxu0 %v1032
      %v1101 = vpop.f32.mrf.mxu0
      %v1102 = vadd.f32 %v906, %v1101
      %v1103 = vpop.f32.mrf.mxu0
      %v1104 = vpop.f32.mrf.mxu0
      %v1105 = vadd.f32 %v909, %v1104
      %v1106 = vpop.f32.mrf.mxu0
      %1107 = vmatprep.mubr.bf16.mxu0 0
      %1108 = vmatmul.mubr.bf16.gmra.mxu0 %v1034
      %v1109 = vpop.f32.mrf.mxu0
      %v1110 = vadd.f32 %v914, %v1109
      %v1111 = vpop.f32.mrf.mxu0
      %v1112 = vpop.f32.mrf.mxu0
      %v1113 = vadd.f32 %v917, %v1112
      %v1114 = vpop.f32.mrf.mxu0
      %1115 = vmatprep.mubr.bf16.mxu0 0
      %1116 = vmatmul.mubr.bf16.gmra.mxu0 %v1036
      %v1117 = vpop.f32.mrf.mxu0
      %v1118 = vadd.f32 %v922, %v1117
      %v1119 = vpop.f32.mrf.mxu0
      %v1120 = vpop.f32.mrf.mxu0
      %v1121 = vadd.f32 %v925, %v1120
      %v1122 = vpop.f32.mrf.mxu0
      %1123 = vmatprep.mubr.bf16.mxu0 0
      %1124 = vmatmul.mubr.bf16.gmra.mxu0 %v1038
      %v1125 = vpop.f32.mrf.mxu0
      %v1126 = vadd.f32 %v930, %v1125
      %v1127 = vpop.f32.mrf.mxu0
      %v1128 = vpop.f32.mrf.mxu0
      %v1129 = vadd.f32 %v933, %v1128
      %v1130 = vpop.f32.mrf.mxu0
      %1131 = vmatprep.mubr.bf16.mxu0 0
      %1132 = vmatmul.mubr.bf16.gmra.mxu0 %v1040
      %v1133 = vpop.f32.mrf.mxu0
      %v1134 = vadd.f32 %v938, %v1133
      %v1135 = vpop.f32.mrf.mxu0
      %v1136 = vpop.f32.mrf.mxu0
      %v1137 = vadd.f32 %v941, %v1136
      %v1138 = vpop.f32.mrf.mxu0
      %1139 = vmatprep.mubr.bf16.mxu0 0
      %1140 = vmatmul.mubr.bf16.gmra.mxu0 %v1042
      %v1141 = vpop.f32.mrf.mxu0
      %v1142 = vadd.f32 %v946, %v1141
      %v1143 = vpop.f32.mrf.mxu0
      %v1144 = vpop.f32.mrf.mxu0
      %v1145 = vadd.f32 %v949, %v1144
      %v1146 = vpop.f32.mrf.mxu0
      %1147 = vmatprep.mubr.bf16.mxu0 0
      %1148 = vmatmul.mubr.bf16.gmra.mxu0 %v1044
      %v1149 = vpop.f32.mrf.mxu0
      %v1150 = vadd.f32 %v954, %v1149
      %v1151 = vpop.f32.mrf.mxu0
      %v1152 = vpop.f32.mrf.mxu0
      %v1153 = vadd.f32 %v957, %v1152
      %v1154 = vpop.f32.mrf.mxu0
      %1155 = vmatprep.mubr.bf16.mxu0 0
      %1156 = vmatmul.mubr.bf16.gmra.mxu0 %v1046
      %v1157 = vpop.f32.mrf.mxu0
      %v1158 = vadd.f32 %v962, %v1157
      %v1159 = vpop.f32.mrf.mxu0
      %v1160 = vpop.f32.mrf.mxu0
      %v1161 = vadd.f32 %v965, %v1160
      %v1162 = vpop.f32.mrf.mxu0
      %1163 = vmatprep.mubr.bf16.mxu0 0
      %1164 = vmatmul.mubr.bf16.gmra.mxu0 %v1048
      %v1165 = vpop.f32.mrf.mxu0
      %v1166 = vadd.f32 %v970, %v1165
      %v1167 = vpop.f32.mrf.mxu0
      %v1168 = vpop.f32.mrf.mxu0
      %v1169 = vadd.f32 %v973, %v1168
      %v1170 = vpop.f32.mrf.mxu0
      %1171 = vmatprep.mubr.bf16.mxu0 0
      %1172 = vmatmul.mubr.bf16.gmra.mxu0 %v1050
      %v1173 = vpop.f32.mrf.mxu0
      %v1174 = vadd.f32 %v978, %v1173
      %v1175 = vpop.f32.mrf.mxu0
      %v1176 = vpop.f32.mrf.mxu0
      %v1177 = vadd.f32 %v981, %v1176
      %v1178 = vpop.f32.mrf.mxu0
      %1179 = vmatprep.mubr.bf16.mxu0 0
      %1180 = vmatmul.mubr.bf16.gmra.mxu0 %v1052
      %v1181 = vpop.f32.mrf.mxu0
      %v1182 = vadd.f32 %v986, %v1181
      %v1183 = vpop.f32.mrf.mxu0
      %v1184 = vpop.f32.mrf.mxu0
      %v1185 = vadd.f32 %v989, %v1184
      %v1186 = vpop.f32.mrf.mxu0
      %1187 = vmatprep.mubr.bf16.mxu0 0
      %1188 = vmatmul.mubr.bf16.gmra.mxu0 %v1054
      %v1189 = vpop.f32.mrf.mxu0
      %v1190 = vadd.f32 %v994, %v1189
      %v1191 = vpop.f32.mrf.mxu0
      %v1192 = vpop.f32.mrf.mxu0
      %v1193 = vadd.f32 %v997, %v1192
      %v1194 = vpop.f32.mrf.mxu0
      %1195 = vmatprep.mubr.bf16.mxu0 0
      %1196 = vmatmul.mubr.bf16.gmra.mxu0 %v1056
      %v1197 = vpop.f32.mrf.mxu0
      %v1198 = vadd.f32 %v1002, %v1197
      %v1199 = vpop.f32.mrf.mxu0
      %v1200 = vpop.f32.mrf.mxu0
      %v1201 = vadd.f32 %v1005, %v1200
      %v1202 = vpop.f32.mrf.mxu0
      %1203 = vmatprep.mubr.bf16.mxu0 0
      %1204 = vmatmul.mubr.bf16.gmra.mxu0 %v1058
      %v1205 = vpop.f32.mrf.mxu0
      %v1206 = vadd.f32 %v1010, %v1205
      %v1207 = vpop.f32.mrf.mxu0
      %v1208 = vpop.f32.mrf.mxu0
      %v1209 = vadd.f32 %v1013, %v1208
      %v1210 = vpop.f32.mrf.mxu0
      %1211 = vmatprep.mubr.bf16.mxu0 0
      %1212 = vmatmul.mubr.bf16.gmra.mxu0 %v1060
      %v1213 = vpop.f32.mrf.mxu0
      %v1214 = vadd.f32 %v1018, %v1213
      %v1215 = vpop.f32.mrf.mxu0
      %v1216 = vpop.f32.mrf.mxu0
      %v1217 = vadd.f32 %v1021, %v1216
      %v1218 = vpop.f32.mrf.mxu0
      %1219 = vmatprep.mubr.bf16.mxu0 0
      %1220 = vmatmul.mubr.bf16.gmra.mxu0 %v1062
      %v1221 = vpop.f32.mrf.mxu0
      %v1222 = vadd.f32 %v1026, %v1221
      %v1223 = vpop.f32.mrf.mxu0
      %v1224 = vpop.f32.mrf.mxu0
      %v1225 = vadd.f32 %v1029, %v1224
      %v1226 = vpop.f32.mrf.mxu0
      %1227 = vdwg.mxu0
      %s1228 = scalar_lea.vmem %s3, 4
      %v1229 = vld [vmem:[%s1228] sm:$0x3]
      %vm1262 = vcmask 1046528
      %v1263 = vrot.slane %v587, 1
      %v1264 = vrot.slane %v588, 1
      %v1265 = vsel %vm1262, %v1263, %v1264
      %v1266 = vrot.slane %v589, 1
      %v1267 = vrot.slane %v590, 1
      %v1268 = vsel %vm1262, %v1266, %v1267
      %v1269 = vrot.slane %v591, 1
      %v1270 = vrot.slane %v592, 1
      %v1271 = vsel %vm1262, %v1269, %v1270
      %v1272 = vrot.slane %v593, 1
      %v1273 = vrot.slane %v594, 1
      %v1274 = vsel %vm1262, %v1272, %v1273
      %v1275 = vrot.slane %v595, 1
      %v1276 = vrot.slane %v596, 1
      %v1277 = vsel %vm1262, %v1275, %v1276
      %v1278 = vrot.slane %v597, 1
      %v1279 = vrot.slane %v598, 1
      %v1280 = vsel %vm1262, %v1278, %v1279
      %v1281 = vrot.slane %v599, 1
      %v1282 = vrot.slane %v600, 1
      %v1283 = vsel %vm1262, %v1281, %v1282
      %v1284 = vrot.slane %v601, 1
      %v1285 = vrot.slane %v602, 1
      %v1286 = vsel %vm1262, %v1284, %v1285
      %v1287 = vrot.slane %v603, 1
      %v1288 = vrot.slane %v604, 1
      %v1289 = vsel %vm1262, %v1287, %v1288
      %v1290 = vrot.slane %v605, 1
      %v1291 = vrot.slane %v606, 1
      %v1292 = vsel %vm1262, %v1290, %v1291
      %v1293 = vrot.slane %v607, 1
      %v1294 = vrot.slane %v608, 1
      %v1295 = vsel %vm1262, %v1293, %v1294
      %v1296 = vrot.slane %v609, 1
      %v1297 = vrot.slane %v610, 1
      %v1298 = vsel %vm1262, %v1296, %v1297
      %v1299 = vrot.slane %v611, 1
      %v1300 = vrot.slane %v612, 1
      %v1301 = vsel %vm1262, %v1299, %v1300
      %v1302 = vrot.slane %v613, 1
      %v1303 = vrot.slane %v614, 1
      %v1304 = vsel %vm1262, %v1302, %v1303
      %v1305 = vrot.slane %v615, 1
      %v1306 = vrot.slane %v616, 1
      %v1307 = vsel %vm1262, %v1305, %v1306
      %v1308 = vrot.slane %v617, 1
      %v1309 = vrot.slane %v618, 1
      %v1310 = vsel %vm1262, %v1308, %v1309
      %v1312 = vsel %vm444, %v1265, 0
      %v1315 = vsel %vm444, %v1268, 0
      %v1318 = vsel %vm444, %v1271, 0
      %v1321 = vsel %vm444, %v1274, 0
      %v1324 = vsel %vm444, %v1277, 0
      %v1327 = vsel %vm444, %v1280, 0
      %v1330 = vsel %vm444, %v1283, 0
      %v1333 = vsel %vm444, %v1286, 0
      %v1336 = vsel %vm444, %v1289, 0
      %v1339 = vsel %vm444, %v1292, 0
      %v1342 = vsel %vm444, %v1295, 0
      %v1345 = vsel %vm444, %v1298, 0
      %v1348 = vsel %vm444, %v1301, 0
      %v1351 = vsel %vm444, %v1304, 0
      %v1354 = vsel %vm444, %v1307, 0
      %v1357 = vsel %vm444, %v1310, 0
      %v1360 = vsel %vm867, %v1229, 0
      %1362 = vmatprep.subr.bf16.mxu0 0
      %1363 = vmatpush1.bf16.msra.mxu0 0
      %1364 = vmatprep.subr.bf16.mxu0 0
      %1365 = vmatpush1.bf16.msra.mxu0 0
      %1366 = vmatprep.subr.bf16.mxu0 0
      %1367 = vmatpush1.bf16.msra.mxu0 0
      %1368 = vmatprep.subr.bf16.mxu0 0
      %1369 = vmatpush1.bf16.msra.mxu0 0
      %1370 = vmatprep.subr.bf16.mxu0 0
      %1371 = vmatpush1.bf16.msra.mxu0 0
      %1372 = vmatprep.subr.bf16.mxu0 0
      %1373 = vmatpush1.bf16.msra.mxu0 0
      %1374 = vmatprep.subr.bf16.mxu0 0
      %1375 = vmatpush1.bf16.msra.mxu0 0
      %1376 = vmatprep.subr.bf16.mxu0 0
      %1377 = vmatpush1.bf16.msra.mxu0 %v1360
      %1378 = vmatprep.subr.bf16.mxu0 0
      %1379 = vmatpush2.bf16.msra.mxu0 0
      %1380 = vmatprep.subr.bf16.mxu0 0
      %1381 = vmatpush2.bf16.msra.mxu0 0
      %1382 = vmatprep.subr.bf16.mxu0 0
      %1383 = vmatpush2.bf16.msra.mxu0 0
      %1384 = vmatprep.subr.bf16.mxu0 0
      %1385 = vmatpush2.bf16.msra.mxu0 0
      %1386 = vmatprep.subr.bf16.mxu0 0
      %1387 = vmatpush2.bf16.msra.mxu0 0
      %1388 = vmatprep.subr.bf16.mxu0 0
      %1389 = vmatpush2.bf16.msra.mxu0 0
      %1390 = vmatprep.subr.bf16.mxu0 0
      %1391 = vmatpush2.bf16.msra.mxu0 0
      %1392 = vmatprep.subr.bf16.mxu0 0
      %1393 = vmatpush2.bf16.msra.mxu0 0
      %1394 = vmatprep.mubr.bf16.mxu0 0
      %1395 = vmatmul.mubr.bf16.gmra.mxu0 %v1312
      %v1396 = vpop.f32.mrf.mxu0
      %v1397 = vadd.f32 0.0, %v1396
      %v1398 = vpop.f32.mrf.mxu0
      %v1399 = vpop.f32.mrf.mxu0
      %v1400 = vadd.f32 0.0, %v1399
      %v1401 = vpop.f32.mrf.mxu0
      %1402 = vmatprep.mubr.bf16.mxu0 0
      %1403 = vmatmul.mubr.bf16.gmra.mxu0 %v1315
      %v1404 = vpop.f32.mrf.mxu0
      %v1405 = vadd.f32 0.0, %v1404
      %v1406 = vpop.f32.mrf.mxu0
      %v1407 = vpop.f32.mrf.mxu0
      %v1408 = vadd.f32 0.0, %v1407
      %v1409 = vpop.f32.mrf.mxu0
      %1410 = vmatprep.mubr.bf16.mxu0 0
      %1411 = vmatmul.mubr.bf16.gmra.mxu0 %v1318
      %v1412 = vpop.f32.mrf.mxu0
      %v1413 = vadd.f32 0.0, %v1412
      %v1414 = vpop.f32.mrf.mxu0
      %v1415 = vpop.f32.mrf.mxu0
      %v1416 = vadd.f32 0.0, %v1415
      %v1417 = vpop.f32.mrf.mxu0
      %1418 = vmatprep.mubr.bf16.mxu0 0
      %1419 = vmatmul.mubr.bf16.gmra.mxu0 %v1321
      %v1420 = vpop.f32.mrf.mxu0
      %v1421 = vadd.f32 0.0, %v1420
      %v1422 = vpop.f32.mrf.mxu0
      %v1423 = vpop.f32.mrf.mxu0
      %v1424 = vadd.f32 0.0, %v1423
      %v1425 = vpop.f32.mrf.mxu0
      %1426 = vmatprep.mubr.bf16.mxu0 0
      %1427 = vmatmul.mubr.bf16.gmra.mxu0 %v1324
      %v1428 = vpop.f32.mrf.mxu0
      %v1429 = vadd.f32 0.0, %v1428
      %v1430 = vpop.f32.mrf.mxu0
      %v1431 = vpop.f32.mrf.mxu0
      %v1432 = vadd.f32 0.0, %v1431
      %v1433 = vpop.f32.mrf.mxu0
      %1434 = vmatprep.mubr.bf16.mxu0 0
      %1435 = vmatmul.mubr.bf16.gmra.mxu0 %v1327
      %v1436 = vpop.f32.mrf.mxu0
      %v1437 = vadd.f32 0.0, %v1436
      %v1438 = vpop.f32.mrf.mxu0
      %v1439 = vpop.f32.mrf.mxu0
      %v1440 = vadd.f32 0.0, %v1439
      %v1441 = vpop.f32.mrf.mxu0
      %1442 = vmatprep.mubr.bf16.mxu0 0
      %1443 = vmatmul.mubr.bf16.gmra.mxu0 %v1330
      %v1444 = vpop.f32.mrf.mxu0
      %v1445 = vadd.f32 0.0, %v1444
      %v1446 = vpop.f32.mrf.mxu0
      %v1447 = vpop.f32.mrf.mxu0
      %v1448 = vadd.f32 0.0, %v1447
      %v1449 = vpop.f32.mrf.mxu0
      %1450 = vmatprep.mubr.bf16.mxu0 0
      %1451 = vmatmul.mubr.bf16.gmra.mxu0 %v1333
      %v1452 = vpop.f32.mrf.mxu0
      %v1453 = vadd.f32 0.0, %v1452
      %v1454 = vpop.f32.mrf.mxu0
      %v1455 = vpop.f32.mrf.mxu0
      %v1456 = vadd.f32 0.0, %v1455
      %v1457 = vpop.f32.mrf.mxu0
      %1458 = vmatprep.mubr.bf16.mxu0 0
      %1459 = vmatmul.mubr.bf16.gmra.mxu0 %v1336
      %v1460 = vpop.f32.mrf.mxu0
      %v1461 = vadd.f32 0.0, %v1460
      %v1462 = vpop.f32.mrf.mxu0
      %v1463 = vpop.f32.mrf.mxu0
      %v1464 = vadd.f32 0.0, %v1463
      %v1465 = vpop.f32.mrf.mxu0
      %1466 = vmatprep.mubr.bf16.mxu0 0
      %1467 = vmatmul.mubr.bf16.gmra.mxu0 %v1339
      %v1468 = vpop.f32.mrf.mxu0
      %v1469 = vadd.f32 0.0, %v1468
      %v1470 = vpop.f32.mrf.mxu0
      %v1471 = vpop.f32.mrf.mxu0
      %v1472 = vadd.f32 0.0, %v1471
      %v1473 = vpop.f32.mrf.mxu0
      %1474 = vmatprep.mubr.bf16.mxu0 0
      %1475 = vmatmul.mubr.bf16.gmra.mxu0 %v1342
      %v1476 = vpop.f32.mrf.mxu0
      %v1477 = vadd.f32 0.0, %v1476
      %v1478 = vpop.f32.mrf.mxu0
      %v1479 = vpop.f32.mrf.mxu0
      %v1480 = vadd.f32 0.0, %v1479
      %v1481 = vpop.f32.mrf.mxu0
      %1482 = vmatprep.mubr.bf16.mxu0 0
      %1483 = vmatmul.mubr.bf16.gmra.mxu0 %v1345
      %v1484 = vpop.f32.mrf.mxu0
      %v1485 = vadd.f32 0.0, %v1484
      %v1486 = vpop.f32.mrf.mxu0
      %v1487 = vpop.f32.mrf.mxu0
      %v1488 = vadd.f32 0.0, %v1487
      %v1489 = vpop.f32.mrf.mxu0
      %1490 = vmatprep.mubr.bf16.mxu0 0
      %1491 = vmatmul.mubr.bf16.gmra.mxu0 %v1348
      %v1492 = vpop.f32.mrf.mxu0
      %v1493 = vadd.f32 0.0, %v1492
      %v1494 = vpop.f32.mrf.mxu0
      %v1495 = vpop.f32.mrf.mxu0
      %v1496 = vadd.f32 0.0, %v1495
      %v1497 = vpop.f32.mrf.mxu0
      %1498 = vmatprep.mubr.bf16.mxu0 0
      %1499 = vmatmul.mubr.bf16.gmra.mxu0 %v1351
      %v1500 = vpop.f32.mrf.mxu0
      %v1501 = vadd.f32 0.0, %v1500
      %v1502 = vpop.f32.mrf.mxu0
      %v1503 = vpop.f32.mrf.mxu0
      %v1504 = vadd.f32 0.0, %v1503
      %v1505 = vpop.f32.mrf.mxu0
      %1506 = vmatprep.mubr.bf16.mxu0 0
      %1507 = vmatmul.mubr.bf16.gmra.mxu0 %v1354
      %v1508 = vpop.f32.mrf.mxu0
      %v1509 = vadd.f32 0.0, %v1508
      %v1510 = vpop.f32.mrf.mxu0
      %v1511 = vpop.f32.mrf.mxu0
      %v1512 = vadd.f32 0.0, %v1511
      %v1513 = vpop.f32.mrf.mxu0
      %1514 = vmatprep.mubr.bf16.mxu0 0
      %1515 = vmatmul.mubr.bf16.gmra.mxu0 %v1357
      %v1516 = vpop.f32.mrf.mxu0
      %v1517 = vadd.f32 0.0, %v1516
      %v1518 = vpop.f32.mrf.mxu0
      %v1519 = vpop.f32.mrf.mxu0
      %v1520 = vadd.f32 0.0, %v1519
      %v1521 = vpop.f32.mrf.mxu0
      %1522 = vdwg.mxu0
      %v1523 = vadd.f32 %v1102, %v1397
      %v1524 = vadd.f32 %v1105, %v1400
      %v1525 = vadd.f32 %v1110, %v1405
      %v1526 = vadd.f32 %v1113, %v1408
      %v1527 = vadd.f32 %v1118, %v1413
      %v1528 = vadd.f32 %v1121, %v1416
      %v1529 = vadd.f32 %v1126, %v1421
      %v1530 = vadd.f32 %v1129, %v1424
      %v1531 = vadd.f32 %v1134, %v1429
      %v1532 = vadd.f32 %v1137, %v1432
      %v1533 = vadd.f32 %v1142, %v1437
      %v1534 = vadd.f32 %v1145, %v1440
      %v1535 = vadd.f32 %v1150, %v1445
      %v1536 = vadd.f32 %v1153, %v1448
      %v1537 = vadd.f32 %v1158, %v1453
      %v1538 = vadd.f32 %v1161, %v1456
      %v1539 = vadd.f32 %v1166, %v1461
      %v1540 = vadd.f32 %v1169, %v1464
      %v1541 = vadd.f32 %v1174, %v1469
      %v1542 = vadd.f32 %v1177, %v1472
      %v1543 = vadd.f32 %v1182, %v1477
      %v1544 = vadd.f32 %v1185, %v1480
      %v1545 = vadd.f32 %v1190, %v1485
      %v1546 = vadd.f32 %v1193, %v1488
      %v1547 = vadd.f32 %v1198, %v1493
      %v1548 = vadd.f32 %v1201, %v1496
      %v1549 = vadd.f32 %v1206, %v1501
      %v1550 = vadd.f32 %v1209, %v1504
      %v1551 = vadd.f32 %v1214, %v1509
      %v1552 = vadd.f32 %v1217, %v1512
      %v1553 = vadd.f32 %v1222, %v1517
      %v1554 = vadd.f32 %v1225, %v1520
      %s1555 = scalar_lea.vmem %s3, 6
      %v1556 = vld [vmem:[%s1555] sm:$0x3]
      %v1558 = vsel %vm444, %v619, 0
      %v1561 = vsel %vm867, %v1556, 0
      %1563 = vmatprep.subr.bf16.mxu0 0
      %1564 = vmatpush1.bf16.msra.mxu0 0
      %1565 = vmatprep.subr.bf16.mxu0 0
      %1566 = vmatpush1.bf16.msra.mxu0 0
      %1567 = vmatprep.subr.bf16.mxu0 0
      %1568 = vmatpush1.bf16.msra.mxu0 0
      %1569 = vmatprep.subr.bf16.mxu0 0
      %1570 = vmatpush1.bf16.msra.mxu0 0
      %1571 = vmatprep.subr.bf16.mxu0 0
      %1572 = vmatpush1.bf16.msra.mxu0 0
      %1573 = vmatprep.subr.bf16.mxu0 0
      %1574 = vmatpush1.bf16.msra.mxu0 0
      %1575 = vmatprep.subr.bf16.mxu0 0
      %1576 = vmatpush1.bf16.msra.mxu0 0
      %1577 = vmatprep.subr.bf16.mxu0 0
      %1578 = vmatpush1.bf16.msra.mxu0 %v1561
      %1579 = vmatprep.subr.bf16.mxu0 0
      %1580 = vmatpush2.bf16.msra.mxu0 0
      %1581 = vmatprep.subr.bf16.mxu0 0
      %1582 = vmatpush2.bf16.msra.mxu0 0
      %1583 = vmatprep.subr.bf16.mxu0 0
      %1584 = vmatpush2.bf16.msra.mxu0 0
      %1585 = vmatprep.subr.bf16.mxu0 0
      %1586 = vmatpush2.bf16.msra.mxu0 0
      %1587 = vmatprep.subr.bf16.mxu0 0
      %1588 = vmatpush2.bf16.msra.mxu0 0
      %1589 = vmatprep.subr.bf16.mxu0 0
      %1590 = vmatpush2.bf16.msra.mxu0 0
      %1591 = vmatprep.subr.bf16.mxu0 0
      %1592 = vmatpush2.bf16.msra.mxu0 0
      %1593 = vmatprep.subr.bf16.mxu0 0
      %1594 = vmatpush2.bf16.msra.mxu0 0
      %1595 = vmatprep.mubr.bf16.mxu0 0
      %1596 = vmatmul.mubr.bf16.gmra.mxu0 %v1034
      %v1597 = vpop.f32.mrf.mxu0
      %v1598 = vadd.f32 0.0, %v1597
      %v1599 = vpop.f32.mrf.mxu0
      %v1600 = vpop.f32.mrf.mxu0
      %v1601 = vadd.f32 0.0, %v1600
      %v1602 = vpop.f32.mrf.mxu0
      %1603 = vmatprep.mubr.bf16.mxu0 0
      %1604 = vmatmul.mubr.bf16.gmra.mxu0 %v1036
      %v1605 = vpop.f32.mrf.mxu0
      %v1606 = vadd.f32 0.0, %v1605
      %v1607 = vpop.f32.mrf.mxu0
      %v1608 = vpop.f32.mrf.mxu0
      %v1609 = vadd.f32 0.0, %v1608
      %v1610 = vpop.f32.mrf.mxu0
      %1611 = vmatprep.mubr.bf16.mxu0 0
      %1612 = vmatmul.mubr.bf16.gmra.mxu0 %v1038
      %v1613 = vpop.f32.mrf.mxu0
      %v1614 = vadd.f32 0.0, %v1613
      %v1615 = vpop.f32.mrf.mxu0
      %v1616 = vpop.f32.mrf.mxu0
      %v1617 = vadd.f32 0.0, %v1616
      %v1618 = vpop.f32.mrf.mxu0
      %1619 = vmatprep.mubr.bf16.mxu0 0
      %1620 = vmatmul.mubr.bf16.gmra.mxu0 %v1040
      %v1621 = vpop.f32.mrf.mxu0
      %v1622 = vadd.f32 0.0, %v1621
      %v1623 = vpop.f32.mrf.mxu0
      %v1624 = vpop.f32.mrf.mxu0
      %v1625 = vadd.f32 0.0, %v1624
      %v1626 = vpop.f32.mrf.mxu0
      %1627 = vmatprep.mubr.bf16.mxu0 0
      %1628 = vmatmul.mubr.bf16.gmra.mxu0 %v1042
      %v1629 = vpop.f32.mrf.mxu0
      %v1630 = vadd.f32 0.0, %v1629
      %v1631 = vpop.f32.mrf.mxu0
      %v1632 = vpop.f32.mrf.mxu0
      %v1633 = vadd.f32 0.0, %v1632
      %v1634 = vpop.f32.mrf.mxu0
      %1635 = vmatprep.mubr.bf16.mxu0 0
      %1636 = vmatmul.mubr.bf16.gmra.mxu0 %v1044
      %v1637 = vpop.f32.mrf.mxu0
      %v1638 = vadd.f32 0.0, %v1637
      %v1639 = vpop.f32.mrf.mxu0
      %v1640 = vpop.f32.mrf.mxu0
      %v1641 = vadd.f32 0.0, %v1640
      %v1642 = vpop.f32.mrf.mxu0
      %1643 = vmatprep.mubr.bf16.mxu0 0
      %1644 = vmatmul.mubr.bf16.gmra.mxu0 %v1046
      %v1645 = vpop.f32.mrf.mxu0
      %v1646 = vadd.f32 0.0, %v1645
      %v1647 = vpop.f32.mrf.mxu0
      %v1648 = vpop.f32.mrf.mxu0
      %v1649 = vadd.f32 0.0, %v1648
      %v1650 = vpop.f32.mrf.mxu0
      %1651 = vmatprep.mubr.bf16.mxu0 0
      %1652 = vmatmul.mubr.bf16.gmra.mxu0 %v1048
      %v1653 = vpop.f32.mrf.mxu0
      %v1654 = vadd.f32 0.0, %v1653
      %v1655 = vpop.f32.mrf.mxu0
      %v1656 = vpop.f32.mrf.mxu0
      %v1657 = vadd.f32 0.0, %v1656
      %v1658 = vpop.f32.mrf.mxu0
      %1659 = vmatprep.mubr.bf16.mxu0 0
      %1660 = vmatmul.mubr.bf16.gmra.mxu0 %v1050
      %v1661 = vpop.f32.mrf.mxu0
      %v1662 = vadd.f32 0.0, %v1661
      %v1663 = vpop.f32.mrf.mxu0
      %v1664 = vpop.f32.mrf.mxu0
      %v1665 = vadd.f32 0.0, %v1664
      %v1666 = vpop.f32.mrf.mxu0
      %1667 = vmatprep.mubr.bf16.mxu0 0
      %1668 = vmatmul.mubr.bf16.gmra.mxu0 %v1052
      %v1669 = vpop.f32.mrf.mxu0
      %v1670 = vadd.f32 0.0, %v1669
      %v1671 = vpop.f32.mrf.mxu0
      %v1672 = vpop.f32.mrf.mxu0
      %v1673 = vadd.f32 0.0, %v1672
      %v1674 = vpop.f32.mrf.mxu0
      %1675 = vmatprep.mubr.bf16.mxu0 0
      %1676 = vmatmul.mubr.bf16.gmra.mxu0 %v1054
      %v1677 = vpop.f32.mrf.mxu0
      %v1678 = vadd.f32 0.0, %v1677
      %v1679 = vpop.f32.mrf.mxu0
      %v1680 = vpop.f32.mrf.mxu0
      %v1681 = vadd.f32 0.0, %v1680
      %v1682 = vpop.f32.mrf.mxu0
      %1683 = vmatprep.mubr.bf16.mxu0 0
      %1684 = vmatmul.mubr.bf16.gmra.mxu0 %v1056
      %v1685 = vpop.f32.mrf.mxu0
      %v1686 = vadd.f32 0.0, %v1685
      %v1687 = vpop.f32.mrf.mxu0
      %v1688 = vpop.f32.mrf.mxu0
      %v1689 = vadd.f32 0.0, %v1688
      %v1690 = vpop.f32.mrf.mxu0
      %1691 = vmatprep.mubr.bf16.mxu0 0
      %1692 = vmatmul.mubr.bf16.gmra.mxu0 %v1058
      %v1693 = vpop.f32.mrf.mxu0
      %v1694 = vadd.f32 0.0, %v1693
      %v1695 = vpop.f32.mrf.mxu0
      %v1696 = vpop.f32.mrf.mxu0
      %v1697 = vadd.f32 0.0, %v1696
      %v1698 = vpop.f32.mrf.mxu0
      %1699 = vmatprep.mubr.bf16.mxu0 0
      %1700 = vmatmul.mubr.bf16.gmra.mxu0 %v1060
      %v1701 = vpop.f32.mrf.mxu0
      %v1702 = vadd.f32 0.0, %v1701
      %v1703 = vpop.f32.mrf.mxu0
      %v1704 = vpop.f32.mrf.mxu0
      %v1705 = vadd.f32 0.0, %v1704
      %v1706 = vpop.f32.mrf.mxu0
      %1707 = vmatprep.mubr.bf16.mxu0 0
      %1708 = vmatmul.mubr.bf16.gmra.mxu0 %v1062
      %v1709 = vpop.f32.mrf.mxu0
      %v1710 = vadd.f32 0.0, %v1709
      %v1711 = vpop.f32.mrf.mxu0
      %v1712 = vpop.f32.mrf.mxu0
      %v1713 = vadd.f32 0.0, %v1712
      %v1714 = vpop.f32.mrf.mxu0
      %1715 = vmatprep.mubr.bf16.mxu0 0
      %1716 = vmatmul.mubr.bf16.gmra.mxu0 %v1558
      %v1717 = vpop.f32.mrf.mxu0
      %v1718 = vadd.f32 0.0, %v1717
      %v1719 = vpop.f32.mrf.mxu0
      %v1720 = vpop.f32.mrf.mxu0
      %v1721 = vadd.f32 0.0, %v1720
      %v1722 = vpop.f32.mrf.mxu0
      %1723 = vdwg.mxu0
      %v1724 = vadd.f32 %v1523, %v1598
      %v1725 = vadd.f32 %v1524, %v1601
      %v1726 = vadd.f32 %v1525, %v1606
      %v1727 = vadd.f32 %v1526, %v1609
      %v1728 = vadd.f32 %v1527, %v1614
      %v1729 = vadd.f32 %v1528, %v1617
      %v1730 = vadd.f32 %v1529, %v1622
      %v1731 = vadd.f32 %v1530, %v1625
      %v1732 = vadd.f32 %v1531, %v1630
      %v1733 = vadd.f32 %v1532, %v1633
      %v1734 = vadd.f32 %v1533, %v1638
      %v1735 = vadd.f32 %v1534, %v1641
      %v1736 = vadd.f32 %v1535, %v1646
      %v1737 = vadd.f32 %v1536, %v1649
      %v1738 = vadd.f32 %v1537, %v1654
      %v1739 = vadd.f32 %v1538, %v1657
      %v1740 = vadd.f32 %v1539, %v1662
      %v1741 = vadd.f32 %v1540, %v1665
      %v1742 = vadd.f32 %v1541, %v1670
      %v1743 = vadd.f32 %v1542, %v1673
      %v1744 = vadd.f32 %v1543, %v1678
      %v1745 = vadd.f32 %v1544, %v1681
      %v1746 = vadd.f32 %v1545, %v1686
      %v1747 = vadd.f32 %v1546, %v1689
      %v1748 = vadd.f32 %v1547, %v1694
      %v1749 = vadd.f32 %v1548, %v1697
      %v1750 = vadd.f32 %v1549, %v1702
      %v1751 = vadd.f32 %v1550, %v1705
      %v1752 = vadd.f32 %v1551, %v1710
      %v1753 = vadd.f32 %v1552, %v1713
      %v1754 = vadd.f32 %v1553, %v1718
      %v1755 = vadd.f32 %v1554, %v1721
      %s1756 = scalar_lea.vmem %s3, 8
      %v1757 = vld [vmem:[%s1756] sm:$0x3]
      %v1758 = vshrl.u32 %v619, 16
      %v1760 = vshll.u32 %v619, 16
      %v1762 = vrot.slane %v1760, 1
      %v1763 = vor.u32 %v1758, %v1762
      %v1765 = vshll.u32 %v620, 16
      %v1767 = vrot.slane %v1765, 1
      %v1768 = vsel %vm626, %v1763, %v1767
      %v1770 = vsel %vm444, %v1768, 0
      %v1773 = vsel %vm867, %v1757, 0
      %1775 = vmatprep.subr.bf16.mxu0 0
      %1776 = vmatpush1.bf16.msra.mxu0 0
      %1777 = vmatprep.subr.bf16.mxu0 0
      %1778 = vmatpush1.bf16.msra.mxu0 0
      %1779 = vmatprep.subr.bf16.mxu0 0
      %1780 = vmatpush1.bf16.msra.mxu0 0
      %1781 = vmatprep.subr.bf16.mxu0 0
      %1782 = vmatpush1.bf16.msra.mxu0 0
      %1783 = vmatprep.subr.bf16.mxu0 0
      %1784 = vmatpush1.bf16.msra.mxu0 0
      %1785 = vmatprep.subr.bf16.mxu0 0
      %1786 = vmatpush1.bf16.msra.mxu0 0
      %1787 = vmatprep.subr.bf16.mxu0 0
      %1788 = vmatpush1.bf16.msra.mxu0 0
      %1789 = vmatprep.subr.bf16.mxu0 0
      %1790 = vmatpush1.bf16.msra.mxu0 %v1773
      %1791 = vmatprep.subr.bf16.mxu0 0
      %1792 = vmatpush2.bf16.msra.mxu0 0
      %1793 = vmatprep.subr.bf16.mxu0 0
      %1794 = vmatpush2.bf16.msra.mxu0 0
      %1795 = vmatprep.subr.bf16.mxu0 0
      %1796 = vmatpush2.bf16.msra.mxu0 0
      %1797 = vmatprep.subr.bf16.mxu0 0
      %1798 = vmatpush2.bf16.msra.mxu0 0
      %1799 = vmatprep.subr.bf16.mxu0 0
      %1800 = vmatpush2.bf16.msra.mxu0 0
      %1801 = vmatprep.subr.bf16.mxu0 0
      %1802 = vmatpush2.bf16.msra.mxu0 0
      %1803 = vmatprep.subr.bf16.mxu0 0
      %1804 = vmatpush2.bf16.msra.mxu0 0
      %1805 = vmatprep.subr.bf16.mxu0 0
      %1806 = vmatpush2.bf16.msra.mxu0 0
      %1807 = vmatprep.mubr.bf16.mxu0 0
      %1808 = vmatmul.mubr.bf16.gmra.mxu0 %v823
      %v1809 = vpop.f32.mrf.mxu0
      %v1810 = vadd.f32 0.0, %v1809
      %v1811 = vpop.f32.mrf.mxu0
      %v1812 = vpop.f32.mrf.mxu0
      %v1813 = vadd.f32 0.0, %v1812
      %v1814 = vpop.f32.mrf.mxu0
      %1815 = vmatprep.mubr.bf16.mxu0 0
      %1816 = vmatmul.mubr.bf16.gmra.mxu0 %v826
      %v1817 = vpop.f32.mrf.mxu0
      %v1818 = vadd.f32 0.0, %v1817
      %v1819 = vpop.f32.mrf.mxu0
      %v1820 = vpop.f32.mrf.mxu0
      %v1821 = vadd.f32 0.0, %v1820
      %v1822 = vpop.f32.mrf.mxu0
      %1823 = vmatprep.mubr.bf16.mxu0 0
      %1824 = vmatmul.mubr.bf16.gmra.mxu0 %v829
      %v1825 = vpop.f32.mrf.mxu0
      %v1826 = vadd.f32 0.0, %v1825
      %v1827 = vpop.f32.mrf.mxu0
      %v1828 = vpop.f32.mrf.mxu0
      %v1829 = vadd.f32 0.0, %v1828
      %v1830 = vpop.f32.mrf.mxu0
      %1831 = vmatprep.mubr.bf16.mxu0 0
      %1832 = vmatmul.mubr.bf16.gmra.mxu0 %v832
      %v1833 = vpop.f32.mrf.mxu0
      %v1834 = vadd.f32 0.0, %v1833
      %v1835 = vpop.f32.mrf.mxu0
      %v1836 = vpop.f32.mrf.mxu0
      %v1837 = vadd.f32 0.0, %v1836
      %v1838 = vpop.f32.mrf.mxu0
      %1839 = vmatprep.mubr.bf16.mxu0 0
      %1840 = vmatmul.mubr.bf16.gmra.mxu0 %v835
      %v1841 = vpop.f32.mrf.mxu0
      %v1842 = vadd.f32 0.0, %v1841
      %v1843 = vpop.f32.mrf.mxu0
      %v1844 = vpop.f32.mrf.mxu0
      %v1845 = vadd.f32 0.0, %v1844
      %v1846 = vpop.f32.mrf.mxu0
      %1847 = vmatprep.mubr.bf16.mxu0 0
      %1848 = vmatmul.mubr.bf16.gmra.mxu0 %v838
      %v1849 = vpop.f32.mrf.mxu0
      %v1850 = vadd.f32 0.0, %v1849
      %v1851 = vpop.f32.mrf.mxu0
      %v1852 = vpop.f32.mrf.mxu0
      %v1853 = vadd.f32 0.0, %v1852
      %v1854 = vpop.f32.mrf.mxu0
      %1855 = vmatprep.mubr.bf16.mxu0 0
      %1856 = vmatmul.mubr.bf16.gmra.mxu0 %v841
      %v1857 = vpop.f32.mrf.mxu0
      %v1858 = vadd.f32 0.0, %v1857
      %v1859 = vpop.f32.mrf.mxu0
      %v1860 = vpop.f32.mrf.mxu0
      %v1861 = vadd.f32 0.0, %v1860
      %v1862 = vpop.f32.mrf.mxu0
      %1863 = vmatprep.mubr.bf16.mxu0 0
      %1864 = vmatmul.mubr.bf16.gmra.mxu0 %v844
      %v1865 = vpop.f32.mrf.mxu0
      %v1866 = vadd.f32 0.0, %v1865
      %v1867 = vpop.f32.mrf.mxu0
      %v1868 = vpop.f32.mrf.mxu0
      %v1869 = vadd.f32 0.0, %v1868
      %v1870 = vpop.f32.mrf.mxu0
      %1871 = vmatprep.mubr.bf16.mxu0 0
      %1872 = vmatmul.mubr.bf16.gmra.mxu0 %v847
      %v1873 = vpop.f32.mrf.mxu0
      %v1874 = vadd.f32 0.0, %v1873
      %v1875 = vpop.f32.mrf.mxu0
      %v1876 = vpop.f32.mrf.mxu0
      %v1877 = vadd.f32 0.0, %v1876
      %v1878 = vpop.f32.mrf.mxu0
      %1879 = vmatprep.mubr.bf16.mxu0 0
      %1880 = vmatmul.mubr.bf16.gmra.mxu0 %v850
      %v1881 = vpop.f32.mrf.mxu0
      %v1882 = vadd.f32 0.0, %v1881
      %v1883 = vpop.f32.mrf.mxu0
      %v1884 = vpop.f32.mrf.mxu0
      %v1885 = vadd.f32 0.0, %v1884
      %v1886 = vpop.f32.mrf.mxu0
      %1887 = vmatprep.mubr.bf16.mxu0 0
      %1888 = vmatmul.mubr.bf16.gmra.mxu0 %v853
      %v1889 = vpop.f32.mrf.mxu0
      %v1890 = vadd.f32 0.0, %v1889
      %v1891 = vpop.f32.mrf.mxu0
      %v1892 = vpop.f32.mrf.mxu0
      %v1893 = vadd.f32 0.0, %v1892
      %v1894 = vpop.f32.mrf.mxu0
      %1895 = vmatprep.mubr.bf16.mxu0 0
      %1896 = vmatmul.mubr.bf16.gmra.mxu0 %v856
      %v1897 = vpop.f32.mrf.mxu0
      %v1898 = vadd.f32 0.0, %v1897
      %v1899 = vpop.f32.mrf.mxu0
      %v1900 = vpop.f32.mrf.mxu0
      %v1901 = vadd.f32 0.0, %v1900
      %v1902 = vpop.f32.mrf.mxu0
      %1903 = vmatprep.mubr.bf16.mxu0 0
      %1904 = vmatmul.mubr.bf16.gmra.mxu0 %v859
      %v1905 = vpop.f32.mrf.mxu0
      %v1906 = vadd.f32 0.0, %v1905
      %v1907 = vpop.f32.mrf.mxu0
      %v1908 = vpop.f32.mrf.mxu0
      %v1909 = vadd.f32 0.0, %v1908
      %v1910 = vpop.f32.mrf.mxu0
      %1911 = vmatprep.mubr.bf16.mxu0 0
      %1912 = vmatmul.mubr.bf16.gmra.mxu0 %v862
      %v1913 = vpop.f32.mrf.mxu0
      %v1914 = vadd.f32 0.0, %v1913
      %v1915 = vpop.f32.mrf.mxu0
      %v1916 = vpop.f32.mrf.mxu0
      %v1917 = vadd.f32 0.0, %v1916
      %v1918 = vpop.f32.mrf.mxu0
      %1919 = vmatprep.mubr.bf16.mxu0 0
      %1920 = vmatmul.mubr.bf16.gmra.mxu0 %v865
      %v1921 = vpop.f32.mrf.mxu0
      %v1922 = vadd.f32 0.0, %v1921
      %v1923 = vpop.f32.mrf.mxu0
      %v1924 = vpop.f32.mrf.mxu0
      %v1925 = vadd.f32 0.0, %v1924
      %v1926 = vpop.f32.mrf.mxu0
      %1927 = vmatprep.mubr.bf16.mxu0 0
      %1928 = vmatmul.mubr.bf16.gmra.mxu0 %v1770
      %v1929 = vpop.f32.mrf.mxu0
      %v1930 = vadd.f32 0.0, %v1929
      %v1931 = vpop.f32.mrf.mxu0
      %v1932 = vpop.f32.mrf.mxu0
      %v1933 = vadd.f32 0.0, %v1932
      %v1934 = vpop.f32.mrf.mxu0
      %1935 = vdwg.mxu0
      %v1936 = vadd.f32 %v1724, %v1810
      %v1937 = vadd.f32 %v1725, %v1813
      %v1938 = vadd.f32 %v1726, %v1818
      %v1939 = vadd.f32 %v1727, %v1821
      %v1940 = vadd.f32 %v1728, %v1826
      %v1941 = vadd.f32 %v1729, %v1829
      %v1942 = vadd.f32 %v1730, %v1834
      %v1943 = vadd.f32 %v1731, %v1837
      %v1944 = vadd.f32 %v1732, %v1842
      %v1945 = vadd.f32 %v1733, %v1845
      %v1946 = vadd.f32 %v1734, %v1850
      %v1947 = vadd.f32 %v1735, %v1853
      %v1948 = vadd.f32 %v1736, %v1858
      %v1949 = vadd.f32 %v1737, %v1861
      %v1950 = vadd.f32 %v1738, %v1866
      %v1951 = vadd.f32 %v1739, %v1869
      %v1952 = vadd.f32 %v1740, %v1874
      %v1953 = vadd.f32 %v1741, %v1877
      %v1954 = vadd.f32 %v1742, %v1882
      %v1955 = vadd.f32 %v1743, %v1885
      %v1956 = vadd.f32 %v1744, %v1890
      %v1957 = vadd.f32 %v1745, %v1893
      %v1958 = vadd.f32 %v1746, %v1898
      %v1959 = vadd.f32 %v1747, %v1901
      %v1960 = vadd.f32 %v1748, %v1906
      %v1961 = vadd.f32 %v1749, %v1909
      %v1962 = vadd.f32 %v1750, %v1914
      %v1963 = vadd.f32 %v1751, %v1917
      %v1964 = vadd.f32 %v1752, %v1922
      %v1965 = vadd.f32 %v1753, %v1925
      %v1966 = vadd.f32 %v1754, %v1930
      %v1967 = vadd.f32 %v1755, %v1933
      %s1968 = scalar_lea.vmem %s3, 10
      %v1969 = vld [vmem:[%s1968] sm:$0x3]
      %v1972 = vrot.slane %v619, 1
      %v1973 = vrot.slane %v620, 1
      %v1974 = vsel %vm1262, %v1972, %v1973
      %v1976 = vsel %vm444, %v1974, 0
      %v1979 = vsel %vm867, %v1969, 0
      %1981 = vmatprep.subr.bf16.mxu0 0
      %1982 = vmatpush1.bf16.msra.mxu0 0
      %1983 = vmatprep.subr.bf16.mxu0 0
      %1984 = vmatpush1.bf16.msra.mxu0 0
      %1985 = vmatprep.subr.bf16.mxu0 0
      %1986 = vmatpush1.bf16.msra.mxu0 0
      %1987 = vmatprep.subr.bf16.mxu0 0
      %1988 = vmatpush1.bf16.msra.mxu0 0
      %1989 = vmatprep.subr.bf16.mxu0 0
      %1990 = vmatpush1.bf16.msra.mxu0 0
      %1991 = vmatprep.subr.bf16.mxu0 0
      %1992 = vmatpush1.bf16.msra.mxu0 0
      %1993 = vmatprep.subr.bf16.mxu0 0
      %1994 = vmatpush1.bf16.msra.mxu0 0
      %1995 = vmatprep.subr.bf16.mxu0 0
      %1996 = vmatpush1.bf16.msra.mxu0 %v1979
      %1997 = vmatprep.subr.bf16.mxu0 0
      %1998 = vmatpush2.bf16.msra.mxu0 0
      %1999 = vmatprep.subr.bf16.mxu0 0
      %2000 = vmatpush2.bf16.msra.mxu0 0
      %2001 = vmatprep.subr.bf16.mxu0 0
      %2002 = vmatpush2.bf16.msra.mxu0 0
      %2003 = vmatprep.subr.bf16.mxu0 0
      %2004 = vmatpush2.bf16.msra.mxu0 0
      %2005 = vmatprep.subr.bf16.mxu0 0
      %2006 = vmatpush2.bf16.msra.mxu0 0
      %2007 = vmatprep.subr.bf16.mxu0 0
      %2008 = vmatpush2.bf16.msra.mxu0 0
      %2009 = vmatprep.subr.bf16.mxu0 0
      %2010 = vmatpush2.bf16.msra.mxu0 0
      %2011 = vmatprep.subr.bf16.mxu0 0
      %2012 = vmatpush2.bf16.msra.mxu0 0
      %2013 = vmatprep.mubr.bf16.mxu0 0
      %2014 = vmatmul.mubr.bf16.gmra.mxu0 %v1315
      %v2015 = vpop.f32.mrf.mxu0
      %v2016 = vadd.f32 0.0, %v2015
      %v2017 = vpop.f32.mrf.mxu0
      %v2018 = vpop.f32.mrf.mxu0
      %v2019 = vadd.f32 0.0, %v2018
      %v2020 = vpop.f32.mrf.mxu0
      %2021 = vmatprep.mubr.bf16.mxu0 0
      %2022 = vmatmul.mubr.bf16.gmra.mxu0 %v1318
      %v2023 = vpop.f32.mrf.mxu0
      %v2024 = vadd.f32 0.0, %v2023
      %v2025 = vpop.f32.mrf.mxu0
      %v2026 = vpop.f32.mrf.mxu0
      %v2027 = vadd.f32 0.0, %v2026
      %v2028 = vpop.f32.mrf.mxu0
      %2029 = vmatprep.mubr.bf16.mxu0 0
      %2030 = vmatmul.mubr.bf16.gmra.mxu0 %v1321
      %v2031 = vpop.f32.mrf.mxu0
      %v2032 = vadd.f32 0.0, %v2031
      %v2033 = vpop.f32.mrf.mxu0
      %v2034 = vpop.f32.mrf.mxu0
      %v2035 = vadd.f32 0.0, %v2034
      %v2036 = vpop.f32.mrf.mxu0
      %2037 = vmatprep.mubr.bf16.mxu0 0
      %2038 = vmatmul.mubr.bf16.gmra.mxu0 %v1324
      %v2039 = vpop.f32.mrf.mxu0
      %v2040 = vadd.f32 0.0, %v2039
      %v2041 = vpop.f32.mrf.mxu0
      %v2042 = vpop.f32.mrf.mxu0
      %v2043 = vadd.f32 0.0, %v2042
      %v2044 = vpop.f32.mrf.mxu0
      %2045 = vmatprep.mubr.bf16.mxu0 0
      %2046 = vmatmul.mubr.bf16.gmra.mxu0 %v1327
      %v2047 = vpop.f32.mrf.mxu0
      %v2048 = vadd.f32 0.0, %v2047
      %v2049 = vpop.f32.mrf.mxu0
      %v2050 = vpop.f32.mrf.mxu0
      %v2051 = vadd.f32 0.0, %v2050
      %v2052 = vpop.f32.mrf.mxu0
      %2053 = vmatprep.mubr.bf16.mxu0 0
      %2054 = vmatmul.mubr.bf16.gmra.mxu0 %v1330
      %v2055 = vpop.f32.mrf.mxu0
      %v2056 = vadd.f32 0.0, %v2055
      %v2057 = vpop.f32.mrf.mxu0
      %v2058 = vpop.f32.mrf.mxu0
      %v2059 = vadd.f32 0.0, %v2058
      %v2060 = vpop.f32.mrf.mxu0
      %2061 = vmatprep.mubr.bf16.mxu0 0
      %2062 = vmatmul.mubr.bf16.gmra.mxu0 %v1333
      %v2063 = vpop.f32.mrf.mxu0
      %v2064 = vadd.f32 0.0, %v2063
      %v2065 = vpop.f32.mrf.mxu0
      %v2066 = vpop.f32.mrf.mxu0
      %v2067 = vadd.f32 0.0, %v2066
      %v2068 = vpop.f32.mrf.mxu0
      %2069 = vmatprep.mubr.bf16.mxu0 0
      %2070 = vmatmul.mubr.bf16.gmra.mxu0 %v1336
      %v2071 = vpop.f32.mrf.mxu0
      %v2072 = vadd.f32 0.0, %v2071
      %v2073 = vpop.f32.mrf.mxu0
      %v2074 = vpop.f32.mrf.mxu0
      %v2075 = vadd.f32 0.0, %v2074
      %v2076 = vpop.f32.mrf.mxu0
      %2077 = vmatprep.mubr.bf16.mxu0 0
      %2078 = vmatmul.mubr.bf16.gmra.mxu0 %v1339
      %v2079 = vpop.f32.mrf.mxu0
      %v2080 = vadd.f32 0.0, %v2079
      %v2081 = vpop.f32.mrf.mxu0
      %v2082 = vpop.f32.mrf.mxu0
      %v2083 = vadd.f32 0.0, %v2082
      %v2084 = vpop.f32.mrf.mxu0
      %2085 = vmatprep.mubr.bf16.mxu0 0
      %2086 = vmatmul.mubr.bf16.gmra.mxu0 %v1342
      %v2087 = vpop.f32.mrf.mxu0
      %v2088 = vadd.f32 0.0, %v2087
      %v2089 = vpop.f32.mrf.mxu0
      %v2090 = vpop.f32.mrf.mxu0
      %v2091 = vadd.f32 0.0, %v2090
      %v2092 = vpop.f32.mrf.mxu0
      %2093 = vmatprep.mubr.bf16.mxu0 0
      %2094 = vmatmul.mubr.bf16.gmra.mxu0 %v1345
      %v2095 = vpop.f32.mrf.mxu0
      %v2096 = vadd.f32 0.0, %v2095
      %v2097 = vpop.f32.mrf.mxu0
      %v2098 = vpop.f32.mrf.mxu0
      %v2099 = vadd.f32 0.0, %v2098
      %v2100 = vpop.f32.mrf.mxu0
      %2101 = vmatprep.mubr.bf16.mxu0 0
      %2102 = vmatmul.mubr.bf16.gmra.mxu0 %v1348
      %v2103 = vpop.f32.mrf.mxu0
      %v2104 = vadd.f32 0.0, %v2103
      %v2105 = vpop.f32.mrf.mxu0
      %v2106 = vpop.f32.mrf.mxu0
      %v2107 = vadd.f32 0.0, %v2106
      %v2108 = vpop.f32.mrf.mxu0
      %2109 = vmatprep.mubr.bf16.mxu0 0
      %2110 = vmatmul.mubr.bf16.gmra.mxu0 %v1351
      %v2111 = vpop.f32.mrf.mxu0
      %v2112 = vadd.f32 0.0, %v2111
      %v2113 = vpop.f32.mrf.mxu0
      %v2114 = vpop.f32.mrf.mxu0
      %v2115 = vadd.f32 0.0, %v2114
      %v2116 = vpop.f32.mrf.mxu0
      %2117 = vmatprep.mubr.bf16.mxu0 0
      %2118 = vmatmul.mubr.bf16.gmra.mxu0 %v1354
      %v2119 = vpop.f32.mrf.mxu0
      %v2120 = vadd.f32 0.0, %v2119
      %v2121 = vpop.f32.mrf.mxu0
      %v2122 = vpop.f32.mrf.mxu0
      %v2123 = vadd.f32 0.0, %v2122
      %v2124 = vpop.f32.mrf.mxu0
      %2125 = vmatprep.mubr.bf16.mxu0 0
      %2126 = vmatmul.mubr.bf16.gmra.mxu0 %v1357
      %v2127 = vpop.f32.mrf.mxu0
      %v2128 = vadd.f32 0.0, %v2127
      %v2129 = vpop.f32.mrf.mxu0
      %v2130 = vpop.f32.mrf.mxu0
      %v2131 = vadd.f32 0.0, %v2130
      %v2132 = vpop.f32.mrf.mxu0
      %2133 = vmatprep.mubr.bf16.mxu0 0
      %2134 = vmatmul.mubr.bf16.gmra.mxu0 %v1976
      %v2135 = vpop.f32.mrf.mxu0
      %v2136 = vadd.f32 0.0, %v2135
      %v2137 = vpop.f32.mrf.mxu0
      %v2138 = vpop.f32.mrf.mxu0
      %v2139 = vadd.f32 0.0, %v2138
      %v2140 = vpop.f32.mrf.mxu0
      %2141 = vdwg.mxu0
      %v2142 = vadd.f32 %v1936, %v2016
      %v2143 = vadd.f32 %v1937, %v2019
      %v2144 = vadd.f32 %v1938, %v2024
      %v2145 = vadd.f32 %v1939, %v2027
      %v2146 = vadd.f32 %v1940, %v2032
      %v2147 = vadd.f32 %v1941, %v2035
      %v2148 = vadd.f32 %v1942, %v2040
      %v2149 = vadd.f32 %v1943, %v2043
      %v2150 = vadd.f32 %v1944, %v2048
      %v2151 = vadd.f32 %v1945, %v2051
      %v2152 = vadd.f32 %v1946, %v2056
      %v2153 = vadd.f32 %v1947, %v2059
      %v2154 = vadd.f32 %v1948, %v2064
      %v2155 = vadd.f32 %v1949, %v2067
      %v2156 = vadd.f32 %v1950, %v2072
      %v2157 = vadd.f32 %v1951, %v2075
      %v2158 = vadd.f32 %v1952, %v2080
      %v2159 = vadd.f32 %v1953, %v2083
      %v2160 = vadd.f32 %v1954, %v2088
      %v2161 = vadd.f32 %v1955, %v2091
      %v2162 = vadd.f32 %v1956, %v2096
      %v2163 = vadd.f32 %v1957, %v2099
      %v2164 = vadd.f32 %v1958, %v2104
      %v2165 = vadd.f32 %v1959, %v2107
      %v2166 = vadd.f32 %v1960, %v2112
      %v2167 = vadd.f32 %v1961, %v2115
      %v2168 = vadd.f32 %v1962, %v2120
      %v2169 = vadd.f32 %v1963, %v2123
      %v2170 = vadd.f32 %v1964, %v2128
      %v2171 = vadd.f32 %v1965, %v2131
      %v2172 = vadd.f32 %v1966, %v2136
      %v2173 = vadd.f32 %v1967, %v2139
      %s2174 = scalar_lea.vmem %s3, 12
      %v2175 = vld [vmem:[%s2174] sm:$0x3]
      %v2177 = vsel %vm444, %v621, 0
      %v2180 = vsel %vm867, %v2175, 0
      %2182 = vmatprep.subr.bf16.mxu0 0
      %2183 = vmatpush1.bf16.msra.mxu0 0
      %2184 = vmatprep.subr.bf16.mxu0 0
      %2185 = vmatpush1.bf16.msra.mxu0 0
      %2186 = vmatprep.subr.bf16.mxu0 0
      %2187 = vmatpush1.bf16.msra.mxu0 0
      %2188 = vmatprep.subr.bf16.mxu0 0
      %2189 = vmatpush1.bf16.msra.mxu0 0
      %2190 = vmatprep.subr.bf16.mxu0 0
      %2191 = vmatpush1.bf16.msra.mxu0 0
      %2192 = vmatprep.subr.bf16.mxu0 0
      %2193 = vmatpush1.bf16.msra.mxu0 0
      %2194 = vmatprep.subr.bf16.mxu0 0
      %2195 = vmatpush1.bf16.msra.mxu0 0
      %2196 = vmatprep.subr.bf16.mxu0 0
      %2197 = vmatpush1.bf16.msra.mxu0 %v2180
      %2198 = vmatprep.subr.bf16.mxu0 0
      %2199 = vmatpush2.bf16.msra.mxu0 0
      %2200 = vmatprep.subr.bf16.mxu0 0
      %2201 = vmatpush2.bf16.msra.mxu0 0
      %2202 = vmatprep.subr.bf16.mxu0 0
      %2203 = vmatpush2.bf16.msra.mxu0 0
      %2204 = vmatprep.subr.bf16.mxu0 0
      %2205 = vmatpush2.bf16.msra.mxu0 0
      %2206 = vmatprep.subr.bf16.mxu0 0
      %2207 = vmatpush2.bf16.msra.mxu0 0
      %2208 = vmatprep.subr.bf16.mxu0 0
      %2209 = vmatpush2.bf16.msra.mxu0 0
      %2210 = vmatprep.subr.bf16.mxu0 0
      %2211 = vmatpush2.bf16.msra.mxu0 0
      %2212 = vmatprep.subr.bf16.mxu0 0
      %2213 = vmatpush2.bf16.msra.mxu0 0
      %2214 = vmatprep.mubr.bf16.mxu0 0
      %2215 = vmatmul.mubr.bf16.gmra.mxu0 %v1036
      %v2216 = vpop.f32.mrf.mxu0
      %v2217 = vadd.f32 0.0, %v2216
      %v2218 = vpop.f32.mrf.mxu0
      %v2219 = vpop.f32.mrf.mxu0
      %v2220 = vadd.f32 0.0, %v2219
      %v2221 = vpop.f32.mrf.mxu0
      %2222 = vmatprep.mubr.bf16.mxu0 0
      %2223 = vmatmul.mubr.bf16.gmra.mxu0 %v1038
      %v2224 = vpop.f32.mrf.mxu0
      %v2225 = vadd.f32 0.0, %v2224
      %v2226 = vpop.f32.mrf.mxu0
      %v2227 = vpop.f32.mrf.mxu0
      %v2228 = vadd.f32 0.0, %v2227
      %v2229 = vpop.f32.mrf.mxu0
      %2230 = vmatprep.mubr.bf16.mxu0 0
      %2231 = vmatmul.mubr.bf16.gmra.mxu0 %v1040
      %v2232 = vpop.f32.mrf.mxu0
      %v2233 = vadd.f32 0.0, %v2232
      %v2234 = vpop.f32.mrf.mxu0
      %v2235 = vpop.f32.mrf.mxu0
      %v2236 = vadd.f32 0.0, %v2235
      %v2237 = vpop.f32.mrf.mxu0
      %2238 = vmatprep.mubr.bf16.mxu0 0
      %2239 = vmatmul.mubr.bf16.gmra.mxu0 %v1042
      %v2240 = vpop.f32.mrf.mxu0
      %v2241 = vadd.f32 0.0, %v2240
      %v2242 = vpop.f32.mrf.mxu0
      %v2243 = vpop.f32.mrf.mxu0
      %v2244 = vadd.f32 0.0, %v2243
      %v2245 = vpop.f32.mrf.mxu0
      %2246 = vmatprep.mubr.bf16.mxu0 0
      %2247 = vmatmul.mubr.bf16.gmra.mxu0 %v1044
      %v2248 = vpop.f32.mrf.mxu0
      %v2249 = vadd.f32 0.0, %v2248
      %v2250 = vpop.f32.mrf.mxu0
      %v2251 = vpop.f32.mrf.mxu0
      %v2252 = vadd.f32 0.0, %v2251
      %v2253 = vpop.f32.mrf.mxu0
      %2254 = vmatprep.mubr.bf16.mxu0 0
      %2255 = vmatmul.mubr.bf16.gmra.mxu0 %v1046
      %v2256 = vpop.f32.mrf.mxu0
      %v2257 = vadd.f32 0.0, %v2256
      %v2258 = vpop.f32.mrf.mxu0
      %v2259 = vpop.f32.mrf.mxu0
      %v2260 = vadd.f32 0.0, %v2259
      %v2261 = vpop.f32.mrf.mxu0
      %2262 = vmatprep.mubr.bf16.mxu0 0
      %2263 = vmatmul.mubr.bf16.gmra.mxu0 %v1048
      %v2264 = vpop.f32.mrf.mxu0
      %v2265 = vadd.f32 0.0, %v2264
      %v2266 = vpop.f32.mrf.mxu0
      %v2267 = vpop.f32.mrf.mxu0
      %v2268 = vadd.f32 0.0, %v2267
      %v2269 = vpop.f32.mrf.mxu0
      %2270 = vmatprep.mubr.bf16.mxu0 0
      %2271 = vmatmul.mubr.bf16.gmra.mxu0 %v1050
      %v2272 = vpop.f32.mrf.mxu0
      %v2273 = vadd.f32 0.0, %v2272
      %v2274 = vpop.f32.mrf.mxu0
      %v2275 = vpop.f32.mrf.mxu0
      %v2276 = vadd.f32 0.0, %v2275
      %v2277 = vpop.f32.mrf.mxu0
      %2278 = vmatprep.mubr.bf16.mxu0 0
      %2279 = vmatmul.mubr.bf16.gmra.mxu0 %v1052
      %v2280 = vpop.f32.mrf.mxu0
      %v2281 = vadd.f32 0.0, %v2280
      %v2282 = vpop.f32.mrf.mxu0
      %v2283 = vpop.f32.mrf.mxu0
      %v2284 = vadd.f32 0.0, %v2283
      %v2285 = vpop.f32.mrf.mxu0
      %2286 = vmatprep.mubr.bf16.mxu0 0
      %2287 = vmatmul.mubr.bf16.gmra.mxu0 %v1054
      %v2288 = vpop.f32.mrf.mxu0
      %v2289 = vadd.f32 0.0, %v2288
      %v2290 = vpop.f32.mrf.mxu0
      %v2291 = vpop.f32.mrf.mxu0
      %v2292 = vadd.f32 0.0, %v2291
      %v2293 = vpop.f32.mrf.mxu0
      %2294 = vmatprep.mubr.bf16.mxu0 0
      %2295 = vmatmul.mubr.bf16.gmra.mxu0 %v1056
      %v2296 = vpop.f32.mrf.mxu0
      %v2297 = vadd.f32 0.0, %v2296
      %v2298 = vpop.f32.mrf.mxu0
      %v2299 = vpop.f32.mrf.mxu0
      %v2300 = vadd.f32 0.0, %v2299
      %v2301 = vpop.f32.mrf.mxu0
      %2302 = vmatprep.mubr.bf16.mxu0 0
      %2303 = vmatmul.mubr.bf16.gmra.mxu0 %v1058
      %v2304 = vpop.f32.mrf.mxu0
      %v2305 = vadd.f32 0.0, %v2304
      %v2306 = vpop.f32.mrf.mxu0
      %v2307 = vpop.f32.mrf.mxu0
      %v2308 = vadd.f32 0.0, %v2307
      %v2309 = vpop.f32.mrf.mxu0
      %2310 = vmatprep.mubr.bf16.mxu0 0
      %2311 = vmatmul.mubr.bf16.gmra.mxu0 %v1060
      %v2312 = vpop.f32.mrf.mxu0
      %v2313 = vadd.f32 0.0, %v2312
      %v2314 = vpop.f32.mrf.mxu0
      %v2315 = vpop.f32.mrf.mxu0
      %v2316 = vadd.f32 0.0, %v2315
      %v2317 = vpop.f32.mrf.mxu0
      %2318 = vmatprep.mubr.bf16.mxu0 0
      %2319 = vmatmul.mubr.bf16.gmra.mxu0 %v1062
      %v2320 = vpop.f32.mrf.mxu0
      %v2321 = vadd.f32 0.0, %v2320
      %v2322 = vpop.f32.mrf.mxu0
      %v2323 = vpop.f32.mrf.mxu0
      %v2324 = vadd.f32 0.0, %v2323
      %v2325 = vpop.f32.mrf.mxu0
      %2326 = vmatprep.mubr.bf16.mxu0 0
      %2327 = vmatmul.mubr.bf16.gmra.mxu0 %v1558
      %v2328 = vpop.f32.mrf.mxu0
      %v2329 = vadd.f32 0.0, %v2328
      %v2330 = vpop.f32.mrf.mxu0
      %v2331 = vpop.f32.mrf.mxu0
      %v2332 = vadd.f32 0.0, %v2331
      %v2333 = vpop.f32.mrf.mxu0
      %2334 = vmatprep.mubr.bf16.mxu0 0
      %2335 = vmatmul.mubr.bf16.gmra.mxu0 %v2177
      %v2336 = vpop.f32.mrf.mxu0
      %v2337 = vadd.f32 0.0, %v2336
      %v2338 = vpop.f32.mrf.mxu0
      %v2339 = vpop.f32.mrf.mxu0
      %v2340 = vadd.f32 0.0, %v2339
      %v2341 = vpop.f32.mrf.mxu0
      %2342 = vdwg.mxu0
      %v2343 = vadd.f32 %v2142, %v2217
      %v2344 = vadd.f32 %v2143, %v2220
      %v2345 = vadd.f32 %v2144, %v2225
      %v2346 = vadd.f32 %v2145, %v2228
      %v2347 = vadd.f32 %v2146, %v2233
      %v2348 = vadd.f32 %v2147, %v2236
      %v2349 = vadd.f32 %v2148, %v2241
      %v2350 = vadd.f32 %v2149, %v2244
      %v2351 = vadd.f32 %v2150, %v2249
      %v2352 = vadd.f32 %v2151, %v2252
      %v2353 = vadd.f32 %v2152, %v2257
      %v2354 = vadd.f32 %v2153, %v2260
      %v2355 = vadd.f32 %v2154, %v2265
      %v2356 = vadd.f32 %v2155, %v2268
      %v2357 = vadd.f32 %v2156, %v2273
      %v2358 = vadd.f32 %v2157, %v2276
      %v2359 = vadd.f32 %v2158, %v2281
      %v2360 = vadd.f32 %v2159, %v2284
      %v2361 = vadd.f32 %v2160, %v2289
      %v2362 = vadd.f32 %v2161, %v2292
      %v2363 = vadd.f32 %v2162, %v2297
      %v2364 = vadd.f32 %v2163, %v2300
      %v2365 = vadd.f32 %v2164, %v2305
      %v2366 = vadd.f32 %v2165, %v2308
      %v2367 = vadd.f32 %v2166, %v2313
      %v2368 = vadd.f32 %v2167, %v2316
      %v2369 = vadd.f32 %v2168, %v2321
      %v2370 = vadd.f32 %v2169, %v2324
      %v2371 = vadd.f32 %v2170, %v2329
      %v2372 = vadd.f32 %v2171, %v2332
      %v2373 = vadd.f32 %v2172, %v2337
      %v2374 = vadd.f32 %v2173, %v2340
      %s2375 = scalar_lea.vmem %s3, 14
      %v2376 = vld [vmem:[%s2375] sm:$0x3]
      %v2377 = vshrl.u32 %v621, 16
      %v2379 = vshll.u32 %v621, 16
      %v2381 = vrot.slane %v2379, 1
      %v2382 = vor.u32 %v2377, %v2381
      %v2384 = vshll.u32 %v622, 16
      %v2386 = vrot.slane %v2384, 1
      %v2387 = vsel %vm626, %v2382, %v2386
      %v2389 = vsel %vm444, %v2387, 0
      %v2392 = vsel %vm867, %v2376, 0
      %2394 = vmatprep.subr.bf16.mxu0 0
      %2395 = vmatpush1.bf16.msra.mxu0 0
      %2396 = vmatprep.subr.bf16.mxu0 0
      %2397 = vmatpush1.bf16.msra.mxu0 0
      %2398 = vmatprep.subr.bf16.mxu0 0
      %2399 = vmatpush1.bf16.msra.mxu0 0
      %2400 = vmatprep.subr.bf16.mxu0 0
      %2401 = vmatpush1.bf16.msra.mxu0 0
      %2402 = vmatprep.subr.bf16.mxu0 0
      %2403 = vmatpush1.bf16.msra.mxu0 0
      %2404 = vmatprep.subr.bf16.mxu0 0
      %2405 = vmatpush1.bf16.msra.mxu0 0
      %2406 = vmatprep.subr.bf16.mxu0 0
      %2407 = vmatpush1.bf16.msra.mxu0 0
      %2408 = vmatprep.subr.bf16.mxu0 0
      %2409 = vmatpush1.bf16.msra.mxu0 %v2392
      %2410 = vmatprep.subr.bf16.mxu0 0
      %2411 = vmatpush2.bf16.msra.mxu0 0
      %2412 = vmatprep.subr.bf16.mxu0 0
      %2413 = vmatpush2.bf16.msra.mxu0 0
      %2414 = vmatprep.subr.bf16.mxu0 0
      %2415 = vmatpush2.bf16.msra.mxu0 0
      %2416 = vmatprep.subr.bf16.mxu0 0
      %2417 = vmatpush2.bf16.msra.mxu0 0
      %2418 = vmatprep.subr.bf16.mxu0 0
      %2419 = vmatpush2.bf16.msra.mxu0 0
      %2420 = vmatprep.subr.bf16.mxu0 0
      %2421 = vmatpush2.bf16.msra.mxu0 0
      %2422 = vmatprep.subr.bf16.mxu0 0
      %2423 = vmatpush2.bf16.msra.mxu0 0
      %2424 = vmatprep.subr.bf16.mxu0 0
      %2425 = vmatpush2.bf16.msra.mxu0 0
      %2426 = vmatprep.mubr.bf16.mxu0 0
      %2427 = vmatmul.mubr.bf16.gmra.mxu0 %v826
      %v2428 = vpop.f32.mrf.mxu0
      %v2429 = vadd.f32 0.0, %v2428
      %v2430 = vpop.f32.mrf.mxu0
      %v2431 = vpop.f32.mrf.mxu0
      %v2432 = vadd.f32 0.0, %v2431
      %v2433 = vpop.f32.mrf.mxu0
      %2434 = vmatprep.mubr.bf16.mxu0 0
      %2435 = vmatmul.mubr.bf16.gmra.mxu0 %v829
      %v2436 = vpop.f32.mrf.mxu0
      %v2437 = vadd.f32 0.0, %v2436
      %v2438 = vpop.f32.mrf.mxu0
      %v2439 = vpop.f32.mrf.mxu0
      %v2440 = vadd.f32 0.0, %v2439
      %v2441 = vpop.f32.mrf.mxu0
      %2442 = vmatprep.mubr.bf16.mxu0 0
      %2443 = vmatmul.mubr.bf16.gmra.mxu0 %v832
      %v2444 = vpop.f32.mrf.mxu0
      %v2445 = vadd.f32 0.0, %v2444
      %v2446 = vpop.f32.mrf.mxu0
      %v2447 = vpop.f32.mrf.mxu0
      %v2448 = vadd.f32 0.0, %v2447
      %v2449 = vpop.f32.mrf.mxu0
      %2450 = vmatprep.mubr.bf16.mxu0 0
      %2451 = vmatmul.mubr.bf16.gmra.mxu0 %v835
      %v2452 = vpop.f32.mrf.mxu0
      %v2453 = vadd.f32 0.0, %v2452
      %v2454 = vpop.f32.mrf.mxu0
      %v2455 = vpop.f32.mrf.mxu0
      %v2456 = vadd.f32 0.0, %v2455
      %v2457 = vpop.f32.mrf.mxu0
      %2458 = vmatprep.mubr.bf16.mxu0 0
      %2459 = vmatmul.mubr.bf16.gmra.mxu0 %v838
      %v2460 = vpop.f32.mrf.mxu0
      %v2461 = vadd.f32 0.0, %v2460
      %v2462 = vpop.f32.mrf.mxu0
      %v2463 = vpop.f32.mrf.mxu0
      %v2464 = vadd.f32 0.0, %v2463
      %v2465 = vpop.f32.mrf.mxu0
      %2466 = vmatprep.mubr.bf16.mxu0 0
      %2467 = vmatmul.mubr.bf16.gmra.mxu0 %v841
      %v2468 = vpop.f32.mrf.mxu0
      %v2469 = vadd.f32 0.0, %v2468
      %v2470 = vpop.f32.mrf.mxu0
      %v2471 = vpop.f32.mrf.mxu0
      %v2472 = vadd.f32 0.0, %v2471
      %v2473 = vpop.f32.mrf.mxu0
      %2474 = vmatprep.mubr.bf16.mxu0 0
      %2475 = vmatmul.mubr.bf16.gmra.mxu0 %v844
      %v2476 = vpop.f32.mrf.mxu0
      %v2477 = vadd.f32 0.0, %v2476
      %v2478 = vpop.f32.mrf.mxu0
      %v2479 = vpop.f32.mrf.mxu0
      %v2480 = vadd.f32 0.0, %v2479
      %v2481 = vpop.f32.mrf.mxu0
      %2482 = vmatprep.mubr.bf16.mxu0 0
      %2483 = vmatmul.mubr.bf16.gmra.mxu0 %v847
      %v2484 = vpop.f32.mrf.mxu0
      %v2485 = vadd.f32 0.0, %v2484
      %v2486 = vpop.f32.mrf.mxu0
      %v2487 = vpop.f32.mrf.mxu0
      %v2488 = vadd.f32 0.0, %v2487
      %v2489 = vpop.f32.mrf.mxu0
      %2490 = vmatprep.mubr.bf16.mxu0 0
      %2491 = vmatmul.mubr.bf16.gmra.mxu0 %v850
      %v2492 = vpop.f32.mrf.mxu0
      %v2493 = vadd.f32 0.0, %v2492
      %v2494 = vpop.f32.mrf.mxu0
      %v2495 = vpop.f32.mrf.mxu0
      %v2496 = vadd.f32 0.0, %v2495
      %v2497 = vpop.f32.mrf.mxu0
      %2498 = vmatprep.mubr.bf16.mxu0 0
      %2499 = vmatmul.mubr.bf16.gmra.mxu0 %v853
      %v2500 = vpop.f32.mrf.mxu0
      %v2501 = vadd.f32 0.0, %v2500
      %v2502 = vpop.f32.mrf.mxu0
      %v2503 = vpop.f32.mrf.mxu0
      %v2504 = vadd.f32 0.0, %v2503
      %v2505 = vpop.f32.mrf.mxu0
      %2506 = vmatprep.mubr.bf16.mxu0 0
      %2507 = vmatmul.mubr.bf16.gmra.mxu0 %v856
      %v2508 = vpop.f32.mrf.mxu0
      %v2509 = vadd.f32 0.0, %v2508
      %v2510 = vpop.f32.mrf.mxu0
      %v2511 = vpop.f32.mrf.mxu0
      %v2512 = vadd.f32 0.0, %v2511
      %v2513 = vpop.f32.mrf.mxu0
      %2514 = vmatprep.mubr.bf16.mxu0 0
      %2515 = vmatmul.mubr.bf16.gmra.mxu0 %v859
      %v2516 = vpop.f32.mrf.mxu0
      %v2517 = vadd.f32 0.0, %v2516
      %v2518 = vpop.f32.mrf.mxu0
      %v2519 = vpop.f32.mrf.mxu0
      %v2520 = vadd.f32 0.0, %v2519
      %v2521 = vpop.f32.mrf.mxu0
      %2522 = vmatprep.mubr.bf16.mxu0 0
      %2523 = vmatmul.mubr.bf16.gmra.mxu0 %v862
      %v2524 = vpop.f32.mrf.mxu0
      %v2525 = vadd.f32 0.0, %v2524
      %v2526 = vpop.f32.mrf.mxu0
      %v2527 = vpop.f32.mrf.mxu0
      %v2528 = vadd.f32 0.0, %v2527
      %v2529 = vpop.f32.mrf.mxu0
      %2530 = vmatprep.mubr.bf16.mxu0 0
      %2531 = vmatmul.mubr.bf16.gmra.mxu0 %v865
      %v2532 = vpop.f32.mrf.mxu0
      %v2533 = vadd.f32 0.0, %v2532
      %v2534 = vpop.f32.mrf.mxu0
      %v2535 = vpop.f32.mrf.mxu0
      %v2536 = vadd.f32 0.0, %v2535
      %v2537 = vpop.f32.mrf.mxu0
      %2538 = vmatprep.mubr.bf16.mxu0 0
      %2539 = vmatmul.mubr.bf16.gmra.mxu0 %v1770
      %v2540 = vpop.f32.mrf.mxu0
      %v2541 = vadd.f32 0.0, %v2540
      %v2542 = vpop.f32.mrf.mxu0
      %v2543 = vpop.f32.mrf.mxu0
      %v2544 = vadd.f32 0.0, %v2543
      %v2545 = vpop.f32.mrf.mxu0
      %2546 = vmatprep.mubr.bf16.mxu0 0
      %2547 = vmatmul.mubr.bf16.gmra.mxu0 %v2389
      %v2548 = vpop.f32.mrf.mxu0
      %v2549 = vadd.f32 0.0, %v2548
      %v2550 = vpop.f32.mrf.mxu0
      %v2551 = vpop.f32.mrf.mxu0
      %v2552 = vadd.f32 0.0, %v2551
      %v2553 = vpop.f32.mrf.mxu0
      %2554 = vdwg.mxu0
      %v2555 = vadd.f32 %v2343, %v2429
      %v2556 = vadd.f32 %v2344, %v2432
      %v2557 = vadd.f32 %v2345, %v2437
      %v2558 = vadd.f32 %v2346, %v2440
      %v2559 = vadd.f32 %v2347, %v2445
      %v2560 = vadd.f32 %v2348, %v2448
      %v2561 = vadd.f32 %v2349, %v2453
      %v2562 = vadd.f32 %v2350, %v2456
      %v2563 = vadd.f32 %v2351, %v2461
      %v2564 = vadd.f32 %v2352, %v2464
      %v2565 = vadd.f32 %v2353, %v2469
      %v2566 = vadd.f32 %v2354, %v2472
      %v2567 = vadd.f32 %v2355, %v2477
      %v2568 = vadd.f32 %v2356, %v2480
      %v2569 = vadd.f32 %v2357, %v2485
      %v2570 = vadd.f32 %v2358, %v2488
      %v2571 = vadd.f32 %v2359, %v2493
      %v2572 = vadd.f32 %v2360, %v2496
      %v2573 = vadd.f32 %v2361, %v2501
      %v2574 = vadd.f32 %v2362, %v2504
      %v2575 = vadd.f32 %v2363, %v2509
      %v2576 = vadd.f32 %v2364, %v2512
      %v2577 = vadd.f32 %v2365, %v2517
      %v2578 = vadd.f32 %v2366, %v2520
      %v2579 = vadd.f32 %v2367, %v2525
      %v2580 = vadd.f32 %v2368, %v2528
      %v2581 = vadd.f32 %v2369, %v2533
      %v2582 = vadd.f32 %v2370, %v2536
      %v2583 = vadd.f32 %v2371, %v2541
      %v2584 = vadd.f32 %v2372, %v2544
      %v2585 = vadd.f32 %v2373, %v2549
      %v2586 = vadd.f32 %v2374, %v2552
      %s2587 = scalar_lea.vmem %s3, 16
      %v2588 = vld [vmem:[%s2587] sm:$0x3]
      %v2591 = vrot.slane %v621, 1
      %v2592 = vrot.slane %v622, 1
      %v2593 = vsel %vm1262, %v2591, %v2592
      %v2595 = vsel %vm444, %v2593, 0
      %v2598 = vsel %vm867, %v2588, 0
      %2600 = vmatprep.subr.bf16.mxu0 0
      %2601 = vmatpush1.bf16.msra.mxu0 0
      %2602 = vmatprep.subr.bf16.mxu0 0
      %2603 = vmatpush1.bf16.msra.mxu0 0
      %2604 = vmatprep.subr.bf16.mxu0 0
      %2605 = vmatpush1.bf16.msra.mxu0 0
      %2606 = vmatprep.subr.bf16.mxu0 0
      %2607 = vmatpush1.bf16.msra.mxu0 0
      %2608 = vmatprep.subr.bf16.mxu0 0
      %2609 = vmatpush1.bf16.msra.mxu0 0
      %2610 = vmatprep.subr.bf16.mxu0 0
      %2611 = vmatpush1.bf16.msra.mxu0 0
      %2612 = vmatprep.subr.bf16.mxu0 0
      %2613 = vmatpush1.bf16.msra.mxu0 0
      %2614 = vmatprep.subr.bf16.mxu0 0
      %2615 = vmatpush1.bf16.msra.mxu0 %v2598
      %2616 = vmatprep.subr.bf16.mxu0 0
      %2617 = vmatpush2.bf16.msra.mxu0 0
      %2618 = vmatprep.subr.bf16.mxu0 0
      %2619 = vmatpush2.bf16.msra.mxu0 0
      %2620 = vmatprep.subr.bf16.mxu0 0
      %2621 = vmatpush2.bf16.msra.mxu0 0
      %2622 = vmatprep.subr.bf16.mxu0 0
      %2623 = vmatpush2.bf16.msra.mxu0 0
      %2624 = vmatprep.subr.bf16.mxu0 0
      %2625 = vmatpush2.bf16.msra.mxu0 0
      %2626 = vmatprep.subr.bf16.mxu0 0
      %2627 = vmatpush2.bf16.msra.mxu0 0
      %2628 = vmatprep.subr.bf16.mxu0 0
      %2629 = vmatpush2.bf16.msra.mxu0 0
      %2630 = vmatprep.subr.bf16.mxu0 0
      %2631 = vmatpush2.bf16.msra.mxu0 0
      %2632 = vmatprep.mubr.bf16.mxu0 0
      %2633 = vmatmul.mubr.bf16.gmra.mxu0 %v1318
      %v2634 = vpop.f32.mrf.mxu0
      %v2635 = vadd.f32 0.0, %v2634
      %v2636 = vpop.f32.mrf.mxu0
      %v2637 = vpop.f32.mrf.mxu0
      %v2638 = vadd.f32 0.0, %v2637
      %v2639 = vpop.f32.mrf.mxu0
      %2640 = vmatprep.mubr.bf16.mxu0 0
      %2641 = vmatmul.mubr.bf16.gmra.mxu0 %v1321
      %v2642 = vpop.f32.mrf.mxu0
      %v2643 = vadd.f32 0.0, %v2642
      %v2644 = vpop.f32.mrf.mxu0
      %v2645 = vpop.f32.mrf.mxu0
      %v2646 = vadd.f32 0.0, %v2645
      %v2647 = vpop.f32.mrf.mxu0
      %2648 = vmatprep.mubr.bf16.mxu0 0
      %2649 = vmatmul.mubr.bf16.gmra.mxu0 %v1324
      %v2650 = vpop.f32.mrf.mxu0
      %v2651 = vadd.f32 0.0, %v2650
      %v2652 = vpop.f32.mrf.mxu0
      %v2653 = vpop.f32.mrf.mxu0
      %v2654 = vadd.f32 0.0, %v2653
      %v2655 = vpop.f32.mrf.mxu0
      %2656 = vmatprep.mubr.bf16.mxu0 0
      %2657 = vmatmul.mubr.bf16.gmra.mxu0 %v1327
      %v2658 = vpop.f32.mrf.mxu0
      %v2659 = vadd.f32 0.0, %v2658
      %v2660 = vpop.f32.mrf.mxu0
      %v2661 = vpop.f32.mrf.mxu0
      %v2662 = vadd.f32 0.0, %v2661
      %v2663 = vpop.f32.mrf.mxu0
      %2664 = vmatprep.mubr.bf16.mxu0 0
      %2665 = vmatmul.mubr.bf16.gmra.mxu0 %v1330
      %v2666 = vpop.f32.mrf.mxu0
      %v2667 = vadd.f32 0.0, %v2666
      %v2668 = vpop.f32.mrf.mxu0
      %v2669 = vpop.f32.mrf.mxu0
      %v2670 = vadd.f32 0.0, %v2669
      %v2671 = vpop.f32.mrf.mxu0
      %2672 = vmatprep.mubr.bf16.mxu0 0
      %2673 = vmatmul.mubr.bf16.gmra.mxu0 %v1333
      %v2674 = vpop.f32.mrf.mxu0
      %v2675 = vadd.f32 0.0, %v2674
      %v2676 = vpop.f32.mrf.mxu0
      %v2677 = vpop.f32.mrf.mxu0
      %v2678 = vadd.f32 0.0, %v2677
      %v2679 = vpop.f32.mrf.mxu0
      %2680 = vmatprep.mubr.bf16.mxu0 0
      %2681 = vmatmul.mubr.bf16.gmra.mxu0 %v1336
      %v2682 = vpop.f32.mrf.mxu0
      %v2683 = vadd.f32 0.0, %v2682
      %v2684 = vpop.f32.mrf.mxu0
      %v2685 = vpop.f32.mrf.mxu0
      %v2686 = vadd.f32 0.0, %v2685
      %v2687 = vpop.f32.mrf.mxu0
      %2688 = vmatprep.mubr.bf16.mxu0 0
      %2689 = vmatmul.mubr.bf16.gmra.mxu0 %v1339
      %v2690 = vpop.f32.mrf.mxu0
      %v2691 = vadd.f32 0.0, %v2690
      %v2692 = vpop.f32.mrf.mxu0
      %v2693 = vpop.f32.mrf.mxu0
      %v2694 = vadd.f32 0.0, %v2693
      %v2695 = vpop.f32.mrf.mxu0
      %2696 = vmatprep.mubr.bf16.mxu0 0
      %2697 = vmatmul.mubr.bf16.gmra.mxu0 %v1342
      %v2698 = vpop.f32.mrf.mxu0
      %v2699 = vadd.f32 0.0, %v2698
      %v2700 = vpop.f32.mrf.mxu0
      %v2701 = vpop.f32.mrf.mxu0
      %v2702 = vadd.f32 0.0, %v2701
      %v2703 = vpop.f32.mrf.mxu0
      %2704 = vmatprep.mubr.bf16.mxu0 0
      %2705 = vmatmul.mubr.bf16.gmra.mxu0 %v1345
      %v2706 = vpop.f32.mrf.mxu0
      %v2707 = vadd.f32 0.0, %v2706
      %v2708 = vpop.f32.mrf.mxu0
      %v2709 = vpop.f32.mrf.mxu0
      %v2710 = vadd.f32 0.0, %v2709
      %v2711 = vpop.f32.mrf.mxu0
      %2712 = vmatprep.mubr.bf16.mxu0 0
      %2713 = vmatmul.mubr.bf16.gmra.mxu0 %v1348
      %v2714 = vpop.f32.mrf.mxu0
      %v2715 = vadd.f32 0.0, %v2714
      %v2716 = vpop.f32.mrf.mxu0
      %v2717 = vpop.f32.mrf.mxu0
      %v2718 = vadd.f32 0.0, %v2717
      %v2719 = vpop.f32.mrf.mxu0
      %2720 = vmatprep.mubr.bf16.mxu0 0
      %2721 = vmatmul.mubr.bf16.gmra.mxu0 %v1351
      %v2722 = vpop.f32.mrf.mxu0
      %v2723 = vadd.f32 0.0, %v2722
      %v2724 = vpop.f32.mrf.mxu0
      %v2725 = vpop.f32.mrf.mxu0
      %v2726 = vadd.f32 0.0, %v2725
      %v2727 = vpop.f32.mrf.mxu0
      %2728 = vmatprep.mubr.bf16.mxu0 0
      %2729 = vmatmul.mubr.bf16.gmra.mxu0 %v1354
      %v2730 = vpop.f32.mrf.mxu0
      %v2731 = vadd.f32 0.0, %v2730
      %v2732 = vpop.f32.mrf.mxu0
      %v2733 = vpop.f32.mrf.mxu0
      %v2734 = vadd.f32 0.0, %v2733
      %v2735 = vpop.f32.mrf.mxu0
      %2736 = vmatprep.mubr.bf16.mxu0 0
      %2737 = vmatmul.mubr.bf16.gmra.mxu0 %v1357
      %v2738 = vpop.f32.mrf.mxu0
      %v2739 = vadd.f32 0.0, %v2738
      %v2740 = vpop.f32.mrf.mxu0
      %v2741 = vpop.f32.mrf.mxu0
      %v2742 = vadd.f32 0.0, %v2741
      %v2743 = vpop.f32.mrf.mxu0
      %2744 = vmatprep.mubr.bf16.mxu0 0
      %2745 = vmatmul.mubr.bf16.gmra.mxu0 %v1976
      %v2746 = vpop.f32.mrf.mxu0
      %v2747 = vadd.f32 0.0, %v2746
      %v2748 = vpop.f32.mrf.mxu0
      %v2749 = vpop.f32.mrf.mxu0
      %v2750 = vadd.f32 0.0, %v2749
      %v2751 = vpop.f32.mrf.mxu0
      %2752 = vmatprep.mubr.bf16.mxu0 0
      %2753 = vmatmul.mubr.bf16.gmra.mxu0 %v2595
      %v2754 = vpop.f32.mrf.mxu0
      %v2755 = vadd.f32 0.0, %v2754
      %v2756 = vpop.f32.mrf.mxu0
      %v2757 = vpop.f32.mrf.mxu0
      %v2758 = vadd.f32 0.0, %v2757
      %v2759 = vpop.f32.mrf.mxu0
      %2760 = vdwg.mxu0
      %v2761 = vadd.f32 %v2555, %v2635
      %v2762 = vadd.f32 %v2556, %v2638
      %v2763 = vadd.f32 %v2557, %v2643
      %v2764 = vadd.f32 %v2558, %v2646
      %v2765 = vadd.f32 %v2559, %v2651
      %v2766 = vadd.f32 %v2560, %v2654
      %v2767 = vadd.f32 %v2561, %v2659
      %v2768 = vadd.f32 %v2562, %v2662
      %v2769 = vadd.f32 %v2563, %v2667
      %v2770 = vadd.f32 %v2564, %v2670
      %v2771 = vadd.f32 %v2565, %v2675
      %v2772 = vadd.f32 %v2566, %v2678
      %v2773 = vadd.f32 %v2567, %v2683
      %v2774 = vadd.f32 %v2568, %v2686
      %v2775 = vadd.f32 %v2569, %v2691
      %v2776 = vadd.f32 %v2570, %v2694
      %v2777 = vadd.f32 %v2571, %v2699
      %v2778 = vadd.f32 %v2572, %v2702
      %v2779 = vadd.f32 %v2573, %v2707
      %v2780 = vadd.f32 %v2574, %v2710
      %v2781 = vadd.f32 %v2575, %v2715
      %v2782 = vadd.f32 %v2576, %v2718
      %v2783 = vadd.f32 %v2577, %v2723
      %v2784 = vadd.f32 %v2578, %v2726
      %v2785 = vadd.f32 %v2579, %v2731
      %v2786 = vadd.f32 %v2580, %v2734
      %v2787 = vadd.f32 %v2581, %v2739
      %v2788 = vadd.f32 %v2582, %v2742
      %v2789 = vadd.f32 %v2583, %v2747
      %v2790 = vadd.f32 %v2584, %v2750
      %v2791 = vadd.f32 %v2585, %v2755
      %v2792 = vadd.f32 %v2586, %v2758
      %v2793 = vsel %vm444, %v2761, 0.0
      %v2794 = vsel %vm444, %v2762, 0.0
      %v2795 = vadd.f32 %v2793, %v2794
      %v2796 = vsel %vm444, %v2763, 0.0
      %v2797 = vadd.f32 %v2795, %v2796
      %v2798 = vsel %vm444, %v2764, 0.0
      %v2799 = vadd.f32 %v2797, %v2798
      %v2800 = vsel %vm444, %v2765, 0.0
      %v2801 = vadd.f32 %v2799, %v2800
      %v2802 = vsel %vm444, %v2766, 0.0
      %v2803 = vadd.f32 %v2801, %v2802
      %v2804 = vsel %vm444, %v2767, 0.0
      %v2805 = vadd.f32 %v2803, %v2804
      %v2806 = vsel %vm444, %v2768, 0.0
      %v2807 = vadd.f32 %v2805, %v2806
      %v2808 = vsel %vm444, %v2769, 0.0
      %v2809 = vadd.f32 %v2807, %v2808
      %v2810 = vsel %vm444, %v2770, 0.0
      %v2811 = vadd.f32 %v2809, %v2810
      %v2812 = vsel %vm444, %v2771, 0.0
      %v2813 = vadd.f32 %v2811, %v2812
      %v2814 = vsel %vm444, %v2772, 0.0
      %v2815 = vadd.f32 %v2813, %v2814
      %v2816 = vsel %vm444, %v2773, 0.0
      %v2817 = vadd.f32 %v2815, %v2816
      %v2818 = vsel %vm444, %v2774, 0.0
      %v2819 = vadd.f32 %v2817, %v2818
      %v2820 = vsel %vm444, %v2775, 0.0
      %v2821 = vadd.f32 %v2819, %v2820
      %v2822 = vsel %vm444, %v2776, 0.0
      %v2823 = vadd.f32 %v2821, %v2822
      %v2824 = vsel %vm444, %v2777, 0.0
      %v2825 = vadd.f32 %v2823, %v2824
      %v2826 = vsel %vm444, %v2778, 0.0
      %v2827 = vadd.f32 %v2825, %v2826
      %v2828 = vsel %vm444, %v2779, 0.0
      %v2829 = vadd.f32 %v2827, %v2828
      %v2830 = vsel %vm444, %v2780, 0.0
      %v2831 = vadd.f32 %v2829, %v2830
      %v2832 = vsel %vm444, %v2781, 0.0
      %v2833 = vadd.f32 %v2831, %v2832
      %v2834 = vsel %vm444, %v2782, 0.0
      %v2835 = vadd.f32 %v2833, %v2834
      %v2836 = vsel %vm444, %v2783, 0.0
      %v2837 = vadd.f32 %v2835, %v2836
      %v2838 = vsel %vm444, %v2784, 0.0
      %v2839 = vadd.f32 %v2837, %v2838
      %v2840 = vsel %vm444, %v2785, 0.0
      %v2841 = vadd.f32 %v2839, %v2840
      %v2842 = vsel %vm444, %v2786, 0.0
      %v2843 = vadd.f32 %v2841, %v2842
      %v2844 = vsel %vm444, %v2787, 0.0
      %v2845 = vadd.f32 %v2843, %v2844
      %v2846 = vsel %vm444, %v2788, 0.0
      %v2847 = vadd.f32 %v2845, %v2846
      %v2848 = vsel %vm444, %v2789, 0.0
      %v2849 = vadd.f32 %v2847, %v2848
      %v2850 = vsel %vm444, %v2790, 0.0
      %v2851 = vadd.f32 %v2849, %v2850
      %v2852 = vsel %vm444, %v2791, 0.0
      %v2853 = vadd.f32 %v2851, %v2852
      %v2854 = vsel %vm444, %v2792, 0.0
      %v2855 = vadd.f32 %v2853, %v2854
      %v2856 = vrot.slane %v2855, 4
      %v2857 = vadd.f32 %v2855, %v2856
      %v2858 = vrot.slane %v2857, 2
      %v2859 = vadd.f32 %v2857, %v2858
      %v2860 = vrot.slane %v2859, 1
      %v2861 = vadd.f32 %v2859, %v2860
      %vm2862 = vcmask 24576
      %2863 = vst.msk [vmem:[%s265] sm:$0x1] %vm2862, %v2861
      %v2864 = vmul.f32 %v2761, %v2761
      %v2865 = vmul.f32 %v2762, %v2762
      %v2866 = vmul.f32 %v2763, %v2763
      %v2867 = vmul.f32 %v2764, %v2764
      %v2868 = vmul.f32 %v2765, %v2765
      %v2869 = vmul.f32 %v2766, %v2766
      %v2870 = vmul.f32 %v2767, %v2767
      %v2871 = vmul.f32 %v2768, %v2768
      %v2872 = vmul.f32 %v2769, %v2769
      %v2873 = vmul.f32 %v2770, %v2770
      %v2874 = vmul.f32 %v2771, %v2771
      %v2875 = vmul.f32 %v2772, %v2772
      %v2876 = vmul.f32 %v2773, %v2773
      %v2877 = vmul.f32 %v2774, %v2774
      %v2878 = vmul.f32 %v2775, %v2775
      %v2879 = vmul.f32 %v2776, %v2776
      %v2880 = vmul.f32 %v2777, %v2777
      %v2881 = vmul.f32 %v2778, %v2778
      %v2882 = vmul.f32 %v2779, %v2779
      %v2883 = vmul.f32 %v2780, %v2780
      %v2884 = vmul.f32 %v2781, %v2781
      %v2885 = vmul.f32 %v2782, %v2782
      %v2886 = vmul.f32 %v2783, %v2783
      %v2887 = vmul.f32 %v2784, %v2784
      %v2888 = vmul.f32 %v2785, %v2785
      %v2889 = vmul.f32 %v2786, %v2786
      %v2890 = vmul.f32 %v2787, %v2787
      %v2891 = vmul.f32 %v2788, %v2788
      %v2892 = vmul.f32 %v2789, %v2789
      %v2893 = vmul.f32 %v2790, %v2790
      %v2894 = vmul.f32 %v2791, %v2791
      %v2895 = vmul.f32 %v2792, %v2792
      %v2896 = vsel %vm444, %v2864, 0.0
      %v2897 = vsel %vm444, %v2865, 0.0
      %v2898 = vadd.f32 %v2896, %v2897
      %v2899 = vsel %vm444, %v2866, 0.0
      %v2900 = vadd.f32 %v2898, %v2899
      %v2901 = vsel %vm444, %v2867, 0.0
      %v2902 = vadd.f32 %v2900, %v2901
      %v2903 = vsel %vm444, %v2868, 0.0
      %v2904 = vadd.f32 %v2902, %v2903
      %v2905 = vsel %vm444, %v2869, 0.0
      %v2906 = vadd.f32 %v2904, %v2905
      %v2907 = vsel %vm444, %v2870, 0.0
      %v2908 = vadd.f32 %v2906, %v2907
      %v2909 = vsel %vm444, %v2871, 0.0
      %v2910 = vadd.f32 %v2908, %v2909
      %v2911 = vsel %vm444, %v2872, 0.0
      %v2912 = vadd.f32 %v2910, %v2911
      %v2913 = vsel %vm444, %v2873, 0.0
      %v2914 = vadd.f32 %v2912, %v2913
      %v2915 = vsel %vm444, %v2874, 0.0
      %v2916 = vadd.f32 %v2914, %v2915
      %v2917 = vsel %vm444, %v2875, 0.0
      %v2918 = vadd.f32 %v2916, %v2917
      %v2919 = vsel %vm444, %v2876, 0.0
      %v2920 = vadd.f32 %v2918, %v2919
      %v2921 = vsel %vm444, %v2877, 0.0
      %v2922 = vadd.f32 %v2920, %v2921
      %v2923 = vsel %vm444, %v2878, 0.0
      %v2924 = vadd.f32 %v2922, %v2923
      %v2925 = vsel %vm444, %v2879, 0.0
      %v2926 = vadd.f32 %v2924, %v2925
      %v2927 = vsel %vm444, %v2880, 0.0
      %v2928 = vadd.f32 %v2926, %v2927
      %v2929 = vsel %vm444, %v2881, 0.0
      %v2930 = vadd.f32 %v2928, %v2929
      %v2931 = vsel %vm444, %v2882, 0.0
      %v2932 = vadd.f32 %v2930, %v2931
      %v2933 = vsel %vm444, %v2883, 0.0
      %v2934 = vadd.f32 %v2932, %v2933
      %v2935 = vsel %vm444, %v2884, 0.0
      %v2936 = vadd.f32 %v2934, %v2935
      %v2937 = vsel %vm444, %v2885, 0.0
      %v2938 = vadd.f32 %v2936, %v2937
      %v2939 = vsel %vm444, %v2886, 0.0
      %v2940 = vadd.f32 %v2938, %v2939
      %v2941 = vsel %vm444, %v2887, 0.0
      %v2942 = vadd.f32 %v2940, %v2941
      %v2943 = vsel %vm444, %v2888, 0.0
      %v2944 = vadd.f32 %v2942, %v2943
      %v2945 = vsel %vm444, %v2889, 0.0
      %v2946 = vadd.f32 %v2944, %v2945
      %v2947 = vsel %vm444, %v2890, 0.0
      %v2948 = vadd.f32 %v2946, %v2947
      %v2949 = vsel %vm444, %v2891, 0.0
      %v2950 = vadd.f32 %v2948, %v2949
      %v2951 = vsel %vm444, %v2892, 0.0
      %v2952 = vadd.f32 %v2950, %v2951
      %v2953 = vsel %vm444, %v2893, 0.0
      %v2954 = vadd.f32 %v2952, %v2953
      %v2955 = vsel %vm444, %v2894, 0.0
      %v2956 = vadd.f32 %v2954, %v2955
      %v2957 = vsel %vm444, %v2895, 0.0
      %v2958 = vadd.f32 %v2956, %v2957
      %v2959 = vrot.slane %v2958, 4
      %v2960 = vadd.f32 %v2958, %v2959
      %v2961 = vrot.slane %v2960, 2
      %v2962 = vadd.f32 %v2960, %v2961
      %v2963 = vrot.slane %v2962, 1
      %v2964 = vadd.f32 %v2962, %v2963
      %2965 = vst.msk [vmem:[%s268] sm:$0x1] %vm2862, %v2964
      %v2966 = vpack.c.bf16 %v2762, %v2761
      %v2967 = vpack.c.bf16 %v2764, %v2763
      %v2968 = vpack.c.bf16 %v2766, %v2765
      %v2969 = vpack.c.bf16 %v2768, %v2767
      %v2970 = vpack.c.bf16 %v2770, %v2769
      %v2971 = vpack.c.bf16 %v2772, %v2771
      %v2972 = vpack.c.bf16 %v2774, %v2773
      %v2973 = vpack.c.bf16 %v2776, %v2775
      %v2974 = vpack.c.bf16 %v2778, %v2777
      %v2975 = vpack.c.bf16 %v2780, %v2779
      %v2976 = vpack.c.bf16 %v2782, %v2781
      %v2977 = vpack.c.bf16 %v2784, %v2783
      %v2978 = vpack.c.bf16 %v2786, %v2785
      %v2979 = vpack.c.bf16 %v2788, %v2787
      %v2980 = vpack.c.bf16 %v2790, %v2789
      %v2981 = vpack.c.bf16 %v2792, %v2791
      %v2998 = vunpack.c.l.b16 %v2966
      %v2999 = vunpack.c.h.b16 %v2966
      %v3000 = vunpack.c.l.b16 %v2967
      %v3001 = vunpack.c.h.b16 %v2967
      %v3002 = vunpack.c.l.b16 %v2968
      %v3003 = vunpack.c.h.b16 %v2968
      %v3004 = vunpack.c.l.b16 %v2969
      %v3005 = vunpack.c.h.b16 %v2969
      %v3006 = vunpack.c.l.b16 %v2970
      %v3007 = vunpack.c.h.b16 %v2970
      %v3008 = vunpack.c.l.b16 %v2971
      %v3009 = vunpack.c.h.b16 %v2971
      %v3010 = vunpack.c.l.b16 %v2972
      %v3011 = vunpack.c.h.b16 %v2972
      %v3012 = vunpack.c.l.b16 %v2973
      %v3013 = vunpack.c.h.b16 %v2973
      %v3014 = vunpack.c.l.b16 %v2974
      %v3015 = vunpack.c.h.b16 %v2974
      %v3016 = vunpack.c.l.b16 %v2975
      %v3017 = vunpack.c.h.b16 %v2975
      %v3018 = vunpack.c.l.b16 %v2976
      %v3019 = vunpack.c.h.b16 %v2976
      %v3020 = vunpack.c.l.b16 %v2977
      %v3021 = vunpack.c.h.b16 %v2977
      %v3022 = vunpack.c.l.b16 %v2978
      %v3023 = vunpack.c.h.b16 %v2978
      %v3024 = vunpack.c.l.b16 %v2979
      %v3025 = vunpack.c.h.b16 %v2979
      %v3026 = vunpack.c.l.b16 %v2980
      %v3027 = vunpack.c.h.b16 %v2980
      %v3028 = vunpack.c.l.b16 %v2981
      %v3029 = vunpack.c.h.b16 %v2981
      %v3030 = vpack.c.b16 %v2998, %v2998
      %v3031 = vpack.c.b16 %v2999, %v2999
      %v3032 = vpack.c.b16 %v3000, %v3000
      %v3033 = vpack.c.b16 %v3001, %v3001
      %v3034 = vpack.c.b16 %v3002, %v3002
      %v3035 = vpack.c.b16 %v3003, %v3003
      %v3036 = vpack.c.b16 %v3004, %v3004
      %v3037 = vpack.c.b16 %v3005, %v3005
      %v3038 = vpack.c.b16 %v3006, %v3006
      %v3039 = vpack.c.b16 %v3007, %v3007
      %v3040 = vpack.c.b16 %v3008, %v3008
      %v3041 = vpack.c.b16 %v3009, %v3009
      %v3042 = vpack.c.b16 %v3010, %v3010
      %v3043 = vpack.c.b16 %v3011, %v3011
      %v3044 = vpack.c.b16 %v3012, %v3012
      %v3045 = vpack.c.b16 %v3013, %v3013
      %v3046 = vpack.c.b16 %v3014, %v3014
      %v3047 = vpack.c.b16 %v3015, %v3015
      %v3048 = vpack.c.b16 %v3016, %v3016
      %v3049 = vpack.c.b16 %v3017, %v3017
      %v3050 = vpack.c.b16 %v3018, %v3018
      %v3051 = vpack.c.b16 %v3019, %v3019
      %v3052 = vpack.c.b16 %v3020, %v3020
      %v3053 = vpack.c.b16 %v3021, %v3021
      %v3054 = vpack.c.b16 %v3022, %v3022
      %v3055 = vpack.c.b16 %v3023, %v3023
      %v3056 = vpack.c.b16 %v3024, %v3024
      %v3057 = vpack.c.b16 %v3025, %v3025
      %v3058 = vpack.c.b16 %v3026, %v3026
      %v3059 = vpack.c.b16 %v3027, %v3027
      %v3060 = vpack.c.b16 %v3028, %v3028
      %v3061 = vpack.c.b16 %v3029, %v3029
      %vm3094 = vcmask 27648
      %3095 = vst.msk [vmem:[%s262] sm:$0xf] %vm3094, %v3030
      %3096 = vst.msk [vmem:[%s262 + $0x4] sm:$0xf] %vm3094, %v3031
      %3097 = vst.msk [vmem:[%s262 + $0x8] sm:$0xf] %vm3094, %v3032
      %3098 = vst.msk [vmem:[%s262 + $0xc] sm:$0xf] %vm3094, %v3033
      %3099 = vst.msk [vmem:[%s262 + $0x10] sm:$0xf] %vm3094, %v3034
      %3100 = vst.msk [vmem:[%s262 + $0x14] sm:$0xf] %vm3094, %v3035
      %3101 = vst.msk [vmem:[%s262 + $0x18] sm:$0xf] %vm3094, %v3036
      %3102 = vst.msk [vmem:[%s262 + $0x1c] sm:$0xf] %vm3094, %v3037
      %3103 = vst.msk [vmem:[%s262 + $0x20] sm:$0xf] %vm3094, %v3038
      %3104 = vst.msk [vmem:[%s262 + $0x24] sm:$0xf] %vm3094, %v3039
      %3105 = vst.msk [vmem:[%s262 + $0x28] sm:$0xf] %vm3094, %v3040
      %3106 = vst.msk [vmem:[%s262 + $0x2c] sm:$0xf] %vm3094, %v3041
      %3107 = vst.msk [vmem:[%s262 + $0x30] sm:$0xf] %vm3094, %v3042
      %3108 = vst.msk [vmem:[%s262 + $0x34] sm:$0xf] %vm3094, %v3043
      %3109 = vst.msk [vmem:[%s262 + $0x38] sm:$0xf] %vm3094, %v3044
      %3110 = vst.msk [vmem:[%s262 + $0x3c] sm:$0xf] %vm3094, %v3045
      %3111 = vst.msk [vmem:[%s262 + $0x40] sm:$0xf] %vm3094, %v3046
      %3112 = vst.msk [vmem:[%s262 + $0x44] sm:$0xf] %vm3094, %v3047
      %3113 = vst.msk [vmem:[%s262 + $0x48] sm:$0xf] %vm3094, %v3048
      %3114 = vst.msk [vmem:[%s262 + $0x4c] sm:$0xf] %vm3094, %v3049
      %3115 = vst.msk [vmem:[%s262 + $0x50] sm:$0xf] %vm3094, %v3050
      %3116 = vst.msk [vmem:[%s262 + $0x54] sm:$0xf] %vm3094, %v3051
      %3117 = vst.msk [vmem:[%s262 + $0x58] sm:$0xf] %vm3094, %v3052
      %3118 = vst.msk [vmem:[%s262 + $0x5c] sm:$0xf] %vm3094, %v3053
      %3119 = vst.msk [vmem:[%s262 + $0x60] sm:$0xf] %vm3094, %v3054
      %3120 = vst.msk [vmem:[%s262 + $0x64] sm:$0xf] %vm3094, %v3055
      %3121 = vst.msk [vmem:[%s262 + $0x68] sm:$0xf] %vm3094, %v3056
      %3122 = vst.msk [vmem:[%s262 + $0x6c] sm:$0xf] %vm3094, %v3057
      %3123 = vst.msk [vmem:[%s262 + $0x70] sm:$0xf] %vm3094, %v3058
      %3124 = vst.msk [vmem:[%s262 + $0x74] sm:$0xf] %vm3094, %v3059
      %3125 = vst.msk [vmem:[%s262 + $0x78] sm:$0xf] %vm3094, %v3060
      %3126 = vst.msk [vmem:[%s262 + $0x7c] sm:$0xf] %vm3094, %v3061
      %p3127 = scmp.lt.s32.totalorder %s18, 1
      %s3128 = scalar_select %p3127, %s18, 1
      %s3129 = smul.addr %s3128, 32
      %s3130 = smul.addr %s3129, 4
      %s3131 = scalar_lea.vmem %s4, %s3130
      %p3132 = scmp.lt.s32.totalorder %s18, 1
      %s3133 = scalar_select %p3132, %s18, 1
      %s3134 = scalar_lea.vmem %s5, %s3133
      %p3135 = scmp.lt.s32.totalorder %s18, 1
      %s3136 = scalar_select %p3135, %s18, 1
      %s3137 = scalar_lea.vmem %s6, %s3136
      // Predicated region
      $region37: #{basic_block_forward.4} parent=35 // pred_check
        %p3138 = pneg %p125
      $region38: #{basic_block_forward.4} parent=35 // pred_check_branch
        %3140 = sbr.rel (%p3138) target = $region40
      $region39: #{basic_block_forward.4} parent=35 // pred_region
        _
      $region40: #{basic_block_forward.4} parent=35 // pred_fallthru
        _
      // Predicated region
      $region41: #{basic_block_forward.4} parent=35 // pred_check
        %p3141 = pneg %p151
      $region42: #{basic_block_forward.4} parent=35 // pred_check_branch
        %3143 = sbr.rel (%p3141) target = $region44
      $region43: #{basic_block_forward.4} parent=35 // pred_region
        _
      $region44: #{basic_block_forward.4} parent=35 // pred_fallthru
        _
      // Predicated region
      $region45: #{basic_block_forward.4} parent=35 // pred_check
        %p3144 = pneg %p177
      $region46: #{basic_block_forward.4} parent=35 // pred_check_branch
        %3146 = sbr.rel (%p3144) target = $region48
      $region47: #{basic_block_forward.4} parent=35 // pred_region
        _
      $region48: #{basic_block_forward.4} parent=35 // pred_fallthru
        _
    $region36: #{basic_block_forward.4} parent=5 // pred_fallthru
      _
    %p3147 = scmp.le.s32.totalorder 2, %s13
    // Predicated region
    $region49: #{basic_block_forward.4} parent=5 // pred_check
      %p3148 = pneg %p3147
    $region50: #{basic_block_forward.4} parent=5 // pred_check_branch
      %3150 = sbr.rel (%p3148) target = $region52
    $region51: #{basic_block_forward.4} parent=5 // pred_region
      %s3151 = ssub.s32 %s13, 2
      // Predicated region
      $region53: #{basic_block_forward.4} parent=51 // pred_check
        %p3152 = pneg %p131
      $region54: #{basic_block_forward.4} parent=51 // pred_check_branch
        %3154 = sbr.rel (%p3152) target = $region56
      $region55: #{basic_block_forward.4} parent=51 // pred_region
        %p3155 = scmp.lt.s32.totalorder %s19, 1
        %s3156 = scalar_select %p3155, %s19, 1
        %s3157 = smul.addr %s3156, 32
        %s3158 = smul.addr %s3157, 4
        %s3159 = scalar_lea.vmem %s4, %s3158
      $region56: #{basic_block_forward.4} parent=51 // pred_fallthru
        _
      // Predicated region
      $region57: #{basic_block_forward.4} parent=51 // pred_check
        %p3160 = pneg %p157
      $region58: #{basic_block_forward.4} parent=51 // pred_check_branch
        %3162 = sbr.rel (%p3160) target = $region60
      $region59: #{basic_block_forward.4} parent=51 // pred_region
        %p3163 = scmp.lt.s32.totalorder %s19, 1
        %s3164 = scalar_select %p3163, %s19, 1
        %s3165 = scalar_lea.vmem %s5, %s3164
      $region60: #{basic_block_forward.4} parent=51 // pred_fallthru
        _
      // Predicated region
      $region61: #{basic_block_forward.4} parent=51 // pred_check
        %p3166 = pneg %p183
      $region62: #{basic_block_forward.4} parent=51 // pred_check_branch
        %3168 = sbr.rel (%p3166) target = $region64
      $region63: #{basic_block_forward.4} parent=51 // pred_region
        %p3169 = scmp.lt.s32.totalorder %s19, 1
        %s3170 = scalar_select %p3169, %s19, 1
        %s3171 = scalar_lea.vmem %s6, %s3170
      $region64: #{basic_block_forward.4} parent=51 // pred_fallthru
        _
    $region52: #{basic_block_forward.4} parent=5 // pred_fallthru
      _
  $region6: #{basic_block_forward.4} parent=0 // loop_footer
    %s17 = sadd.s32 1, %s13
  $region7: #{basic_block_forward.4} parent=0 // loop_footer_branch
    %12 = sbr.rel target = $region3
  $region8: #{basic_block_forward.4} parent=0 // loop_exit
    _

</llo_original>
